<compile_context>
chip_gen: v7x
topology: tpu7x:2x2x1
jax: 0.10.0
libtpu: 0.0.40
codegen_flags: <defaults>
</compile_context>

<pallas_src>
import jax
import jax.numpy as jnp
from jax.experimental import pallas as pl
from jax.experimental.pallas import tpu as pltpu

HIDDEN_SIZE = 32       # CFG.hidden_size (small synthetic stand-in)
ATTN_INNER = 512       # fixed 512 inside the attention Sequential
NLASTLINEAR = 1        # CFG.nlastlinear (single similarity number)
BATCH = 4              # demo batch: B_TILE=2 -> grid=(2,)
SEQ = 16               # multiple of 16 so the bf16 path keeps tile-aligned reshapes

_HIGHEST = jax.lax.Precision.HIGHEST


def head_kernel(x_ref, w1_ref, b1_ref, w2_ref, w3_ref, b3_ref, out_ref):
    """One grid step = B_TILE batch elements.

    x_ref : (B_TILE, S, H)  compute dtype (f32 or bf16)
    w1_ref: (H, 512)        compute dtype (resident)
    b1_ref: (1, 512) f32 ;  w2_ref: (1, 512) f32 ;  w3_ref: (1, H) f32
    b3_ref: (1,) f32 in SMEM
    out_ref: (8, 128) f32 — one shared slab per step, row b = local batch b.
    """
    bt, S, H = x_ref.shape
    inner = w1_ref.shape[1]
    x = x_ref[...]

    # attention[0:2]: Linear(H,512)+Tanh as ONE 2-D MXU matmul over all
    # B_TILE*S tokens (leading-dim merge is layout-preserving: S is tile
    # aligned). Accumulate in f32; elementwise math stays f32 (v5e-friendly).
    x2d = x.reshape(bt * S, H)
    h = jnp.tanh(
        jnp.dot(x2d, w1_ref[...],
                preferred_element_type=jnp.float32, precision=_HIGHEST)
        + b1_ref[...])                                      # (bt*S, 512) f32
    h3 = h.reshape(bt, S, inner)                            # leading-dim split

    # attention[2]: Linear(512,1) as a flash-style batched einsum so the
    # logits come out LANE-DENSE: (bt, 1, S) with the sequence on lanes
    # (an M=1 MXU matmul per batch is cheap and keeps softmax off the [S,1]
    # sublane-column layout).  b2 is omitted: a constant added before
    # Softmax(dim=1) cancels exactly.
    w2b = jnp.broadcast_to(w2_ref[...].reshape(1, 1, inner), (bt, 1, inner))
    logits = jnp.einsum('bqk,bsk->bqs', w2b, h3,
                        preferred_element_type=jnp.float32,
                        precision=_HIGHEST)                 # (bt, 1, S) f32

    # attention[3]: Softmax over the sequence = lane-axis reductions.
    m = jnp.max(logits, axis=-1, keepdims=True)
    e = jnp.exp(logits - m)
    denom = jnp.sum(e, axis=-1, keepdims=True)
    weights = e * pl.reciprocal(denom, approx=False)        # exact: holds 1e-4

    # feature = sum_seq(weights * x): flash-style P@V batched matmul.
    # Dropout is identity in eval mode.
    feature = jnp.einsum('bqs,bsh->bqh', weights.astype(x.dtype), x,
                         preferred_element_type=jnp.float32,
                         precision=_HIGHEST)                # (bt, 1, H) f32
    feature2 = feature.reshape(bt, H)

    # final Linear(H, 1): VPU multiply + lane reduce; scalar bias from SMEM.
    res = (jnp.sum(feature2 * w3_ref[...], axis=-1, keepdims=True)
           + b3_ref[0])                                     # (bt, 1) f32

    # Pack ALL bt results of this step into ONE unmasked (8,128) slab:
    # row b holds batch b's scalar broadcast across the 128 lanes.
    if bt < 8:
        res = jnp.concatenate(
            [res, jnp.zeros((8 - bt, 1), jnp.float32)], axis=0)
    out_ref[...] = jnp.broadcast_to(res, (8, 128)).astype(out_ref.dtype)


def _pick_b_tile(B, cap=8):
    """Largest divisor of B that is <= cap AND leaves a grid of >= 2 steps
    (so both v7x TensorCores get work); otherwise collapse to one step."""
    best = None
    for d in range(1, min(B, cap) + 1):
        if B % d == 0 and (B // d) >= 2:
            best = d
    if best is None:
        best = B if B <= cap else 1
    return best


def my_model_head(last_hidden_states, params, *, compute_dtype=jnp.float32,
                  b_tile=None, single_buffer_weights=True):
    """last_hidden_states: [B, S, H] float32. Returns [B, nlastlinear] float32."""
    B, S, H = last_hidden_states.shape
    if compute_dtype == jnp.bfloat16:
        assert S % 16 == 0, "bf16 path needs S % 16 == 0 (16 sublanes / vreg)"
    else:
        assert S % 8 == 0, "f32 path needs S % 8 == 0 (sublane tile)"

    bt = b_tile if b_tile is not None else _pick_b_tile(B)
    assert B % bt == 0 and 1 <= bt <= 8
    num_steps = B // bt

    w3 = params["w3"]
    nlast = w3.shape[1]
    assert nlast == 1, "kernel implements the nlastlinear==1 similarity head"

    # Layout plumbing in the wrapper (keeps the kernel lane-dense).
    x_c = last_hidden_states.astype(compute_dtype)            # MXU LHS stream
    w1_c = params["w1"].astype(compute_dtype)                 # MXU RHS, resident
    b1_row = params["b1"].reshape(1, ATTN_INNER).astype(jnp.float32)
    w2_row = params["w2"].reshape(1, ATTN_INNER).astype(jnp.float32)
    w3_row = w3.reshape(1, H).astype(jnp.float32)
    b3_s = params["b3"].reshape(1).astype(jnp.float32)

    def run(single_buffer):
        # Resident weights (constant index_map): 1-deep buffering avoids a
        # pointless second VMEM copy (matters inside v7x's 64 MiB VMEM).
        wkw = dict(pipeline_mode=pl.Buffered(1)) if single_buffer else {}
        grid_spec = pltpu.PrefetchScalarGridSpec(
            num_scalar_prefetch=0,
            grid=(num_steps,),
            in_specs=[
                pl.BlockSpec((bt, S, H), lambda i: (i, 0, 0)),        # x tile
                pl.BlockSpec((H, ATTN_INNER), lambda i: (0, 0), **wkw),
                pl.BlockSpec((1, ATTN_INNER), lambda i: (0, 0), **wkw),
                pl.BlockSpec((1, ATTN_INNER), lambda i: (0, 0), **wkw),
                pl.BlockSpec((1, H), lambda i: (0, 0), **wkw),
                pl.BlockSpec(memory_space=pltpu.MemorySpace.SMEM),    # b3
            ],
            out_specs=pl.BlockSpec((8, 128), lambda i: (i, 0)),       # 1 slab/step
        )
        out_padded = pl.pallas_call(
            head_kernel,
            out_shape=jax.ShapeDtypeStruct((num_steps * 8, 128), jnp.float32),
            grid_spec=grid_spec,
            compiler_params=pltpu.CompilerParams(
                dimension_semantics=("parallel",),
                vmem_limit_bytes=32 * 1024 * 1024),   # explicit, fits all gens
        )(x_c, w1_c, b1_row, w2_row, w3_row, b3_s)
        return jax.block_until_ready(out_padded)

    if single_buffer_weights:
        try:
            out_padded = run(True)
        except Exception:
            # pl.Buffered(1) not accepted by this jax build: fall back to the
            # default 2-deep buffering (correctness unaffected).
            out_padded = run(False)
    else:
        out_padded = run(False)

    # One (8,128) slab per grid step; row b / lane 0 holds batch (step*bt + b).
    out = out_padded.reshape(num_steps, 8, 128)[:, :bt, 0]
    return out.reshape(B, nlast)


def init_params(key):
    k1, k2, k3, k4, k5, k6 = jax.random.split(key, 6)
    scale1 = 1.0 / jnp.sqrt(HIDDEN_SIZE)
    scale2 = 1.0 / jnp.sqrt(ATTN_INNER)
    return {
        # attention: Linear(H,512) -> Tanh -> Linear(512,1) -> Softmax(dim=1)
        "w1": jax.random.normal(k1, (HIDDEN_SIZE, ATTN_INNER), jnp.float32) * scale1,
        "b1": jax.random.normal(k2, (ATTN_INNER,), jnp.float32) * 0.01,
        "w2": jax.random.normal(k3, (ATTN_INNER, 1), jnp.float32) * scale2,
        "b2": jax.random.normal(k4, (1,), jnp.float32) * 0.01,
        # final linear: Linear(H, nlastlinear)
        "w3": jax.random.normal(k5, (HIDDEN_SIZE, NLASTLINEAR), jnp.float32) * scale1,
        "b3": jax.random.normal(k6, (NLASTLINEAR,), jnp.float32) * 0.01,
    }


def reference(last_hidden_states, params):
    """Pure-JAX reference matching the PyTorch forward (eval mode), incl. b2."""
    x = last_hidden_states
    h = jnp.tanh(jnp.dot(x, params["w1"], precision=_HIGHEST) + params["b1"])
    logits = jnp.dot(h, params["w2"], precision=_HIGHEST) + params["b2"]
    weights = jax.nn.softmax(logits, axis=1)
    feature = jnp.sum(weights * x, axis=1)
    return jnp.dot(feature, params["w3"], precision=_HIGHEST) + params["b3"]


if __name__ == "__main__":
    key = jax.random.PRNGKey(0)
    kx, kp = jax.random.split(key)
    # Synthetic BERT last_hidden_states: [batch, seq, hidden]
    last_hidden_states = jax.random.normal(
        kx, (BATCH, SEQ, HIDDEN_SIZE), jnp.float32)
    params = init_params(kp)
    ref = reference(last_hidden_states, params)

    # f32 path: strict tolerance (matches the f32 reference to 1e-4).
    out_f32 = my_model_head(last_hidden_states, params,
                            compute_dtype=jnp.float32)
    out_f32 = jax.block_until_ready(out_f32)
    assert out_f32.shape == (BATCH, NLASTLINEAR), out_f32.shape
    assert jnp.allclose(out_f32, ref, atol=1e-4, rtol=1e-4), (out_f32, ref)

    # bf16 MXU path (x / w1 in bf16, f32 accumulation + f32 elementwise):
    # expected quantization error ~3e-3 on this config -> bf16-level tolerance.
    out_bf16 = my_model_head(last_hidden_states, params,
                             compute_dtype=jnp.bfloat16)
    out_bf16 = jax.block_until_ready(out_bf16)
    assert out_bf16.shape == (BATCH, NLASTLINEAR), out_bf16.shape
    assert jnp.allclose(out_bf16, ref, atol=3e-2, rtol=3e-2), (out_bf16, ref)

    print("KERNEL_OK")
</pallas_src>

<mosaic_0001>
module attributes {stable_mosaic.version = 11 : i64} {
  func.func @head_kernel(%arg0: i32, %arg1: memref<2x16x32xf32, #tpu.memory_space<vmem>>, %arg2: memref<32x512xf32, #tpu.memory_space<vmem>>, %arg3: memref<1x512xf32, #tpu.memory_space<vmem>>, %arg4: memref<1x512xf32, #tpu.memory_space<vmem>>, %arg5: memref<1x32xf32, #tpu.memory_space<vmem>>, %arg6: memref<1xf32, #tpu.memory_space<smem>>, %arg7: memref<8x128xf32, #tpu.memory_space<vmem>>) attributes {dimension_semantics = [#tpu.dimension_semantics<parallel>], iteration_bounds = array<i64: 2>, scalar_prefetch = 0 : i64, scratch_operands = 0 : i64, tpu.core_type = #tpu.core_type<tc>, window_params = [{transform_indices = @transform_0, window_bounds = array<i64: 2, 16, 32>}, {pipeline_mode = #tpu.pipeline_mode<synchronous>, transform_indices = @transform_1, window_bounds = array<i64: 32, 512>}, {pipeline_mode = #tpu.pipeline_mode<synchronous>, transform_indices = @transform_2, window_bounds = array<i64: 1, 512>}, {pipeline_mode = #tpu.pipeline_mode<synchronous>, transform_indices = @transform_3, window_bounds = array<i64: 1, 512>}, {pipeline_mode = #tpu.pipeline_mode<synchronous>, transform_indices = @transform_4, window_bounds = array<i64: 1, 32>}, {transform_indices = @transform_5, window_bounds = array<i64: 1>}, {transform_indices = @transform_6, window_bounds = array<i64: 8, 128>}]} {
    %c0 = arith.constant 0 : index
    %c0_0 = arith.constant 0 : index
    %c0_1 = arith.constant 0 : index
    %0 = vector.load %arg1[%c0, %c0_0, %c0_1] : memref<2x16x32xf32, #tpu.memory_space<vmem>>, vector<2x16x32xf32>
    %1 = vector.shape_cast %0 : vector<2x16x32xf32> to vector<32x32xf32>
    %c0_2 = arith.constant 0 : index
    %c0_3 = arith.constant 0 : index
    %2 = vector.load %arg2[%c0_2, %c0_3] : memref<32x512xf32, #tpu.memory_space<vmem>>, vector<32x512xf32>
    %cst = arith.constant dense<0.000000e+00> : vector<32x512xf32>
    %3 = tpu.matmul %1, %2, %cst {dimension_numbers = #tpu.dot_dimension_numbers<[1], [0], [0], [1], [0, 0, 1, 1], [], []>, precision = #tpu.contract_precision<fp32>} : vector<32x32xf32>, vector<32x512xf32>, vector<32x512xf32> -> vector<32x512xf32>
    %c0_4 = arith.constant 0 : index
    %c0_5 = arith.constant 0 : index
    %4 = vector.load %arg3[%c0_4, %c0_5] : memref<1x512xf32, #tpu.memory_space<vmem>>, vector<1x512xf32>
    %5 = vector.broadcast %4 : vector<1x512xf32> to vector<32x512xf32>
    %6 = arith.addf %3, %5 : vector<32x512xf32>
    %7 = math.tanh %6 : vector<32x512xf32>
    %8 = vector.shape_cast %7 : vector<32x512xf32> to vector<2x16x512xf32>
    %c0_6 = arith.constant 0 : index
    %c0_7 = arith.constant 0 : index
    %9 = vector.load %arg4[%c0_6, %c0_7] : memref<1x512xf32, #tpu.memory_space<vmem>>, vector<1x512xf32>
    %10 = vector.shape_cast %9 : vector<1x512xf32> to vector<1x1x512xf32>
    %11 = vector.shape_cast %10 : vector<1x1x512xf32> to vector<1x1x512xf32>
    %12 = vector.broadcast %11 : vector<1x1x512xf32> to vector<2x1x512xf32>
    "tpu.trace_start"() <{level = 10 : i32, message = "bqk,bsk->bqs"}> : () -> ()
    %cst_8 = arith.constant dense<0.000000e+00> : vector<2x1x16xf32>
    %13 = tpu.matmul %12, %8, %cst_8 {dimension_numbers = #tpu.dot_dimension_numbers<[2], [2], [1], [1], [0, 0, 0, 1, 1, 1], [0], [0]>, precision = #tpu.contract_precision<fp32>} : vector<2x1x512xf32>, vector<2x16x512xf32>, vector<2x1x16xf32> -> vector<2x1x16xf32>
    "tpu.trace_stop"() : () -> ()
    %cst_9 = arith.constant dense<0xFF800000> : vector<2x1xf32>
    %14 = vector.multi_reduction <maximumf>, %13, %cst_9 [2] : vector<2x1x16xf32> to vector<2x1xf32>
    %15 = vector.shape_cast %14 : vector<2x1xf32> to vector<2x1x1xf32>
    %16 = vector.broadcast %15 : vector<2x1x1xf32> to vector<2x1x16xf32>
    %17 = arith.subf %13, %16 : vector<2x1x16xf32>
    %18 = math.exp %17 : vector<2x1x16xf32>
    %cst_10 = arith.constant dense<0.000000e+00> : vector<2x1xf32>
    %19 = vector.multi_reduction <add>, %18, %cst_10 [2] : vector<2x1x16xf32> to vector<2x1xf32>
    %20 = vector.shape_cast %19 : vector<2x1xf32> to vector<2x1x1xf32>
    %21 = tpu.reciprocal %20 : vector<2x1x1xf32> -> vector<2x1x1xf32>
    %22 = vector.broadcast %21 : vector<2x1x1xf32> to vector<2x1x16xf32>
    %23 = arith.mulf %18, %22 : vector<2x1x16xf32>
    "tpu.trace_start"() <{level = 10 : i32, message = "bqs,bsh->bqh"}> : () -> ()
    %cst_11 = arith.constant dense<0.000000e+00> : vector<2x1x32xf32>
    %24 = tpu.matmul %23, %0, %cst_11 {dimension_numbers = #tpu.dot_dimension_numbers<[2], [1], [1], [2], [0, 0, 0, 1, 1, 2], [0], [0]>, precision = #tpu.contract_precision<fp32>} : vector<2x1x16xf32>, vector<2x16x32xf32>, vector<2x1x32xf32> -> vector<2x1x32xf32>
    "tpu.trace_stop"() : () -> ()
    %25 = vector.shape_cast %24 : vector<2x1x32xf32> to vector<2x32xf32>
    %c0_12 = arith.constant 0 : index
    %c0_13 = arith.constant 0 : index
    %26 = vector.load %arg5[%c0_12, %c0_13] : memref<1x32xf32, #tpu.memory_space<vmem>>, vector<1x32xf32>
    %27 = vector.broadcast %26 : vector<1x32xf32> to vector<2x32xf32>
    %28 = arith.mulf %25, %27 : vector<2x32xf32>
    %cst_14 = arith.constant dense<0.000000e+00> : vector<2xf32>
    %29 = vector.multi_reduction <add>, %28, %cst_14 [1] : vector<2x32xf32> to vector<2xf32>
    %30 = vector.shape_cast %29 : vector<2xf32> to vector<2x1xf32>
    %c0_15 = arith.constant 0 : index
    %31 = memref.load %arg6[%c0_15] : memref<1xf32, #tpu.memory_space<smem>>
    %32 = vector.broadcast %31 : f32 to vector<2x1xf32>
    %33 = arith.addf %30, %32 : vector<2x1xf32>
    %cst_16 = arith.constant 0.000000e+00 : f32
    %34 = vector.broadcast %cst_16 : f32 to vector<6x1xf32>
    %35 = tpu.concatenate %33, %34 in 0 : vector<2x1xf32>, vector<6x1xf32> -> vector<8x1xf32>
    %36 = vector.shape_cast %35 : vector<8x1xf32> to vector<8x1xf32>
    %37 = vector.broadcast %36 : vector<8x1xf32> to vector<8x128xf32>
    %c0_17 = arith.constant 0 : index
    %c0_18 = arith.constant 0 : index
    %38 = vector.load %arg7[%c0_17, %c0_18] : memref<8x128xf32, #tpu.memory_space<vmem>>, vector<8x128xf32>
    tpu.vector_store %arg7[%c0_17, %c0_18], %37 {strides = array<i32>} : memref<8x128xf32, #tpu.memory_space<vmem>>, vector<8x128xf32>,
    return
  }
  func.func @transform_0(%arg0: i32) -> (i32, i32, i32) {
    %c0_i32 = arith.constant 0 : i32
    %c0_i32_0 = arith.constant 0 : i32
    %c0_i32_1 = arith.constant 0 : i32
    return %arg0, %c0_i32, %c0_i32_0 : i32, i32, i32
  }
  func.func @transform_1(%arg0: i32) -> (i32, i32) {
    %c0_i32 = arith.constant 0 : i32
    %c0_i32_0 = arith.constant 0 : i32
    %c0_i32_1 = arith.constant 0 : i32
    return %c0_i32, %c0_i32_0 : i32, i32
  }
  func.func @transform_2(%arg0: i32) -> (i32, i32) {
    %c0_i32 = arith.constant 0 : i32
    %c0_i32_0 = arith.constant 0 : i32
    %c0_i32_1 = arith.constant 0 : i32
    return %c0_i32, %c0_i32_0 : i32, i32
  }
  func.func @transform_3(%arg0: i32) -> (i32, i32) {
    %c0_i32 = arith.constant 0 : i32
    %c0_i32_0 = arith.constant 0 : i32
    %c0_i32_1 = arith.constant 0 : i32
    return %c0_i32, %c0_i32_0 : i32, i32
  }
  func.func @transform_4(%arg0: i32) -> (i32, i32) {
    %c0_i32 = arith.constant 0 : i32
    %c0_i32_0 = arith.constant 0 : i32
    %c0_i32_1 = arith.constant 0 : i32
    return %c0_i32, %c0_i32_0 : i32, i32
  }
  func.func @transform_5(%arg0: i32) -> i32 {
    %c0_i32 = arith.constant 0 : i32
    %c0_i32_0 = arith.constant 0 : i32
    return %c0_i32 : i32
  }
  func.func @transform_6(%arg0: i32) -> (i32, i32) {
    %c0_i32 = arith.constant 0 : i32
    %c0_i32_0 = arith.constant 0 : i32
    return %arg0, %c0_i32 : i32, i32
  }
}

module attributes {stable_mosaic.version = 11 : i64} {
  func.func @head_kernel(%arg0: i32, %arg1: memref<2x16x32xf32, #tpu.memory_space<vmem>>, %arg2: memref<32x512xf32, #tpu.memory_space<vmem>>, %arg3: memref<1x512xf32, #tpu.memory_space<vmem>>, %arg4: memref<1x512xf32, #tpu.memory_space<vmem>>, %arg5: memref<1x32xf32, #tpu.memory_space<vmem>>, %arg6: memref<1xf32, #tpu.memory_space<smem>>, %arg7: memref<8x128xf32, #tpu.memory_space<vmem>>) attributes {dimension_semantics = [#tpu.dimension_semantics<parallel>], iteration_bounds = array<i64: 2>, scalar_prefetch = 0 : i64, scratch_operands = 0 : i64, tpu.core_type = #tpu.core_type<tc>, window_params = [{transform_indices = @transform_0, window_bounds = array<i64: 2, 16, 32>}, {pipeline_mode = #tpu.pipeline_mode<synchronous>, transform_indices = @transform_1, window_bounds = array<i64: 32, 512>}, {pipeline_mode = #tpu.pipeline_mode<synchronous>, transform_indices = @transform_2, window_bounds = array<i64: 1, 512>}, {pipeline_mode = #tpu.pipeline_mode<synchronous>, transform_indices = @transform_3, window_bounds = array<i64: 1, 512>}, {pipeline_mode = #tpu.pipeline_mode<synchronous>, transform_indices = @transform_4, window_bounds = array<i64: 1, 32>}, {transform_indices = @transform_5, window_bounds = array<i64: 1>}, {transform_indices = @transform_6, window_bounds = array<i64: 8, 128>}]} {
    %c0 = arith.constant 0 : index
    %c0_0 = arith.constant 0 : index
    %c0_1 = arith.constant 0 : index
    %0 = vector.load %arg1[%c0, %c0_0, %c0_1] : memref<2x16x32xf32, #tpu.memory_space<vmem>>, vector<2x16x32xf32>
    %1 = vector.shape_cast %0 : vector<2x16x32xf32> to vector<32x32xf32>
    %c0_2 = arith.constant 0 : index
    %c0_3 = arith.constant 0 : index
    %2 = vector.load %arg2[%c0_2, %c0_3] : memref<32x512xf32, #tpu.memory_space<vmem>>, vector<32x512xf32>
    %cst = arith.constant dense<0.000000e+00> : vector<32x512xf32>
    %3 = tpu.matmul %1, %2, %cst {dimension_numbers = #tpu.dot_dimension_numbers<[1], [0], [0], [1], [0, 0, 1, 1], [], []>, precision = #tpu.contract_precision<fp32>} : vector<32x32xf32>, vector<32x512xf32>, vector<32x512xf32> -> vector<32x512xf32>
    %c0_4 = arith.constant 0 : index
    %c0_5 = arith.constant 0 : index
    %4 = vector.load %arg3[%c0_4, %c0_5] : memref<1x512xf32, #tpu.memory_space<vmem>>, vector<1x512xf32>
    %5 = vector.broadcast %4 : vector<1x512xf32> to vector<32x512xf32>
    %6 = arith.addf %3, %5 : vector<32x512xf32>
    %7 = math.tanh %6 : vector<32x512xf32>
    %8 = vector.shape_cast %7 : vector<32x512xf32> to vector<2x16x512xf32>
    %c0_6 = arith.constant 0 : index
    %c0_7 = arith.constant 0 : index
    %9 = vector.load %arg4[%c0_6, %c0_7] : memref<1x512xf32, #tpu.memory_space<vmem>>, vector<1x512xf32>
    %10 = vector.shape_cast %9 : vector<1x512xf32> to vector<1x1x512xf32>
    %11 = vector.shape_cast %10 : vector<1x1x512xf32> to vector<1x1x512xf32>
    %12 = vector.broadcast %11 : vector<1x1x512xf32> to vector<2x1x512xf32>
    "tpu.trace_start"() <{level = 10 : i32, message = "bqk,bsk->bqs"}> : () -> ()
    %cst_8 = arith.constant dense<0.000000e+00> : vector<2x1x16xf32>
    %13 = tpu.matmul %12, %8, %cst_8 {dimension_numbers = #tpu.dot_dimension_numbers<[2], [2], [1], [1], [0, 0, 0, 1, 1, 1], [0], [0]>, precision = #tpu.contract_precision<fp32>} : vector<2x1x512xf32>, vector<2x16x512xf32>, vector<2x1x16xf32> -> vector<2x1x16xf32>
    "tpu.trace_stop"() : () -> ()
    %cst_9 = arith.constant dense<0xFF800000> : vector<2x1xf32>
    %14 = vector.multi_reduction <maximumf>, %13, %cst_9 [2] : vector<2x1x16xf32> to vector<2x1xf32>
    %15 = vector.shape_cast %14 : vector<2x1xf32> to vector<2x1x1xf32>
    %16 = vector.broadcast %15 : vector<2x1x1xf32> to vector<2x1x16xf32>
    %17 = arith.subf %13, %16 : vector<2x1x16xf32>
    %18 = math.exp %17 : vector<2x1x16xf32>
    %cst_10 = arith.constant dense<0.000000e+00> : vector<2x1xf32>
    %19 = vector.multi_reduction <add>, %18, %cst_10 [2] : vector<2x1x16xf32> to vector<2x1xf32>
    %20 = vector.shape_cast %19 : vector<2x1xf32> to vector<2x1x1xf32>
    %21 = tpu.reciprocal %20 : vector<2x1x1xf32> -> vector<2x1x1xf32>
    %22 = vector.broadcast %21 : vector<2x1x1xf32> to vector<2x1x16xf32>
    %23 = arith.mulf %18, %22 : vector<2x1x16xf32>
    "tpu.trace_start"() <{level = 10 : i32, message = "bqs,bsh->bqh"}> : () -> ()
    %cst_11 = arith.constant dense<0.000000e+00> : vector<2x1x32xf32>
    %24 = tpu.matmul %23, %0, %cst_11 {dimension_numbers = #tpu.dot_dimension_numbers<[2], [1], [1], [2], [0, 0, 0, 1, 1, 2], [0], [0]>, precision = #tpu.contract_precision<fp32>} : vector<2x1x16xf32>, vector<2x16x32xf32>, vector<2x1x32xf32> -> vector<2x1x32xf32>
    "tpu.trace_stop"() : () -> ()
    %25 = vector.shape_cast %24 : vector<2x1x32xf32> to vector<2x32xf32>
    %c0_12 = arith.constant 0 : index
    %c0_13 = arith.constant 0 : index
    %26 = vector.load %arg5[%c0_12, %c0_13] : memref<1x32xf32, #tpu.memory_space<vmem>>, vector<1x32xf32>
    %27 = vector.broadcast %26 : vector<1x32xf32> to vector<2x32xf32>
    %28 = arith.mulf %25, %27 : vector<2x32xf32>
    %cst_14 = arith.constant dense<0.000000e+00> : vector<2xf32>
    %29 = vector.multi_reduction <add>, %28, %cst_14 [1] : vector<2x32xf32> to vector<2xf32>
    %30 = vector.shape_cast %29 : vector<2xf32> to vector<2x1xf32>
    %c0_15 = arith.constant 0 : index
    %31 = memref.load %arg6[%c0_15] : memref<1xf32, #tpu.memory_space<smem>>
    %32 = vector.broadcast %31 : f32 to vector<2x1xf32>
    %33 = arith.addf %30, %32 : vector<2x1xf32>
    %cst_16 = arith.constant 0.000000e+00 : f32
    %34 = vector.broadcast %cst_16 : f32 to vector<6x1xf32>
    %35 = tpu.concatenate %33, %34 in 0 : vector<2x1xf32>, vector<6x1xf32> -> vector<8x1xf32>
    %36 = vector.shape_cast %35 : vector<8x1xf32> to vector<8x1xf32>
    %37 = vector.broadcast %36 : vector<8x1xf32> to vector<8x128xf32>
    %c0_17 = arith.constant 0 : index
    %c0_18 = arith.constant 0 : index
    %38 = vector.load %arg7[%c0_17, %c0_18] : memref<8x128xf32, #tpu.memory_space<vmem>>, vector<8x128xf32>
    tpu.vector_store %arg7[%c0_17, %c0_18], %37 {strides = array<i32>} : memref<8x128xf32, #tpu.memory_space<vmem>>, vector<8x128xf32>,
    return
  }
  func.func @transform_0(%arg0: i32) -> (i32, i32, i32) {
    %c0_i32 = arith.constant 0 : i32
    %c0_i32_0 = arith.constant 0 : i32
    %c0_i32_1 = arith.constant 0 : i32
    return %arg0, %c0_i32, %c0_i32_0 : i32, i32, i32
  }
  func.func @transform_1(%arg0: i32) -> (i32, i32) {
    %c0_i32 = arith.constant 0 : i32
    %c0_i32_0 = arith.constant 0 : i32
    %c0_i32_1 = arith.constant 0 : i32
    return %c0_i32, %c0_i32_0 : i32, i32
  }
  func.func @transform_2(%arg0: i32) -> (i32, i32) {
    %c0_i32 = arith.constant 0 : i32
    %c0_i32_0 = arith.constant 0 : i32
    %c0_i32_1 = arith.constant 0 : i32
    return %c0_i32, %c0_i32_0 : i32, i32
  }
  func.func @transform_3(%arg0: i32) -> (i32, i32) {
    %c0_i32 = arith.constant 0 : i32
    %c0_i32_0 = arith.constant 0 : i32
    %c0_i32_1 = arith.constant 0 : i32
    return %c0_i32, %c0_i32_0 : i32, i32
  }
  func.func @transform_4(%arg0: i32) -> (i32, i32) {
    %c0_i32 = arith.constant 0 : i32
    %c0_i32_0 = arith.constant 0 : i32
    %c0_i32_1 = arith.constant 0 : i32
    return %c0_i32, %c0_i32_0 : i32, i32
  }
  func.func @transform_5(%arg0: i32) -> i32 {
    %c0_i32 = arith.constant 0 : i32
    %c0_i32_0 = arith.constant 0 : i32
    return %c0_i32 : i32
  }
  func.func @transform_6(%arg0: i32) -> (i32, i32) {
    %c0_i32 = arith.constant 0 : i32
    %c0_i32_0 = arith.constant 0 : i32
    return %arg0, %c0_i32 : i32, i32
  }
}

</mosaic_0001>

<llo_original>
// kernel: tpu_custom_call.1
$region0: #{tpu_custom_call.1}
  #allocation0 [shape = 'u32[]', space=smem, size = 0x4, offset = 0x4, fixed_abs, tag = 'smem constant byte address 0x4 - core index']
  #allocation1 [shape = 'u32[144,128]{1,0:T(1,128)}', space=vmem, size = 0x12000, scoped, tag = 'internal scratch']
  #allocation2 [shape = 'f32[1]{0:T(128)S(6)}', space=smem, size = 0x200, scoped, tag = 'scoped memory for tpu_custom_call.1']
  %s0 = inlined_call_operand.hbm [shape: f32[4,16,32], index: 0, kind: input, shape index: {}]
  %s1 = inlined_call_operand.hbm [shape: f32[32,512], index: 1, kind: input, shape index: {}]
  %s2 = inlined_call_operand.vmem [shape: f32[1,512], index: 2, kind: input, shape index: {}]
  %s3 = inlined_call_operand.vmem [shape: f32[1,512], index: 3, kind: input, shape index: {}]
  %s4 = inlined_call_operand.vmem [shape: f32[1,32], index: 4, kind: input, shape index: {}]
  %s5 = inlined_call_operand.<no memory space> [shape: f32[1], index: 5, kind: input, shape index: {}]
  %s6 = inlined_call_operand.hbm [shape: f32[16,128], index: 6, kind: output, shape index: {}]
  %s7 = sld [smem:[#allocation0]]
  $region65: #{tpu_custom_call.1} parent=0
    _
  %s9 = ssub.s32 1, %s7
  %s10 = scalar_select 0, %s9, %s7
  %11 = sst [smem:[#allocation2]] %s5
  $region1: #{tpu_custom_call.1} parent=0
    #allocation3 [shape = 'u8[32768]{0}', space=vmem, size = 0x8000, scoped, tag = 'input window, operand 0']
    #allocation4 [shape = 's32[2]{0}', space=sflag, size = 0x8, scoped, tag = 'scoped memory for tpu_custom_call.1']
    #allocation5 [shape = 's32[2]{0}', space=sflag, size = 0x8, scoped, tag = 'scoped memory for tpu_custom_call.1']
    #allocation6 [shape = 'u8[65536]{0}', space=vmem, size = 0x10000, scoped, tag = 'input window, operand 1, single buffered']
    #allocation7 [shape = 's32[1]{0}', space=sflag, size = 0x4, scoped, tag = 'scoped memory for tpu_custom_call.1']
    #allocation8 [shape = 'u8[8192]{0}', space=vmem, size = 0x2000, scoped, tag = 'output window, operand 0']
    %12 = vsyncpa [#allocation4], 0
    %s13 = scalar_lea.sflag [#allocation4], 1
    %14 = vsyncpa %s13, 0
    %15 = vsyncpa [#allocation7], 0
    %16 = vsyncpa [#allocation5], 0
    %s17 = scalar_lea.sflag [#allocation5], 1
    %18 = vsyncpa %s17, 0
    loop: start=0, step=1, limit=4
    $region2: #{tpu_custom_call.1} parent=1 // loop_pre_header
      _
    $region3: #{tpu_custom_call.1} parent=1 // loop_header
      %s20 = sphi 0, %s24
      %p21 = scmp.ge.s32.totalorder %s20, 4
      %s30 = sphi 0, %s32
      %s33 = sphi 0, %s30
      %s34 = sphi 0, %s33
      %s50 = sphi 0, %s34
      %s54 = sphi 0, %s54
      %s56 = sphi 0, %s54
      %s57 = sphi 0, %s56
      %s71 = sphi 0, %s57
      %s75 = sphi 0, %s75
      %s77 = sphi 0, %s75
      %s78 = sphi 0, %s77
      %s92 = sphi 0, %s78
      %s96 = sphi 0, %s96
      %s98 = sphi 0, %s96
      %s99 = sphi 0, %s98
      %s113 = sphi 0, %s99
      %s117 = sphi 0, %s117
      %s119 = sphi 0, %s117
      %s120 = sphi 0, %s119
      %s134 = sphi 0, %s120
      %s138 = sphi 0, %s138
      %s140 = sphi 0, %s138
      %s141 = sphi 0, %s140
      %s155 = sphi 0, %s141
      %s161 = sphi 0, %s163
      %s164 = sphi 0, %s161
      %s165 = sphi 0, %s164
      %s181 = sphi 0, %s165
    $region4: #{tpu_custom_call.1} parent=1 // loop_header_branch
      %23 = sbr.rel (%p21) target = $region8
    $region5: #{tpu_custom_call.1} parent=1 // loop_body
      %s25 = ssub.s32 %s20, 1
      %s26 = ssub.s32 %s20, 2
      %s27 = sadd.s32 %s20, 1
      %s28 = ssub.s32 %s20, %s27
      %p29 = scmp.eq.s32.totalorder %s28, 0
      %s31 = sadd.s32 %s30, 1
      %s32 = scalar_select %p29, %s30, %s31
      %p35 = pneg %p29
      %p36 = scmp.eq.s32.totalorder %s20, 1
      %p37 = por %p35, %p36
      %p38 = scmp.ne.s32.totalorder %s30, %s33
      %p39 = scmp.eq.s32.totalorder %s20, 0
      %p40 = por %p38, %p39
      %p41 = scmp.ne.s32.totalorder %s30, %s33
      %p42 = scmp.eq.s32.totalorder %s25, 1
      %p43 = por %p41, %p42
      %p44 = scmp.ne.s32.totalorder %s33, %s34
      %p45 = scmp.eq.s32.totalorder %s25, 0
      %p46 = por %p44, %p45
      %p47 = scmp.ne.s32.totalorder %s33, %s34
      %p48 = scmp.eq.s32.totalorder %s26, 1
      %p49 = por %p47, %p48
      %p51 = scmp.ne.s32.totalorder %s34, %s50
      %p52 = scmp.eq.s32.totalorder %s26, 0
      %p53 = por %p51, %p52
      %s55 = sadd.s32 %s54, 1
      %p58 = scmp.eq.s32.totalorder %s20, 1
      %p59 = scmp.ne.s32.totalorder %s54, %s56
      %p60 = scmp.eq.s32.totalorder %s20, 0
      %p61 = por %p59, %p60
      %p62 = scmp.ne.s32.totalorder %s54, %s56
      %p63 = scmp.eq.s32.totalorder %s25, 1
      %p64 = por %p62, %p63
      %p65 = scmp.ne.s32.totalorder %s56, %s57
      %p66 = scmp.eq.s32.totalorder %s25, 0
      %p67 = por %p65, %p66
      %p68 = scmp.ne.s32.totalorder %s56, %s57
      %p69 = scmp.eq.s32.totalorder %s26, 1
      %p70 = por %p68, %p69
      %p72 = scmp.ne.s32.totalorder %s57, %s71
      %p73 = scmp.eq.s32.totalorder %s26, 0
      %p74 = por %p72, %p73
      %s76 = sadd.s32 %s75, 1
      %p79 = scmp.eq.s32.totalorder %s20, 1
      %p80 = scmp.ne.s32.totalorder %s75, %s77
      %p81 = scmp.eq.s32.totalorder %s20, 0
      %p82 = por %p80, %p81
      %p83 = scmp.ne.s32.totalorder %s75, %s77
      %p84 = scmp.eq.s32.totalorder %s25, 1
      %p85 = por %p83, %p84
      %p86 = scmp.ne.s32.totalorder %s77, %s78
      %p87 = scmp.eq.s32.totalorder %s25, 0
      %p88 = por %p86, %p87
      %p89 = scmp.ne.s32.totalorder %s77, %s78
      %p90 = scmp.eq.s32.totalorder %s26, 1
      %p91 = por %p89, %p90
      %p93 = scmp.ne.s32.totalorder %s78, %s92
      %p94 = scmp.eq.s32.totalorder %s26, 0
      %p95 = por %p93, %p94
      %s97 = sadd.s32 %s96, 1
      %p100 = scmp.eq.s32.totalorder %s20, 1
      %p101 = scmp.ne.s32.totalorder %s96, %s98
      %p102 = scmp.eq.s32.totalorder %s20, 0
      %p103 = por %p101, %p102
      %p104 = scmp.ne.s32.totalorder %s96, %s98
      %p105 = scmp.eq.s32.totalorder %s25, 1
      %p106 = por %p104, %p105
      %p107 = scmp.ne.s32.totalorder %s98, %s99
      %p108 = scmp.eq.s32.totalorder %s25, 0
      %p109 = por %p107, %p108
      %p110 = scmp.ne.s32.totalorder %s98, %s99
      %p111 = scmp.eq.s32.totalorder %s26, 1
      %p112 = por %p110, %p111
      %p114 = scmp.ne.s32.totalorder %s99, %s113
      %p115 = scmp.eq.s32.totalorder %s26, 0
      %p116 = por %p114, %p115
      %s118 = sadd.s32 %s117, 1
      %p121 = scmp.eq.s32.totalorder %s20, 1
      %p122 = scmp.ne.s32.totalorder %s117, %s119
      %p123 = scmp.eq.s32.totalorder %s20, 0
      %p124 = por %p122, %p123
      %p125 = scmp.ne.s32.totalorder %s117, %s119
      %p126 = scmp.eq.s32.totalorder %s25, 1
      %p127 = por %p125, %p126
      %p128 = scmp.ne.s32.totalorder %s119, %s120
      %p129 = scmp.eq.s32.totalorder %s25, 0
      %p130 = por %p128, %p129
      %p131 = scmp.ne.s32.totalorder %s119, %s120
      %p132 = scmp.eq.s32.totalorder %s26, 1
      %p133 = por %p131, %p132
      %p135 = scmp.ne.s32.totalorder %s120, %s134
      %p136 = scmp.eq.s32.totalorder %s26, 0
      %p137 = por %p135, %p136
      %s139 = sadd.s32 %s138, 1
      %p142 = scmp.eq.s32.totalorder %s20, 1
      %p143 = scmp.ne.s32.totalorder %s138, %s140
      %p144 = scmp.eq.s32.totalorder %s20, 0
      %p145 = por %p143, %p144
      %p146 = scmp.ne.s32.totalorder %s138, %s140
      %p147 = scmp.eq.s32.totalorder %s25, 1
      %p148 = por %p146, %p147
      %p149 = scmp.ne.s32.totalorder %s140, %s141
      %p150 = scmp.eq.s32.totalorder %s25, 0
      %p151 = por %p149, %p150
      %p152 = scmp.ne.s32.totalorder %s140, %s141
      %p153 = scmp.eq.s32.totalorder %s26, 1
      %p154 = por %p152, %p153
      %p156 = scmp.ne.s32.totalorder %s141, %s155
      %p157 = scmp.eq.s32.totalorder %s26, 0
      %p158 = por %p156, %p157
      %s159 = ssub.s32 %s20, %s27
      %p160 = scmp.eq.s32.totalorder %s159, 0
      %s162 = sadd.s32 %s161, 1
      %s163 = scalar_select %p160, %s161, %s162
      %p166 = pneg %p160
      %p167 = scmp.eq.s32.totalorder %s20, 1
      %p168 = por %p166, %p167
      %p169 = scmp.ne.s32.totalorder %s161, %s164
      %p170 = scmp.eq.s32.totalorder %s20, 0
      %p171 = por %p169, %p170
      %p172 = scmp.ne.s32.totalorder %s161, %s164
      %p173 = scmp.eq.s32.totalorder %s25, 1
      %p174 = por %p172, %p173
      %p175 = scmp.ne.s32.totalorder %s164, %s165
      %p176 = scmp.eq.s32.totalorder %s25, 0
      %p177 = por %p175, %p176
      %p178 = scmp.ne.s32.totalorder %s164, %s165
      %p179 = scmp.eq.s32.totalorder %s26, 1
      %p180 = por %p178, %p179
      %p182 = scmp.ne.s32.totalorder %s165, %s181
      %p183 = scmp.eq.s32.totalorder %s26, 0
      %p184 = por %p182, %p183
      %p185 = scmp.le.s32.totalorder 1, %s20
      %p186 = scmp.lt.s32.totalorder %s20, 3
      %p187 = pnand %p185, %p186
      %p188 = pneg %p187
      // Predicated region
      $region9: #{tpu_custom_call.1} parent=5 // pred_check
        _
      $region10: #{tpu_custom_call.1} parent=5 // pred_check_branch
        %190 = sbr.rel (%p187) target = $region12
      $region11: #{tpu_custom_call.1} parent=5 // pred_region
        %s191 = ssub.s32 %s20, 1
        // Predicated region
        $region13: #{tpu_custom_call.1} parent=11 // pred_check
          %p192 = pneg %p67
        $region14: #{tpu_custom_call.1} parent=11 // pred_check_branch
          %194 = sbr.rel (%p192) target = $region16
        $region15: #{tpu_custom_call.1} parent=11 // pred_region
          %s196 = ssub.s32 2048, 2048
          %197 = vsyncadd [#allocation7], %s196
          %s198 = sshll.u32 [#allocation6], 4
          %s199 = int_to_ptr.vmem [resolvable:$true] %s198
          %204 = dma.hbm_to_vmem [thread:$0]  %s1, 2048, %s199, [#allocation7], 512, 512, 32
        $region16: #{tpu_custom_call.1} parent=11 // pred_fallthru
          _
        // Predicated region
        $region17: #{tpu_custom_call.1} parent=11 // pred_check
          %p205 = pneg %p88
        $region18: #{tpu_custom_call.1} parent=11 // pred_check_branch
          %207 = sbr.rel (%p205) target = $region20
        $region19: #{tpu_custom_call.1} parent=11 // pred_region
          _
        $region20: #{tpu_custom_call.1} parent=11 // pred_fallthru
          _
        // Predicated region
        $region21: #{tpu_custom_call.1} parent=11 // pred_check
          %p208 = pneg %p109
        $region22: #{tpu_custom_call.1} parent=11 // pred_check_branch
          %210 = sbr.rel (%p208) target = $region24
        $region23: #{tpu_custom_call.1} parent=11 // pred_region
          _
        $region24: #{tpu_custom_call.1} parent=11 // pred_fallthru
          _
        // Predicated region
        $region25: #{tpu_custom_call.1} parent=11 // pred_check
          %p211 = pneg %p130
        $region26: #{tpu_custom_call.1} parent=11 // pred_check_branch
          %213 = sbr.rel (%p211) target = $region28
        $region27: #{tpu_custom_call.1} parent=11 // pred_region
          _
        $region28: #{tpu_custom_call.1} parent=11 // pred_fallthru
          _
        // Predicated region
        $region29: #{tpu_custom_call.1} parent=11 // pred_check
          %p214 = pneg %p151
        $region30: #{tpu_custom_call.1} parent=11 // pred_check_branch
          %216 = sbr.rel (%p214) target = $region32
        $region31: #{tpu_custom_call.1} parent=11 // pred_region
          _
        $region32: #{tpu_custom_call.1} parent=11 // pred_fallthru
          _
      $region12: #{tpu_custom_call.1} parent=5 // pred_fallthru
        _
      %p217 = scmp.lt.s32.totalorder %s20, 2
      // Predicated region
      $region33: #{tpu_custom_call.1} parent=5 // pred_check
        %p218 = pneg %p217
      $region34: #{tpu_custom_call.1} parent=5 // pred_check_branch
        %220 = sbr.rel (%p218) target = $region36
      $region35: #{tpu_custom_call.1} parent=5 // pred_region
        // Predicated region
        $region37: #{tpu_custom_call.1} parent=35 // pred_check
          %p221 = pneg %p40
        $region38: #{tpu_custom_call.1} parent=35 // pred_check_branch
          %223 = sbr.rel (%p221) target = $region40
        $region39: #{tpu_custom_call.1} parent=35 // pred_region
          %s224 = sand.u32 %s30, 1
          %s225 = scalar_lea.sflag [#allocation4], %s224
          %s226 = sand.u32 %s30, 1
          %s227 = smul.addr %s226, 32
          %s228 = scalar_lea.vmem [#allocation3], %s227
          %s229 = smul.u32 2, %s20
          %s231 = ssub.s32 512, 512
          %232 = vsyncadd %s225, %s231
          %s233 = smul.addr %s229, 2
          %s234 = smul.addr %s233, 128
          %s235 = scalar_lea.hbm %s0, %s234
          %s236 = sshll.u32 %s228, 4
          %s237 = int_to_ptr.vmem [resolvable:$true] %s236
          %242 = dma.hbm_to_vmem [thread:$0]  %s235, 512, %s237, %s225, 128, 128, 8
        $region40: #{tpu_custom_call.1} parent=35 // pred_fallthru
          _
      $region36: #{tpu_custom_call.1} parent=5 // pred_fallthru
        _
      %p243 = scmp.le.s32.totalorder 1, %s20
      %p244 = scmp.lt.s32.totalorder %s20, 3
      %p245 = pnand %p243, %p244
      %p246 = pneg %p245
      // Predicated region
      $region41: #{tpu_custom_call.1} parent=5 // pred_check
        _
      $region42: #{tpu_custom_call.1} parent=5 // pred_check_branch
        %248 = sbr.rel (%p245) target = $region44
      $region43: #{tpu_custom_call.1} parent=5 // pred_region
        %s249 = ssub.s32 %s20, 1
        %s250 = sand.u32 %s33, 1
        %s251 = scalar_lea.sflag [#allocation4], %s250
        %s252 = sand.u32 %s33, 1
        %s253 = smul.addr %s252, 32
        %s254 = scalar_lea.vmem [#allocation3], %s253
        // Predicated region
        $region45: #{tpu_custom_call.1} parent=43 // pred_check
          %p255 = pneg %p46
        $region46: #{tpu_custom_call.1} parent=43 // pred_check_branch
          %257 = sbr.rel (%p255) target = $region48
        $region47: #{tpu_custom_call.1} parent=43 // pred_region
          %258 = dma.done %s251, 512
        $region48: #{tpu_custom_call.1} parent=43 // pred_fallthru
          _
        // Predicated region
        $region49: #{tpu_custom_call.1} parent=43 // pred_check
          %p259 = pneg %p67
        $region50: #{tpu_custom_call.1} parent=43 // pred_check_branch
          %261 = sbr.rel (%p259) target = $region52
        $region51: #{tpu_custom_call.1} parent=43 // pred_region
          %262 = dma.done [#allocation7], 2048
        $region52: #{tpu_custom_call.1} parent=43 // pred_fallthru
          _
        %s263 = sand.u32 %s33, 1
        %s264 = scalar_lea.sflag [#allocation4], %s263
        %s265 = sand.u32 %s33, 1
        %s266 = smul.addr %s265, 32
        %s267 = scalar_lea.vmem [#allocation3], %s266
        %p268 = pneg %p46
        %p269 = pneg %p43
        %p270 = pneg %p67
        %p271 = pneg %p64
        %p272 = pneg %p88
        %p273 = pneg %p85
        %p274 = pneg %p109
        %p275 = pneg %p106
        %p276 = pneg %p130
        %p277 = pneg %p127
        %p278 = pneg %p151
        %p279 = pneg %p148
        %p280 = pneg %p177
        %p281 = pneg %p174
        %s282 = sand.u32 %s164, 1
        %s283 = scalar_lea.sflag [#allocation5], %s282
        %s284 = sand.u32 %s164, 1
        %s285 = smul.addr %s284, 8
        %s286 = scalar_lea.vmem [#allocation8], %s285
        %s287 = smul.u32 2, %s25
        %v288 = vld [vmem:[%s254] sm:$0xff]
        %v289 = vld [vmem:[%s254 + $0x8] sm:$0xff]
        %v290 = vld [vmem:[%s254 + $0x10] sm:$0xff]
        %v291 = vld [vmem:[%s254 + $0x18] sm:$0xff]
        %v292 = vld [vmem:[#allocation6] sm:$0xff]
        %v293 = vld [vmem:[#allocation6 + $0x8] sm:$0xff]
        %v294 = vld [vmem:[#allocation6 + $0x10] sm:$0xff]
        %v295 = vld [vmem:[#allocation6 + $0x18] sm:$0xff]
        %v296 = vld [vmem:[#allocation6 + $0x20] sm:$0xff]
        %v297 = vld [vmem:[#allocation6 + $0x28] sm:$0xff]
        %v298 = vld [vmem:[#allocation6 + $0x30] sm:$0xff]
        %v299 = vld [vmem:[#allocation6 + $0x38] sm:$0xff]
        %v300 = vld [vmem:[#allocation6 + $0x40] sm:$0xff]
        %v301 = vld [vmem:[#allocation6 + $0x48] sm:$0xff]
        %v302 = vld [vmem:[#allocation6 + $0x50] sm:$0xff]
        %v303 = vld [vmem:[#allocation6 + $0x58] sm:$0xff]
        %v304 = vld [vmem:[#allocation6 + $0x60] sm:$0xff]
        %v305 = vld [vmem:[#allocation6 + $0x68] sm:$0xff]
        %v306 = vld [vmem:[#allocation6 + $0x70] sm:$0xff]
        %v307 = vld [vmem:[#allocation6 + $0x78] sm:$0xff]
        %v308 = vld [vmem:[%s2] sm:$0xf]
        %v310 = vlaneseq
        %v311 = vshrl.u32 %v310, 7
        %v312 = vsub.s32 0, %v311
        %v313 = vrot.slane %v308, %v312
        %v314 = vlaneseq
        %v315 = vshrl.u32 %v314, 7
        %v316 = vsub.s32 1, %v315
        %v317 = vrot.slane %v308, %v316
        %v318 = vlaneseq
        %v319 = vshrl.u32 %v318, 7
        %v320 = vsub.s32 2, %v319
        %v321 = vrot.slane %v308, %v320
        %v322 = vlaneseq
        %v323 = vshrl.u32 %v322, 7
        %v324 = vsub.s32 3, %v323
        %v325 = vrot.slane %v308, %v324
        %vm330 = vcmask 261120
        %v332 = vsel %vm330, %v288, 0
        %v335 = vsel %vm330, %v289, 0
        %v338 = vsel %vm330, %v290, 0
        %v341 = vsel %vm330, %v291, 0
        %v343 = vand.u32 %v293, 4294901760
        %344 = vmatprep.subr.mxu0 %v343
        %v345 = vand.u32 %v292, 4294901760
        %346 = vmatpush1.msra.mxu0 %v345
        %v347 = vand.u32 %v297, 4294901760
        %348 = vmatprep.subr.mxu0 %v347
        %v349 = vand.u32 %v296, 4294901760
        %350 = vmatpush1.msra.mxu0 %v349
        %v351 = vand.u32 %v301, 4294901760
        %352 = vmatprep.subr.mxu0 %v351
        %v353 = vand.u32 %v300, 4294901760
        %354 = vmatpush1.msra.mxu0 %v353
        %v355 = vand.u32 %v305, 4294901760
        %356 = vmatprep.subr.mxu0 %v355
        %v357 = vand.u32 %v304, 4294901760
        %358 = vmatpush1.msra.mxu0 %v357
        %359 = vmatprep.subr.mxu0 0.0
        %360 = vmatpush1.msra.mxu0 0.0
        %361 = vmatprep.subr.mxu0 0.0
        %362 = vmatpush1.msra.mxu0 0.0
        %363 = vmatprep.subr.mxu0 0.0
        %364 = vmatpush1.msra.mxu0 0.0
        %365 = vmatprep.subr.mxu0 0.0
        %366 = vmatpush1.msra.mxu0 0.0
        %367 = vmatprep.subr.mxu0 0.0
        %368 = vmatpush1.msra.mxu0 0.0
        %369 = vmatprep.subr.mxu0 0.0
        %370 = vmatpush1.msra.mxu0 0.0
        %371 = vmatprep.subr.mxu0 0.0
        %372 = vmatpush1.msra.mxu0 0.0
        %373 = vmatprep.subr.mxu0 0.0
        %374 = vmatpush1.msra.mxu0 0.0
        %375 = vmatprep.subr.mxu0 0.0
        %376 = vmatpush1.msra.mxu0 0.0
        %377 = vmatprep.subr.mxu0 0.0
        %378 = vmatpush1.msra.mxu0 0.0
        %379 = vmatprep.subr.mxu0 0.0
        %380 = vmatpush1.msra.mxu0 0.0
        %381 = vmatprep.subr.mxu0 0.0
        %382 = vmatpush1.msra.mxu0 0.0
        %383 = vmatprep.subr.mxu0 0.0
        %384 = vmatpush1.msra.mxu0 0.0
        %385 = vmatprep.subr.mxu0 0.0
        %386 = vmatpush1.msra.mxu0 0.0
        %387 = vmatprep.subr.mxu0 0.0
        %388 = vmatpush1.msra.mxu0 0.0
        %389 = vmatprep.subr.mxu0 0.0
        %390 = vmatpush1.msra.mxu0 0.0
        %391 = vmatprep.subr.mxu0 0.0
        %392 = vmatpush1.msra.mxu0 0.0
        %393 = vmatprep.subr.mxu0 0.0
        %394 = vmatpush1.msra.mxu0 0.0
        %395 = vmatprep.subr.mxu0 0.0
        %396 = vmatpush1.msra.mxu0 0.0
        %397 = vmatprep.subr.mxu0 0.0
        %398 = vmatpush1.msra.mxu0 0.0
        %399 = vmatprep.subr.mxu0 0.0
        %400 = vmatpush1.msra.mxu0 0.0
        %401 = vmatprep.subr.mxu0 0.0
        %402 = vmatpush1.msra.mxu0 0.0
        %403 = vmatprep.subr.mxu0 0.0
        %404 = vmatpush1.msra.mxu0 0.0
        %405 = vmatprep.subr.mxu0 0.0
        %406 = vmatpush1.msra.mxu0 0.0
        %407 = vmatprep.subr.mxu0 0.0
        %408 = vmatpush1.msra.mxu0 0.0
        %409 = vmatprep.subr.mxu0 0.0
        %410 = vmatpush1.msra.mxu0 0.0
        %411 = vmatprep.subr.mxu0 0.0
        %412 = vmatpush1.msra.mxu0 0.0
        %413 = vmatprep.subr.mxu0 0.0
        %414 = vmatpush1.msra.mxu0 0.0
        %415 = vmatprep.mubr.f32.mxu0 0.0
        %v416 = vand.u32 %v332, 4294901760
        %v417 = vsub.f32 %v332, %v416
        %v418 = vand.u32 %v417, 4294901760
        %v419 = vsub.f32 %v417, %v418
        %v420 = vand.u32 %v419, 4294901760
        %421 = vmatmul.mubr.f32.gmra.mrb[0].mxu0 %v420
        %v422 = vpop.f32.mrb[0].mxu0
        %v423 = vadd.f32 %v313, %v422
        %v424 = vpop.f32.mrb[0].mxu0
        %v425 = vadd.f32 %v317, %v424
        %426 = vmatprep.mubr.f32.mxu0 0.0
        %v427 = vand.u32 %v335, 4294901760
        %v428 = vsub.f32 %v335, %v427
        %v429 = vand.u32 %v428, 4294901760
        %v430 = vsub.f32 %v428, %v429
        %v431 = vand.u32 %v430, 4294901760
        %432 = vmatmul.mubr.f32.gmra.mrb[0].mxu0 %v431
        %v433 = vpop.f32.mrb[0].mxu0
        %v434 = vadd.f32 %v313, %v433
        %v435 = vpop.f32.mrb[0].mxu0
        %v436 = vadd.f32 %v317, %v435
        %437 = vmatprep.mubr.f32.mxu0 0.0
        %v438 = vand.u32 %v338, 4294901760
        %v439 = vsub.f32 %v338, %v438
        %v440 = vand.u32 %v439, 4294901760
        %v441 = vsub.f32 %v439, %v440
        %v442 = vand.u32 %v441, 4294901760
        %443 = vmatmul.mubr.f32.gmra.mrb[0].mxu0 %v442
        %v444 = vpop.f32.mrb[0].mxu0
        %v445 = vadd.f32 %v313, %v444
        %v446 = vpop.f32.mrb[0].mxu0
        %v447 = vadd.f32 %v317, %v446
        %448 = vmatprep.mubr.f32.mxu0 0.0
        %v449 = vand.u32 %v341, 4294901760
        %v450 = vsub.f32 %v341, %v449
        %v451 = vand.u32 %v450, 4294901760
        %v452 = vsub.f32 %v450, %v451
        %v453 = vand.u32 %v452, 4294901760
        %454 = vmatmul.mubr.f32.gmra.mrb[0].mxu0 %v453
        %v455 = vpop.f32.mrb[0].mxu0
        %v456 = vadd.f32 %v313, %v455
        %v457 = vpop.f32.mrb[0].mxu0
        %v458 = vadd.f32 %v317, %v457
        %459 = vdwg.mxu0
        %v460 = vand.u32 %v293, 4294901760
        %v461 = vsub.f32 %v293, %v460
        %v462 = vand.u32 %v461, 4294901760
        %v463 = vsub.f32 %v461, %v462
        %v464 = vand.u32 %v463, 4294901760
        %465 = vmatprep.subr.mxu0 %v464
        %v466 = vand.u32 %v292, 4294901760
        %v467 = vsub.f32 %v292, %v466
        %v468 = vand.u32 %v467, 4294901760
        %v469 = vsub.f32 %v467, %v468
        %v470 = vand.u32 %v469, 4294901760
        %471 = vmatpush1.msra.mxu0 %v470
        %v472 = vand.u32 %v297, 4294901760
        %v473 = vsub.f32 %v297, %v472
        %v474 = vand.u32 %v473, 4294901760
        %v475 = vsub.f32 %v473, %v474
        %v476 = vand.u32 %v475, 4294901760
        %477 = vmatprep.subr.mxu0 %v476
        %v478 = vand.u32 %v296, 4294901760
        %v479 = vsub.f32 %v296, %v478
        %v480 = vand.u32 %v479, 4294901760
        %v481 = vsub.f32 %v479, %v480
        %v482 = vand.u32 %v481, 4294901760
        %483 = vmatpush1.msra.mxu0 %v482
        %v484 = vand.u32 %v301, 4294901760
        %v485 = vsub.f32 %v301, %v484
        %v486 = vand.u32 %v485, 4294901760
        %v487 = vsub.f32 %v485, %v486
        %v488 = vand.u32 %v487, 4294901760
        %489 = vmatprep.subr.mxu0 %v488
        %v490 = vand.u32 %v300, 4294901760
        %v491 = vsub.f32 %v300, %v490
        %v492 = vand.u32 %v491, 4294901760
        %v493 = vsub.f32 %v491, %v492
        %v494 = vand.u32 %v493, 4294901760
        %495 = vmatpush1.msra.mxu0 %v494
        %v496 = vand.u32 %v305, 4294901760
        %v497 = vsub.f32 %v305, %v496
        %v498 = vand.u32 %v497, 4294901760
        %v499 = vsub.f32 %v497, %v498
        %v500 = vand.u32 %v499, 4294901760
        %501 = vmatprep.subr.mxu0 %v500
        %v502 = vand.u32 %v304, 4294901760
        %v503 = vsub.f32 %v304, %v502
        %v504 = vand.u32 %v503, 4294901760
        %v505 = vsub.f32 %v503, %v504
        %v506 = vand.u32 %v505, 4294901760
        %507 = vmatpush1.msra.mxu0 %v506
        %508 = vmatprep.subr.mxu0 0.0
        %509 = vmatpush1.msra.mxu0 0.0
        %510 = vmatprep.subr.mxu0 0.0
        %511 = vmatpush1.msra.mxu0 0.0
        %512 = vmatprep.subr.mxu0 0.0
        %513 = vmatpush1.msra.mxu0 0.0
        %514 = vmatprep.subr.mxu0 0.0
        %515 = vmatpush1.msra.mxu0 0.0
        %516 = vmatprep.subr.mxu0 0.0
        %517 = vmatpush1.msra.mxu0 0.0
        %518 = vmatprep.subr.mxu0 0.0
        %519 = vmatpush1.msra.mxu0 0.0
        %520 = vmatprep.subr.mxu0 0.0
        %521 = vmatpush1.msra.mxu0 0.0
        %522 = vmatprep.subr.mxu0 0.0
        %523 = vmatpush1.msra.mxu0 0.0
        %524 = vmatprep.subr.mxu0 0.0
        %525 = vmatpush1.msra.mxu0 0.0
        %526 = vmatprep.subr.mxu0 0.0
        %527 = vmatpush1.msra.mxu0 0.0
        %528 = vmatprep.subr.mxu0 0.0
        %529 = vmatpush1.msra.mxu0 0.0
        %530 = vmatprep.subr.mxu0 0.0
        %531 = vmatpush1.msra.mxu0 0.0
        %532 = vmatprep.subr.mxu0 0.0
        %533 = vmatpush1.msra.mxu0 0.0
        %534 = vmatprep.subr.mxu0 0.0
        %535 = vmatpush1.msra.mxu0 0.0
        %536 = vmatprep.subr.mxu0 0.0
        %537 = vmatpush1.msra.mxu0 0.0
        %538 = vmatprep.subr.mxu0 0.0
        %539 = vmatpush1.msra.mxu0 0.0
        %540 = vmatprep.subr.mxu0 0.0
        %541 = vmatpush1.msra.mxu0 0.0
        %542 = vmatprep.subr.mxu0 0.0
        %543 = vmatpush1.msra.mxu0 0.0
        %544 = vmatprep.subr.mxu0 0.0
        %545 = vmatpush1.msra.mxu0 0.0
        %546 = vmatprep.subr.mxu0 0.0
        %547 = vmatpush1.msra.mxu0 0.0
        %548 = vmatprep.subr.mxu0 0.0
        %549 = vmatpush1.msra.mxu0 0.0
        %550 = vmatprep.subr.mxu0 0.0
        %551 = vmatpush1.msra.mxu0 0.0
        %552 = vmatprep.subr.mxu0 0.0
        %553 = vmatpush1.msra.mxu0 0.0
        %554 = vmatprep.subr.mxu0 0.0
        %555 = vmatpush1.msra.mxu0 0.0
        %556 = vmatprep.subr.mxu0 0.0
        %557 = vmatpush1.msra.mxu0 0.0
        %558 = vmatprep.subr.mxu0 0.0
        %559 = vmatpush1.msra.mxu0 0.0
        %560 = vmatprep.subr.mxu0 0.0
        %561 = vmatpush1.msra.mxu0 0.0
        %562 = vmatprep.subr.mxu0 0.0
        %563 = vmatpush1.msra.mxu0 0.0
        %564 = vmatprep.mubr.f32.mxu0 0.0
        %v565 = vand.u32 %v332, 4294901760
        %566 = vmatmul.mubr.f32.gmra.mrb[0].mxu0 %v565
        %v567 = vpop.f32.mrb[0].mxu0
        %v568 = vadd.f32 %v423, %v567
        %v569 = vpop.f32.mrb[0].mxu0
        %v570 = vadd.f32 %v425, %v569
        %571 = vmatprep.mubr.f32.mxu0 0.0
        %v572 = vand.u32 %v335, 4294901760
        %573 = vmatmul.mubr.f32.gmra.mrb[0].mxu0 %v572
        %v574 = vpop.f32.mrb[0].mxu0
        %v575 = vadd.f32 %v434, %v574
        %v576 = vpop.f32.mrb[0].mxu0
        %v577 = vadd.f32 %v436, %v576
        %578 = vmatprep.mubr.f32.mxu0 0.0
        %v579 = vand.u32 %v338, 4294901760
        %580 = vmatmul.mubr.f32.gmra.mrb[0].mxu0 %v579
        %v581 = vpop.f32.mrb[0].mxu0
        %v582 = vadd.f32 %v445, %v581
        %v583 = vpop.f32.mrb[0].mxu0
        %v584 = vadd.f32 %v447, %v583
        %585 = vmatprep.mubr.f32.mxu0 0.0
        %v586 = vand.u32 %v341, 4294901760
        %587 = vmatmul.mubr.f32.gmra.mrb[0].mxu0 %v586
        %v588 = vpop.f32.mrb[0].mxu0
        %v589 = vadd.f32 %v456, %v588
        %v590 = vpop.f32.mrb[0].mxu0
        %v591 = vadd.f32 %v458, %v590
        %592 = vdwg.mxu0
        %v593 = vand.u32 %v293, 4294901760
        %v594 = vsub.f32 %v293, %v593
        %595 = vmatprep.subr.mxu0 %v594
        %v596 = vand.u32 %v292, 4294901760
        %v597 = vsub.f32 %v292, %v596
        %598 = vmatpush1.msra.mxu0 %v597
        %v599 = vand.u32 %v297, 4294901760
        %v600 = vsub.f32 %v297, %v599
        %601 = vmatprep.subr.mxu0 %v600
        %v602 = vand.u32 %v296, 4294901760
        %v603 = vsub.f32 %v296, %v602
        %604 = vmatpush1.msra.mxu0 %v603
        %v605 = vand.u32 %v301, 4294901760
        %v606 = vsub.f32 %v301, %v605
        %607 = vmatprep.subr.mxu0 %v606
        %v608 = vand.u32 %v300, 4294901760
        %v609 = vsub.f32 %v300, %v608
        %610 = vmatpush1.msra.mxu0 %v609
        %v611 = vand.u32 %v305, 4294901760
        %v612 = vsub.f32 %v305, %v611
        %613 = vmatprep.subr.mxu0 %v612
        %v614 = vand.u32 %v304, 4294901760
        %v615 = vsub.f32 %v304, %v614
        %616 = vmatpush1.msra.mxu0 %v615
        %617 = vmatprep.subr.mxu0 0.0
        %618 = vmatpush1.msra.mxu0 0.0
        %619 = vmatprep.subr.mxu0 0.0
        %620 = vmatpush1.msra.mxu0 0.0
        %621 = vmatprep.subr.mxu0 0.0
        %622 = vmatpush1.msra.mxu0 0.0
        %623 = vmatprep.subr.mxu0 0.0
        %624 = vmatpush1.msra.mxu0 0.0
        %625 = vmatprep.subr.mxu0 0.0
        %626 = vmatpush1.msra.mxu0 0.0
        %627 = vmatprep.subr.mxu0 0.0
        %628 = vmatpush1.msra.mxu0 0.0
        %629 = vmatprep.subr.mxu0 0.0
        %630 = vmatpush1.msra.mxu0 0.0
        %631 = vmatprep.subr.mxu0 0.0
        %632 = vmatpush1.msra.mxu0 0.0
        %633 = vmatprep.subr.mxu0 0.0
        %634 = vmatpush1.msra.mxu0 0.0
        %635 = vmatprep.subr.mxu0 0.0
        %636 = vmatpush1.msra.mxu0 0.0
        %637 = vmatprep.subr.mxu0 0.0
        %638 = vmatpush1.msra.mxu0 0.0
        %639 = vmatprep.subr.mxu0 0.0
        %640 = vmatpush1.msra.mxu0 0.0
        %641 = vmatprep.subr.mxu0 0.0
        %642 = vmatpush1.msra.mxu0 0.0
        %643 = vmatprep.subr.mxu0 0.0
        %644 = vmatpush1.msra.mxu0 0.0
        %645 = vmatprep.subr.mxu0 0.0
        %646 = vmatpush1.msra.mxu0 0.0
        %647 = vmatprep.subr.mxu0 0.0
        %648 = vmatpush1.msra.mxu0 0.0
        %649 = vmatprep.subr.mxu0 0.0
        %650 = vmatpush1.msra.mxu0 0.0
        %651 = vmatprep.subr.mxu0 0.0
        %652 = vmatpush1.msra.mxu0 0.0
        %653 = vmatprep.subr.mxu0 0.0
        %654 = vmatpush1.msra.mxu0 0.0
        %655 = vmatprep.subr.mxu0 0.0
        %656 = vmatpush1.msra.mxu0 0.0
        %657 = vmatprep.subr.mxu0 0.0
        %658 = vmatpush1.msra.mxu0 0.0
        %659 = vmatprep.subr.mxu0 0.0
        %660 = vmatpush1.msra.mxu0 0.0
        %661 = vmatprep.subr.mxu0 0.0
        %662 = vmatpush1.msra.mxu0 0.0
        %663 = vmatprep.subr.mxu0 0.0
        %664 = vmatpush1.msra.mxu0 0.0
        %665 = vmatprep.subr.mxu0 0.0
        %666 = vmatpush1.msra.mxu0 0.0
        %667 = vmatprep.subr.mxu0 0.0
        %668 = vmatpush1.msra.mxu0 0.0
        %669 = vmatprep.subr.mxu0 0.0
        %670 = vmatpush1.msra.mxu0 0.0
        %671 = vmatprep.subr.mxu0 0.0
        %672 = vmatpush1.msra.mxu0 0.0
        %673 = vmatprep.mubr.f32.mxu0 0.0
        %v674 = vand.u32 %v332, 4294901760
        %v675 = vsub.f32 %v332, %v674
        %676 = vmatmul.mubr.f32.gmra.mrb[0].mxu0 %v675
        %v677 = vpop.f32.mrb[0].mxu0
        %v678 = vadd.f32 %v568, %v677
        %v679 = vpop.f32.mrb[0].mxu0
        %v680 = vadd.f32 %v570, %v679
        %681 = vmatprep.mubr.f32.mxu0 0.0
        %v682 = vand.u32 %v335, 4294901760
        %v683 = vsub.f32 %v335, %v682
        %684 = vmatmul.mubr.f32.gmra.mrb[0].mxu0 %v683
        %v685 = vpop.f32.mrb[0].mxu0
        %v686 = vadd.f32 %v575, %v685
        %v687 = vpop.f32.mrb[0].mxu0
        %v688 = vadd.f32 %v577, %v687
        %689 = vmatprep.mubr.f32.mxu0 0.0
        %v690 = vand.u32 %v338, 4294901760
        %v691 = vsub.f32 %v338, %v690
        %692 = vmatmul.mubr.f32.gmra.mrb[0].mxu0 %v691
        %v693 = vpop.f32.mrb[0].mxu0
        %v694 = vadd.f32 %v582, %v693
        %v695 = vpop.f32.mrb[0].mxu0
        %v696 = vadd.f32 %v584, %v695
        %697 = vmatprep.mubr.f32.mxu0 0.0
        %v698 = vand.u32 %v341, 4294901760
        %v699 = vsub.f32 %v341, %v698
        %700 = vmatmul.mubr.f32.gmra.mrb[0].mxu0 %v699
        %v701 = vpop.f32.mrb[0].mxu0
        %v702 = vadd.f32 %v589, %v701
        %v703 = vpop.f32.mrb[0].mxu0
        %v704 = vadd.f32 %v591, %v703
        %705 = vdwg.mxu0
        %v706 = vand.u32 %v293, 4294901760
        %707 = vmatprep.subr.mxu0 %v706
        %v708 = vand.u32 %v292, 4294901760
        %709 = vmatpush1.msra.mxu0 %v708
        %v710 = vand.u32 %v297, 4294901760
        %711 = vmatprep.subr.mxu0 %v710
        %v712 = vand.u32 %v296, 4294901760
        %713 = vmatpush1.msra.mxu0 %v712
        %v714 = vand.u32 %v301, 4294901760
        %715 = vmatprep.subr.mxu0 %v714
        %v716 = vand.u32 %v300, 4294901760
        %717 = vmatpush1.msra.mxu0 %v716
        %v718 = vand.u32 %v305, 4294901760
        %719 = vmatprep.subr.mxu0 %v718
        %v720 = vand.u32 %v304, 4294901760
        %721 = vmatpush1.msra.mxu0 %v720
        %722 = vmatprep.subr.mxu0 0.0
        %723 = vmatpush1.msra.mxu0 0.0
        %724 = vmatprep.subr.mxu0 0.0
        %725 = vmatpush1.msra.mxu0 0.0
        %726 = vmatprep.subr.mxu0 0.0
        %727 = vmatpush1.msra.mxu0 0.0
        %728 = vmatprep.subr.mxu0 0.0
        %729 = vmatpush1.msra.mxu0 0.0
        %730 = vmatprep.subr.mxu0 0.0
        %731 = vmatpush1.msra.mxu0 0.0
        %732 = vmatprep.subr.mxu0 0.0
        %733 = vmatpush1.msra.mxu0 0.0
        %734 = vmatprep.subr.mxu0 0.0
        %735 = vmatpush1.msra.mxu0 0.0
        %736 = vmatprep.subr.mxu0 0.0
        %737 = vmatpush1.msra.mxu0 0.0
        %738 = vmatprep.subr.mxu0 0.0
        %739 = vmatpush1.msra.mxu0 0.0
        %740 = vmatprep.subr.mxu0 0.0
        %741 = vmatpush1.msra.mxu0 0.0
        %742 = vmatprep.subr.mxu0 0.0
        %743 = vmatpush1.msra.mxu0 0.0
        %744 = vmatprep.subr.mxu0 0.0
        %745 = vmatpush1.msra.mxu0 0.0
        %746 = vmatprep.subr.mxu0 0.0
        %747 = vmatpush1.msra.mxu0 0.0
        %748 = vmatprep.subr.mxu0 0.0
        %749 = vmatpush1.msra.mxu0 0.0
        %750 = vmatprep.subr.mxu0 0.0
        %751 = vmatpush1.msra.mxu0 0.0
        %752 = vmatprep.subr.mxu0 0.0
        %753 = vmatpush1.msra.mxu0 0.0
        %754 = vmatprep.subr.mxu0 0.0
        %755 = vmatpush1.msra.mxu0 0.0
        %756 = vmatprep.subr.mxu0 0.0
        %757 = vmatpush1.msra.mxu0 0.0
        %758 = vmatprep.subr.mxu0 0.0
        %759 = vmatpush1.msra.mxu0 0.0
        %760 = vmatprep.subr.mxu0 0.0
        %761 = vmatpush1.msra.mxu0 0.0
        %762 = vmatprep.subr.mxu0 0.0
        %763 = vmatpush1.msra.mxu0 0.0
        %764 = vmatprep.subr.mxu0 0.0
        %765 = vmatpush1.msra.mxu0 0.0
        %766 = vmatprep.subr.mxu0 0.0
        %767 = vmatpush1.msra.mxu0 0.0
        %768 = vmatprep.subr.mxu0 0.0
        %769 = vmatpush1.msra.mxu0 0.0
        %770 = vmatprep.subr.mxu0 0.0
        %771 = vmatpush1.msra.mxu0 0.0
        %772 = vmatprep.subr.mxu0 0.0
        %773 = vmatpush1.msra.mxu0 0.0
        %774 = vmatprep.subr.mxu0 0.0
        %775 = vmatpush1.msra.mxu0 0.0
        %776 = vmatprep.subr.mxu0 0.0
        %777 = vmatpush1.msra.mxu0 0.0
        %778 = vmatprep.mubr.f32.mxu0 0.0
        %v779 = vand.u32 %v332, 4294901760
        %v780 = vsub.f32 %v332, %v779
        %v781 = vand.u32 %v780, 4294901760
        %782 = vmatmul.mubr.f32.gmra.mrb[0].mxu0 %v781
        %v783 = vpop.f32.mrb[0].mxu0
        %v784 = vadd.f32 %v678, %v783
        %v785 = vpop.f32.mrb[0].mxu0
        %v786 = vadd.f32 %v680, %v785
        %787 = vmatprep.mubr.f32.mxu0 0.0
        %v788 = vand.u32 %v335, 4294901760
        %v789 = vsub.f32 %v335, %v788
        %v790 = vand.u32 %v789, 4294901760
        %791 = vmatmul.mubr.f32.gmra.mrb[0].mxu0 %v790
        %v792 = vpop.f32.mrb[0].mxu0
        %v793 = vadd.f32 %v686, %v792
        %v794 = vpop.f32.mrb[0].mxu0
        %v795 = vadd.f32 %v688, %v794
        %796 = vmatprep.mubr.f32.mxu0 0.0
        %v797 = vand.u32 %v338, 4294901760
        %v798 = vsub.f32 %v338, %v797
        %v799 = vand.u32 %v798, 4294901760
        %800 = vmatmul.mubr.f32.gmra.mrb[0].mxu0 %v799
        %v801 = vpop.f32.mrb[0].mxu0
        %v802 = vadd.f32 %v694, %v801
        %v803 = vpop.f32.mrb[0].mxu0
        %v804 = vadd.f32 %v696, %v803
        %805 = vmatprep.mubr.f32.mxu0 0.0
        %v806 = vand.u32 %v341, 4294901760
        %v807 = vsub.f32 %v341, %v806
        %v808 = vand.u32 %v807, 4294901760
        %809 = vmatmul.mubr.f32.gmra.mrb[0].mxu0 %v808
        %v810 = vpop.f32.mrb[0].mxu0
        %v811 = vadd.f32 %v702, %v810
        %v812 = vpop.f32.mrb[0].mxu0
        %v813 = vadd.f32 %v704, %v812
        %814 = vdwg.mxu0
        %v815 = vand.u32 %v293, 4294901760
        %v816 = vsub.f32 %v293, %v815
        %v817 = vand.u32 %v816, 4294901760
        %818 = vmatprep.subr.mxu0 %v817
        %v819 = vand.u32 %v292, 4294901760
        %v820 = vsub.f32 %v292, %v819
        %v821 = vand.u32 %v820, 4294901760
        %822 = vmatpush1.msra.mxu0 %v821
        %v823 = vand.u32 %v297, 4294901760
        %v824 = vsub.f32 %v297, %v823
        %v825 = vand.u32 %v824, 4294901760
        %826 = vmatprep.subr.mxu0 %v825
        %v827 = vand.u32 %v296, 4294901760
        %v828 = vsub.f32 %v296, %v827
        %v829 = vand.u32 %v828, 4294901760
        %830 = vmatpush1.msra.mxu0 %v829
        %v831 = vand.u32 %v301, 4294901760
        %v832 = vsub.f32 %v301, %v831
        %v833 = vand.u32 %v832, 4294901760
        %834 = vmatprep.subr.mxu0 %v833
        %v835 = vand.u32 %v300, 4294901760
        %v836 = vsub.f32 %v300, %v835
        %v837 = vand.u32 %v836, 4294901760
        %838 = vmatpush1.msra.mxu0 %v837
        %v839 = vand.u32 %v305, 4294901760
        %v840 = vsub.f32 %v305, %v839
        %v841 = vand.u32 %v840, 4294901760
        %842 = vmatprep.subr.mxu0 %v841
        %v843 = vand.u32 %v304, 4294901760
        %v844 = vsub.f32 %v304, %v843
        %v845 = vand.u32 %v844, 4294901760
        %846 = vmatpush1.msra.mxu0 %v845
        %847 = vmatprep.subr.mxu0 0.0
        %848 = vmatpush1.msra.mxu0 0.0
        %849 = vmatprep.subr.mxu0 0.0
        %850 = vmatpush1.msra.mxu0 0.0
        %851 = vmatprep.subr.mxu0 0.0
        %852 = vmatpush1.msra.mxu0 0.0
        %853 = vmatprep.subr.mxu0 0.0
        %854 = vmatpush1.msra.mxu0 0.0
        %855 = vmatprep.subr.mxu0 0.0
        %856 = vmatpush1.msra.mxu0 0.0
        %857 = vmatprep.subr.mxu0 0.0
        %858 = vmatpush1.msra.mxu0 0.0
        %859 = vmatprep.subr.mxu0 0.0
        %860 = vmatpush1.msra.mxu0 0.0
        %861 = vmatprep.subr.mxu0 0.0
        %862 = vmatpush1.msra.mxu0 0.0
        %863 = vmatprep.subr.mxu0 0.0
        %864 = vmatpush1.msra.mxu0 0.0
        %865 = vmatprep.subr.mxu0 0.0
        %866 = vmatpush1.msra.mxu0 0.0
        %867 = vmatprep.subr.mxu0 0.0
        %868 = vmatpush1.msra.mxu0 0.0
        %869 = vmatprep.subr.mxu0 0.0
        %870 = vmatpush1.msra.mxu0 0.0
        %871 = vmatprep.subr.mxu0 0.0
        %872 = vmatpush1.msra.mxu0 0.0
        %873 = vmatprep.subr.mxu0 0.0
        %874 = vmatpush1.msra.mxu0 0.0
        %875 = vmatprep.subr.mxu0 0.0
        %876 = vmatpush1.msra.mxu0 0.0
        %877 = vmatprep.subr.mxu0 0.0
        %878 = vmatpush1.msra.mxu0 0.0
        %879 = vmatprep.subr.mxu0 0.0
        %880 = vmatpush1.msra.mxu0 0.0
        %881 = vmatprep.subr.mxu0 0.0
        %882 = vmatpush1.msra.mxu0 0.0
        %883 = vmatprep.subr.mxu0 0.0
        %884 = vmatpush1.msra.mxu0 0.0
        %885 = vmatprep.subr.mxu0 0.0
        %886 = vmatpush1.msra.mxu0 0.0
        %887 = vmatprep.subr.mxu0 0.0
        %888 = vmatpush1.msra.mxu0 0.0
        %889 = vmatprep.subr.mxu0 0.0
        %890 = vmatpush1.msra.mxu0 0.0
        %891 = vmatprep.subr.mxu0 0.0
        %892 = vmatpush1.msra.mxu0 0.0
        %893 = vmatprep.subr.mxu0 0.0
        %894 = vmatpush1.msra.mxu0 0.0
        %895 = vmatprep.subr.mxu0 0.0
        %896 = vmatpush1.msra.mxu0 0.0
        %897 = vmatprep.subr.mxu0 0.0
        %898 = vmatpush1.msra.mxu0 0.0
        %899 = vmatprep.subr.mxu0 0.0
        %900 = vmatpush1.msra.mxu0 0.0
        %901 = vmatprep.subr.mxu0 0.0
        %902 = vmatpush1.msra.mxu0 0.0
        %903 = vmatprep.mubr.f32.mxu0 0.0
        %v904 = vand.u32 %v332, 4294901760
        %905 = vmatmul.mubr.f32.gmra.mrb[0].mxu0 %v904
        %v906 = vpop.f32.mrb[0].mxu0
        %v907 = vadd.f32 %v784, %v906
        %v908 = vpop.f32.mrb[0].mxu0
        %v909 = vadd.f32 %v786, %v908
        %910 = vmatprep.mubr.f32.mxu0 0.0
        %v911 = vand.u32 %v335, 4294901760
        %912 = vmatmul.mubr.f32.gmra.mrb[0].mxu0 %v911
        %v913 = vpop.f32.mrb[0].mxu0
        %v914 = vadd.f32 %v793, %v913
        %v915 = vpop.f32.mrb[0].mxu0
        %v916 = vadd.f32 %v795, %v915
        %917 = vmatprep.mubr.f32.mxu0 0.0
        %v918 = vand.u32 %v338, 4294901760
        %919 = vmatmul.mubr.f32.gmra.mrb[0].mxu0 %v918
        %v920 = vpop.f32.mrb[0].mxu0
        %v921 = vadd.f32 %v802, %v920
        %v922 = vpop.f32.mrb[0].mxu0
        %v923 = vadd.f32 %v804, %v922
        %924 = vmatprep.mubr.f32.mxu0 0.0
        %v925 = vand.u32 %v341, 4294901760
        %926 = vmatmul.mubr.f32.gmra.mrb[0].mxu0 %v925
        %v927 = vpop.f32.mrb[0].mxu0
        %v928 = vadd.f32 %v811, %v927
        %v929 = vpop.f32.mrb[0].mxu0
        %v930 = vadd.f32 %v813, %v929
        %931 = vdwg.mxu0
        %v932 = vand.u32 %v293, 4294901760
        %933 = vmatprep.subr.mxu0 %v932
        %v934 = vand.u32 %v292, 4294901760
        %935 = vmatpush1.msra.mxu0 %v934
        %v936 = vand.u32 %v297, 4294901760
        %937 = vmatprep.subr.mxu0 %v936
        %v938 = vand.u32 %v296, 4294901760
        %939 = vmatpush1.msra.mxu0 %v938
        %v940 = vand.u32 %v301, 4294901760
        %941 = vmatprep.subr.mxu0 %v940
        %v942 = vand.u32 %v300, 4294901760
        %943 = vmatpush1.msra.mxu0 %v942
        %v944 = vand.u32 %v305, 4294901760
        %945 = vmatprep.subr.mxu0 %v944
        %v946 = vand.u32 %v304, 4294901760
        %947 = vmatpush1.msra.mxu0 %v946
        %948 = vmatprep.subr.mxu0 0.0
        %949 = vmatpush1.msra.mxu0 0.0
        %950 = vmatprep.subr.mxu0 0.0
        %951 = vmatpush1.msra.mxu0 0.0
        %952 = vmatprep.subr.mxu0 0.0
        %953 = vmatpush1.msra.mxu0 0.0
        %954 = vmatprep.subr.mxu0 0.0
        %955 = vmatpush1.msra.mxu0 0.0
        %956 = vmatprep.subr.mxu0 0.0
        %957 = vmatpush1.msra.mxu0 0.0
        %958 = vmatprep.subr.mxu0 0.0
        %959 = vmatpush1.msra.mxu0 0.0
        %960 = vmatprep.subr.mxu0 0.0
        %961 = vmatpush1.msra.mxu0 0.0
        %962 = vmatprep.subr.mxu0 0.0
        %963 = vmatpush1.msra.mxu0 0.0
        %964 = vmatprep.subr.mxu0 0.0
        %965 = vmatpush1.msra.mxu0 0.0
        %966 = vmatprep.subr.mxu0 0.0
        %967 = vmatpush1.msra.mxu0 0.0
        %968 = vmatprep.subr.mxu0 0.0
        %969 = vmatpush1.msra.mxu0 0.0
        %970 = vmatprep.subr.mxu0 0.0
        %971 = vmatpush1.msra.mxu0 0.0
        %972 = vmatprep.subr.mxu0 0.0
        %973 = vmatpush1.msra.mxu0 0.0
        %974 = vmatprep.subr.mxu0 0.0
        %975 = vmatpush1.msra.mxu0 0.0
        %976 = vmatprep.subr.mxu0 0.0
        %977 = vmatpush1.msra.mxu0 0.0
        %978 = vmatprep.subr.mxu0 0.0
        %979 = vmatpush1.msra.mxu0 0.0
        %980 = vmatprep.subr.mxu0 0.0
        %981 = vmatpush1.msra.mxu0 0.0
        %982 = vmatprep.subr.mxu0 0.0
        %983 = vmatpush1.msra.mxu0 0.0
        %984 = vmatprep.subr.mxu0 0.0
        %985 = vmatpush1.msra.mxu0 0.0
        %986 = vmatprep.subr.mxu0 0.0
        %987 = vmatpush1.msra.mxu0 0.0
        %988 = vmatprep.subr.mxu0 0.0
        %989 = vmatpush1.msra.mxu0 0.0
        %990 = vmatprep.subr.mxu0 0.0
        %991 = vmatpush1.msra.mxu0 0.0
        %992 = vmatprep.subr.mxu0 0.0
        %993 = vmatpush1.msra.mxu0 0.0
        %994 = vmatprep.subr.mxu0 0.0
        %995 = vmatpush1.msra.mxu0 0.0
        %996 = vmatprep.subr.mxu0 0.0
        %997 = vmatpush1.msra.mxu0 0.0
        %998 = vmatprep.subr.mxu0 0.0
        %999 = vmatpush1.msra.mxu0 0.0
        %1000 = vmatprep.subr.mxu0 0.0
        %1001 = vmatpush1.msra.mxu0 0.0
        %1002 = vmatprep.subr.mxu0 0.0
        %1003 = vmatpush1.msra.mxu0 0.0
        %1004 = vmatprep.mubr.f32.mxu0 0.0
        %v1005 = vand.u32 %v332, 4294901760
        %1006 = vmatmul.mubr.f32.gmra.mrb[0].mxu0 %v1005
        %v1007 = vpop.f32.mrb[0].mxu0
        %v1008 = vadd.f32 %v907, %v1007
        %v1009 = vpop.f32.mrb[0].mxu0
        %v1010 = vadd.f32 %v909, %v1009
        %1011 = vmatprep.mubr.f32.mxu0 0.0
        %v1012 = vand.u32 %v335, 4294901760
        %1013 = vmatmul.mubr.f32.gmra.mrb[0].mxu0 %v1012
        %v1014 = vpop.f32.mrb[0].mxu0
        %v1015 = vadd.f32 %v914, %v1014
        %v1016 = vpop.f32.mrb[0].mxu0
        %v1017 = vadd.f32 %v916, %v1016
        %1018 = vmatprep.mubr.f32.mxu0 0.0
        %v1019 = vand.u32 %v338, 4294901760
        %1020 = vmatmul.mubr.f32.gmra.mrb[0].mxu0 %v1019
        %v1021 = vpop.f32.mrb[0].mxu0
        %v1022 = vadd.f32 %v921, %v1021
        %v1023 = vpop.f32.mrb[0].mxu0
        %v1024 = vadd.f32 %v923, %v1023
        %1025 = vmatprep.mubr.f32.mxu0 0.0
        %v1026 = vand.u32 %v341, 4294901760
        %1027 = vmatmul.mubr.f32.gmra.mrb[0].mxu0 %v1026
        %v1028 = vpop.f32.mrb[0].mxu0
        %v1029 = vadd.f32 %v928, %v1028
        %v1030 = vpop.f32.mrb[0].mxu0
        %v1031 = vadd.f32 %v930, %v1030
        %1032 = vdwg.mxu0
        %v1033 = vand.u32 %v295, 4294901760
        %1034 = vmatprep.subr.mxu0 %v1033
        %v1035 = vand.u32 %v294, 4294901760
        %1036 = vmatpush1.msra.mxu0 %v1035
        %v1037 = vand.u32 %v299, 4294901760
        %1038 = vmatprep.subr.mxu0 %v1037
        %v1039 = vand.u32 %v298, 4294901760
        %1040 = vmatpush1.msra.mxu0 %v1039
        %v1041 = vand.u32 %v303, 4294901760
        %1042 = vmatprep.subr.mxu0 %v1041
        %v1043 = vand.u32 %v302, 4294901760
        %1044 = vmatpush1.msra.mxu0 %v1043
        %v1045 = vand.u32 %v307, 4294901760
        %1046 = vmatprep.subr.mxu0 %v1045
        %v1047 = vand.u32 %v306, 4294901760
        %1048 = vmatpush1.msra.mxu0 %v1047
        %1049 = vmatprep.subr.mxu0 0.0
        %1050 = vmatpush1.msra.mxu0 0.0
        %1051 = vmatprep.subr.mxu0 0.0
        %1052 = vmatpush1.msra.mxu0 0.0
        %1053 = vmatprep.subr.mxu0 0.0
        %1054 = vmatpush1.msra.mxu0 0.0
        %1055 = vmatprep.subr.mxu0 0.0
        %1056 = vmatpush1.msra.mxu0 0.0
        %1057 = vmatprep.subr.mxu0 0.0
        %1058 = vmatpush1.msra.mxu0 0.0
        %1059 = vmatprep.subr.mxu0 0.0
        %1060 = vmatpush1.msra.mxu0 0.0
        %1061 = vmatprep.subr.mxu0 0.0
        %1062 = vmatpush1.msra.mxu0 0.0
        %1063 = vmatprep.subr.mxu0 0.0
        %1064 = vmatpush1.msra.mxu0 0.0
        %1065 = vmatprep.subr.mxu0 0.0
        %1066 = vmatpush1.msra.mxu0 0.0
        %1067 = vmatprep.subr.mxu0 0.0
        %1068 = vmatpush1.msra.mxu0 0.0
        %1069 = vmatprep.subr.mxu0 0.0
        %1070 = vmatpush1.msra.mxu0 0.0
        %1071 = vmatprep.subr.mxu0 0.0
        %1072 = vmatpush1.msra.mxu0 0.0
        %1073 = vmatprep.subr.mxu0 0.0
        %1074 = vmatpush1.msra.mxu0 0.0
        %1075 = vmatprep.subr.mxu0 0.0
        %1076 = vmatpush1.msra.mxu0 0.0
        %1077 = vmatprep.subr.mxu0 0.0
        %1078 = vmatpush1.msra.mxu0 0.0
        %1079 = vmatprep.subr.mxu0 0.0
        %1080 = vmatpush1.msra.mxu0 0.0
        %1081 = vmatprep.subr.mxu0 0.0
        %1082 = vmatpush1.msra.mxu0 0.0
        %1083 = vmatprep.subr.mxu0 0.0
        %1084 = vmatpush1.msra.mxu0 0.0
        %1085 = vmatprep.subr.mxu0 0.0
        %1086 = vmatpush1.msra.mxu0 0.0
        %1087 = vmatprep.subr.mxu0 0.0
        %1088 = vmatpush1.msra.mxu0 0.0
        %1089 = vmatprep.subr.mxu0 0.0
        %1090 = vmatpush1.msra.mxu0 0.0
        %1091 = vmatprep.subr.mxu0 0.0
        %1092 = vmatpush1.msra.mxu0 0.0
        %1093 = vmatprep.subr.mxu0 0.0
        %1094 = vmatpush1.msra.mxu0 0.0
        %1095 = vmatprep.subr.mxu0 0.0
        %1096 = vmatpush1.msra.mxu0 0.0
        %1097 = vmatprep.subr.mxu0 0.0
        %1098 = vmatpush1.msra.mxu0 0.0
        %1099 = vmatprep.subr.mxu0 0.0
        %1100 = vmatpush1.msra.mxu0 0.0
        %1101 = vmatprep.subr.mxu0 0.0
        %1102 = vmatpush1.msra.mxu0 0.0
        %1103 = vmatprep.subr.mxu0 0.0
        %1104 = vmatpush1.msra.mxu0 0.0
        %1105 = vmatprep.mubr.f32.mxu0 0.0
        %v1106 = vand.u32 %v332, 4294901760
        %v1107 = vsub.f32 %v332, %v1106
        %v1108 = vand.u32 %v1107, 4294901760
        %v1109 = vsub.f32 %v1107, %v1108
        %v1110 = vand.u32 %v1109, 4294901760
        %1111 = vmatmul.mubr.f32.gmra.mrb[0].mxu0 %v1110
        %v1112 = vpop.f32.mrb[0].mxu0
        %v1113 = vadd.f32 %v321, %v1112
        %v1114 = vpop.f32.mrb[0].mxu0
        %v1115 = vadd.f32 %v325, %v1114
        %1116 = vmatprep.mubr.f32.mxu0 0.0
        %v1117 = vand.u32 %v335, 4294901760
        %v1118 = vsub.f32 %v335, %v1117
        %v1119 = vand.u32 %v1118, 4294901760
        %v1120 = vsub.f32 %v1118, %v1119
        %v1121 = vand.u32 %v1120, 4294901760
        %1122 = vmatmul.mubr.f32.gmra.mrb[0].mxu0 %v1121
        %v1123 = vpop.f32.mrb[0].mxu0
        %v1124 = vadd.f32 %v321, %v1123
        %v1125 = vpop.f32.mrb[0].mxu0
        %v1126 = vadd.f32 %v325, %v1125
        %1127 = vmatprep.mubr.f32.mxu0 0.0
        %v1128 = vand.u32 %v338, 4294901760
        %v1129 = vsub.f32 %v338, %v1128
        %v1130 = vand.u32 %v1129, 4294901760
        %v1131 = vsub.f32 %v1129, %v1130
        %v1132 = vand.u32 %v1131, 4294901760
        %1133 = vmatmul.mubr.f32.gmra.mrb[0].mxu0 %v1132
        %v1134 = vpop.f32.mrb[0].mxu0
        %v1135 = vadd.f32 %v321, %v1134
        %v1136 = vpop.f32.mrb[0].mxu0
        %v1137 = vadd.f32 %v325, %v1136
        %1138 = vmatprep.mubr.f32.mxu0 0.0
        %v1139 = vand.u32 %v341, 4294901760
        %v1140 = vsub.f32 %v341, %v1139
        %v1141 = vand.u32 %v1140, 4294901760
        %v1142 = vsub.f32 %v1140, %v1141
        %v1143 = vand.u32 %v1142, 4294901760
        %1144 = vmatmul.mubr.f32.gmra.mrb[0].mxu0 %v1143
        %v1145 = vpop.f32.mrb[0].mxu0
        %v1146 = vadd.f32 %v321, %v1145
        %v1147 = vpop.f32.mrb[0].mxu0
        %v1148 = vadd.f32 %v325, %v1147
        %1149 = vdwg.mxu0
        %v1150 = vand.u32 %v295, 4294901760
        %v1151 = vsub.f32 %v295, %v1150
        %v1152 = vand.u32 %v1151, 4294901760
        %v1153 = vsub.f32 %v1151, %v1152
        %v1154 = vand.u32 %v1153, 4294901760
        %1155 = vmatprep.subr.mxu0 %v1154
        %v1156 = vand.u32 %v294, 4294901760
        %v1157 = vsub.f32 %v294, %v1156
        %v1158 = vand.u32 %v1157, 4294901760
        %v1159 = vsub.f32 %v1157, %v1158
        %v1160 = vand.u32 %v1159, 4294901760
        %1161 = vmatpush1.msra.mxu0 %v1160
        %v1162 = vand.u32 %v299, 4294901760
        %v1163 = vsub.f32 %v299, %v1162
        %v1164 = vand.u32 %v1163, 4294901760
        %v1165 = vsub.f32 %v1163, %v1164
        %v1166 = vand.u32 %v1165, 4294901760
        %1167 = vmatprep.subr.mxu0 %v1166
        %v1168 = vand.u32 %v298, 4294901760
        %v1169 = vsub.f32 %v298, %v1168
        %v1170 = vand.u32 %v1169, 4294901760
        %v1171 = vsub.f32 %v1169, %v1170
        %v1172 = vand.u32 %v1171, 4294901760
        %1173 = vmatpush1.msra.mxu0 %v1172
        %v1174 = vand.u32 %v303, 4294901760
        %v1175 = vsub.f32 %v303, %v1174
        %v1176 = vand.u32 %v1175, 4294901760
        %v1177 = vsub.f32 %v1175, %v1176
        %v1178 = vand.u32 %v1177, 4294901760
        %1179 = vmatprep.subr.mxu0 %v1178
        %v1180 = vand.u32 %v302, 4294901760
        %v1181 = vsub.f32 %v302, %v1180
        %v1182 = vand.u32 %v1181, 4294901760
        %v1183 = vsub.f32 %v1181, %v1182
        %v1184 = vand.u32 %v1183, 4294901760
        %1185 = vmatpush1.msra.mxu0 %v1184
        %v1186 = vand.u32 %v307, 4294901760
        %v1187 = vsub.f32 %v307, %v1186
        %v1188 = vand.u32 %v1187, 4294901760
        %v1189 = vsub.f32 %v1187, %v1188
        %v1190 = vand.u32 %v1189, 4294901760
        %1191 = vmatprep.subr.mxu0 %v1190
        %v1192 = vand.u32 %v306, 4294901760
        %v1193 = vsub.f32 %v306, %v1192
        %v1194 = vand.u32 %v1193, 4294901760
        %v1195 = vsub.f32 %v1193, %v1194
        %v1196 = vand.u32 %v1195, 4294901760
        %1197 = vmatpush1.msra.mxu0 %v1196
        %1198 = vmatprep.subr.mxu0 0.0
        %1199 = vmatpush1.msra.mxu0 0.0
        %1200 = vmatprep.subr.mxu0 0.0
        %1201 = vmatpush1.msra.mxu0 0.0
        %1202 = vmatprep.subr.mxu0 0.0
        %1203 = vmatpush1.msra.mxu0 0.0
        %1204 = vmatprep.subr.mxu0 0.0
        %1205 = vmatpush1.msra.mxu0 0.0
        %1206 = vmatprep.subr.mxu0 0.0
        %1207 = vmatpush1.msra.mxu0 0.0
        %1208 = vmatprep.subr.mxu0 0.0
        %1209 = vmatpush1.msra.mxu0 0.0
        %1210 = vmatprep.subr.mxu0 0.0
        %1211 = vmatpush1.msra.mxu0 0.0
        %1212 = vmatprep.subr.mxu0 0.0
        %1213 = vmatpush1.msra.mxu0 0.0
        %1214 = vmatprep.subr.mxu0 0.0
        %1215 = vmatpush1.msra.mxu0 0.0
        %1216 = vmatprep.subr.mxu0 0.0
        %1217 = vmatpush1.msra.mxu0 0.0
        %1218 = vmatprep.subr.mxu0 0.0
        %1219 = vmatpush1.msra.mxu0 0.0
        %1220 = vmatprep.subr.mxu0 0.0
        %1221 = vmatpush1.msra.mxu0 0.0
        %1222 = vmatprep.subr.mxu0 0.0
        %1223 = vmatpush1.msra.mxu0 0.0
        %1224 = vmatprep.subr.mxu0 0.0
        %1225 = vmatpush1.msra.mxu0 0.0
        %1226 = vmatprep.subr.mxu0 0.0
        %1227 = vmatpush1.msra.mxu0 0.0
        %1228 = vmatprep.subr.mxu0 0.0
        %1229 = vmatpush1.msra.mxu0 0.0
        %1230 = vmatprep.subr.mxu0 0.0
        %1231 = vmatpush1.msra.mxu0 0.0
        %1232 = vmatprep.subr.mxu0 0.0
        %1233 = vmatpush1.msra.mxu0 0.0
        %1234 = vmatprep.subr.mxu0 0.0
        %1235 = vmatpush1.msra.mxu0 0.0
        %1236 = vmatprep.subr.mxu0 0.0
        %1237 = vmatpush1.msra.mxu0 0.0
        %1238 = vmatprep.subr.mxu0 0.0
        %1239 = vmatpush1.msra.mxu0 0.0
        %1240 = vmatprep.subr.mxu0 0.0
        %1241 = vmatpush1.msra.mxu0 0.0
        %1242 = vmatprep.subr.mxu0 0.0
        %1243 = vmatpush1.msra.mxu0 0.0
        %1244 = vmatprep.subr.mxu0 0.0
        %1245 = vmatpush1.msra.mxu0 0.0
        %1246 = vmatprep.subr.mxu0 0.0
        %1247 = vmatpush1.msra.mxu0 0.0
        %1248 = vmatprep.subr.mxu0 0.0
        %1249 = vmatpush1.msra.mxu0 0.0
        %1250 = vmatprep.subr.mxu0 0.0
        %1251 = vmatpush1.msra.mxu0 0.0
        %1252 = vmatprep.subr.mxu0 0.0
        %1253 = vmatpush1.msra.mxu0 0.0
        %1254 = vmatprep.mubr.f32.mxu0 0.0
        %v1255 = vand.u32 %v332, 4294901760
        %1256 = vmatmul.mubr.f32.gmra.mrb[0].mxu0 %v1255
        %v1257 = vpop.f32.mrb[0].mxu0
        %v1258 = vadd.f32 %v1113, %v1257
        %v1259 = vpop.f32.mrb[0].mxu0
        %v1260 = vadd.f32 %v1115, %v1259
        %1261 = vmatprep.mubr.f32.mxu0 0.0
        %v1262 = vand.u32 %v335, 4294901760
        %1263 = vmatmul.mubr.f32.gmra.mrb[0].mxu0 %v1262
        %v1264 = vpop.f32.mrb[0].mxu0
        %v1265 = vadd.f32 %v1124, %v1264
        %v1266 = vpop.f32.mrb[0].mxu0
        %v1267 = vadd.f32 %v1126, %v1266
        %1268 = vmatprep.mubr.f32.mxu0 0.0
        %v1269 = vand.u32 %v338, 4294901760
        %1270 = vmatmul.mubr.f32.gmra.mrb[0].mxu0 %v1269
        %v1271 = vpop.f32.mrb[0].mxu0
        %v1272 = vadd.f32 %v1135, %v1271
        %v1273 = vpop.f32.mrb[0].mxu0
        %v1274 = vadd.f32 %v1137, %v1273
        %1275 = vmatprep.mubr.f32.mxu0 0.0
        %v1276 = vand.u32 %v341, 4294901760
        %1277 = vmatmul.mubr.f32.gmra.mrb[0].mxu0 %v1276
        %v1278 = vpop.f32.mrb[0].mxu0
        %v1279 = vadd.f32 %v1146, %v1278
        %v1280 = vpop.f32.mrb[0].mxu0
        %v1281 = vadd.f32 %v1148, %v1280
        %1282 = vdwg.mxu0
        %v1283 = vand.u32 %v295, 4294901760
        %v1284 = vsub.f32 %v295, %v1283
        %1285 = vmatprep.subr.mxu0 %v1284
        %v1286 = vand.u32 %v294, 4294901760
        %v1287 = vsub.f32 %v294, %v1286
        %1288 = vmatpush1.msra.mxu0 %v1287
        %v1289 = vand.u32 %v299, 4294901760
        %v1290 = vsub.f32 %v299, %v1289
        %1291 = vmatprep.subr.mxu0 %v1290
        %v1292 = vand.u32 %v298, 4294901760
        %v1293 = vsub.f32 %v298, %v1292
        %1294 = vmatpush1.msra.mxu0 %v1293
        %v1295 = vand.u32 %v303, 4294901760
        %v1296 = vsub.f32 %v303, %v1295
        %1297 = vmatprep.subr.mxu0 %v1296
        %v1298 = vand.u32 %v302, 4294901760
        %v1299 = vsub.f32 %v302, %v1298
        %1300 = vmatpush1.msra.mxu0 %v1299
        %v1301 = vand.u32 %v307, 4294901760
        %v1302 = vsub.f32 %v307, %v1301
        %1303 = vmatprep.subr.mxu0 %v1302
        %v1304 = vand.u32 %v306, 4294901760
        %v1305 = vsub.f32 %v306, %v1304
        %1306 = vmatpush1.msra.mxu0 %v1305
        %1307 = vmatprep.subr.mxu0 0.0
        %1308 = vmatpush1.msra.mxu0 0.0
        %1309 = vmatprep.subr.mxu0 0.0
        %1310 = vmatpush1.msra.mxu0 0.0
        %1311 = vmatprep.subr.mxu0 0.0
        %1312 = vmatpush1.msra.mxu0 0.0
        %1313 = vmatprep.subr.mxu0 0.0
        %1314 = vmatpush1.msra.mxu0 0.0
        %1315 = vmatprep.subr.mxu0 0.0
        %1316 = vmatpush1.msra.mxu0 0.0
        %1317 = vmatprep.subr.mxu0 0.0
        %1318 = vmatpush1.msra.mxu0 0.0
        %1319 = vmatprep.subr.mxu0 0.0
        %1320 = vmatpush1.msra.mxu0 0.0
        %1321 = vmatprep.subr.mxu0 0.0
        %1322 = vmatpush1.msra.mxu0 0.0
        %1323 = vmatprep.subr.mxu0 0.0
        %1324 = vmatpush1.msra.mxu0 0.0
        %1325 = vmatprep.subr.mxu0 0.0
        %1326 = vmatpush1.msra.mxu0 0.0
        %1327 = vmatprep.subr.mxu0 0.0
        %1328 = vmatpush1.msra.mxu0 0.0
        %1329 = vmatprep.subr.mxu0 0.0
        %1330 = vmatpush1.msra.mxu0 0.0
        %1331 = vmatprep.subr.mxu0 0.0
        %1332 = vmatpush1.msra.mxu0 0.0
        %1333 = vmatprep.subr.mxu0 0.0
        %1334 = vmatpush1.msra.mxu0 0.0
        %1335 = vmatprep.subr.mxu0 0.0
        %1336 = vmatpush1.msra.mxu0 0.0
        %1337 = vmatprep.subr.mxu0 0.0
        %1338 = vmatpush1.msra.mxu0 0.0
        %1339 = vmatprep.subr.mxu0 0.0
        %1340 = vmatpush1.msra.mxu0 0.0
        %1341 = vmatprep.subr.mxu0 0.0
        %1342 = vmatpush1.msra.mxu0 0.0
        %1343 = vmatprep.subr.mxu0 0.0
        %1344 = vmatpush1.msra.mxu0 0.0
        %1345 = vmatprep.subr.mxu0 0.0
        %1346 = vmatpush1.msra.mxu0 0.0
        %1347 = vmatprep.subr.mxu0 0.0
        %1348 = vmatpush1.msra.mxu0 0.0
        %1349 = vmatprep.subr.mxu0 0.0
        %1350 = vmatpush1.msra.mxu0 0.0
        %1351 = vmatprep.subr.mxu0 0.0
        %1352 = vmatpush1.msra.mxu0 0.0
        %1353 = vmatprep.subr.mxu0 0.0
        %1354 = vmatpush1.msra.mxu0 0.0
        %1355 = vmatprep.subr.mxu0 0.0
        %1356 = vmatpush1.msra.mxu0 0.0
        %1357 = vmatprep.subr.mxu0 0.0
        %1358 = vmatpush1.msra.mxu0 0.0
        %1359 = vmatprep.subr.mxu0 0.0
        %1360 = vmatpush1.msra.mxu0 0.0
        %1361 = vmatprep.subr.mxu0 0.0
        %1362 = vmatpush1.msra.mxu0 0.0
        %1363 = vmatprep.mubr.f32.mxu0 0.0
        %v1364 = vand.u32 %v332, 4294901760
        %v1365 = vsub.f32 %v332, %v1364
        %1366 = vmatmul.mubr.f32.gmra.mrb[0].mxu0 %v1365
        %v1367 = vpop.f32.mrb[0].mxu0
        %v1368 = vadd.f32 %v1258, %v1367
        %v1369 = vpop.f32.mrb[0].mxu0
        %v1370 = vadd.f32 %v1260, %v1369
        %1371 = vmatprep.mubr.f32.mxu0 0.0
        %v1372 = vand.u32 %v335, 4294901760
        %v1373 = vsub.f32 %v335, %v1372
        %1374 = vmatmul.mubr.f32.gmra.mrb[0].mxu0 %v1373
        %v1375 = vpop.f32.mrb[0].mxu0
        %v1376 = vadd.f32 %v1265, %v1375
        %v1377 = vpop.f32.mrb[0].mxu0
        %v1378 = vadd.f32 %v1267, %v1377
        %1379 = vmatprep.mubr.f32.mxu0 0.0
        %v1380 = vand.u32 %v338, 4294901760
        %v1381 = vsub.f32 %v338, %v1380
        %1382 = vmatmul.mubr.f32.gmra.mrb[0].mxu0 %v1381
        %v1383 = vpop.f32.mrb[0].mxu0
        %v1384 = vadd.f32 %v1272, %v1383
        %v1385 = vpop.f32.mrb[0].mxu0
        %v1386 = vadd.f32 %v1274, %v1385
        %1387 = vmatprep.mubr.f32.mxu0 0.0
        %v1388 = vand.u32 %v341, 4294901760
        %v1389 = vsub.f32 %v341, %v1388
        %1390 = vmatmul.mubr.f32.gmra.mrb[0].mxu0 %v1389
        %v1391 = vpop.f32.mrb[0].mxu0
        %v1392 = vadd.f32 %v1279, %v1391
        %v1393 = vpop.f32.mrb[0].mxu0
        %v1394 = vadd.f32 %v1281, %v1393
        %1395 = vdwg.mxu0
        %v1396 = vand.u32 %v295, 4294901760
        %1397 = vmatprep.subr.mxu0 %v1396
        %v1398 = vand.u32 %v294, 4294901760
        %1399 = vmatpush1.msra.mxu0 %v1398
        %v1400 = vand.u32 %v299, 4294901760
        %1401 = vmatprep.subr.mxu0 %v1400
        %v1402 = vand.u32 %v298, 4294901760
        %1403 = vmatpush1.msra.mxu0 %v1402
        %v1404 = vand.u32 %v303, 4294901760
        %1405 = vmatprep.subr.mxu0 %v1404
        %v1406 = vand.u32 %v302, 4294901760
        %1407 = vmatpush1.msra.mxu0 %v1406
        %v1408 = vand.u32 %v307, 4294901760
        %1409 = vmatprep.subr.mxu0 %v1408
        %v1410 = vand.u32 %v306, 4294901760
        %1411 = vmatpush1.msra.mxu0 %v1410
        %1412 = vmatprep.subr.mxu0 0.0
        %1413 = vmatpush1.msra.mxu0 0.0
        %1414 = vmatprep.subr.mxu0 0.0
        %1415 = vmatpush1.msra.mxu0 0.0
        %1416 = vmatprep.subr.mxu0 0.0
        %1417 = vmatpush1.msra.mxu0 0.0
        %1418 = vmatprep.subr.mxu0 0.0
        %1419 = vmatpush1.msra.mxu0 0.0
        %1420 = vmatprep.subr.mxu0 0.0
        %1421 = vmatpush1.msra.mxu0 0.0
        %1422 = vmatprep.subr.mxu0 0.0
        %1423 = vmatpush1.msra.mxu0 0.0
        %1424 = vmatprep.subr.mxu0 0.0
        %1425 = vmatpush1.msra.mxu0 0.0
        %1426 = vmatprep.subr.mxu0 0.0
        %1427 = vmatpush1.msra.mxu0 0.0
        %1428 = vmatprep.subr.mxu0 0.0
        %1429 = vmatpush1.msra.mxu0 0.0
        %1430 = vmatprep.subr.mxu0 0.0
        %1431 = vmatpush1.msra.mxu0 0.0
        %1432 = vmatprep.subr.mxu0 0.0
        %1433 = vmatpush1.msra.mxu0 0.0
        %1434 = vmatprep.subr.mxu0 0.0
        %1435 = vmatpush1.msra.mxu0 0.0
        %1436 = vmatprep.subr.mxu0 0.0
        %1437 = vmatpush1.msra.mxu0 0.0
        %1438 = vmatprep.subr.mxu0 0.0
        %1439 = vmatpush1.msra.mxu0 0.0
        %1440 = vmatprep.subr.mxu0 0.0
        %1441 = vmatpush1.msra.mxu0 0.0
        %1442 = vmatprep.subr.mxu0 0.0
        %1443 = vmatpush1.msra.mxu0 0.0
        %1444 = vmatprep.subr.mxu0 0.0
        %1445 = vmatpush1.msra.mxu0 0.0
        %1446 = vmatprep.subr.mxu0 0.0
        %1447 = vmatpush1.msra.mxu0 0.0
        %1448 = vmatprep.subr.mxu0 0.0
        %1449 = vmatpush1.msra.mxu0 0.0
        %1450 = vmatprep.subr.mxu0 0.0
        %1451 = vmatpush1.msra.mxu0 0.0
        %1452 = vmatprep.subr.mxu0 0.0
        %1453 = vmatpush1.msra.mxu0 0.0
        %1454 = vmatprep.subr.mxu0 0.0
        %1455 = vmatpush1.msra.mxu0 0.0
        %1456 = vmatprep.subr.mxu0 0.0
        %1457 = vmatpush1.msra.mxu0 0.0
        %1458 = vmatprep.subr.mxu0 0.0
        %1459 = vmatpush1.msra.mxu0 0.0
        %1460 = vmatprep.subr.mxu0 0.0
        %1461 = vmatpush1.msra.mxu0 0.0
        %1462 = vmatprep.subr.mxu0 0.0
        %1463 = vmatpush1.msra.mxu0 0.0
        %1464 = vmatprep.subr.mxu0 0.0
        %1465 = vmatpush1.msra.mxu0 0.0
        %1466 = vmatprep.subr.mxu0 0.0
        %1467 = vmatpush1.msra.mxu0 0.0
        %1468 = vmatprep.mubr.f32.mxu0 0.0
        %v1469 = vand.u32 %v332, 4294901760
        %v1470 = vsub.f32 %v332, %v1469
        %v1471 = vand.u32 %v1470, 4294901760
        %1472 = vmatmul.mubr.f32.gmra.mrb[0].mxu0 %v1471
        %v1473 = vpop.f32.mrb[0].mxu0
        %v1474 = vadd.f32 %v1368, %v1473
        %v1475 = vpop.f32.mrb[0].mxu0
        %v1476 = vadd.f32 %v1370, %v1475
        %1477 = vmatprep.mubr.f32.mxu0 0.0
        %v1478 = vand.u32 %v335, 4294901760
        %v1479 = vsub.f32 %v335, %v1478
        %v1480 = vand.u32 %v1479, 4294901760
        %1481 = vmatmul.mubr.f32.gmra.mrb[0].mxu0 %v1480
        %v1482 = vpop.f32.mrb[0].mxu0
        %v1483 = vadd.f32 %v1376, %v1482
        %v1484 = vpop.f32.mrb[0].mxu0
        %v1485 = vadd.f32 %v1378, %v1484
        %1486 = vmatprep.mubr.f32.mxu0 0.0
        %v1487 = vand.u32 %v338, 4294901760
        %v1488 = vsub.f32 %v338, %v1487
        %v1489 = vand.u32 %v1488, 4294901760
        %1490 = vmatmul.mubr.f32.gmra.mrb[0].mxu0 %v1489
        %v1491 = vpop.f32.mrb[0].mxu0
        %v1492 = vadd.f32 %v1384, %v1491
        %v1493 = vpop.f32.mrb[0].mxu0
        %v1494 = vadd.f32 %v1386, %v1493
        %1495 = vmatprep.mubr.f32.mxu0 0.0
        %v1496 = vand.u32 %v341, 4294901760
        %v1497 = vsub.f32 %v341, %v1496
        %v1498 = vand.u32 %v1497, 4294901760
        %1499 = vmatmul.mubr.f32.gmra.mrb[0].mxu0 %v1498
        %v1500 = vpop.f32.mrb[0].mxu0
        %v1501 = vadd.f32 %v1392, %v1500
        %v1502 = vpop.f32.mrb[0].mxu0
        %v1503 = vadd.f32 %v1394, %v1502
        %1504 = vdwg.mxu0
        %v1505 = vand.u32 %v295, 4294901760
        %v1506 = vsub.f32 %v295, %v1505
        %v1507 = vand.u32 %v1506, 4294901760
        %1508 = vmatprep.subr.mxu0 %v1507
        %v1509 = vand.u32 %v294, 4294901760
        %v1510 = vsub.f32 %v294, %v1509
        %v1511 = vand.u32 %v1510, 4294901760
        %1512 = vmatpush1.msra.mxu0 %v1511
        %v1513 = vand.u32 %v299, 4294901760
        %v1514 = vsub.f32 %v299, %v1513
        %v1515 = vand.u32 %v1514, 4294901760
        %1516 = vmatprep.subr.mxu0 %v1515
        %v1517 = vand.u32 %v298, 4294901760
        %v1518 = vsub.f32 %v298, %v1517
        %v1519 = vand.u32 %v1518, 4294901760
        %1520 = vmatpush1.msra.mxu0 %v1519
        %v1521 = vand.u32 %v303, 4294901760
        %v1522 = vsub.f32 %v303, %v1521
        %v1523 = vand.u32 %v1522, 4294901760
        %1524 = vmatprep.subr.mxu0 %v1523
        %v1525 = vand.u32 %v302, 4294901760
        %v1526 = vsub.f32 %v302, %v1525
        %v1527 = vand.u32 %v1526, 4294901760
        %1528 = vmatpush1.msra.mxu0 %v1527
        %v1529 = vand.u32 %v307, 4294901760
        %v1530 = vsub.f32 %v307, %v1529
        %v1531 = vand.u32 %v1530, 4294901760
        %1532 = vmatprep.subr.mxu0 %v1531
        %v1533 = vand.u32 %v306, 4294901760
        %v1534 = vsub.f32 %v306, %v1533
        %v1535 = vand.u32 %v1534, 4294901760
        %1536 = vmatpush1.msra.mxu0 %v1535
        %1537 = vmatprep.subr.mxu0 0.0
        %1538 = vmatpush1.msra.mxu0 0.0
        %1539 = vmatprep.subr.mxu0 0.0
        %1540 = vmatpush1.msra.mxu0 0.0
        %1541 = vmatprep.subr.mxu0 0.0
        %1542 = vmatpush1.msra.mxu0 0.0
        %1543 = vmatprep.subr.mxu0 0.0
        %1544 = vmatpush1.msra.mxu0 0.0
        %1545 = vmatprep.subr.mxu0 0.0
        %1546 = vmatpush1.msra.mxu0 0.0
        %1547 = vmatprep.subr.mxu0 0.0
        %1548 = vmatpush1.msra.mxu0 0.0
        %1549 = vmatprep.subr.mxu0 0.0
        %1550 = vmatpush1.msra.mxu0 0.0
        %1551 = vmatprep.subr.mxu0 0.0
        %1552 = vmatpush1.msra.mxu0 0.0
        %1553 = vmatprep.subr.mxu0 0.0
        %1554 = vmatpush1.msra.mxu0 0.0
        %1555 = vmatprep.subr.mxu0 0.0
        %1556 = vmatpush1.msra.mxu0 0.0
        %1557 = vmatprep.subr.mxu0 0.0
        %1558 = vmatpush1.msra.mxu0 0.0
        %1559 = vmatprep.subr.mxu0 0.0
        %1560 = vmatpush1.msra.mxu0 0.0
        %1561 = vmatprep.subr.mxu0 0.0
        %1562 = vmatpush1.msra.mxu0 0.0
        %1563 = vmatprep.subr.mxu0 0.0
        %1564 = vmatpush1.msra.mxu0 0.0
        %1565 = vmatprep.subr.mxu0 0.0
        %1566 = vmatpush1.msra.mxu0 0.0
        %1567 = vmatprep.subr.mxu0 0.0
        %1568 = vmatpush1.msra.mxu0 0.0
        %1569 = vmatprep.subr.mxu0 0.0
        %1570 = vmatpush1.msra.mxu0 0.0
        %1571 = vmatprep.subr.mxu0 0.0
        %1572 = vmatpush1.msra.mxu0 0.0
        %1573 = vmatprep.subr.mxu0 0.0
        %1574 = vmatpush1.msra.mxu0 0.0
        %1575 = vmatprep.subr.mxu0 0.0
        %1576 = vmatpush1.msra.mxu0 0.0
        %1577 = vmatprep.subr.mxu0 0.0
        %1578 = vmatpush1.msra.mxu0 0.0
        %1579 = vmatprep.subr.mxu0 0.0
        %1580 = vmatpush1.msra.mxu0 0.0
        %1581 = vmatprep.subr.mxu0 0.0
        %1582 = vmatpush1.msra.mxu0 0.0
        %1583 = vmatprep.subr.mxu0 0.0
        %1584 = vmatpush1.msra.mxu0 0.0
        %1585 = vmatprep.subr.mxu0 0.0
        %1586 = vmatpush1.msra.mxu0 0.0
        %1587 = vmatprep.subr.mxu0 0.0
        %1588 = vmatpush1.msra.mxu0 0.0
        %1589 = vmatprep.subr.mxu0 0.0
        %1590 = vmatpush1.msra.mxu0 0.0
        %1591 = vmatprep.subr.mxu0 0.0
        %1592 = vmatpush1.msra.mxu0 0.0
        %1593 = vmatprep.mubr.f32.mxu0 0.0
        %v1594 = vand.u32 %v332, 4294901760
        %1595 = vmatmul.mubr.f32.gmra.mrb[0].mxu0 %v1594
        %v1596 = vpop.f32.mrb[0].mxu0
        %v1597 = vadd.f32 %v1474, %v1596
        %v1598 = vpop.f32.mrb[0].mxu0
        %v1599 = vadd.f32 %v1476, %v1598
        %1600 = vmatprep.mubr.f32.mxu0 0.0
        %v1601 = vand.u32 %v335, 4294901760
        %1602 = vmatmul.mubr.f32.gmra.mrb[0].mxu0 %v1601
        %v1603 = vpop.f32.mrb[0].mxu0
        %v1604 = vadd.f32 %v1483, %v1603
        %v1605 = vpop.f32.mrb[0].mxu0
        %v1606 = vadd.f32 %v1485, %v1605
        %1607 = vmatprep.mubr.f32.mxu0 0.0
        %v1608 = vand.u32 %v338, 4294901760
        %1609 = vmatmul.mubr.f32.gmra.mrb[0].mxu0 %v1608
        %v1610 = vpop.f32.mrb[0].mxu0
        %v1611 = vadd.f32 %v1492, %v1610
        %v1612 = vpop.f32.mrb[0].mxu0
        %v1613 = vadd.f32 %v1494, %v1612
        %1614 = vmatprep.mubr.f32.mxu0 0.0
        %v1615 = vand.u32 %v341, 4294901760
        %1616 = vmatmul.mubr.f32.gmra.mrb[0].mxu0 %v1615
        %v1617 = vpop.f32.mrb[0].mxu0
        %v1618 = vadd.f32 %v1501, %v1617
        %v1619 = vpop.f32.mrb[0].mxu0
        %v1620 = vadd.f32 %v1503, %v1619
        %1621 = vdwg.mxu0
        %v1622 = vand.u32 %v295, 4294901760
        %1623 = vmatprep.subr.mxu0 %v1622
        %v1624 = vand.u32 %v294, 4294901760
        %1625 = vmatpush1.msra.mxu0 %v1624
        %v1626 = vand.u32 %v299, 4294901760
        %1627 = vmatprep.subr.mxu0 %v1626
        %v1628 = vand.u32 %v298, 4294901760
        %1629 = vmatpush1.msra.mxu0 %v1628
        %v1630 = vand.u32 %v303, 4294901760
        %1631 = vmatprep.subr.mxu0 %v1630
        %v1632 = vand.u32 %v302, 4294901760
        %1633 = vmatpush1.msra.mxu0 %v1632
        %v1634 = vand.u32 %v307, 4294901760
        %1635 = vmatprep.subr.mxu0 %v1634
        %v1636 = vand.u32 %v306, 4294901760
        %1637 = vmatpush1.msra.mxu0 %v1636
        %1638 = vmatprep.subr.mxu0 0.0
        %1639 = vmatpush1.msra.mxu0 0.0
        %1640 = vmatprep.subr.mxu0 0.0
        %1641 = vmatpush1.msra.mxu0 0.0
        %1642 = vmatprep.subr.mxu0 0.0
        %1643 = vmatpush1.msra.mxu0 0.0
        %1644 = vmatprep.subr.mxu0 0.0
        %1645 = vmatpush1.msra.mxu0 0.0
        %1646 = vmatprep.subr.mxu0 0.0
        %1647 = vmatpush1.msra.mxu0 0.0
        %1648 = vmatprep.subr.mxu0 0.0
        %1649 = vmatpush1.msra.mxu0 0.0
        %1650 = vmatprep.subr.mxu0 0.0
        %1651 = vmatpush1.msra.mxu0 0.0
        %1652 = vmatprep.subr.mxu0 0.0
        %1653 = vmatpush1.msra.mxu0 0.0
        %1654 = vmatprep.subr.mxu0 0.0
        %1655 = vmatpush1.msra.mxu0 0.0
        %1656 = vmatprep.subr.mxu0 0.0
        %1657 = vmatpush1.msra.mxu0 0.0
        %1658 = vmatprep.subr.mxu0 0.0
        %1659 = vmatpush1.msra.mxu0 0.0
        %1660 = vmatprep.subr.mxu0 0.0
        %1661 = vmatpush1.msra.mxu0 0.0
        %1662 = vmatprep.subr.mxu0 0.0
        %1663 = vmatpush1.msra.mxu0 0.0
        %1664 = vmatprep.subr.mxu0 0.0
        %1665 = vmatpush1.msra.mxu0 0.0
        %1666 = vmatprep.subr.mxu0 0.0
        %1667 = vmatpush1.msra.mxu0 0.0
        %1668 = vmatprep.subr.mxu0 0.0
        %1669 = vmatpush1.msra.mxu0 0.0
        %1670 = vmatprep.subr.mxu0 0.0
        %1671 = vmatpush1.msra.mxu0 0.0
        %1672 = vmatprep.subr.mxu0 0.0
        %1673 = vmatpush1.msra.mxu0 0.0
        %1674 = vmatprep.subr.mxu0 0.0
        %1675 = vmatpush1.msra.mxu0 0.0
        %1676 = vmatprep.subr.mxu0 0.0
        %1677 = vmatpush1.msra.mxu0 0.0
        %1678 = vmatprep.subr.mxu0 0.0
        %1679 = vmatpush1.msra.mxu0 0.0
        %1680 = vmatprep.subr.mxu0 0.0
        %1681 = vmatpush1.msra.mxu0 0.0
        %1682 = vmatprep.subr.mxu0 0.0
        %1683 = vmatpush1.msra.mxu0 0.0
        %1684 = vmatprep.subr.mxu0 0.0
        %1685 = vmatpush1.msra.mxu0 0.0
        %1686 = vmatprep.subr.mxu0 0.0
        %1687 = vmatpush1.msra.mxu0 0.0
        %1688 = vmatprep.subr.mxu0 0.0
        %1689 = vmatpush1.msra.mxu0 0.0
        %1690 = vmatprep.subr.mxu0 0.0
        %1691 = vmatpush1.msra.mxu0 0.0
        %1692 = vmatprep.subr.mxu0 0.0
        %1693 = vmatpush1.msra.mxu0 0.0
        %1694 = vmatprep.mubr.f32.mxu0 0.0
        %v1695 = vand.u32 %v332, 4294901760
        %1696 = vmatmul.mubr.f32.gmra.mrb[0].mxu0 %v1695
        %v1697 = vpop.f32.mrb[0].mxu0
        %v1698 = vadd.f32 %v1597, %v1697
        %v1699 = vpop.f32.mrb[0].mxu0
        %v1700 = vadd.f32 %v1599, %v1699
        %1701 = vmatprep.mubr.f32.mxu0 0.0
        %v1702 = vand.u32 %v335, 4294901760
        %1703 = vmatmul.mubr.f32.gmra.mrb[0].mxu0 %v1702
        %v1704 = vpop.f32.mrb[0].mxu0
        %v1705 = vadd.f32 %v1604, %v1704
        %v1706 = vpop.f32.mrb[0].mxu0
        %v1707 = vadd.f32 %v1606, %v1706
        %1708 = vmatprep.mubr.f32.mxu0 0.0
        %v1709 = vand.u32 %v338, 4294901760
        %1710 = vmatmul.mubr.f32.gmra.mrb[0].mxu0 %v1709
        %v1711 = vpop.f32.mrb[0].mxu0
        %v1712 = vadd.f32 %v1611, %v1711
        %v1713 = vpop.f32.mrb[0].mxu0
        %v1714 = vadd.f32 %v1613, %v1713
        %1715 = vmatprep.mubr.f32.mxu0 0.0
        %v1716 = vand.u32 %v341, 4294901760
        %1717 = vmatmul.mubr.f32.gmra.mrb[0].mxu0 %v1716
        %v1718 = vpop.f32.mrb[0].mxu0
        %v1719 = vadd.f32 %v1618, %v1718
        %v1720 = vpop.f32.mrb[0].mxu0
        %v1721 = vadd.f32 %v1620, %v1720
        %1722 = vdwg.mxu0
        %v1723 = vtanh.pop %v1008
        %v1724 = vtanh.pop %v1010
        %v1725 = vtanh.pop %v1698
        %v1726 = vtanh.pop %v1700
        %v1727 = vtanh.pop %v1015
        %v1728 = vtanh.pop %v1017
        %v1729 = vtanh.pop %v1705
        %v1730 = vtanh.pop %v1707
        %v1731 = vtanh.pop %v1022
        %v1732 = vtanh.pop %v1024
        %v1733 = vtanh.pop %v1712
        %v1734 = vtanh.pop %v1714
        %v1735 = vtanh.pop %v1029
        %v1736 = vtanh.pop %v1031
        %v1737 = vtanh.pop %v1719
        %v1738 = vtanh.pop %v1721
        %v1739 = vld [vmem:[%s3] sm:$0xf]
        %v1741 = vlaneseq
        %v1742 = vshrl.u32 %v1741, 7
        %v1743 = vsub.s32 0, %v1742
        %v1744 = vrot.slane %v1739, %v1743
        %v1745 = vlaneseq
        %v1746 = vshrl.u32 %v1745, 7
        %v1747 = vsub.s32 1, %v1746
        %v1748 = vrot.slane %v1739, %v1747
        %v1749 = vlaneseq
        %v1750 = vshrl.u32 %v1749, 7
        %v1751 = vsub.s32 2, %v1750
        %v1752 = vrot.slane %v1739, %v1751
        %v1753 = vlaneseq
        %v1754 = vshrl.u32 %v1753, 7
        %v1755 = vsub.s32 3, %v1754
        %v1756 = vrot.slane %v1739, %v1755
        %v1761 = vand.u32 %v1724, 4294901760
        %1762 = vmatprep.subr.mxu0 %v1761
        %v1763 = vand.u32 %v1723, 4294901760
        %1764 = vmatpush1.xpose.msra.mxu0 %v1763
        %v1765 = vand.u32 %v1728, 4294901760
        %1766 = vmatprep.subr.mxu0 %v1765
        %v1767 = vand.u32 %v1727, 4294901760
        %1768 = vmatpush1.xpose.msra.mxu0 %v1767
        %1769 = vmatprep.subr.mxu0 0.0
        %1770 = vmatpush1.xpose.msra.mxu0 0.0
        %1771 = vmatprep.subr.mxu0 0.0
        %1772 = vmatpush1.xpose.msra.mxu0 0.0
        %1773 = vmatprep.subr.mxu0 0.0
        %1774 = vmatpush1.xpose.msra.mxu0 0.0
        %1775 = vmatprep.subr.mxu0 0.0
        %1776 = vmatpush1.xpose.msra.mxu0 0.0
        %1777 = vmatprep.subr.mxu0 0.0
        %1778 = vmatpush1.xpose.msra.mxu0 0.0
        %1779 = vmatprep.subr.mxu0 0.0
        %1780 = vmatpush1.xpose.msra.mxu0 0.0
        %1781 = vmatprep.subr.mxu0 0.0
        %1782 = vmatpush1.xpose.msra.mxu0 0.0
        %1783 = vmatprep.subr.mxu0 0.0
        %1784 = vmatpush1.xpose.msra.mxu0 0.0
        %1785 = vmatprep.subr.mxu0 0.0
        %1786 = vmatpush1.xpose.msra.mxu0 0.0
        %1787 = vmatprep.subr.mxu0 0.0
        %1788 = vmatpush1.xpose.msra.mxu0 0.0
        %1789 = vmatprep.subr.mxu0 0.0
        %1790 = vmatpush1.xpose.msra.mxu0 0.0
        %1791 = vmatprep.subr.mxu0 0.0
        %1792 = vmatpush1.xpose.msra.mxu0 0.0
        %1793 = vmatprep.subr.mxu0 0.0
        %1794 = vmatpush1.xpose.msra.mxu0 0.0
        %1795 = vmatprep.subr.mxu0 0.0
        %1796 = vmatpush1.xpose.msra.mxu0 0.0
        %1797 = vmatprep.subr.mxu0 0.0
        %1798 = vmatpush1.xpose.msra.mxu0 0.0
        %1799 = vmatprep.subr.mxu0 0.0
        %1800 = vmatpush1.xpose.msra.mxu0 0.0
        %1801 = vmatprep.subr.mxu0 0.0
        %1802 = vmatpush1.xpose.msra.mxu0 0.0
        %1803 = vmatprep.subr.mxu0 0.0
        %1804 = vmatpush1.xpose.msra.mxu0 0.0
        %1805 = vmatprep.subr.mxu0 0.0
        %1806 = vmatpush1.xpose.msra.mxu0 0.0
        %1807 = vmatprep.subr.mxu0 0.0
        %1808 = vmatpush1.xpose.msra.mxu0 0.0
        %1809 = vmatprep.subr.mxu0 0.0
        %1810 = vmatpush1.xpose.msra.mxu0 0.0
        %1811 = vmatprep.subr.mxu0 0.0
        %1812 = vmatpush1.xpose.msra.mxu0 0.0
        %1813 = vmatprep.subr.mxu0 0.0
        %1814 = vmatpush1.xpose.msra.mxu0 0.0
        %1815 = vmatprep.subr.mxu0 0.0
        %1816 = vmatpush1.xpose.msra.mxu0 0.0
        %1817 = vmatprep.subr.mxu0 0.0
        %1818 = vmatpush1.xpose.msra.mxu0 0.0
        %1819 = vmatprep.subr.mxu0 0.0
        %1820 = vmatpush1.xpose.msra.mxu0 0.0
        %1821 = vmatprep.subr.mxu0 0.0
        %1822 = vmatpush1.xpose.msra.mxu0 0.0
        %1823 = vmatprep.subr.mxu0 0.0
        %1824 = vmatpush1.xpose.msra.mxu0 0.0
        %1825 = vmatprep.subr.mxu0 0.0
        %1826 = vmatpush1.xpose.msra.mxu0 0.0
        %1827 = vmatprep.subr.mxu0 0.0
        %1828 = vmatpush1.xpose.msra.mxu0 0.0
        %v1829 = vand.u32 %v1748, 4294901760
        %v1830 = vsub.f32 %v1748, %v1829
        %v1831 = vand.u32 %v1830, 4294901760
        %v1832 = vsub.f32 %v1830, %v1831
        %v1833 = vand.u32 %v1832, 4294901760
        %1834 = vmatprep.mubr.f32.mxu0 %v1833
        %v1835 = vand.u32 %v1744, 4294901760
        %v1836 = vsub.f32 %v1744, %v1835
        %v1837 = vand.u32 %v1836, 4294901760
        %v1838 = vsub.f32 %v1836, %v1837
        %v1839 = vand.u32 %v1838, 4294901760
        %1840 = vmatmul.mubr.f32.gmra.mrb[0].mxu0 %v1839
        %v1841 = vpop.f32.mrb[0].mxu0
        %v1842 = vadd.f32 0.0, %v1841
        %v1843 = vpop.f32.mrb[0].mxu0
        %1844 = vdwg.mxu0
        %v1845 = vand.u32 %v1724, 4294901760
        %v1846 = vsub.f32 %v1724, %v1845
        %v1847 = vand.u32 %v1846, 4294901760
        %v1848 = vsub.f32 %v1846, %v1847
        %v1849 = vand.u32 %v1848, 4294901760
        %1850 = vmatprep.subr.mxu0 %v1849
        %v1851 = vand.u32 %v1723, 4294901760
        %v1852 = vsub.f32 %v1723, %v1851
        %v1853 = vand.u32 %v1852, 4294901760
        %v1854 = vsub.f32 %v1852, %v1853
        %v1855 = vand.u32 %v1854, 4294901760
        %1856 = vmatpush1.xpose.msra.mxu0 %v1855
        %v1857 = vand.u32 %v1728, 4294901760
        %v1858 = vsub.f32 %v1728, %v1857
        %v1859 = vand.u32 %v1858, 4294901760
        %v1860 = vsub.f32 %v1858, %v1859
        %v1861 = vand.u32 %v1860, 4294901760
        %1862 = vmatprep.subr.mxu0 %v1861
        %v1863 = vand.u32 %v1727, 4294901760
        %v1864 = vsub.f32 %v1727, %v1863
        %v1865 = vand.u32 %v1864, 4294901760
        %v1866 = vsub.f32 %v1864, %v1865
        %v1867 = vand.u32 %v1866, 4294901760
        %1868 = vmatpush1.xpose.msra.mxu0 %v1867
        %1869 = vmatprep.subr.mxu0 0.0
        %1870 = vmatpush1.xpose.msra.mxu0 0.0
        %1871 = vmatprep.subr.mxu0 0.0
        %1872 = vmatpush1.xpose.msra.mxu0 0.0
        %1873 = vmatprep.subr.mxu0 0.0
        %1874 = vmatpush1.xpose.msra.mxu0 0.0
        %1875 = vmatprep.subr.mxu0 0.0
        %1876 = vmatpush1.xpose.msra.mxu0 0.0
        %1877 = vmatprep.subr.mxu0 0.0
        %1878 = vmatpush1.xpose.msra.mxu0 0.0
        %1879 = vmatprep.subr.mxu0 0.0
        %1880 = vmatpush1.xpose.msra.mxu0 0.0
        %1881 = vmatprep.subr.mxu0 0.0
        %1882 = vmatpush1.xpose.msra.mxu0 0.0
        %1883 = vmatprep.subr.mxu0 0.0
        %1884 = vmatpush1.xpose.msra.mxu0 0.0
        %1885 = vmatprep.subr.mxu0 0.0
        %1886 = vmatpush1.xpose.msra.mxu0 0.0
        %1887 = vmatprep.subr.mxu0 0.0
        %1888 = vmatpush1.xpose.msra.mxu0 0.0
        %1889 = vmatprep.subr.mxu0 0.0
        %1890 = vmatpush1.xpose.msra.mxu0 0.0
        %1891 = vmatprep.subr.mxu0 0.0
        %1892 = vmatpush1.xpose.msra.mxu0 0.0
        %1893 = vmatprep.subr.mxu0 0.0
        %1894 = vmatpush1.xpose.msra.mxu0 0.0
        %1895 = vmatprep.subr.mxu0 0.0
        %1896 = vmatpush1.xpose.msra.mxu0 0.0
        %1897 = vmatprep.subr.mxu0 0.0
        %1898 = vmatpush1.xpose.msra.mxu0 0.0
        %1899 = vmatprep.subr.mxu0 0.0
        %1900 = vmatpush1.xpose.msra.mxu0 0.0
        %1901 = vmatprep.subr.mxu0 0.0
        %1902 = vmatpush1.xpose.msra.mxu0 0.0
        %1903 = vmatprep.subr.mxu0 0.0
        %1904 = vmatpush1.xpose.msra.mxu0 0.0
        %1905 = vmatprep.subr.mxu0 0.0
        %1906 = vmatpush1.xpose.msra.mxu0 0.0
        %1907 = vmatprep.subr.mxu0 0.0
        %1908 = vmatpush1.xpose.msra.mxu0 0.0
        %1909 = vmatprep.subr.mxu0 0.0
        %1910 = vmatpush1.xpose.msra.mxu0 0.0
        %1911 = vmatprep.subr.mxu0 0.0
        %1912 = vmatpush1.xpose.msra.mxu0 0.0
        %1913 = vmatprep.subr.mxu0 0.0
        %1914 = vmatpush1.xpose.msra.mxu0 0.0
        %1915 = vmatprep.subr.mxu0 0.0
        %1916 = vmatpush1.xpose.msra.mxu0 0.0
        %1917 = vmatprep.subr.mxu0 0.0
        %1918 = vmatpush1.xpose.msra.mxu0 0.0
        %1919 = vmatprep.subr.mxu0 0.0
        %1920 = vmatpush1.xpose.msra.mxu0 0.0
        %1921 = vmatprep.subr.mxu0 0.0
        %1922 = vmatpush1.xpose.msra.mxu0 0.0
        %1923 = vmatprep.subr.mxu0 0.0
        %1924 = vmatpush1.xpose.msra.mxu0 0.0
        %1925 = vmatprep.subr.mxu0 0.0
        %1926 = vmatpush1.xpose.msra.mxu0 0.0
        %1927 = vmatprep.subr.mxu0 0.0
        %1928 = vmatpush1.xpose.msra.mxu0 0.0
        %v1929 = vand.u32 %v1748, 4294901760
        %1930 = vmatprep.mubr.f32.mxu0 %v1929
        %v1931 = vand.u32 %v1744, 4294901760
        %1932 = vmatmul.mubr.f32.gmra.mrb[0].mxu0 %v1931
        %v1933 = vpop.f32.mrb[0].mxu0
        %v1934 = vadd.f32 %v1842, %v1933
        %v1935 = vpop.f32.mrb[0].mxu0
        %1936 = vdwg.mxu0
        %v1937 = vand.u32 %v1724, 4294901760
        %v1938 = vsub.f32 %v1724, %v1937
        %1939 = vmatprep.subr.mxu0 %v1938
        %v1940 = vand.u32 %v1723, 4294901760
        %v1941 = vsub.f32 %v1723, %v1940
        %1942 = vmatpush1.xpose.msra.mxu0 %v1941
        %v1943 = vand.u32 %v1728, 4294901760
        %v1944 = vsub.f32 %v1728, %v1943
        %1945 = vmatprep.subr.mxu0 %v1944
        %v1946 = vand.u32 %v1727, 4294901760
        %v1947 = vsub.f32 %v1727, %v1946
        %1948 = vmatpush1.xpose.msra.mxu0 %v1947
        %1949 = vmatprep.subr.mxu0 0.0
        %1950 = vmatpush1.xpose.msra.mxu0 0.0
        %1951 = vmatprep.subr.mxu0 0.0
        %1952 = vmatpush1.xpose.msra.mxu0 0.0
        %1953 = vmatprep.subr.mxu0 0.0
        %1954 = vmatpush1.xpose.msra.mxu0 0.0
        %1955 = vmatprep.subr.mxu0 0.0
        %1956 = vmatpush1.xpose.msra.mxu0 0.0
        %1957 = vmatprep.subr.mxu0 0.0
        %1958 = vmatpush1.xpose.msra.mxu0 0.0
        %1959 = vmatprep.subr.mxu0 0.0
        %1960 = vmatpush1.xpose.msra.mxu0 0.0
        %1961 = vmatprep.subr.mxu0 0.0
        %1962 = vmatpush1.xpose.msra.mxu0 0.0
        %1963 = vmatprep.subr.mxu0 0.0
        %1964 = vmatpush1.xpose.msra.mxu0 0.0
        %1965 = vmatprep.subr.mxu0 0.0
        %1966 = vmatpush1.xpose.msra.mxu0 0.0
        %1967 = vmatprep.subr.mxu0 0.0
        %1968 = vmatpush1.xpose.msra.mxu0 0.0
        %1969 = vmatprep.subr.mxu0 0.0
        %1970 = vmatpush1.xpose.msra.mxu0 0.0
        %1971 = vmatprep.subr.mxu0 0.0
        %1972 = vmatpush1.xpose.msra.mxu0 0.0
        %1973 = vmatprep.subr.mxu0 0.0
        %1974 = vmatpush1.xpose.msra.mxu0 0.0
        %1975 = vmatprep.subr.mxu0 0.0
        %1976 = vmatpush1.xpose.msra.mxu0 0.0
        %1977 = vmatprep.subr.mxu0 0.0
        %1978 = vmatpush1.xpose.msra.mxu0 0.0
        %1979 = vmatprep.subr.mxu0 0.0
        %1980 = vmatpush1.xpose.msra.mxu0 0.0
        %1981 = vmatprep.subr.mxu0 0.0
        %1982 = vmatpush1.xpose.msra.mxu0 0.0
        %1983 = vmatprep.subr.mxu0 0.0
        %1984 = vmatpush1.xpose.msra.mxu0 0.0
        %1985 = vmatprep.subr.mxu0 0.0
        %1986 = vmatpush1.xpose.msra.mxu0 0.0
        %1987 = vmatprep.subr.mxu0 0.0
        %1988 = vmatpush1.xpose.msra.mxu0 0.0
        %1989 = vmatprep.subr.mxu0 0.0
        %1990 = vmatpush1.xpose.msra.mxu0 0.0
        %1991 = vmatprep.subr.mxu0 0.0
        %1992 = vmatpush1.xpose.msra.mxu0 0.0
        %1993 = vmatprep.subr.mxu0 0.0
        %1994 = vmatpush1.xpose.msra.mxu0 0.0
        %1995 = vmatprep.subr.mxu0 0.0
        %1996 = vmatpush1.xpose.msra.mxu0 0.0
        %1997 = vmatprep.subr.mxu0 0.0
        %1998 = vmatpush1.xpose.msra.mxu0 0.0
        %1999 = vmatprep.subr.mxu0 0.0
        %2000 = vmatpush1.xpose.msra.mxu0 0.0
        %2001 = vmatprep.subr.mxu0 0.0
        %2002 = vmatpush1.xpose.msra.mxu0 0.0
        %2003 = vmatprep.subr.mxu0 0.0
        %2004 = vmatpush1.xpose.msra.mxu0 0.0
        %2005 = vmatprep.subr.mxu0 0.0
        %2006 = vmatpush1.xpose.msra.mxu0 0.0
        %2007 = vmatprep.subr.mxu0 0.0
        %2008 = vmatpush1.xpose.msra.mxu0 0.0
        %v2009 = vand.u32 %v1748, 4294901760
        %v2010 = vsub.f32 %v1748, %v2009
        %2011 = vmatprep.mubr.f32.mxu0 %v2010
        %v2012 = vand.u32 %v1744, 4294901760
        %v2013 = vsub.f32 %v1744, %v2012
        %2014 = vmatmul.mubr.f32.gmra.mrb[0].mxu0 %v2013
        %v2015 = vpop.f32.mrb[0].mxu0
        %v2016 = vadd.f32 %v1934, %v2015
        %v2017 = vpop.f32.mrb[0].mxu0
        %2018 = vdwg.mxu0
        %v2019 = vand.u32 %v1724, 4294901760
        %2020 = vmatprep.subr.mxu0 %v2019
        %v2021 = vand.u32 %v1723, 4294901760
        %2022 = vmatpush1.xpose.msra.mxu0 %v2021
        %v2023 = vand.u32 %v1728, 4294901760
        %2024 = vmatprep.subr.mxu0 %v2023
        %v2025 = vand.u32 %v1727, 4294901760
        %2026 = vmatpush1.xpose.msra.mxu0 %v2025
        %2027 = vmatprep.subr.mxu0 0.0
        %2028 = vmatpush1.xpose.msra.mxu0 0.0
        %2029 = vmatprep.subr.mxu0 0.0
        %2030 = vmatpush1.xpose.msra.mxu0 0.0
        %2031 = vmatprep.subr.mxu0 0.0
        %2032 = vmatpush1.xpose.msra.mxu0 0.0
        %2033 = vmatprep.subr.mxu0 0.0
        %2034 = vmatpush1.xpose.msra.mxu0 0.0
        %2035 = vmatprep.subr.mxu0 0.0
        %2036 = vmatpush1.xpose.msra.mxu0 0.0
        %2037 = vmatprep.subr.mxu0 0.0
        %2038 = vmatpush1.xpose.msra.mxu0 0.0
        %2039 = vmatprep.subr.mxu0 0.0
        %2040 = vmatpush1.xpose.msra.mxu0 0.0
        %2041 = vmatprep.subr.mxu0 0.0
        %2042 = vmatpush1.xpose.msra.mxu0 0.0
        %2043 = vmatprep.subr.mxu0 0.0
        %2044 = vmatpush1.xpose.msra.mxu0 0.0
        %2045 = vmatprep.subr.mxu0 0.0
        %2046 = vmatpush1.xpose.msra.mxu0 0.0
        %2047 = vmatprep.subr.mxu0 0.0
        %2048 = vmatpush1.xpose.msra.mxu0 0.0
        %2049 = vmatprep.subr.mxu0 0.0
        %2050 = vmatpush1.xpose.msra.mxu0 0.0
        %2051 = vmatprep.subr.mxu0 0.0
        %2052 = vmatpush1.xpose.msra.mxu0 0.0
        %2053 = vmatprep.subr.mxu0 0.0
        %2054 = vmatpush1.xpose.msra.mxu0 0.0
        %2055 = vmatprep.subr.mxu0 0.0
        %2056 = vmatpush1.xpose.msra.mxu0 0.0
        %2057 = vmatprep.subr.mxu0 0.0
        %2058 = vmatpush1.xpose.msra.mxu0 0.0
        %2059 = vmatprep.subr.mxu0 0.0
        %2060 = vmatpush1.xpose.msra.mxu0 0.0
        %2061 = vmatprep.subr.mxu0 0.0
        %2062 = vmatpush1.xpose.msra.mxu0 0.0
        %2063 = vmatprep.subr.mxu0 0.0
        %2064 = vmatpush1.xpose.msra.mxu0 0.0
        %2065 = vmatprep.subr.mxu0 0.0
        %2066 = vmatpush1.xpose.msra.mxu0 0.0
        %2067 = vmatprep.subr.mxu0 0.0
        %2068 = vmatpush1.xpose.msra.mxu0 0.0
        %2069 = vmatprep.subr.mxu0 0.0
        %2070 = vmatpush1.xpose.msra.mxu0 0.0
        %2071 = vmatprep.subr.mxu0 0.0
        %2072 = vmatpush1.xpose.msra.mxu0 0.0
        %2073 = vmatprep.subr.mxu0 0.0
        %2074 = vmatpush1.xpose.msra.mxu0 0.0
        %2075 = vmatprep.subr.mxu0 0.0
        %2076 = vmatpush1.xpose.msra.mxu0 0.0
        %2077 = vmatprep.subr.mxu0 0.0
        %2078 = vmatpush1.xpose.msra.mxu0 0.0
        %2079 = vmatprep.subr.mxu0 0.0
        %2080 = vmatpush1.xpose.msra.mxu0 0.0
        %2081 = vmatprep.subr.mxu0 0.0
        %2082 = vmatpush1.xpose.msra.mxu0 0.0
        %2083 = vmatprep.subr.mxu0 0.0
        %2084 = vmatpush1.xpose.msra.mxu0 0.0
        %2085 = vmatprep.subr.mxu0 0.0
        %2086 = vmatpush1.xpose.msra.mxu0 0.0
        %v2087 = vand.u32 %v1748, 4294901760
        %v2088 = vsub.f32 %v1748, %v2087
        %v2089 = vand.u32 %v2088, 4294901760
        %2090 = vmatprep.mubr.f32.mxu0 %v2089
        %v2091 = vand.u32 %v1744, 4294901760
        %v2092 = vsub.f32 %v1744, %v2091
        %v2093 = vand.u32 %v2092, 4294901760
        %2094 = vmatmul.mubr.f32.gmra.mrb[0].mxu0 %v2093
        %v2095 = vpop.f32.mrb[0].mxu0
        %v2096 = vadd.f32 %v2016, %v2095
        %v2097 = vpop.f32.mrb[0].mxu0
        %2098 = vdwg.mxu0
        %v2099 = vand.u32 %v1724, 4294901760
        %v2100 = vsub.f32 %v1724, %v2099
        %v2101 = vand.u32 %v2100, 4294901760
        %2102 = vmatprep.subr.mxu0 %v2101
        %v2103 = vand.u32 %v1723, 4294901760
        %v2104 = vsub.f32 %v1723, %v2103
        %v2105 = vand.u32 %v2104, 4294901760
        %2106 = vmatpush1.xpose.msra.mxu0 %v2105
        %v2107 = vand.u32 %v1728, 4294901760
        %v2108 = vsub.f32 %v1728, %v2107
        %v2109 = vand.u32 %v2108, 4294901760
        %2110 = vmatprep.subr.mxu0 %v2109
        %v2111 = vand.u32 %v1727, 4294901760
        %v2112 = vsub.f32 %v1727, %v2111
        %v2113 = vand.u32 %v2112, 4294901760
        %2114 = vmatpush1.xpose.msra.mxu0 %v2113
        %2115 = vmatprep.subr.mxu0 0.0
        %2116 = vmatpush1.xpose.msra.mxu0 0.0
        %2117 = vmatprep.subr.mxu0 0.0
        %2118 = vmatpush1.xpose.msra.mxu0 0.0
        %2119 = vmatprep.subr.mxu0 0.0
        %2120 = vmatpush1.xpose.msra.mxu0 0.0
        %2121 = vmatprep.subr.mxu0 0.0
        %2122 = vmatpush1.xpose.msra.mxu0 0.0
        %2123 = vmatprep.subr.mxu0 0.0
        %2124 = vmatpush1.xpose.msra.mxu0 0.0
        %2125 = vmatprep.subr.mxu0 0.0
        %2126 = vmatpush1.xpose.msra.mxu0 0.0
        %2127 = vmatprep.subr.mxu0 0.0
        %2128 = vmatpush1.xpose.msra.mxu0 0.0
        %2129 = vmatprep.subr.mxu0 0.0
        %2130 = vmatpush1.xpose.msra.mxu0 0.0
        %2131 = vmatprep.subr.mxu0 0.0
        %2132 = vmatpush1.xpose.msra.mxu0 0.0
        %2133 = vmatprep.subr.mxu0 0.0
        %2134 = vmatpush1.xpose.msra.mxu0 0.0
        %2135 = vmatprep.subr.mxu0 0.0
        %2136 = vmatpush1.xpose.msra.mxu0 0.0
        %2137 = vmatprep.subr.mxu0 0.0
        %2138 = vmatpush1.xpose.msra.mxu0 0.0
        %2139 = vmatprep.subr.mxu0 0.0
        %2140 = vmatpush1.xpose.msra.mxu0 0.0
        %2141 = vmatprep.subr.mxu0 0.0
        %2142 = vmatpush1.xpose.msra.mxu0 0.0
        %2143 = vmatprep.subr.mxu0 0.0
        %2144 = vmatpush1.xpose.msra.mxu0 0.0
        %2145 = vmatprep.subr.mxu0 0.0
        %2146 = vmatpush1.xpose.msra.mxu0 0.0
        %2147 = vmatprep.subr.mxu0 0.0
        %2148 = vmatpush1.xpose.msra.mxu0 0.0
        %2149 = vmatprep.subr.mxu0 0.0
        %2150 = vmatpush1.xpose.msra.mxu0 0.0
        %2151 = vmatprep.subr.mxu0 0.0
        %2152 = vmatpush1.xpose.msra.mxu0 0.0
        %2153 = vmatprep.subr.mxu0 0.0
        %2154 = vmatpush1.xpose.msra.mxu0 0.0
        %2155 = vmatprep.subr.mxu0 0.0
        %2156 = vmatpush1.xpose.msra.mxu0 0.0
        %2157 = vmatprep.subr.mxu0 0.0
        %2158 = vmatpush1.xpose.msra.mxu0 0.0
        %2159 = vmatprep.subr.mxu0 0.0
        %2160 = vmatpush1.xpose.msra.mxu0 0.0
        %2161 = vmatprep.subr.mxu0 0.0
        %2162 = vmatpush1.xpose.msra.mxu0 0.0
        %2163 = vmatprep.subr.mxu0 0.0
        %2164 = vmatpush1.xpose.msra.mxu0 0.0
        %2165 = vmatprep.subr.mxu0 0.0
        %2166 = vmatpush1.xpose.msra.mxu0 0.0
        %2167 = vmatprep.subr.mxu0 0.0
        %2168 = vmatpush1.xpose.msra.mxu0 0.0
        %2169 = vmatprep.subr.mxu0 0.0
        %2170 = vmatpush1.xpose.msra.mxu0 0.0
        %2171 = vmatprep.subr.mxu0 0.0
        %2172 = vmatpush1.xpose.msra.mxu0 0.0
        %2173 = vmatprep.subr.mxu0 0.0
        %2174 = vmatpush1.xpose.msra.mxu0 0.0
        %v2175 = vand.u32 %v1748, 4294901760
        %2176 = vmatprep.mubr.f32.mxu0 %v2175
        %v2177 = vand.u32 %v1744, 4294901760
        %2178 = vmatmul.mubr.f32.gmra.mrb[0].mxu0 %v2177
        %v2179 = vpop.f32.mrb[0].mxu0
        %v2180 = vadd.f32 %v2096, %v2179
        %v2181 = vpop.f32.mrb[0].mxu0
        %2182 = vdwg.mxu0
        %v2183 = vand.u32 %v1724, 4294901760
        %2184 = vmatprep.subr.mxu0 %v2183
        %v2185 = vand.u32 %v1723, 4294901760
        %2186 = vmatpush1.xpose.msra.mxu0 %v2185
        %v2187 = vand.u32 %v1728, 4294901760
        %2188 = vmatprep.subr.mxu0 %v2187
        %v2189 = vand.u32 %v1727, 4294901760
        %2190 = vmatpush1.xpose.msra.mxu0 %v2189
        %2191 = vmatprep.subr.mxu0 0.0
        %2192 = vmatpush1.xpose.msra.mxu0 0.0
        %2193 = vmatprep.subr.mxu0 0.0
        %2194 = vmatpush1.xpose.msra.mxu0 0.0
        %2195 = vmatprep.subr.mxu0 0.0
        %2196 = vmatpush1.xpose.msra.mxu0 0.0
        %2197 = vmatprep.subr.mxu0 0.0
        %2198 = vmatpush1.xpose.msra.mxu0 0.0
        %2199 = vmatprep.subr.mxu0 0.0
        %2200 = vmatpush1.xpose.msra.mxu0 0.0
        %2201 = vmatprep.subr.mxu0 0.0
        %2202 = vmatpush1.xpose.msra.mxu0 0.0
        %2203 = vmatprep.subr.mxu0 0.0
        %2204 = vmatpush1.xpose.msra.mxu0 0.0
        %2205 = vmatprep.subr.mxu0 0.0
        %2206 = vmatpush1.xpose.msra.mxu0 0.0
        %2207 = vmatprep.subr.mxu0 0.0
        %2208 = vmatpush1.xpose.msra.mxu0 0.0
        %2209 = vmatprep.subr.mxu0 0.0
        %2210 = vmatpush1.xpose.msra.mxu0 0.0
        %2211 = vmatprep.subr.mxu0 0.0
        %2212 = vmatpush1.xpose.msra.mxu0 0.0
        %2213 = vmatprep.subr.mxu0 0.0
        %2214 = vmatpush1.xpose.msra.mxu0 0.0
        %2215 = vmatprep.subr.mxu0 0.0
        %2216 = vmatpush1.xpose.msra.mxu0 0.0
        %2217 = vmatprep.subr.mxu0 0.0
        %2218 = vmatpush1.xpose.msra.mxu0 0.0
        %2219 = vmatprep.subr.mxu0 0.0
        %2220 = vmatpush1.xpose.msra.mxu0 0.0
        %2221 = vmatprep.subr.mxu0 0.0
        %2222 = vmatpush1.xpose.msra.mxu0 0.0
        %2223 = vmatprep.subr.mxu0 0.0
        %2224 = vmatpush1.xpose.msra.mxu0 0.0
        %2225 = vmatprep.subr.mxu0 0.0
        %2226 = vmatpush1.xpose.msra.mxu0 0.0
        %2227 = vmatprep.subr.mxu0 0.0
        %2228 = vmatpush1.xpose.msra.mxu0 0.0
        %2229 = vmatprep.subr.mxu0 0.0
        %2230 = vmatpush1.xpose.msra.mxu0 0.0
        %2231 = vmatprep.subr.mxu0 0.0
        %2232 = vmatpush1.xpose.msra.mxu0 0.0
        %2233 = vmatprep.subr.mxu0 0.0
        %2234 = vmatpush1.xpose.msra.mxu0 0.0
        %2235 = vmatprep.subr.mxu0 0.0
        %2236 = vmatpush1.xpose.msra.mxu0 0.0
        %2237 = vmatprep.subr.mxu0 0.0
        %2238 = vmatpush1.xpose.msra.mxu0 0.0
        %2239 = vmatprep.subr.mxu0 0.0
        %2240 = vmatpush1.xpose.msra.mxu0 0.0
        %2241 = vmatprep.subr.mxu0 0.0
        %2242 = vmatpush1.xpose.msra.mxu0 0.0
        %2243 = vmatprep.subr.mxu0 0.0
        %2244 = vmatpush1.xpose.msra.mxu0 0.0
        %2245 = vmatprep.subr.mxu0 0.0
        %2246 = vmatpush1.xpose.msra.mxu0 0.0
        %2247 = vmatprep.subr.mxu0 0.0
        %2248 = vmatpush1.xpose.msra.mxu0 0.0
        %2249 = vmatprep.subr.mxu0 0.0
        %2250 = vmatpush1.xpose.msra.mxu0 0.0
        %v2251 = vand.u32 %v1748, 4294901760
        %2252 = vmatprep.mubr.f32.mxu0 %v2251
        %v2253 = vand.u32 %v1744, 4294901760
        %2254 = vmatmul.mubr.f32.gmra.mrb[0].mxu0 %v2253
        %v2255 = vpop.f32.mrb[0].mxu0
        %v2256 = vadd.f32 %v2180, %v2255
        %v2257 = vpop.f32.mrb[0].mxu0
        %2258 = vdwg.mxu0
        %v2259 = vand.u32 %v1726, 4294901760
        %2260 = vmatprep.subr.mxu0 %v2259
        %v2261 = vand.u32 %v1725, 4294901760
        %2262 = vmatpush1.xpose.msra.mxu0 %v2261
        %v2263 = vand.u32 %v1730, 4294901760
        %2264 = vmatprep.subr.mxu0 %v2263
        %v2265 = vand.u32 %v1729, 4294901760
        %2266 = vmatpush1.xpose.msra.mxu0 %v2265
        %2267 = vmatprep.subr.mxu0 0.0
        %2268 = vmatpush1.xpose.msra.mxu0 0.0
        %2269 = vmatprep.subr.mxu0 0.0
        %2270 = vmatpush1.xpose.msra.mxu0 0.0
        %2271 = vmatprep.subr.mxu0 0.0
        %2272 = vmatpush1.xpose.msra.mxu0 0.0
        %2273 = vmatprep.subr.mxu0 0.0
        %2274 = vmatpush1.xpose.msra.mxu0 0.0
        %2275 = vmatprep.subr.mxu0 0.0
        %2276 = vmatpush1.xpose.msra.mxu0 0.0
        %2277 = vmatprep.subr.mxu0 0.0
        %2278 = vmatpush1.xpose.msra.mxu0 0.0
        %2279 = vmatprep.subr.mxu0 0.0
        %2280 = vmatpush1.xpose.msra.mxu0 0.0
        %2281 = vmatprep.subr.mxu0 0.0
        %2282 = vmatpush1.xpose.msra.mxu0 0.0
        %2283 = vmatprep.subr.mxu0 0.0
        %2284 = vmatpush1.xpose.msra.mxu0 0.0
        %2285 = vmatprep.subr.mxu0 0.0
        %2286 = vmatpush1.xpose.msra.mxu0 0.0
        %2287 = vmatprep.subr.mxu0 0.0
        %2288 = vmatpush1.xpose.msra.mxu0 0.0
        %2289 = vmatprep.subr.mxu0 0.0
        %2290 = vmatpush1.xpose.msra.mxu0 0.0
        %2291 = vmatprep.subr.mxu0 0.0
        %2292 = vmatpush1.xpose.msra.mxu0 0.0
        %2293 = vmatprep.subr.mxu0 0.0
        %2294 = vmatpush1.xpose.msra.mxu0 0.0
        %2295 = vmatprep.subr.mxu0 0.0
        %2296 = vmatpush1.xpose.msra.mxu0 0.0
        %2297 = vmatprep.subr.mxu0 0.0
        %2298 = vmatpush1.xpose.msra.mxu0 0.0
        %2299 = vmatprep.subr.mxu0 0.0
        %2300 = vmatpush1.xpose.msra.mxu0 0.0
        %2301 = vmatprep.subr.mxu0 0.0
        %2302 = vmatpush1.xpose.msra.mxu0 0.0
        %2303 = vmatprep.subr.mxu0 0.0
        %2304 = vmatpush1.xpose.msra.mxu0 0.0
        %2305 = vmatprep.subr.mxu0 0.0
        %2306 = vmatpush1.xpose.msra.mxu0 0.0
        %2307 = vmatprep.subr.mxu0 0.0
        %2308 = vmatpush1.xpose.msra.mxu0 0.0
        %2309 = vmatprep.subr.mxu0 0.0
        %2310 = vmatpush1.xpose.msra.mxu0 0.0
        %2311 = vmatprep.subr.mxu0 0.0
        %2312 = vmatpush1.xpose.msra.mxu0 0.0
        %2313 = vmatprep.subr.mxu0 0.0
        %2314 = vmatpush1.xpose.msra.mxu0 0.0
        %2315 = vmatprep.subr.mxu0 0.0
        %2316 = vmatpush1.xpose.msra.mxu0 0.0
        %2317 = vmatprep.subr.mxu0 0.0
        %2318 = vmatpush1.xpose.msra.mxu0 0.0
        %2319 = vmatprep.subr.mxu0 0.0
        %2320 = vmatpush1.xpose.msra.mxu0 0.0
        %2321 = vmatprep.subr.mxu0 0.0
        %2322 = vmatpush1.xpose.msra.mxu0 0.0
        %2323 = vmatprep.subr.mxu0 0.0
        %2324 = vmatpush1.xpose.msra.mxu0 0.0
        %2325 = vmatprep.subr.mxu0 0.0
        %2326 = vmatpush1.xpose.msra.mxu0 0.0
        %v2327 = vand.u32 %v1756, 4294901760
        %v2328 = vsub.f32 %v1756, %v2327
        %v2329 = vand.u32 %v2328, 4294901760
        %v2330 = vsub.f32 %v2328, %v2329
        %v2331 = vand.u32 %v2330, 4294901760
        %2332 = vmatprep.mubr.f32.mxu0 %v2331
        %v2333 = vand.u32 %v1752, 4294901760
        %v2334 = vsub.f32 %v1752, %v2333
        %v2335 = vand.u32 %v2334, 4294901760
        %v2336 = vsub.f32 %v2334, %v2335
        %v2337 = vand.u32 %v2336, 4294901760
        %2338 = vmatmul.mubr.f32.gmra.mrb[0].mxu0 %v2337
        %v2339 = vpop.f32.mrb[0].mxu0
        %v2340 = vadd.f32 %v2256, %v2339
        %v2341 = vpop.f32.mrb[0].mxu0
        %2342 = vdwg.mxu0
        %v2343 = vand.u32 %v1726, 4294901760
        %v2344 = vsub.f32 %v1726, %v2343
        %v2345 = vand.u32 %v2344, 4294901760
        %v2346 = vsub.f32 %v2344, %v2345
        %v2347 = vand.u32 %v2346, 4294901760
        %2348 = vmatprep.subr.mxu0 %v2347
        %v2349 = vand.u32 %v1725, 4294901760
        %v2350 = vsub.f32 %v1725, %v2349
        %v2351 = vand.u32 %v2350, 4294901760
        %v2352 = vsub.f32 %v2350, %v2351
        %v2353 = vand.u32 %v2352, 4294901760
        %2354 = vmatpush1.xpose.msra.mxu0 %v2353
        %v2355 = vand.u32 %v1730, 4294901760
        %v2356 = vsub.f32 %v1730, %v2355
        %v2357 = vand.u32 %v2356, 4294901760
        %v2358 = vsub.f32 %v2356, %v2357
        %v2359 = vand.u32 %v2358, 4294901760
        %2360 = vmatprep.subr.mxu0 %v2359
        %v2361 = vand.u32 %v1729, 4294901760
        %v2362 = vsub.f32 %v1729, %v2361
        %v2363 = vand.u32 %v2362, 4294901760
        %v2364 = vsub.f32 %v2362, %v2363
        %v2365 = vand.u32 %v2364, 4294901760
        %2366 = vmatpush1.xpose.msra.mxu0 %v2365
        %2367 = vmatprep.subr.mxu0 0.0
        %2368 = vmatpush1.xpose.msra.mxu0 0.0
        %2369 = vmatprep.subr.mxu0 0.0
        %2370 = vmatpush1.xpose.msra.mxu0 0.0
        %2371 = vmatprep.subr.mxu0 0.0
        %2372 = vmatpush1.xpose.msra.mxu0 0.0
        %2373 = vmatprep.subr.mxu0 0.0
        %2374 = vmatpush1.xpose.msra.mxu0 0.0
        %2375 = vmatprep.subr.mxu0 0.0
        %2376 = vmatpush1.xpose.msra.mxu0 0.0
        %2377 = vmatprep.subr.mxu0 0.0
        %2378 = vmatpush1.xpose.msra.mxu0 0.0
        %2379 = vmatprep.subr.mxu0 0.0
        %2380 = vmatpush1.xpose.msra.mxu0 0.0
        %2381 = vmatprep.subr.mxu0 0.0
        %2382 = vmatpush1.xpose.msra.mxu0 0.0
        %2383 = vmatprep.subr.mxu0 0.0
        %2384 = vmatpush1.xpose.msra.mxu0 0.0
        %2385 = vmatprep.subr.mxu0 0.0
        %2386 = vmatpush1.xpose.msra.mxu0 0.0
        %2387 = vmatprep.subr.mxu0 0.0
        %2388 = vmatpush1.xpose.msra.mxu0 0.0
        %2389 = vmatprep.subr.mxu0 0.0
        %2390 = vmatpush1.xpose.msra.mxu0 0.0
        %2391 = vmatprep.subr.mxu0 0.0
        %2392 = vmatpush1.xpose.msra.mxu0 0.0
        %2393 = vmatprep.subr.mxu0 0.0
        %2394 = vmatpush1.xpose.msra.mxu0 0.0
        %2395 = vmatprep.subr.mxu0 0.0
        %2396 = vmatpush1.xpose.msra.mxu0 0.0
        %2397 = vmatprep.subr.mxu0 0.0
        %2398 = vmatpush1.xpose.msra.mxu0 0.0
        %2399 = vmatprep.subr.mxu0 0.0
        %2400 = vmatpush1.xpose.msra.mxu0 0.0
        %2401 = vmatprep.subr.mxu0 0.0
        %2402 = vmatpush1.xpose.msra.mxu0 0.0
        %2403 = vmatprep.subr.mxu0 0.0
        %2404 = vmatpush1.xpose.msra.mxu0 0.0
        %2405 = vmatprep.subr.mxu0 0.0
        %2406 = vmatpush1.xpose.msra.mxu0 0.0
        %2407 = vmatprep.subr.mxu0 0.0
        %2408 = vmatpush1.xpose.msra.mxu0 0.0
        %2409 = vmatprep.subr.mxu0 0.0
        %2410 = vmatpush1.xpose.msra.mxu0 0.0
        %2411 = vmatprep.subr.mxu0 0.0
        %2412 = vmatpush1.xpose.msra.mxu0 0.0
        %2413 = vmatprep.subr.mxu0 0.0
        %2414 = vmatpush1.xpose.msra.mxu0 0.0
        %2415 = vmatprep.subr.mxu0 0.0
        %2416 = vmatpush1.xpose.msra.mxu0 0.0
        %2417 = vmatprep.subr.mxu0 0.0
        %2418 = vmatpush1.xpose.msra.mxu0 0.0
        %2419 = vmatprep.subr.mxu0 0.0
        %2420 = vmatpush1.xpose.msra.mxu0 0.0
        %2421 = vmatprep.subr.mxu0 0.0
        %2422 = vmatpush1.xpose.msra.mxu0 0.0
        %2423 = vmatprep.subr.mxu0 0.0
        %2424 = vmatpush1.xpose.msra.mxu0 0.0
        %2425 = vmatprep.subr.mxu0 0.0
        %2426 = vmatpush1.xpose.msra.mxu0 0.0
        %v2427 = vand.u32 %v1756, 4294901760
        %2428 = vmatprep.mubr.f32.mxu0 %v2427
        %v2429 = vand.u32 %v1752, 4294901760
        %2430 = vmatmul.mubr.f32.gmra.mrb[0].mxu0 %v2429
        %v2431 = vpop.f32.mrb[0].mxu0
        %v2432 = vadd.f32 %v2340, %v2431
        %v2433 = vpop.f32.mrb[0].mxu0
        %2434 = vdwg.mxu0
        %v2435 = vand.u32 %v1726, 4294901760
        %v2436 = vsub.f32 %v1726, %v2435
        %2437 = vmatprep.subr.mxu0 %v2436
        %v2438 = vand.u32 %v1725, 4294901760
        %v2439 = vsub.f32 %v1725, %v2438
        %2440 = vmatpush1.xpose.msra.mxu0 %v2439
        %v2441 = vand.u32 %v1730, 4294901760
        %v2442 = vsub.f32 %v1730, %v2441
        %2443 = vmatprep.subr.mxu0 %v2442
        %v2444 = vand.u32 %v1729, 4294901760
        %v2445 = vsub.f32 %v1729, %v2444
        %2446 = vmatpush1.xpose.msra.mxu0 %v2445
        %2447 = vmatprep.subr.mxu0 0.0
        %2448 = vmatpush1.xpose.msra.mxu0 0.0
        %2449 = vmatprep.subr.mxu0 0.0
        %2450 = vmatpush1.xpose.msra.mxu0 0.0
        %2451 = vmatprep.subr.mxu0 0.0
        %2452 = vmatpush1.xpose.msra.mxu0 0.0
        %2453 = vmatprep.subr.mxu0 0.0
        %2454 = vmatpush1.xpose.msra.mxu0 0.0
        %2455 = vmatprep.subr.mxu0 0.0
        %2456 = vmatpush1.xpose.msra.mxu0 0.0
        %2457 = vmatprep.subr.mxu0 0.0
        %2458 = vmatpush1.xpose.msra.mxu0 0.0
        %2459 = vmatprep.subr.mxu0 0.0
        %2460 = vmatpush1.xpose.msra.mxu0 0.0
        %2461 = vmatprep.subr.mxu0 0.0
        %2462 = vmatpush1.xpose.msra.mxu0 0.0
        %2463 = vmatprep.subr.mxu0 0.0
        %2464 = vmatpush1.xpose.msra.mxu0 0.0
        %2465 = vmatprep.subr.mxu0 0.0
        %2466 = vmatpush1.xpose.msra.mxu0 0.0
        %2467 = vmatprep.subr.mxu0 0.0
        %2468 = vmatpush1.xpose.msra.mxu0 0.0
        %2469 = vmatprep.subr.mxu0 0.0
        %2470 = vmatpush1.xpose.msra.mxu0 0.0
        %2471 = vmatprep.subr.mxu0 0.0
        %2472 = vmatpush1.xpose.msra.mxu0 0.0
        %2473 = vmatprep.subr.mxu0 0.0
        %2474 = vmatpush1.xpose.msra.mxu0 0.0
        %2475 = vmatprep.subr.mxu0 0.0
        %2476 = vmatpush1.xpose.msra.mxu0 0.0
        %2477 = vmatprep.subr.mxu0 0.0
        %2478 = vmatpush1.xpose.msra.mxu0 0.0
        %2479 = vmatprep.subr.mxu0 0.0
        %2480 = vmatpush1.xpose.msra.mxu0 0.0
        %2481 = vmatprep.subr.mxu0 0.0
        %2482 = vmatpush1.xpose.msra.mxu0 0.0
        %2483 = vmatprep.subr.mxu0 0.0
        %2484 = vmatpush1.xpose.msra.mxu0 0.0
        %2485 = vmatprep.subr.mxu0 0.0
        %2486 = vmatpush1.xpose.msra.mxu0 0.0
        %2487 = vmatprep.subr.mxu0 0.0
        %2488 = vmatpush1.xpose.msra.mxu0 0.0
        %2489 = vmatprep.subr.mxu0 0.0
        %2490 = vmatpush1.xpose.msra.mxu0 0.0
        %2491 = vmatprep.subr.mxu0 0.0
        %2492 = vmatpush1.xpose.msra.mxu0 0.0
        %2493 = vmatprep.subr.mxu0 0.0
        %2494 = vmatpush1.xpose.msra.mxu0 0.0
        %2495 = vmatprep.subr.mxu0 0.0
        %2496 = vmatpush1.xpose.msra.mxu0 0.0
        %2497 = vmatprep.subr.mxu0 0.0
        %2498 = vmatpush1.xpose.msra.mxu0 0.0
        %2499 = vmatprep.subr.mxu0 0.0
        %2500 = vmatpush1.xpose.msra.mxu0 0.0
        %2501 = vmatprep.subr.mxu0 0.0
        %2502 = vmatpush1.xpose.msra.mxu0 0.0
        %2503 = vmatprep.subr.mxu0 0.0
        %2504 = vmatpush1.xpose.msra.mxu0 0.0
        %2505 = vmatprep.subr.mxu0 0.0
        %2506 = vmatpush1.xpose.msra.mxu0 0.0
        %v2507 = vand.u32 %v1756, 4294901760
        %v2508 = vsub.f32 %v1756, %v2507
        %2509 = vmatprep.mubr.f32.mxu0 %v2508
        %v2510 = vand.u32 %v1752, 4294901760
        %v2511 = vsub.f32 %v1752, %v2510
        %2512 = vmatmul.mubr.f32.gmra.mrb[0].mxu0 %v2511
        %v2513 = vpop.f32.mrb[0].mxu0
        %v2514 = vadd.f32 %v2432, %v2513
        %v2515 = vpop.f32.mrb[0].mxu0
        %2516 = vdwg.mxu0
        %v2517 = vand.u32 %v1726, 4294901760
        %2518 = vmatprep.subr.mxu0 %v2517
        %v2519 = vand.u32 %v1725, 4294901760
        %2520 = vmatpush1.xpose.msra.mxu0 %v2519
        %v2521 = vand.u32 %v1730, 4294901760
        %2522 = vmatprep.subr.mxu0 %v2521
        %v2523 = vand.u32 %v1729, 4294901760
        %2524 = vmatpush1.xpose.msra.mxu0 %v2523
        %2525 = vmatprep.subr.mxu0 0.0
        %2526 = vmatpush1.xpose.msra.mxu0 0.0
        %2527 = vmatprep.subr.mxu0 0.0
        %2528 = vmatpush1.xpose.msra.mxu0 0.0
        %2529 = vmatprep.subr.mxu0 0.0
        %2530 = vmatpush1.xpose.msra.mxu0 0.0
        %2531 = vmatprep.subr.mxu0 0.0
        %2532 = vmatpush1.xpose.msra.mxu0 0.0
        %2533 = vmatprep.subr.mxu0 0.0
        %2534 = vmatpush1.xpose.msra.mxu0 0.0
        %2535 = vmatprep.subr.mxu0 0.0
        %2536 = vmatpush1.xpose.msra.mxu0 0.0
        %2537 = vmatprep.subr.mxu0 0.0
        %2538 = vmatpush1.xpose.msra.mxu0 0.0
        %2539 = vmatprep.subr.mxu0 0.0
        %2540 = vmatpush1.xpose.msra.mxu0 0.0
        %2541 = vmatprep.subr.mxu0 0.0
        %2542 = vmatpush1.xpose.msra.mxu0 0.0
        %2543 = vmatprep.subr.mxu0 0.0
        %2544 = vmatpush1.xpose.msra.mxu0 0.0
        %2545 = vmatprep.subr.mxu0 0.0
        %2546 = vmatpush1.xpose.msra.mxu0 0.0
        %2547 = vmatprep.subr.mxu0 0.0
        %2548 = vmatpush1.xpose.msra.mxu0 0.0
        %2549 = vmatprep.subr.mxu0 0.0
        %2550 = vmatpush1.xpose.msra.mxu0 0.0
        %2551 = vmatprep.subr.mxu0 0.0
        %2552 = vmatpush1.xpose.msra.mxu0 0.0
        %2553 = vmatprep.subr.mxu0 0.0
        %2554 = vmatpush1.xpose.msra.mxu0 0.0
        %2555 = vmatprep.subr.mxu0 0.0
        %2556 = vmatpush1.xpose.msra.mxu0 0.0
        %2557 = vmatprep.subr.mxu0 0.0
        %2558 = vmatpush1.xpose.msra.mxu0 0.0
        %2559 = vmatprep.subr.mxu0 0.0
        %2560 = vmatpush1.xpose.msra.mxu0 0.0
        %2561 = vmatprep.subr.mxu0 0.0
        %2562 = vmatpush1.xpose.msra.mxu0 0.0
        %2563 = vmatprep.subr.mxu0 0.0
        %2564 = vmatpush1.xpose.msra.mxu0 0.0
        %2565 = vmatprep.subr.mxu0 0.0
        %2566 = vmatpush1.xpose.msra.mxu0 0.0
        %2567 = vmatprep.subr.mxu0 0.0
        %2568 = vmatpush1.xpose.msra.mxu0 0.0
        %2569 = vmatprep.subr.mxu0 0.0
        %2570 = vmatpush1.xpose.msra.mxu0 0.0
        %2571 = vmatprep.subr.mxu0 0.0
        %2572 = vmatpush1.xpose.msra.mxu0 0.0
        %2573 = vmatprep.subr.mxu0 0.0
        %2574 = vmatpush1.xpose.msra.mxu0 0.0
        %2575 = vmatprep.subr.mxu0 0.0
        %2576 = vmatpush1.xpose.msra.mxu0 0.0
        %2577 = vmatprep.subr.mxu0 0.0
        %2578 = vmatpush1.xpose.msra.mxu0 0.0
        %2579 = vmatprep.subr.mxu0 0.0
        %2580 = vmatpush1.xpose.msra.mxu0 0.0
        %2581 = vmatprep.subr.mxu0 0.0
        %2582 = vmatpush1.xpose.msra.mxu0 0.0
        %2583 = vmatprep.subr.mxu0 0.0
        %2584 = vmatpush1.xpose.msra.mxu0 0.0
        %v2585 = vand.u32 %v1756, 4294901760
        %v2586 = vsub.f32 %v1756, %v2585
        %v2587 = vand.u32 %v2586, 4294901760
        %2588 = vmatprep.mubr.f32.mxu0 %v2587
        %v2589 = vand.u32 %v1752, 4294901760
        %v2590 = vsub.f32 %v1752, %v2589
        %v2591 = vand.u32 %v2590, 4294901760
        %2592 = vmatmul.mubr.f32.gmra.mrb[0].mxu0 %v2591
        %v2593 = vpop.f32.mrb[0].mxu0
        %v2594 = vadd.f32 %v2514, %v2593
        %v2595 = vpop.f32.mrb[0].mxu0
        %2596 = vdwg.mxu0
        %v2597 = vand.u32 %v1726, 4294901760
        %v2598 = vsub.f32 %v1726, %v2597
        %v2599 = vand.u32 %v2598, 4294901760
        %2600 = vmatprep.subr.mxu0 %v2599
        %v2601 = vand.u32 %v1725, 4294901760
        %v2602 = vsub.f32 %v1725, %v2601
        %v2603 = vand.u32 %v2602, 4294901760
        %2604 = vmatpush1.xpose.msra.mxu0 %v2603
        %v2605 = vand.u32 %v1730, 4294901760
        %v2606 = vsub.f32 %v1730, %v2605
        %v2607 = vand.u32 %v2606, 4294901760
        %2608 = vmatprep.subr.mxu0 %v2607
        %v2609 = vand.u32 %v1729, 4294901760
        %v2610 = vsub.f32 %v1729, %v2609
        %v2611 = vand.u32 %v2610, 4294901760
        %2612 = vmatpush1.xpose.msra.mxu0 %v2611
        %2613 = vmatprep.subr.mxu0 0.0
        %2614 = vmatpush1.xpose.msra.mxu0 0.0
        %2615 = vmatprep.subr.mxu0 0.0
        %2616 = vmatpush1.xpose.msra.mxu0 0.0
        %2617 = vmatprep.subr.mxu0 0.0
        %2618 = vmatpush1.xpose.msra.mxu0 0.0
        %2619 = vmatprep.subr.mxu0 0.0
        %2620 = vmatpush1.xpose.msra.mxu0 0.0
        %2621 = vmatprep.subr.mxu0 0.0
        %2622 = vmatpush1.xpose.msra.mxu0 0.0
        %2623 = vmatprep.subr.mxu0 0.0
        %2624 = vmatpush1.xpose.msra.mxu0 0.0
        %2625 = vmatprep.subr.mxu0 0.0
        %2626 = vmatpush1.xpose.msra.mxu0 0.0
        %2627 = vmatprep.subr.mxu0 0.0
        %2628 = vmatpush1.xpose.msra.mxu0 0.0
        %2629 = vmatprep.subr.mxu0 0.0
        %2630 = vmatpush1.xpose.msra.mxu0 0.0
        %2631 = vmatprep.subr.mxu0 0.0
        %2632 = vmatpush1.xpose.msra.mxu0 0.0
        %2633 = vmatprep.subr.mxu0 0.0
        %2634 = vmatpush1.xpose.msra.mxu0 0.0
        %2635 = vmatprep.subr.mxu0 0.0
        %2636 = vmatpush1.xpose.msra.mxu0 0.0
        %2637 = vmatprep.subr.mxu0 0.0
        %2638 = vmatpush1.xpose.msra.mxu0 0.0
        %2639 = vmatprep.subr.mxu0 0.0
        %2640 = vmatpush1.xpose.msra.mxu0 0.0
        %2641 = vmatprep.subr.mxu0 0.0
        %2642 = vmatpush1.xpose.msra.mxu0 0.0
        %2643 = vmatprep.subr.mxu0 0.0
        %2644 = vmatpush1.xpose.msra.mxu0 0.0
        %2645 = vmatprep.subr.mxu0 0.0
        %2646 = vmatpush1.xpose.msra.mxu0 0.0
        %2647 = vmatprep.subr.mxu0 0.0
        %2648 = vmatpush1.xpose.msra.mxu0 0.0
        %2649 = vmatprep.subr.mxu0 0.0
        %2650 = vmatpush1.xpose.msra.mxu0 0.0
        %2651 = vmatprep.subr.mxu0 0.0
        %2652 = vmatpush1.xpose.msra.mxu0 0.0
        %2653 = vmatprep.subr.mxu0 0.0
        %2654 = vmatpush1.xpose.msra.mxu0 0.0
        %2655 = vmatprep.subr.mxu0 0.0
        %2656 = vmatpush1.xpose.msra.mxu0 0.0
        %2657 = vmatprep.subr.mxu0 0.0
        %2658 = vmatpush1.xpose.msra.mxu0 0.0
        %2659 = vmatprep.subr.mxu0 0.0
        %2660 = vmatpush1.xpose.msra.mxu0 0.0
        %2661 = vmatprep.subr.mxu0 0.0
        %2662 = vmatpush1.xpose.msra.mxu0 0.0
        %2663 = vmatprep.subr.mxu0 0.0
        %2664 = vmatpush1.xpose.msra.mxu0 0.0
        %2665 = vmatprep.subr.mxu0 0.0
        %2666 = vmatpush1.xpose.msra.mxu0 0.0
        %2667 = vmatprep.subr.mxu0 0.0
        %2668 = vmatpush1.xpose.msra.mxu0 0.0
        %2669 = vmatprep.subr.mxu0 0.0
        %2670 = vmatpush1.xpose.msra.mxu0 0.0
        %2671 = vmatprep.subr.mxu0 0.0
        %2672 = vmatpush1.xpose.msra.mxu0 0.0
        %v2673 = vand.u32 %v1756, 4294901760
        %2674 = vmatprep.mubr.f32.mxu0 %v2673
        %v2675 = vand.u32 %v1752, 4294901760
        %2676 = vmatmul.mubr.f32.gmra.mrb[0].mxu0 %v2675
        %v2677 = vpop.f32.mrb[0].mxu0
        %v2678 = vadd.f32 %v2594, %v2677
        %v2679 = vpop.f32.mrb[0].mxu0
        %2680 = vdwg.mxu0
        %v2681 = vand.u32 %v1726, 4294901760
        %2682 = vmatprep.subr.mxu0 %v2681
        %v2683 = vand.u32 %v1725, 4294901760
        %2684 = vmatpush1.xpose.msra.mxu0 %v2683
        %v2685 = vand.u32 %v1730, 4294901760
        %2686 = vmatprep.subr.mxu0 %v2685
        %v2687 = vand.u32 %v1729, 4294901760
        %2688 = vmatpush1.xpose.msra.mxu0 %v2687
        %2689 = vmatprep.subr.mxu0 0.0
        %2690 = vmatpush1.xpose.msra.mxu0 0.0
        %2691 = vmatprep.subr.mxu0 0.0
        %2692 = vmatpush1.xpose.msra.mxu0 0.0
        %2693 = vmatprep.subr.mxu0 0.0
        %2694 = vmatpush1.xpose.msra.mxu0 0.0
        %2695 = vmatprep.subr.mxu0 0.0
        %2696 = vmatpush1.xpose.msra.mxu0 0.0
        %2697 = vmatprep.subr.mxu0 0.0
        %2698 = vmatpush1.xpose.msra.mxu0 0.0
        %2699 = vmatprep.subr.mxu0 0.0
        %2700 = vmatpush1.xpose.msra.mxu0 0.0
        %2701 = vmatprep.subr.mxu0 0.0
        %2702 = vmatpush1.xpose.msra.mxu0 0.0
        %2703 = vmatprep.subr.mxu0 0.0
        %2704 = vmatpush1.xpose.msra.mxu0 0.0
        %2705 = vmatprep.subr.mxu0 0.0
        %2706 = vmatpush1.xpose.msra.mxu0 0.0
        %2707 = vmatprep.subr.mxu0 0.0
        %2708 = vmatpush1.xpose.msra.mxu0 0.0
        %2709 = vmatprep.subr.mxu0 0.0
        %2710 = vmatpush1.xpose.msra.mxu0 0.0
        %2711 = vmatprep.subr.mxu0 0.0
        %2712 = vmatpush1.xpose.msra.mxu0 0.0
        %2713 = vmatprep.subr.mxu0 0.0
        %2714 = vmatpush1.xpose.msra.mxu0 0.0
        %2715 = vmatprep.subr.mxu0 0.0
        %2716 = vmatpush1.xpose.msra.mxu0 0.0
        %2717 = vmatprep.subr.mxu0 0.0
        %2718 = vmatpush1.xpose.msra.mxu0 0.0
        %2719 = vmatprep.subr.mxu0 0.0
        %2720 = vmatpush1.xpose.msra.mxu0 0.0
        %2721 = vmatprep.subr.mxu0 0.0
        %2722 = vmatpush1.xpose.msra.mxu0 0.0
        %2723 = vmatprep.subr.mxu0 0.0
        %2724 = vmatpush1.xpose.msra.mxu0 0.0
        %2725 = vmatprep.subr.mxu0 0.0
        %2726 = vmatpush1.xpose.msra.mxu0 0.0
        %2727 = vmatprep.subr.mxu0 0.0
        %2728 = vmatpush1.xpose.msra.mxu0 0.0
        %2729 = vmatprep.subr.mxu0 0.0
        %2730 = vmatpush1.xpose.msra.mxu0 0.0
        %2731 = vmatprep.subr.mxu0 0.0
        %2732 = vmatpush1.xpose.msra.mxu0 0.0
        %2733 = vmatprep.subr.mxu0 0.0
        %2734 = vmatpush1.xpose.msra.mxu0 0.0
        %2735 = vmatprep.subr.mxu0 0.0
        %2736 = vmatpush1.xpose.msra.mxu0 0.0
        %2737 = vmatprep.subr.mxu0 0.0
        %2738 = vmatpush1.xpose.msra.mxu0 0.0
        %2739 = vmatprep.subr.mxu0 0.0
        %2740 = vmatpush1.xpose.msra.mxu0 0.0
        %2741 = vmatprep.subr.mxu0 0.0
        %2742 = vmatpush1.xpose.msra.mxu0 0.0
        %2743 = vmatprep.subr.mxu0 0.0
        %2744 = vmatpush1.xpose.msra.mxu0 0.0
        %2745 = vmatprep.subr.mxu0 0.0
        %2746 = vmatpush1.xpose.msra.mxu0 0.0
        %2747 = vmatprep.subr.mxu0 0.0
        %2748 = vmatpush1.xpose.msra.mxu0 0.0
        %v2749 = vand.u32 %v1756, 4294901760
        %2750 = vmatprep.mubr.f32.mxu0 %v2749
        %v2751 = vand.u32 %v1752, 4294901760
        %2752 = vmatmul.mubr.f32.gmra.mrb[0].mxu0 %v2751
        %v2753 = vpop.f32.mrb[0].mxu0
        %v2754 = vadd.f32 %v2678, %v2753
        %v2755 = vpop.f32.mrb[0].mxu0
        %2756 = vdwg.mxu0
        %v2757 = vand.u32 %v1732, 4294901760
        %2758 = vmatprep.subr.mxu0 %v2757
        %v2759 = vand.u32 %v1731, 4294901760
        %2760 = vmatpush1.xpose.msra.mxu0 %v2759
        %v2761 = vand.u32 %v1736, 4294901760
        %2762 = vmatprep.subr.mxu0 %v2761
        %v2763 = vand.u32 %v1735, 4294901760
        %2764 = vmatpush1.xpose.msra.mxu0 %v2763
        %2765 = vmatprep.subr.mxu0 0.0
        %2766 = vmatpush1.xpose.msra.mxu0 0.0
        %2767 = vmatprep.subr.mxu0 0.0
        %2768 = vmatpush1.xpose.msra.mxu0 0.0
        %2769 = vmatprep.subr.mxu0 0.0
        %2770 = vmatpush1.xpose.msra.mxu0 0.0
        %2771 = vmatprep.subr.mxu0 0.0
        %2772 = vmatpush1.xpose.msra.mxu0 0.0
        %2773 = vmatprep.subr.mxu0 0.0
        %2774 = vmatpush1.xpose.msra.mxu0 0.0
        %2775 = vmatprep.subr.mxu0 0.0
        %2776 = vmatpush1.xpose.msra.mxu0 0.0
        %2777 = vmatprep.subr.mxu0 0.0
        %2778 = vmatpush1.xpose.msra.mxu0 0.0
        %2779 = vmatprep.subr.mxu0 0.0
        %2780 = vmatpush1.xpose.msra.mxu0 0.0
        %2781 = vmatprep.subr.mxu0 0.0
        %2782 = vmatpush1.xpose.msra.mxu0 0.0
        %2783 = vmatprep.subr.mxu0 0.0
        %2784 = vmatpush1.xpose.msra.mxu0 0.0
        %2785 = vmatprep.subr.mxu0 0.0
        %2786 = vmatpush1.xpose.msra.mxu0 0.0
        %2787 = vmatprep.subr.mxu0 0.0
        %2788 = vmatpush1.xpose.msra.mxu0 0.0
        %2789 = vmatprep.subr.mxu0 0.0
        %2790 = vmatpush1.xpose.msra.mxu0 0.0
        %2791 = vmatprep.subr.mxu0 0.0
        %2792 = vmatpush1.xpose.msra.mxu0 0.0
        %2793 = vmatprep.subr.mxu0 0.0
        %2794 = vmatpush1.xpose.msra.mxu0 0.0
        %2795 = vmatprep.subr.mxu0 0.0
        %2796 = vmatpush1.xpose.msra.mxu0 0.0
        %2797 = vmatprep.subr.mxu0 0.0
        %2798 = vmatpush1.xpose.msra.mxu0 0.0
        %2799 = vmatprep.subr.mxu0 0.0
        %2800 = vmatpush1.xpose.msra.mxu0 0.0
        %2801 = vmatprep.subr.mxu0 0.0
        %2802 = vmatpush1.xpose.msra.mxu0 0.0
        %2803 = vmatprep.subr.mxu0 0.0
        %2804 = vmatpush1.xpose.msra.mxu0 0.0
        %2805 = vmatprep.subr.mxu0 0.0
        %2806 = vmatpush1.xpose.msra.mxu0 0.0
        %2807 = vmatprep.subr.mxu0 0.0
        %2808 = vmatpush1.xpose.msra.mxu0 0.0
        %2809 = vmatprep.subr.mxu0 0.0
        %2810 = vmatpush1.xpose.msra.mxu0 0.0
        %2811 = vmatprep.subr.mxu0 0.0
        %2812 = vmatpush1.xpose.msra.mxu0 0.0
        %2813 = vmatprep.subr.mxu0 0.0
        %2814 = vmatpush1.xpose.msra.mxu0 0.0
        %2815 = vmatprep.subr.mxu0 0.0
        %2816 = vmatpush1.xpose.msra.mxu0 0.0
        %2817 = vmatprep.subr.mxu0 0.0
        %2818 = vmatpush1.xpose.msra.mxu0 0.0
        %2819 = vmatprep.subr.mxu0 0.0
        %2820 = vmatpush1.xpose.msra.mxu0 0.0
        %2821 = vmatprep.subr.mxu0 0.0
        %2822 = vmatpush1.xpose.msra.mxu0 0.0
        %2823 = vmatprep.subr.mxu0 0.0
        %2824 = vmatpush1.xpose.msra.mxu0 0.0
        %v2825 = vand.u32 %v1748, 4294901760
        %v2826 = vsub.f32 %v1748, %v2825
        %v2827 = vand.u32 %v2826, 4294901760
        %v2828 = vsub.f32 %v2826, %v2827
        %v2829 = vand.u32 %v2828, 4294901760
        %2830 = vmatprep.mubr.f32.mxu0 %v2829
        %v2831 = vand.u32 %v1744, 4294901760
        %v2832 = vsub.f32 %v1744, %v2831
        %v2833 = vand.u32 %v2832, 4294901760
        %v2834 = vsub.f32 %v2832, %v2833
        %v2835 = vand.u32 %v2834, 4294901760
        %2836 = vmatmul.mubr.f32.gmra.mrb[0].mxu0 %v2835
        %v2837 = vpop.f32.mrb[0].mxu0
        %v2838 = vadd.f32 0.0, %v2837
        %v2839 = vpop.f32.mrb[0].mxu0
        %2840 = vdwg.mxu0
        %v2841 = vand.u32 %v1732, 4294901760
        %v2842 = vsub.f32 %v1732, %v2841
        %v2843 = vand.u32 %v2842, 4294901760
        %v2844 = vsub.f32 %v2842, %v2843
        %v2845 = vand.u32 %v2844, 4294901760
        %2846 = vmatprep.subr.mxu0 %v2845
        %v2847 = vand.u32 %v1731, 4294901760
        %v2848 = vsub.f32 %v1731, %v2847
        %v2849 = vand.u32 %v2848, 4294901760
        %v2850 = vsub.f32 %v2848, %v2849
        %v2851 = vand.u32 %v2850, 4294901760
        %2852 = vmatpush1.xpose.msra.mxu0 %v2851
        %v2853 = vand.u32 %v1736, 4294901760
        %v2854 = vsub.f32 %v1736, %v2853
        %v2855 = vand.u32 %v2854, 4294901760
        %v2856 = vsub.f32 %v2854, %v2855
        %v2857 = vand.u32 %v2856, 4294901760
        %2858 = vmatprep.subr.mxu0 %v2857
        %v2859 = vand.u32 %v1735, 4294901760
        %v2860 = vsub.f32 %v1735, %v2859
        %v2861 = vand.u32 %v2860, 4294901760
        %v2862 = vsub.f32 %v2860, %v2861
        %v2863 = vand.u32 %v2862, 4294901760
        %2864 = vmatpush1.xpose.msra.mxu0 %v2863
        %2865 = vmatprep.subr.mxu0 0.0
        %2866 = vmatpush1.xpose.msra.mxu0 0.0
        %2867 = vmatprep.subr.mxu0 0.0
        %2868 = vmatpush1.xpose.msra.mxu0 0.0
        %2869 = vmatprep.subr.mxu0 0.0
        %2870 = vmatpush1.xpose.msra.mxu0 0.0
        %2871 = vmatprep.subr.mxu0 0.0
        %2872 = vmatpush1.xpose.msra.mxu0 0.0
        %2873 = vmatprep.subr.mxu0 0.0
        %2874 = vmatpush1.xpose.msra.mxu0 0.0
        %2875 = vmatprep.subr.mxu0 0.0
        %2876 = vmatpush1.xpose.msra.mxu0 0.0
        %2877 = vmatprep.subr.mxu0 0.0
        %2878 = vmatpush1.xpose.msra.mxu0 0.0
        %2879 = vmatprep.subr.mxu0 0.0
        %2880 = vmatpush1.xpose.msra.mxu0 0.0
        %2881 = vmatprep.subr.mxu0 0.0
        %2882 = vmatpush1.xpose.msra.mxu0 0.0
        %2883 = vmatprep.subr.mxu0 0.0
        %2884 = vmatpush1.xpose.msra.mxu0 0.0
        %2885 = vmatprep.subr.mxu0 0.0
        %2886 = vmatpush1.xpose.msra.mxu0 0.0
        %2887 = vmatprep.subr.mxu0 0.0
        %2888 = vmatpush1.xpose.msra.mxu0 0.0
        %2889 = vmatprep.subr.mxu0 0.0
        %2890 = vmatpush1.xpose.msra.mxu0 0.0
        %2891 = vmatprep.subr.mxu0 0.0
        %2892 = vmatpush1.xpose.msra.mxu0 0.0
        %2893 = vmatprep.subr.mxu0 0.0
        %2894 = vmatpush1.xpose.msra.mxu0 0.0
        %2895 = vmatprep.subr.mxu0 0.0
        %2896 = vmatpush1.xpose.msra.mxu0 0.0
        %2897 = vmatprep.subr.mxu0 0.0
        %2898 = vmatpush1.xpose.msra.mxu0 0.0
        %2899 = vmatprep.subr.mxu0 0.0
        %2900 = vmatpush1.xpose.msra.mxu0 0.0
        %2901 = vmatprep.subr.mxu0 0.0
        %2902 = vmatpush1.xpose.msra.mxu0 0.0
        %2903 = vmatprep.subr.mxu0 0.0
        %2904 = vmatpush1.xpose.msra.mxu0 0.0
        %2905 = vmatprep.subr.mxu0 0.0
        %2906 = vmatpush1.xpose.msra.mxu0 0.0
        %2907 = vmatprep.subr.mxu0 0.0
        %2908 = vmatpush1.xpose.msra.mxu0 0.0
        %2909 = vmatprep.subr.mxu0 0.0
        %2910 = vmatpush1.xpose.msra.mxu0 0.0
        %2911 = vmatprep.subr.mxu0 0.0
        %2912 = vmatpush1.xpose.msra.mxu0 0.0
        %2913 = vmatprep.subr.mxu0 0.0
        %2914 = vmatpush1.xpose.msra.mxu0 0.0
        %2915 = vmatprep.subr.mxu0 0.0
        %2916 = vmatpush1.xpose.msra.mxu0 0.0
        %2917 = vmatprep.subr.mxu0 0.0
        %2918 = vmatpush1.xpose.msra.mxu0 0.0
        %2919 = vmatprep.subr.mxu0 0.0
        %2920 = vmatpush1.xpose.msra.mxu0 0.0
        %2921 = vmatprep.subr.mxu0 0.0
        %2922 = vmatpush1.xpose.msra.mxu0 0.0
        %2923 = vmatprep.subr.mxu0 0.0
        %2924 = vmatpush1.xpose.msra.mxu0 0.0
        %v2925 = vand.u32 %v1748, 4294901760
        %2926 = vmatprep.mubr.f32.mxu0 %v2925
        %v2927 = vand.u32 %v1744, 4294901760
        %2928 = vmatmul.mubr.f32.gmra.mrb[0].mxu0 %v2927
        %v2929 = vpop.f32.mrb[0].mxu0
        %v2930 = vadd.f32 %v2838, %v2929
        %v2931 = vpop.f32.mrb[0].mxu0
        %2932 = vdwg.mxu0
        %v2933 = vand.u32 %v1732, 4294901760
        %v2934 = vsub.f32 %v1732, %v2933
        %2935 = vmatprep.subr.mxu0 %v2934
        %v2936 = vand.u32 %v1731, 4294901760
        %v2937 = vsub.f32 %v1731, %v2936
        %2938 = vmatpush1.xpose.msra.mxu0 %v2937
        %v2939 = vand.u32 %v1736, 4294901760
        %v2940 = vsub.f32 %v1736, %v2939
        %2941 = vmatprep.subr.mxu0 %v2940
        %v2942 = vand.u32 %v1735, 4294901760
        %v2943 = vsub.f32 %v1735, %v2942
        %2944 = vmatpush1.xpose.msra.mxu0 %v2943
        %2945 = vmatprep.subr.mxu0 0.0
        %2946 = vmatpush1.xpose.msra.mxu0 0.0
        %2947 = vmatprep.subr.mxu0 0.0
        %2948 = vmatpush1.xpose.msra.mxu0 0.0
        %2949 = vmatprep.subr.mxu0 0.0
        %2950 = vmatpush1.xpose.msra.mxu0 0.0
        %2951 = vmatprep.subr.mxu0 0.0
        %2952 = vmatpush1.xpose.msra.mxu0 0.0
        %2953 = vmatprep.subr.mxu0 0.0
        %2954 = vmatpush1.xpose.msra.mxu0 0.0
        %2955 = vmatprep.subr.mxu0 0.0
        %2956 = vmatpush1.xpose.msra.mxu0 0.0
        %2957 = vmatprep.subr.mxu0 0.0
        %2958 = vmatpush1.xpose.msra.mxu0 0.0
        %2959 = vmatprep.subr.mxu0 0.0
        %2960 = vmatpush1.xpose.msra.mxu0 0.0
        %2961 = vmatprep.subr.mxu0 0.0
        %2962 = vmatpush1.xpose.msra.mxu0 0.0
        %2963 = vmatprep.subr.mxu0 0.0
        %2964 = vmatpush1.xpose.msra.mxu0 0.0
        %2965 = vmatprep.subr.mxu0 0.0
        %2966 = vmatpush1.xpose.msra.mxu0 0.0
        %2967 = vmatprep.subr.mxu0 0.0
        %2968 = vmatpush1.xpose.msra.mxu0 0.0
        %2969 = vmatprep.subr.mxu0 0.0
        %2970 = vmatpush1.xpose.msra.mxu0 0.0
        %2971 = vmatprep.subr.mxu0 0.0
        %2972 = vmatpush1.xpose.msra.mxu0 0.0
        %2973 = vmatprep.subr.mxu0 0.0
        %2974 = vmatpush1.xpose.msra.mxu0 0.0
        %2975 = vmatprep.subr.mxu0 0.0
        %2976 = vmatpush1.xpose.msra.mxu0 0.0
        %2977 = vmatprep.subr.mxu0 0.0
        %2978 = vmatpush1.xpose.msra.mxu0 0.0
        %2979 = vmatprep.subr.mxu0 0.0
        %2980 = vmatpush1.xpose.msra.mxu0 0.0
        %2981 = vmatprep.subr.mxu0 0.0
        %2982 = vmatpush1.xpose.msra.mxu0 0.0
        %2983 = vmatprep.subr.mxu0 0.0
        %2984 = vmatpush1.xpose.msra.mxu0 0.0
        %2985 = vmatprep.subr.mxu0 0.0
        %2986 = vmatpush1.xpose.msra.mxu0 0.0
        %2987 = vmatprep.subr.mxu0 0.0
        %2988 = vmatpush1.xpose.msra.mxu0 0.0
        %2989 = vmatprep.subr.mxu0 0.0
        %2990 = vmatpush1.xpose.msra.mxu0 0.0
        %2991 = vmatprep.subr.mxu0 0.0
        %2992 = vmatpush1.xpose.msra.mxu0 0.0
        %2993 = vmatprep.subr.mxu0 0.0
        %2994 = vmatpush1.xpose.msra.mxu0 0.0
        %2995 = vmatprep.subr.mxu0 0.0
        %2996 = vmatpush1.xpose.msra.mxu0 0.0
        %2997 = vmatprep.subr.mxu0 0.0
        %2998 = vmatpush1.xpose.msra.mxu0 0.0
        %2999 = vmatprep.subr.mxu0 0.0
        %3000 = vmatpush1.xpose.msra.mxu0 0.0
        %3001 = vmatprep.subr.mxu0 0.0
        %3002 = vmatpush1.xpose.msra.mxu0 0.0
        %3003 = vmatprep.subr.mxu0 0.0
        %3004 = vmatpush1.xpose.msra.mxu0 0.0
        %v3005 = vand.u32 %v1748, 4294901760
        %v3006 = vsub.f32 %v1748, %v3005
        %3007 = vmatprep.mubr.f32.mxu0 %v3006
        %v3008 = vand.u32 %v1744, 4294901760
        %v3009 = vsub.f32 %v1744, %v3008
        %3010 = vmatmul.mubr.f32.gmra.mrb[0].mxu0 %v3009
        %v3011 = vpop.f32.mrb[0].mxu0
        %v3012 = vadd.f32 %v2930, %v3011
        %v3013 = vpop.f32.mrb[0].mxu0
        %3014 = vdwg.mxu0
        %v3015 = vand.u32 %v1732, 4294901760
        %3016 = vmatprep.subr.mxu0 %v3015
        %v3017 = vand.u32 %v1731, 4294901760
        %3018 = vmatpush1.xpose.msra.mxu0 %v3017
        %v3019 = vand.u32 %v1736, 4294901760
        %3020 = vmatprep.subr.mxu0 %v3019
        %v3021 = vand.u32 %v1735, 4294901760
        %3022 = vmatpush1.xpose.msra.mxu0 %v3021
        %3023 = vmatprep.subr.mxu0 0.0
        %3024 = vmatpush1.xpose.msra.mxu0 0.0
        %3025 = vmatprep.subr.mxu0 0.0
        %3026 = vmatpush1.xpose.msra.mxu0 0.0
        %3027 = vmatprep.subr.mxu0 0.0
        %3028 = vmatpush1.xpose.msra.mxu0 0.0
        %3029 = vmatprep.subr.mxu0 0.0
        %3030 = vmatpush1.xpose.msra.mxu0 0.0
        %3031 = vmatprep.subr.mxu0 0.0
        %3032 = vmatpush1.xpose.msra.mxu0 0.0
        %3033 = vmatprep.subr.mxu0 0.0
        %3034 = vmatpush1.xpose.msra.mxu0 0.0
        %3035 = vmatprep.subr.mxu0 0.0
        %3036 = vmatpush1.xpose.msra.mxu0 0.0
        %3037 = vmatprep.subr.mxu0 0.0
        %3038 = vmatpush1.xpose.msra.mxu0 0.0
        %3039 = vmatprep.subr.mxu0 0.0
        %3040 = vmatpush1.xpose.msra.mxu0 0.0
        %3041 = vmatprep.subr.mxu0 0.0
        %3042 = vmatpush1.xpose.msra.mxu0 0.0
        %3043 = vmatprep.subr.mxu0 0.0
        %3044 = vmatpush1.xpose.msra.mxu0 0.0
        %3045 = vmatprep.subr.mxu0 0.0
        %3046 = vmatpush1.xpose.msra.mxu0 0.0
        %3047 = vmatprep.subr.mxu0 0.0
        %3048 = vmatpush1.xpose.msra.mxu0 0.0
        %3049 = vmatprep.subr.mxu0 0.0
        %3050 = vmatpush1.xpose.msra.mxu0 0.0
        %3051 = vmatprep.subr.mxu0 0.0
        %3052 = vmatpush1.xpose.msra.mxu0 0.0
        %3053 = vmatprep.subr.mxu0 0.0
        %3054 = vmatpush1.xpose.msra.mxu0 0.0
        %3055 = vmatprep.subr.mxu0 0.0
        %3056 = vmatpush1.xpose.msra.mxu0 0.0
        %3057 = vmatprep.subr.mxu0 0.0
        %3058 = vmatpush1.xpose.msra.mxu0 0.0
        %3059 = vmatprep.subr.mxu0 0.0
        %3060 = vmatpush1.xpose.msra.mxu0 0.0
        %3061 = vmatprep.subr.mxu0 0.0
        %3062 = vmatpush1.xpose.msra.mxu0 0.0
        %3063 = vmatprep.subr.mxu0 0.0
        %3064 = vmatpush1.xpose.msra.mxu0 0.0
        %3065 = vmatprep.subr.mxu0 0.0
        %3066 = vmatpush1.xpose.msra.mxu0 0.0
        %3067 = vmatprep.subr.mxu0 0.0
        %3068 = vmatpush1.xpose.msra.mxu0 0.0
        %3069 = vmatprep.subr.mxu0 0.0
        %3070 = vmatpush1.xpose.msra.mxu0 0.0
        %3071 = vmatprep.subr.mxu0 0.0
        %3072 = vmatpush1.xpose.msra.mxu0 0.0
        %3073 = vmatprep.subr.mxu0 0.0
        %3074 = vmatpush1.xpose.msra.mxu0 0.0
        %3075 = vmatprep.subr.mxu0 0.0
        %3076 = vmatpush1.xpose.msra.mxu0 0.0
        %3077 = vmatprep.subr.mxu0 0.0
        %3078 = vmatpush1.xpose.msra.mxu0 0.0
        %3079 = vmatprep.subr.mxu0 0.0
        %3080 = vmatpush1.xpose.msra.mxu0 0.0
        %3081 = vmatprep.subr.mxu0 0.0
        %3082 = vmatpush1.xpose.msra.mxu0 0.0
        %v3083 = vand.u32 %v1748, 4294901760
        %v3084 = vsub.f32 %v1748, %v3083
        %v3085 = vand.u32 %v3084, 4294901760
        %3086 = vmatprep.mubr.f32.mxu0 %v3085
        %v3087 = vand.u32 %v1744, 4294901760
        %v3088 = vsub.f32 %v1744, %v3087
        %v3089 = vand.u32 %v3088, 4294901760
        %3090 = vmatmul.mubr.f32.gmra.mrb[0].mxu0 %v3089
        %v3091 = vpop.f32.mrb[0].mxu0
        %v3092 = vadd.f32 %v3012, %v3091
        %v3093 = vpop.f32.mrb[0].mxu0
        %3094 = vdwg.mxu0
        %v3095 = vand.u32 %v1732, 4294901760
        %v3096 = vsub.f32 %v1732, %v3095
        %v3097 = vand.u32 %v3096, 4294901760
        %3098 = vmatprep.subr.mxu0 %v3097
        %v3099 = vand.u32 %v1731, 4294901760
        %v3100 = vsub.f32 %v1731, %v3099
        %v3101 = vand.u32 %v3100, 4294901760
        %3102 = vmatpush1.xpose.msra.mxu0 %v3101
        %v3103 = vand.u32 %v1736, 4294901760
        %v3104 = vsub.f32 %v1736, %v3103
        %v3105 = vand.u32 %v3104, 4294901760
        %3106 = vmatprep.subr.mxu0 %v3105
        %v3107 = vand.u32 %v1735, 4294901760
        %v3108 = vsub.f32 %v1735, %v3107
        %v3109 = vand.u32 %v3108, 4294901760
        %3110 = vmatpush1.xpose.msra.mxu0 %v3109
        %3111 = vmatprep.subr.mxu0 0.0
        %3112 = vmatpush1.xpose.msra.mxu0 0.0
        %3113 = vmatprep.subr.mxu0 0.0
        %3114 = vmatpush1.xpose.msra.mxu0 0.0
        %3115 = vmatprep.subr.mxu0 0.0
        %3116 = vmatpush1.xpose.msra.mxu0 0.0
        %3117 = vmatprep.subr.mxu0 0.0
        %3118 = vmatpush1.xpose.msra.mxu0 0.0
        %3119 = vmatprep.subr.mxu0 0.0
        %3120 = vmatpush1.xpose.msra.mxu0 0.0
        %3121 = vmatprep.subr.mxu0 0.0
        %3122 = vmatpush1.xpose.msra.mxu0 0.0
        %3123 = vmatprep.subr.mxu0 0.0
        %3124 = vmatpush1.xpose.msra.mxu0 0.0
        %3125 = vmatprep.subr.mxu0 0.0
        %3126 = vmatpush1.xpose.msra.mxu0 0.0
        %3127 = vmatprep.subr.mxu0 0.0
        %3128 = vmatpush1.xpose.msra.mxu0 0.0
        %3129 = vmatprep.subr.mxu0 0.0
        %3130 = vmatpush1.xpose.msra.mxu0 0.0
        %3131 = vmatprep.subr.mxu0 0.0
        %3132 = vmatpush1.xpose.msra.mxu0 0.0
        %3133 = vmatprep.subr.mxu0 0.0
        %3134 = vmatpush1.xpose.msra.mxu0 0.0
        %3135 = vmatprep.subr.mxu0 0.0
        %3136 = vmatpush1.xpose.msra.mxu0 0.0
        %3137 = vmatprep.subr.mxu0 0.0
        %3138 = vmatpush1.xpose.msra.mxu0 0.0
        %3139 = vmatprep.subr.mxu0 0.0
        %3140 = vmatpush1.xpose.msra.mxu0 0.0
        %3141 = vmatprep.subr.mxu0 0.0
        %3142 = vmatpush1.xpose.msra.mxu0 0.0
        %3143 = vmatprep.subr.mxu0 0.0
        %3144 = vmatpush1.xpose.msra.mxu0 0.0
        %3145 = vmatprep.subr.mxu0 0.0
        %3146 = vmatpush1.xpose.msra.mxu0 0.0
        %3147 = vmatprep.subr.mxu0 0.0
        %3148 = vmatpush1.xpose.msra.mxu0 0.0
        %3149 = vmatprep.subr.mxu0 0.0
        %3150 = vmatpush1.xpose.msra.mxu0 0.0
        %3151 = vmatprep.subr.mxu0 0.0
        %3152 = vmatpush1.xpose.msra.mxu0 0.0
        %3153 = vmatprep.subr.mxu0 0.0
        %3154 = vmatpush1.xpose.msra.mxu0 0.0
        %3155 = vmatprep.subr.mxu0 0.0
        %3156 = vmatpush1.xpose.msra.mxu0 0.0
        %3157 = vmatprep.subr.mxu0 0.0
        %3158 = vmatpush1.xpose.msra.mxu0 0.0
        %3159 = vmatprep.subr.mxu0 0.0
        %3160 = vmatpush1.xpose.msra.mxu0 0.0
        %3161 = vmatprep.subr.mxu0 0.0
        %3162 = vmatpush1.xpose.msra.mxu0 0.0
        %3163 = vmatprep.subr.mxu0 0.0
        %3164 = vmatpush1.xpose.msra.mxu0 0.0
        %3165 = vmatprep.subr.mxu0 0.0
        %3166 = vmatpush1.xpose.msra.mxu0 0.0
        %3167 = vmatprep.subr.mxu0 0.0
        %3168 = vmatpush1.xpose.msra.mxu0 0.0
        %3169 = vmatprep.subr.mxu0 0.0
        %3170 = vmatpush1.xpose.msra.mxu0 0.0
        %v3171 = vand.u32 %v1748, 4294901760
        %3172 = vmatprep.mubr.f32.mxu0 %v3171
        %v3173 = vand.u32 %v1744, 4294901760
        %3174 = vmatmul.mubr.f32.gmra.mrb[0].mxu0 %v3173
        %v3175 = vpop.f32.mrb[0].mxu0
        %v3176 = vadd.f32 %v3092, %v3175
        %v3177 = vpop.f32.mrb[0].mxu0
        %3178 = vdwg.mxu0
        %v3179 = vand.u32 %v1732, 4294901760
        %3180 = vmatprep.subr.mxu0 %v3179
        %v3181 = vand.u32 %v1731, 4294901760
        %3182 = vmatpush1.xpose.msra.mxu0 %v3181
        %v3183 = vand.u32 %v1736, 4294901760
        %3184 = vmatprep.subr.mxu0 %v3183
        %v3185 = vand.u32 %v1735, 4294901760
        %3186 = vmatpush1.xpose.msra.mxu0 %v3185
        %3187 = vmatprep.subr.mxu0 0.0
        %3188 = vmatpush1.xpose.msra.mxu0 0.0
        %3189 = vmatprep.subr.mxu0 0.0
        %3190 = vmatpush1.xpose.msra.mxu0 0.0
        %3191 = vmatprep.subr.mxu0 0.0
        %3192 = vmatpush1.xpose.msra.mxu0 0.0
        %3193 = vmatprep.subr.mxu0 0.0
        %3194 = vmatpush1.xpose.msra.mxu0 0.0
        %3195 = vmatprep.subr.mxu0 0.0
        %3196 = vmatpush1.xpose.msra.mxu0 0.0
        %3197 = vmatprep.subr.mxu0 0.0
        %3198 = vmatpush1.xpose.msra.mxu0 0.0
        %3199 = vmatprep.subr.mxu0 0.0
        %3200 = vmatpush1.xpose.msra.mxu0 0.0
        %3201 = vmatprep.subr.mxu0 0.0
        %3202 = vmatpush1.xpose.msra.mxu0 0.0
        %3203 = vmatprep.subr.mxu0 0.0
        %3204 = vmatpush1.xpose.msra.mxu0 0.0
        %3205 = vmatprep.subr.mxu0 0.0
        %3206 = vmatpush1.xpose.msra.mxu0 0.0
        %3207 = vmatprep.subr.mxu0 0.0
        %3208 = vmatpush1.xpose.msra.mxu0 0.0
        %3209 = vmatprep.subr.mxu0 0.0
        %3210 = vmatpush1.xpose.msra.mxu0 0.0
        %3211 = vmatprep.subr.mxu0 0.0
        %3212 = vmatpush1.xpose.msra.mxu0 0.0
        %3213 = vmatprep.subr.mxu0 0.0
        %3214 = vmatpush1.xpose.msra.mxu0 0.0
        %3215 = vmatprep.subr.mxu0 0.0
        %3216 = vmatpush1.xpose.msra.mxu0 0.0
        %3217 = vmatprep.subr.mxu0 0.0
        %3218 = vmatpush1.xpose.msra.mxu0 0.0
        %3219 = vmatprep.subr.mxu0 0.0
        %3220 = vmatpush1.xpose.msra.mxu0 0.0
        %3221 = vmatprep.subr.mxu0 0.0
        %3222 = vmatpush1.xpose.msra.mxu0 0.0
        %3223 = vmatprep.subr.mxu0 0.0
        %3224 = vmatpush1.xpose.msra.mxu0 0.0
        %3225 = vmatprep.subr.mxu0 0.0
        %3226 = vmatpush1.xpose.msra.mxu0 0.0
        %3227 = vmatprep.subr.mxu0 0.0
        %3228 = vmatpush1.xpose.msra.mxu0 0.0
        %3229 = vmatprep.subr.mxu0 0.0
        %3230 = vmatpush1.xpose.msra.mxu0 0.0
        %3231 = vmatprep.subr.mxu0 0.0
        %3232 = vmatpush1.xpose.msra.mxu0 0.0
        %3233 = vmatprep.subr.mxu0 0.0
        %3234 = vmatpush1.xpose.msra.mxu0 0.0
        %3235 = vmatprep.subr.mxu0 0.0
        %3236 = vmatpush1.xpose.msra.mxu0 0.0
        %3237 = vmatprep.subr.mxu0 0.0
        %3238 = vmatpush1.xpose.msra.mxu0 0.0
        %3239 = vmatprep.subr.mxu0 0.0
        %3240 = vmatpush1.xpose.msra.mxu0 0.0
        %3241 = vmatprep.subr.mxu0 0.0
        %3242 = vmatpush1.xpose.msra.mxu0 0.0
        %3243 = vmatprep.subr.mxu0 0.0
        %3244 = vmatpush1.xpose.msra.mxu0 0.0
        %3245 = vmatprep.subr.mxu0 0.0
        %3246 = vmatpush1.xpose.msra.mxu0 0.0
        %v3247 = vand.u32 %v1748, 4294901760
        %3248 = vmatprep.mubr.f32.mxu0 %v3247
        %v3249 = vand.u32 %v1744, 4294901760
        %3250 = vmatmul.mubr.f32.gmra.mrb[0].mxu0 %v3249
        %v3251 = vpop.f32.mrb[0].mxu0
        %v3252 = vadd.f32 %v3176, %v3251
        %v3253 = vpop.f32.mrb[0].mxu0
        %3254 = vdwg.mxu0
        %v3255 = vand.u32 %v1734, 4294901760
        %3256 = vmatprep.subr.mxu0 %v3255
        %v3257 = vand.u32 %v1733, 4294901760
        %3258 = vmatpush1.xpose.msra.mxu0 %v3257
        %v3259 = vand.u32 %v1738, 4294901760
        %3260 = vmatprep.subr.mxu0 %v3259
        %v3261 = vand.u32 %v1737, 4294901760
        %3262 = vmatpush1.xpose.msra.mxu0 %v3261
        %3263 = vmatprep.subr.mxu0 0.0
        %3264 = vmatpush1.xpose.msra.mxu0 0.0
        %3265 = vmatprep.subr.mxu0 0.0
        %3266 = vmatpush1.xpose.msra.mxu0 0.0
        %3267 = vmatprep.subr.mxu0 0.0
        %3268 = vmatpush1.xpose.msra.mxu0 0.0
        %3269 = vmatprep.subr.mxu0 0.0
        %3270 = vmatpush1.xpose.msra.mxu0 0.0
        %3271 = vmatprep.subr.mxu0 0.0
        %3272 = vmatpush1.xpose.msra.mxu0 0.0
        %3273 = vmatprep.subr.mxu0 0.0
        %3274 = vmatpush1.xpose.msra.mxu0 0.0
        %3275 = vmatprep.subr.mxu0 0.0
        %3276 = vmatpush1.xpose.msra.mxu0 0.0
        %3277 = vmatprep.subr.mxu0 0.0
        %3278 = vmatpush1.xpose.msra.mxu0 0.0
        %3279 = vmatprep.subr.mxu0 0.0
        %3280 = vmatpush1.xpose.msra.mxu0 0.0
        %3281 = vmatprep.subr.mxu0 0.0
        %3282 = vmatpush1.xpose.msra.mxu0 0.0
        %3283 = vmatprep.subr.mxu0 0.0
        %3284 = vmatpush1.xpose.msra.mxu0 0.0
        %3285 = vmatprep.subr.mxu0 0.0
        %3286 = vmatpush1.xpose.msra.mxu0 0.0
        %3287 = vmatprep.subr.mxu0 0.0
        %3288 = vmatpush1.xpose.msra.mxu0 0.0
        %3289 = vmatprep.subr.mxu0 0.0
        %3290 = vmatpush1.xpose.msra.mxu0 0.0
        %3291 = vmatprep.subr.mxu0 0.0
        %3292 = vmatpush1.xpose.msra.mxu0 0.0
        %3293 = vmatprep.subr.mxu0 0.0
        %3294 = vmatpush1.xpose.msra.mxu0 0.0
        %3295 = vmatprep.subr.mxu0 0.0
        %3296 = vmatpush1.xpose.msra.mxu0 0.0
        %3297 = vmatprep.subr.mxu0 0.0
        %3298 = vmatpush1.xpose.msra.mxu0 0.0
        %3299 = vmatprep.subr.mxu0 0.0
        %3300 = vmatpush1.xpose.msra.mxu0 0.0
        %3301 = vmatprep.subr.mxu0 0.0
        %3302 = vmatpush1.xpose.msra.mxu0 0.0
        %3303 = vmatprep.subr.mxu0 0.0
        %3304 = vmatpush1.xpose.msra.mxu0 0.0
        %3305 = vmatprep.subr.mxu0 0.0
        %3306 = vmatpush1.xpose.msra.mxu0 0.0
        %3307 = vmatprep.subr.mxu0 0.0
        %3308 = vmatpush1.xpose.msra.mxu0 0.0
        %3309 = vmatprep.subr.mxu0 0.0
        %3310 = vmatpush1.xpose.msra.mxu0 0.0
        %3311 = vmatprep.subr.mxu0 0.0
        %3312 = vmatpush1.xpose.msra.mxu0 0.0
        %3313 = vmatprep.subr.mxu0 0.0
        %3314 = vmatpush1.xpose.msra.mxu0 0.0
        %3315 = vmatprep.subr.mxu0 0.0
        %3316 = vmatpush1.xpose.msra.mxu0 0.0
        %3317 = vmatprep.subr.mxu0 0.0
        %3318 = vmatpush1.xpose.msra.mxu0 0.0
        %3319 = vmatprep.subr.mxu0 0.0
        %3320 = vmatpush1.xpose.msra.mxu0 0.0
        %3321 = vmatprep.subr.mxu0 0.0
        %3322 = vmatpush1.xpose.msra.mxu0 0.0
        %v3323 = vand.u32 %v1756, 4294901760
        %v3324 = vsub.f32 %v1756, %v3323
        %v3325 = vand.u32 %v3324, 4294901760
        %v3326 = vsub.f32 %v3324, %v3325
        %v3327 = vand.u32 %v3326, 4294901760
        %3328 = vmatprep.mubr.f32.mxu0 %v3327
        %v3329 = vand.u32 %v1752, 4294901760
        %v3330 = vsub.f32 %v1752, %v3329
        %v3331 = vand.u32 %v3330, 4294901760
        %v3332 = vsub.f32 %v3330, %v3331
        %v3333 = vand.u32 %v3332, 4294901760
        %3334 = vmatmul.mubr.f32.gmra.mrb[0].mxu0 %v3333
        %v3335 = vpop.f32.mrb[0].mxu0
        %v3336 = vadd.f32 %v3252, %v3335
        %v3337 = vpop.f32.mrb[0].mxu0
        %3338 = vdwg.mxu0
        %v3339 = vand.u32 %v1734, 4294901760
        %v3340 = vsub.f32 %v1734, %v3339
        %v3341 = vand.u32 %v3340, 4294901760
        %v3342 = vsub.f32 %v3340, %v3341
        %v3343 = vand.u32 %v3342, 4294901760
        %3344 = vmatprep.subr.mxu0 %v3343
        %v3345 = vand.u32 %v1733, 4294901760
        %v3346 = vsub.f32 %v1733, %v3345
        %v3347 = vand.u32 %v3346, 4294901760
        %v3348 = vsub.f32 %v3346, %v3347
        %v3349 = vand.u32 %v3348, 4294901760
        %3350 = vmatpush1.xpose.msra.mxu0 %v3349
        %v3351 = vand.u32 %v1738, 4294901760
        %v3352 = vsub.f32 %v1738, %v3351
        %v3353 = vand.u32 %v3352, 4294901760
        %v3354 = vsub.f32 %v3352, %v3353
        %v3355 = vand.u32 %v3354, 4294901760
        %3356 = vmatprep.subr.mxu0 %v3355
        %v3357 = vand.u32 %v1737, 4294901760
        %v3358 = vsub.f32 %v1737, %v3357
        %v3359 = vand.u32 %v3358, 4294901760
        %v3360 = vsub.f32 %v3358, %v3359
        %v3361 = vand.u32 %v3360, 4294901760
        %3362 = vmatpush1.xpose.msra.mxu0 %v3361
        %3363 = vmatprep.subr.mxu0 0.0
        %3364 = vmatpush1.xpose.msra.mxu0 0.0
        %3365 = vmatprep.subr.mxu0 0.0
        %3366 = vmatpush1.xpose.msra.mxu0 0.0
        %3367 = vmatprep.subr.mxu0 0.0
        %3368 = vmatpush1.xpose.msra.mxu0 0.0
        %3369 = vmatprep.subr.mxu0 0.0
        %3370 = vmatpush1.xpose.msra.mxu0 0.0
        %3371 = vmatprep.subr.mxu0 0.0
        %3372 = vmatpush1.xpose.msra.mxu0 0.0
        %3373 = vmatprep.subr.mxu0 0.0
        %3374 = vmatpush1.xpose.msra.mxu0 0.0
        %3375 = vmatprep.subr.mxu0 0.0
        %3376 = vmatpush1.xpose.msra.mxu0 0.0
        %3377 = vmatprep.subr.mxu0 0.0
        %3378 = vmatpush1.xpose.msra.mxu0 0.0
        %3379 = vmatprep.subr.mxu0 0.0
        %3380 = vmatpush1.xpose.msra.mxu0 0.0
        %3381 = vmatprep.subr.mxu0 0.0
        %3382 = vmatpush1.xpose.msra.mxu0 0.0
        %3383 = vmatprep.subr.mxu0 0.0
        %3384 = vmatpush1.xpose.msra.mxu0 0.0
        %3385 = vmatprep.subr.mxu0 0.0
        %3386 = vmatpush1.xpose.msra.mxu0 0.0
        %3387 = vmatprep.subr.mxu0 0.0
        %3388 = vmatpush1.xpose.msra.mxu0 0.0
        %3389 = vmatprep.subr.mxu0 0.0
        %3390 = vmatpush1.xpose.msra.mxu0 0.0
        %3391 = vmatprep.subr.mxu0 0.0
        %3392 = vmatpush1.xpose.msra.mxu0 0.0
        %3393 = vmatprep.subr.mxu0 0.0
        %3394 = vmatpush1.xpose.msra.mxu0 0.0
        %3395 = vmatprep.subr.mxu0 0.0
        %3396 = vmatpush1.xpose.msra.mxu0 0.0
        %3397 = vmatprep.subr.mxu0 0.0
        %3398 = vmatpush1.xpose.msra.mxu0 0.0
        %3399 = vmatprep.subr.mxu0 0.0
        %3400 = vmatpush1.xpose.msra.mxu0 0.0
        %3401 = vmatprep.subr.mxu0 0.0
        %3402 = vmatpush1.xpose.msra.mxu0 0.0
        %3403 = vmatprep.subr.mxu0 0.0
        %3404 = vmatpush1.xpose.msra.mxu0 0.0
        %3405 = vmatprep.subr.mxu0 0.0
        %3406 = vmatpush1.xpose.msra.mxu0 0.0
        %3407 = vmatprep.subr.mxu0 0.0
        %3408 = vmatpush1.xpose.msra.mxu0 0.0
        %3409 = vmatprep.subr.mxu0 0.0
        %3410 = vmatpush1.xpose.msra.mxu0 0.0
        %3411 = vmatprep.subr.mxu0 0.0
        %3412 = vmatpush1.xpose.msra.mxu0 0.0
        %3413 = vmatprep.subr.mxu0 0.0
        %3414 = vmatpush1.xpose.msra.mxu0 0.0
        %3415 = vmatprep.subr.mxu0 0.0
        %3416 = vmatpush1.xpose.msra.mxu0 0.0
        %3417 = vmatprep.subr.mxu0 0.0
        %3418 = vmatpush1.xpose.msra.mxu0 0.0
        %3419 = vmatprep.subr.mxu0 0.0
        %3420 = vmatpush1.xpose.msra.mxu0 0.0
        %3421 = vmatprep.subr.mxu0 0.0
        %3422 = vmatpush1.xpose.msra.mxu0 0.0
        %v3423 = vand.u32 %v1756, 4294901760
        %3424 = vmatprep.mubr.f32.mxu0 %v3423
        %v3425 = vand.u32 %v1752, 4294901760
        %3426 = vmatmul.mubr.f32.gmra.mrb[0].mxu0 %v3425
        %v3427 = vpop.f32.mrb[0].mxu0
        %v3428 = vadd.f32 %v3336, %v3427
        %v3429 = vpop.f32.mrb[0].mxu0
        %3430 = vdwg.mxu0
        %v3431 = vand.u32 %v1734, 4294901760
        %v3432 = vsub.f32 %v1734, %v3431
        %3433 = vmatprep.subr.mxu0 %v3432
        %v3434 = vand.u32 %v1733, 4294901760
        %v3435 = vsub.f32 %v1733, %v3434
        %3436 = vmatpush1.xpose.msra.mxu0 %v3435
        %v3437 = vand.u32 %v1738, 4294901760
        %v3438 = vsub.f32 %v1738, %v3437
        %3439 = vmatprep.subr.mxu0 %v3438
        %v3440 = vand.u32 %v1737, 4294901760
        %v3441 = vsub.f32 %v1737, %v3440
        %3442 = vmatpush1.xpose.msra.mxu0 %v3441
        %3443 = vmatprep.subr.mxu0 0.0
        %3444 = vmatpush1.xpose.msra.mxu0 0.0
        %3445 = vmatprep.subr.mxu0 0.0
        %3446 = vmatpush1.xpose.msra.mxu0 0.0
        %3447 = vmatprep.subr.mxu0 0.0
        %3448 = vmatpush1.xpose.msra.mxu0 0.0
        %3449 = vmatprep.subr.mxu0 0.0
        %3450 = vmatpush1.xpose.msra.mxu0 0.0
        %3451 = vmatprep.subr.mxu0 0.0
        %3452 = vmatpush1.xpose.msra.mxu0 0.0
        %3453 = vmatprep.subr.mxu0 0.0
        %3454 = vmatpush1.xpose.msra.mxu0 0.0
        %3455 = vmatprep.subr.mxu0 0.0
        %3456 = vmatpush1.xpose.msra.mxu0 0.0
        %3457 = vmatprep.subr.mxu0 0.0
        %3458 = vmatpush1.xpose.msra.mxu0 0.0
        %3459 = vmatprep.subr.mxu0 0.0
        %3460 = vmatpush1.xpose.msra.mxu0 0.0
        %3461 = vmatprep.subr.mxu0 0.0
        %3462 = vmatpush1.xpose.msra.mxu0 0.0
        %3463 = vmatprep.subr.mxu0 0.0
        %3464 = vmatpush1.xpose.msra.mxu0 0.0
        %3465 = vmatprep.subr.mxu0 0.0
        %3466 = vmatpush1.xpose.msra.mxu0 0.0
        %3467 = vmatprep.subr.mxu0 0.0
        %3468 = vmatpush1.xpose.msra.mxu0 0.0
        %3469 = vmatprep.subr.mxu0 0.0
        %3470 = vmatpush1.xpose.msra.mxu0 0.0
        %3471 = vmatprep.subr.mxu0 0.0
        %3472 = vmatpush1.xpose.msra.mxu0 0.0
        %3473 = vmatprep.subr.mxu0 0.0
        %3474 = vmatpush1.xpose.msra.mxu0 0.0
        %3475 = vmatprep.subr.mxu0 0.0
        %3476 = vmatpush1.xpose.msra.mxu0 0.0
        %3477 = vmatprep.subr.mxu0 0.0
        %3478 = vmatpush1.xpose.msra.mxu0 0.0
        %3479 = vmatprep.subr.mxu0 0.0
        %3480 = vmatpush1.xpose.msra.mxu0 0.0
        %3481 = vmatprep.subr.mxu0 0.0
        %3482 = vmatpush1.xpose.msra.mxu0 0.0
        %3483 = vmatprep.subr.mxu0 0.0
        %3484 = vmatpush1.xpose.msra.mxu0 0.0
        %3485 = vmatprep.subr.mxu0 0.0
        %3486 = vmatpush1.xpose.msra.mxu0 0.0
        %3487 = vmatprep.subr.mxu0 0.0
        %3488 = vmatpush1.xpose.msra.mxu0 0.0
        %3489 = vmatprep.subr.mxu0 0.0
        %3490 = vmatpush1.xpose.msra.mxu0 0.0
        %3491 = vmatprep.subr.mxu0 0.0
        %3492 = vmatpush1.xpose.msra.mxu0 0.0
        %3493 = vmatprep.subr.mxu0 0.0
        %3494 = vmatpush1.xpose.msra.mxu0 0.0
        %3495 = vmatprep.subr.mxu0 0.0
        %3496 = vmatpush1.xpose.msra.mxu0 0.0
        %3497 = vmatprep.subr.mxu0 0.0
        %3498 = vmatpush1.xpose.msra.mxu0 0.0
        %3499 = vmatprep.subr.mxu0 0.0
        %3500 = vmatpush1.xpose.msra.mxu0 0.0
        %3501 = vmatprep.subr.mxu0 0.0
        %3502 = vmatpush1.xpose.msra.mxu0 0.0
        %v3503 = vand.u32 %v1756, 4294901760
        %v3504 = vsub.f32 %v1756, %v3503
        %3505 = vmatprep.mubr.f32.mxu0 %v3504
        %v3506 = vand.u32 %v1752, 4294901760
        %v3507 = vsub.f32 %v1752, %v3506
        %3508 = vmatmul.mubr.f32.gmra.mrb[0].mxu0 %v3507
        %v3509 = vpop.f32.mrb[0].mxu0
        %v3510 = vadd.f32 %v3428, %v3509
        %v3511 = vpop.f32.mrb[0].mxu0
        %3512 = vdwg.mxu0
        %v3513 = vand.u32 %v1734, 4294901760
        %3514 = vmatprep.subr.mxu0 %v3513
        %v3515 = vand.u32 %v1733, 4294901760
        %3516 = vmatpush1.xpose.msra.mxu0 %v3515
        %v3517 = vand.u32 %v1738, 4294901760
        %3518 = vmatprep.subr.mxu0 %v3517
        %v3519 = vand.u32 %v1737, 4294901760
        %3520 = vmatpush1.xpose.msra.mxu0 %v3519
        %3521 = vmatprep.subr.mxu0 0.0
        %3522 = vmatpush1.xpose.msra.mxu0 0.0
        %3523 = vmatprep.subr.mxu0 0.0
        %3524 = vmatpush1.xpose.msra.mxu0 0.0
        %3525 = vmatprep.subr.mxu0 0.0
        %3526 = vmatpush1.xpose.msra.mxu0 0.0
        %3527 = vmatprep.subr.mxu0 0.0
        %3528 = vmatpush1.xpose.msra.mxu0 0.0
        %3529 = vmatprep.subr.mxu0 0.0
        %3530 = vmatpush1.xpose.msra.mxu0 0.0
        %3531 = vmatprep.subr.mxu0 0.0
        %3532 = vmatpush1.xpose.msra.mxu0 0.0
        %3533 = vmatprep.subr.mxu0 0.0
        %3534 = vmatpush1.xpose.msra.mxu0 0.0
        %3535 = vmatprep.subr.mxu0 0.0
        %3536 = vmatpush1.xpose.msra.mxu0 0.0
        %3537 = vmatprep.subr.mxu0 0.0
        %3538 = vmatpush1.xpose.msra.mxu0 0.0
        %3539 = vmatprep.subr.mxu0 0.0
        %3540 = vmatpush1.xpose.msra.mxu0 0.0
        %3541 = vmatprep.subr.mxu0 0.0
        %3542 = vmatpush1.xpose.msra.mxu0 0.0
        %3543 = vmatprep.subr.mxu0 0.0
        %3544 = vmatpush1.xpose.msra.mxu0 0.0
        %3545 = vmatprep.subr.mxu0 0.0
        %3546 = vmatpush1.xpose.msra.mxu0 0.0
        %3547 = vmatprep.subr.mxu0 0.0
        %3548 = vmatpush1.xpose.msra.mxu0 0.0
        %3549 = vmatprep.subr.mxu0 0.0
        %3550 = vmatpush1.xpose.msra.mxu0 0.0
        %3551 = vmatprep.subr.mxu0 0.0
        %3552 = vmatpush1.xpose.msra.mxu0 0.0
        %3553 = vmatprep.subr.mxu0 0.0
        %3554 = vmatpush1.xpose.msra.mxu0 0.0
        %3555 = vmatprep.subr.mxu0 0.0
        %3556 = vmatpush1.xpose.msra.mxu0 0.0
        %3557 = vmatprep.subr.mxu0 0.0
        %3558 = vmatpush1.xpose.msra.mxu0 0.0
        %3559 = vmatprep.subr.mxu0 0.0
        %3560 = vmatpush1.xpose.msra.mxu0 0.0
        %3561 = vmatprep.subr.mxu0 0.0
        %3562 = vmatpush1.xpose.msra.mxu0 0.0
        %3563 = vmatprep.subr.mxu0 0.0
        %3564 = vmatpush1.xpose.msra.mxu0 0.0
        %3565 = vmatprep.subr.mxu0 0.0
        %3566 = vmatpush1.xpose.msra.mxu0 0.0
        %3567 = vmatprep.subr.mxu0 0.0
        %3568 = vmatpush1.xpose.msra.mxu0 0.0
        %3569 = vmatprep.subr.mxu0 0.0
        %3570 = vmatpush1.xpose.msra.mxu0 0.0
        %3571 = vmatprep.subr.mxu0 0.0
        %3572 = vmatpush1.xpose.msra.mxu0 0.0
        %3573 = vmatprep.subr.mxu0 0.0
        %3574 = vmatpush1.xpose.msra.mxu0 0.0
        %3575 = vmatprep.subr.mxu0 0.0
        %3576 = vmatpush1.xpose.msra.mxu0 0.0
        %3577 = vmatprep.subr.mxu0 0.0
        %3578 = vmatpush1.xpose.msra.mxu0 0.0
        %3579 = vmatprep.subr.mxu0 0.0
        %3580 = vmatpush1.xpose.msra.mxu0 0.0
        %v3581 = vand.u32 %v1756, 4294901760
        %v3582 = vsub.f32 %v1756, %v3581
        %v3583 = vand.u32 %v3582, 4294901760
        %3584 = vmatprep.mubr.f32.mxu0 %v3583
        %v3585 = vand.u32 %v1752, 4294901760
        %v3586 = vsub.f32 %v1752, %v3585
        %v3587 = vand.u32 %v3586, 4294901760
        %3588 = vmatmul.mubr.f32.gmra.mrb[0].mxu0 %v3587
        %v3589 = vpop.f32.mrb[0].mxu0
        %v3590 = vadd.f32 %v3510, %v3589
        %v3591 = vpop.f32.mrb[0].mxu0
        %3592 = vdwg.mxu0
        %v3593 = vand.u32 %v1734, 4294901760
        %v3594 = vsub.f32 %v1734, %v3593
        %v3595 = vand.u32 %v3594, 4294901760
        %3596 = vmatprep.subr.mxu0 %v3595
        %v3597 = vand.u32 %v1733, 4294901760
        %v3598 = vsub.f32 %v1733, %v3597
        %v3599 = vand.u32 %v3598, 4294901760
        %3600 = vmatpush1.xpose.msra.mxu0 %v3599
        %v3601 = vand.u32 %v1738, 4294901760
        %v3602 = vsub.f32 %v1738, %v3601
        %v3603 = vand.u32 %v3602, 4294901760
        %3604 = vmatprep.subr.mxu0 %v3603
        %v3605 = vand.u32 %v1737, 4294901760
        %v3606 = vsub.f32 %v1737, %v3605
        %v3607 = vand.u32 %v3606, 4294901760
        %3608 = vmatpush1.xpose.msra.mxu0 %v3607
        %3609 = vmatprep.subr.mxu0 0.0
        %3610 = vmatpush1.xpose.msra.mxu0 0.0
        %3611 = vmatprep.subr.mxu0 0.0
        %3612 = vmatpush1.xpose.msra.mxu0 0.0
        %3613 = vmatprep.subr.mxu0 0.0
        %3614 = vmatpush1.xpose.msra.mxu0 0.0
        %3615 = vmatprep.subr.mxu0 0.0
        %3616 = vmatpush1.xpose.msra.mxu0 0.0
        %3617 = vmatprep.subr.mxu0 0.0
        %3618 = vmatpush1.xpose.msra.mxu0 0.0
        %3619 = vmatprep.subr.mxu0 0.0
        %3620 = vmatpush1.xpose.msra.mxu0 0.0
        %3621 = vmatprep.subr.mxu0 0.0
        %3622 = vmatpush1.xpose.msra.mxu0 0.0
        %3623 = vmatprep.subr.mxu0 0.0
        %3624 = vmatpush1.xpose.msra.mxu0 0.0
        %3625 = vmatprep.subr.mxu0 0.0
        %3626 = vmatpush1.xpose.msra.mxu0 0.0
        %3627 = vmatprep.subr.mxu0 0.0
        %3628 = vmatpush1.xpose.msra.mxu0 0.0
        %3629 = vmatprep.subr.mxu0 0.0
        %3630 = vmatpush1.xpose.msra.mxu0 0.0
        %3631 = vmatprep.subr.mxu0 0.0
        %3632 = vmatpush1.xpose.msra.mxu0 0.0
        %3633 = vmatprep.subr.mxu0 0.0
        %3634 = vmatpush1.xpose.msra.mxu0 0.0
        %3635 = vmatprep.subr.mxu0 0.0
        %3636 = vmatpush1.xpose.msra.mxu0 0.0
        %3637 = vmatprep.subr.mxu0 0.0
        %3638 = vmatpush1.xpose.msra.mxu0 0.0
        %3639 = vmatprep.subr.mxu0 0.0
        %3640 = vmatpush1.xpose.msra.mxu0 0.0
        %3641 = vmatprep.subr.mxu0 0.0
        %3642 = vmatpush1.xpose.msra.mxu0 0.0
        %3643 = vmatprep.subr.mxu0 0.0
        %3644 = vmatpush1.xpose.msra.mxu0 0.0
        %3645 = vmatprep.subr.mxu0 0.0
        %3646 = vmatpush1.xpose.msra.mxu0 0.0
        %3647 = vmatprep.subr.mxu0 0.0
        %3648 = vmatpush1.xpose.msra.mxu0 0.0
        %3649 = vmatprep.subr.mxu0 0.0
        %3650 = vmatpush1.xpose.msra.mxu0 0.0
        %3651 = vmatprep.subr.mxu0 0.0
        %3652 = vmatpush1.xpose.msra.mxu0 0.0
        %3653 = vmatprep.subr.mxu0 0.0
        %3654 = vmatpush1.xpose.msra.mxu0 0.0
        %3655 = vmatprep.subr.mxu0 0.0
        %3656 = vmatpush1.xpose.msra.mxu0 0.0
        %3657 = vmatprep.subr.mxu0 0.0
        %3658 = vmatpush1.xpose.msra.mxu0 0.0
        %3659 = vmatprep.subr.mxu0 0.0
        %3660 = vmatpush1.xpose.msra.mxu0 0.0
        %3661 = vmatprep.subr.mxu0 0.0
        %3662 = vmatpush1.xpose.msra.mxu0 0.0
        %3663 = vmatprep.subr.mxu0 0.0
        %3664 = vmatpush1.xpose.msra.mxu0 0.0
        %3665 = vmatprep.subr.mxu0 0.0
        %3666 = vmatpush1.xpose.msra.mxu0 0.0
        %3667 = vmatprep.subr.mxu0 0.0
        %3668 = vmatpush1.xpose.msra.mxu0 0.0
        %v3669 = vand.u32 %v1756, 4294901760
        %3670 = vmatprep.mubr.f32.mxu0 %v3669
        %v3671 = vand.u32 %v1752, 4294901760
        %3672 = vmatmul.mubr.f32.gmra.mrb[0].mxu0 %v3671
        %v3673 = vpop.f32.mrb[0].mxu0
        %v3674 = vadd.f32 %v3590, %v3673
        %v3675 = vpop.f32.mrb[0].mxu0
        %3676 = vdwg.mxu0
        %v3677 = vand.u32 %v1734, 4294901760
        %3678 = vmatprep.subr.mxu0 %v3677
        %v3679 = vand.u32 %v1733, 4294901760
        %3680 = vmatpush1.xpose.msra.mxu0 %v3679
        %v3681 = vand.u32 %v1738, 4294901760
        %3682 = vmatprep.subr.mxu0 %v3681
        %v3683 = vand.u32 %v1737, 4294901760
        %3684 = vmatpush1.xpose.msra.mxu0 %v3683
        %3685 = vmatprep.subr.mxu0 0.0
        %3686 = vmatpush1.xpose.msra.mxu0 0.0
        %3687 = vmatprep.subr.mxu0 0.0
        %3688 = vmatpush1.xpose.msra.mxu0 0.0
        %3689 = vmatprep.subr.mxu0 0.0
        %3690 = vmatpush1.xpose.msra.mxu0 0.0
        %3691 = vmatprep.subr.mxu0 0.0
        %3692 = vmatpush1.xpose.msra.mxu0 0.0
        %3693 = vmatprep.subr.mxu0 0.0
        %3694 = vmatpush1.xpose.msra.mxu0 0.0
        %3695 = vmatprep.subr.mxu0 0.0
        %3696 = vmatpush1.xpose.msra.mxu0 0.0
        %3697 = vmatprep.subr.mxu0 0.0
        %3698 = vmatpush1.xpose.msra.mxu0 0.0
        %3699 = vmatprep.subr.mxu0 0.0
        %3700 = vmatpush1.xpose.msra.mxu0 0.0
        %3701 = vmatprep.subr.mxu0 0.0
        %3702 = vmatpush1.xpose.msra.mxu0 0.0
        %3703 = vmatprep.subr.mxu0 0.0
        %3704 = vmatpush1.xpose.msra.mxu0 0.0
        %3705 = vmatprep.subr.mxu0 0.0
        %3706 = vmatpush1.xpose.msra.mxu0 0.0
        %3707 = vmatprep.subr.mxu0 0.0
        %3708 = vmatpush1.xpose.msra.mxu0 0.0
        %3709 = vmatprep.subr.mxu0 0.0
        %3710 = vmatpush1.xpose.msra.mxu0 0.0
        %3711 = vmatprep.subr.mxu0 0.0
        %3712 = vmatpush1.xpose.msra.mxu0 0.0
        %3713 = vmatprep.subr.mxu0 0.0
        %3714 = vmatpush1.xpose.msra.mxu0 0.0
        %3715 = vmatprep.subr.mxu0 0.0
        %3716 = vmatpush1.xpose.msra.mxu0 0.0
        %3717 = vmatprep.subr.mxu0 0.0
        %3718 = vmatpush1.xpose.msra.mxu0 0.0
        %3719 = vmatprep.subr.mxu0 0.0
        %3720 = vmatpush1.xpose.msra.mxu0 0.0
        %3721 = vmatprep.subr.mxu0 0.0
        %3722 = vmatpush1.xpose.msra.mxu0 0.0
        %3723 = vmatprep.subr.mxu0 0.0
        %3724 = vmatpush1.xpose.msra.mxu0 0.0
        %3725 = vmatprep.subr.mxu0 0.0
        %3726 = vmatpush1.xpose.msra.mxu0 0.0
        %3727 = vmatprep.subr.mxu0 0.0
        %3728 = vmatpush1.xpose.msra.mxu0 0.0
        %3729 = vmatprep.subr.mxu0 0.0
        %3730 = vmatpush1.xpose.msra.mxu0 0.0
        %3731 = vmatprep.subr.mxu0 0.0
        %3732 = vmatpush1.xpose.msra.mxu0 0.0
        %3733 = vmatprep.subr.mxu0 0.0
        %3734 = vmatpush1.xpose.msra.mxu0 0.0
        %3735 = vmatprep.subr.mxu0 0.0
        %3736 = vmatpush1.xpose.msra.mxu0 0.0
        %3737 = vmatprep.subr.mxu0 0.0
        %3738 = vmatpush1.xpose.msra.mxu0 0.0
        %3739 = vmatprep.subr.mxu0 0.0
        %3740 = vmatpush1.xpose.msra.mxu0 0.0
        %3741 = vmatprep.subr.mxu0 0.0
        %3742 = vmatpush1.xpose.msra.mxu0 0.0
        %3743 = vmatprep.subr.mxu0 0.0
        %3744 = vmatpush1.xpose.msra.mxu0 0.0
        %v3745 = vand.u32 %v1756, 4294901760
        %3746 = vmatprep.mubr.f32.mxu0 %v3745
        %v3747 = vand.u32 %v1752, 4294901760
        %3748 = vmatmul.mubr.f32.gmra.mrb[0].mxu0 %v3747
        %v3749 = vpop.f32.mrb[0].mxu0
        %v3750 = vadd.f32 %v3674, %v3749
        %v3751 = vpop.f32.mrb[0].mxu0
        %3752 = vdwg.mxu0
        %vm3753 = vcmask 122880
        %v3754 = vsel %vm3753, %v2754, -inf
        %3755 = vmax.xlane.f32.xlu0 %v3754
        %v3756 = vpop.xlane.xlu0 %3755
        %v3757 = vsel %vm3753, %v3750, -inf
        %3758 = vmax.xlane.f32.xlu0 %v3757
        %v3759 = vpop.xlane.xlu0 %3758
        %v3760 = vsub.f32 %v2754, %v3756
        %v3761 = vsub.f32 %v3750, %v3759
        %v3762 = vmul.f32 %v3760, 1.442695
        %v3763 = vpow.pop %v3762
        %v3764 = vmul.f32 %v3761, 1.442695
        %v3765 = vpow.pop %v3764
        %v3766 = vsel %vm3753, %v3763, 0.0
        %3767 = vadd.xlane.f32.xlu0 %v3766
        %v3768 = vpop.xlane.xlu0 %3767
        %v3769 = vsel %vm3753, %v3765, 0.0
        %3770 = vadd.xlane.f32.xlu0 %v3769
        %v3771 = vpop.xlane.xlu0 %3770
        %v3772 = vrcp.pop %v3768
        %v3773 = vrcp.pop %v3771
        %v3774 = vmul.f32 %v3763, %v3772
        %v3775 = vmul.f32 %v3765, %v3773
        %vm3776 = vcmask 130048
        %v3778 = vsel %vm3776, %v3774, 0
        %3780 = vmatprep.subr.mxu0 0.0
        %v3781 = vand.u32 %v288, 4294901760
        %3782 = vmatpush1.msra.mxu0 %v3781
        %3783 = vmatprep.subr.mxu0 0.0
        %v3784 = vand.u32 %v289, 4294901760
        %3785 = vmatpush1.msra.mxu0 %v3784
        %3786 = vmatprep.subr.mxu0 0.0
        %3787 = vmatpush1.msra.mxu0 0.0
        %3788 = vmatprep.subr.mxu0 0.0
        %3789 = vmatpush1.msra.mxu0 0.0
        %3790 = vmatprep.subr.mxu0 0.0
        %3791 = vmatpush1.msra.mxu0 0.0
        %3792 = vmatprep.subr.mxu0 0.0
        %3793 = vmatpush1.msra.mxu0 0.0
        %3794 = vmatprep.subr.mxu0 0.0
        %3795 = vmatpush1.msra.mxu0 0.0
        %3796 = vmatprep.subr.mxu0 0.0
        %3797 = vmatpush1.msra.mxu0 0.0
        %3798 = vmatprep.subr.mxu0 0.0
        %3799 = vmatpush1.msra.mxu0 0.0
        %3800 = vmatprep.subr.mxu0 0.0
        %3801 = vmatpush1.msra.mxu0 0.0
        %3802 = vmatprep.subr.mxu0 0.0
        %3803 = vmatpush1.msra.mxu0 0.0
        %3804 = vmatprep.subr.mxu0 0.0
        %3805 = vmatpush1.msra.mxu0 0.0
        %3806 = vmatprep.subr.mxu0 0.0
        %3807 = vmatpush1.msra.mxu0 0.0
        %3808 = vmatprep.subr.mxu0 0.0
        %3809 = vmatpush1.msra.mxu0 0.0
        %3810 = vmatprep.subr.mxu0 0.0
        %3811 = vmatpush1.msra.mxu0 0.0
        %3812 = vmatprep.subr.mxu0 0.0
        %3813 = vmatpush1.msra.mxu0 0.0
        %3814 = vmatprep.subr.mxu0 0.0
        %3815 = vmatpush1.msra.mxu0 0.0
        %3816 = vmatprep.subr.mxu0 0.0
        %3817 = vmatpush1.msra.mxu0 0.0
        %3818 = vmatprep.subr.mxu0 0.0
        %3819 = vmatpush1.msra.mxu0 0.0
        %3820 = vmatprep.subr.mxu0 0.0
        %3821 = vmatpush1.msra.mxu0 0.0
        %3822 = vmatprep.subr.mxu0 0.0
        %3823 = vmatpush1.msra.mxu0 0.0
        %3824 = vmatprep.subr.mxu0 0.0
        %3825 = vmatpush1.msra.mxu0 0.0
        %3826 = vmatprep.subr.mxu0 0.0
        %3827 = vmatpush1.msra.mxu0 0.0
        %3828 = vmatprep.subr.mxu0 0.0
        %3829 = vmatpush1.msra.mxu0 0.0
        %3830 = vmatprep.subr.mxu0 0.0
        %3831 = vmatpush1.msra.mxu0 0.0
        %3832 = vmatprep.subr.mxu0 0.0
        %3833 = vmatpush1.msra.mxu0 0.0
        %3834 = vmatprep.subr.mxu0 0.0
        %3835 = vmatpush1.msra.mxu0 0.0
        %3836 = vmatprep.subr.mxu0 0.0
        %3837 = vmatpush1.msra.mxu0 0.0
        %3838 = vmatprep.subr.mxu0 0.0
        %3839 = vmatpush1.msra.mxu0 0.0
        %3840 = vmatprep.subr.mxu0 0.0
        %3841 = vmatpush1.msra.mxu0 0.0
        %3842 = vmatprep.subr.mxu0 0.0
        %3843 = vmatpush1.msra.mxu0 0.0
        %3844 = vmatprep.subr.mxu0 0.0
        %3845 = vmatpush1.msra.mxu0 0.0
        %3846 = vmatprep.mubr.f32.mxu0 0.0
        %v3847 = vand.u32 %v3778, 4294901760
        %v3848 = vsub.f32 %v3778, %v3847
        %v3849 = vand.u32 %v3848, 4294901760
        %v3850 = vsub.f32 %v3848, %v3849
        %v3851 = vand.u32 %v3850, 4294901760
        %3852 = vmatmul.mubr.f32.gmra.mrb[0].mxu0 %v3851
        %v3853 = vpop.f32.mrb[0].mxu0
        %v3854 = vadd.f32 0.0, %v3853
        %v3855 = vpop.f32.mrb[0].mxu0
        %3856 = vdwg.mxu0
        %3857 = vmatprep.subr.mxu0 0.0
        %v3858 = vand.u32 %v288, 4294901760
        %v3859 = vsub.f32 %v288, %v3858
        %v3860 = vand.u32 %v3859, 4294901760
        %v3861 = vsub.f32 %v3859, %v3860
        %v3862 = vand.u32 %v3861, 4294901760
        %3863 = vmatpush1.msra.mxu0 %v3862
        %3864 = vmatprep.subr.mxu0 0.0
        %v3865 = vand.u32 %v289, 4294901760
        %v3866 = vsub.f32 %v289, %v3865
        %v3867 = vand.u32 %v3866, 4294901760
        %v3868 = vsub.f32 %v3866, %v3867
        %v3869 = vand.u32 %v3868, 4294901760
        %3870 = vmatpush1.msra.mxu0 %v3869
        %3871 = vmatprep.subr.mxu0 0.0
        %3872 = vmatpush1.msra.mxu0 0.0
        %3873 = vmatprep.subr.mxu0 0.0
        %3874 = vmatpush1.msra.mxu0 0.0
        %3875 = vmatprep.subr.mxu0 0.0
        %3876 = vmatpush1.msra.mxu0 0.0
        %3877 = vmatprep.subr.mxu0 0.0
        %3878 = vmatpush1.msra.mxu0 0.0
        %3879 = vmatprep.subr.mxu0 0.0
        %3880 = vmatpush1.msra.mxu0 0.0
        %3881 = vmatprep.subr.mxu0 0.0
        %3882 = vmatpush1.msra.mxu0 0.0
        %3883 = vmatprep.subr.mxu0 0.0
        %3884 = vmatpush1.msra.mxu0 0.0
        %3885 = vmatprep.subr.mxu0 0.0
        %3886 = vmatpush1.msra.mxu0 0.0
        %3887 = vmatprep.subr.mxu0 0.0
        %3888 = vmatpush1.msra.mxu0 0.0
        %3889 = vmatprep.subr.mxu0 0.0
        %3890 = vmatpush1.msra.mxu0 0.0
        %3891 = vmatprep.subr.mxu0 0.0
        %3892 = vmatpush1.msra.mxu0 0.0
        %3893 = vmatprep.subr.mxu0 0.0
        %3894 = vmatpush1.msra.mxu0 0.0
        %3895 = vmatprep.subr.mxu0 0.0
        %3896 = vmatpush1.msra.mxu0 0.0
        %3897 = vmatprep.subr.mxu0 0.0
        %3898 = vmatpush1.msra.mxu0 0.0
        %3899 = vmatprep.subr.mxu0 0.0
        %3900 = vmatpush1.msra.mxu0 0.0
        %3901 = vmatprep.subr.mxu0 0.0
        %3902 = vmatpush1.msra.mxu0 0.0
        %3903 = vmatprep.subr.mxu0 0.0
        %3904 = vmatpush1.msra.mxu0 0.0
        %3905 = vmatprep.subr.mxu0 0.0
        %3906 = vmatpush1.msra.mxu0 0.0
        %3907 = vmatprep.subr.mxu0 0.0
        %3908 = vmatpush1.msra.mxu0 0.0
        %3909 = vmatprep.subr.mxu0 0.0
        %3910 = vmatpush1.msra.mxu0 0.0
        %3911 = vmatprep.subr.mxu0 0.0
        %3912 = vmatpush1.msra.mxu0 0.0
        %3913 = vmatprep.subr.mxu0 0.0
        %3914 = vmatpush1.msra.mxu0 0.0
        %3915 = vmatprep.subr.mxu0 0.0
        %3916 = vmatpush1.msra.mxu0 0.0
        %3917 = vmatprep.subr.mxu0 0.0
        %3918 = vmatpush1.msra.mxu0 0.0
        %3919 = vmatprep.subr.mxu0 0.0
        %3920 = vmatpush1.msra.mxu0 0.0
        %3921 = vmatprep.subr.mxu0 0.0
        %3922 = vmatpush1.msra.mxu0 0.0
        %3923 = vmatprep.subr.mxu0 0.0
        %3924 = vmatpush1.msra.mxu0 0.0
        %3925 = vmatprep.subr.mxu0 0.0
        %3926 = vmatpush1.msra.mxu0 0.0
        %3927 = vmatprep.subr.mxu0 0.0
        %3928 = vmatpush1.msra.mxu0 0.0
        %3929 = vmatprep.subr.mxu0 0.0
        %3930 = vmatpush1.msra.mxu0 0.0
        %3931 = vmatprep.mubr.f32.mxu0 0.0
        %v3932 = vand.u32 %v3778, 4294901760
        %3933 = vmatmul.mubr.f32.gmra.mrb[0].mxu0 %v3932
        %v3934 = vpop.f32.mrb[0].mxu0
        %v3935 = vadd.f32 %v3854, %v3934
        %v3936 = vpop.f32.mrb[0].mxu0
        %3937 = vdwg.mxu0
        %3938 = vmatprep.subr.mxu0 0.0
        %v3939 = vand.u32 %v288, 4294901760
        %v3940 = vsub.f32 %v288, %v3939
        %3941 = vmatpush1.msra.mxu0 %v3940
        %3942 = vmatprep.subr.mxu0 0.0
        %v3943 = vand.u32 %v289, 4294901760
        %v3944 = vsub.f32 %v289, %v3943
        %3945 = vmatpush1.msra.mxu0 %v3944
        %3946 = vmatprep.subr.mxu0 0.0
        %3947 = vmatpush1.msra.mxu0 0.0
        %3948 = vmatprep.subr.mxu0 0.0
        %3949 = vmatpush1.msra.mxu0 0.0
        %3950 = vmatprep.subr.mxu0 0.0
        %3951 = vmatpush1.msra.mxu0 0.0
        %3952 = vmatprep.subr.mxu0 0.0
        %3953 = vmatpush1.msra.mxu0 0.0
        %3954 = vmatprep.subr.mxu0 0.0
        %3955 = vmatpush1.msra.mxu0 0.0
        %3956 = vmatprep.subr.mxu0 0.0
        %3957 = vmatpush1.msra.mxu0 0.0
        %3958 = vmatprep.subr.mxu0 0.0
        %3959 = vmatpush1.msra.mxu0 0.0
        %3960 = vmatprep.subr.mxu0 0.0
        %3961 = vmatpush1.msra.mxu0 0.0
        %3962 = vmatprep.subr.mxu0 0.0
        %3963 = vmatpush1.msra.mxu0 0.0
        %3964 = vmatprep.subr.mxu0 0.0
        %3965 = vmatpush1.msra.mxu0 0.0
        %3966 = vmatprep.subr.mxu0 0.0
        %3967 = vmatpush1.msra.mxu0 0.0
        %3968 = vmatprep.subr.mxu0 0.0
        %3969 = vmatpush1.msra.mxu0 0.0
        %3970 = vmatprep.subr.mxu0 0.0
        %3971 = vmatpush1.msra.mxu0 0.0
        %3972 = vmatprep.subr.mxu0 0.0
        %3973 = vmatpush1.msra.mxu0 0.0
        %3974 = vmatprep.subr.mxu0 0.0
        %3975 = vmatpush1.msra.mxu0 0.0
        %3976 = vmatprep.subr.mxu0 0.0
        %3977 = vmatpush1.msra.mxu0 0.0
        %3978 = vmatprep.subr.mxu0 0.0
        %3979 = vmatpush1.msra.mxu0 0.0
        %3980 = vmatprep.subr.mxu0 0.0
        %3981 = vmatpush1.msra.mxu0 0.0
        %3982 = vmatprep.subr.mxu0 0.0
        %3983 = vmatpush1.msra.mxu0 0.0
        %3984 = vmatprep.subr.mxu0 0.0
        %3985 = vmatpush1.msra.mxu0 0.0
        %3986 = vmatprep.subr.mxu0 0.0
        %3987 = vmatpush1.msra.mxu0 0.0
        %3988 = vmatprep.subr.mxu0 0.0
        %3989 = vmatpush1.msra.mxu0 0.0
        %3990 = vmatprep.subr.mxu0 0.0
        %3991 = vmatpush1.msra.mxu0 0.0
        %3992 = vmatprep.subr.mxu0 0.0
        %3993 = vmatpush1.msra.mxu0 0.0
        %3994 = vmatprep.subr.mxu0 0.0
        %3995 = vmatpush1.msra.mxu0 0.0
        %3996 = vmatprep.subr.mxu0 0.0
        %3997 = vmatpush1.msra.mxu0 0.0
        %3998 = vmatprep.subr.mxu0 0.0
        %3999 = vmatpush1.msra.mxu0 0.0
        %4000 = vmatprep.subr.mxu0 0.0
        %4001 = vmatpush1.msra.mxu0 0.0
        %4002 = vmatprep.subr.mxu0 0.0
        %4003 = vmatpush1.msra.mxu0 0.0
        %4004 = vmatprep.subr.mxu0 0.0
        %4005 = vmatpush1.msra.mxu0 0.0
        %4006 = vmatprep.mubr.f32.mxu0 0.0
        %v4007 = vand.u32 %v3778, 4294901760
        %v4008 = vsub.f32 %v3778, %v4007
        %4009 = vmatmul.mubr.f32.gmra.mrb[0].mxu0 %v4008
        %v4010 = vpop.f32.mrb[0].mxu0
        %v4011 = vadd.f32 %v3935, %v4010
        %v4012 = vpop.f32.mrb[0].mxu0
        %4013 = vdwg.mxu0
        %4014 = vmatprep.subr.mxu0 0.0
        %v4015 = vand.u32 %v288, 4294901760
        %4016 = vmatpush1.msra.mxu0 %v4015
        %4017 = vmatprep.subr.mxu0 0.0
        %v4018 = vand.u32 %v289, 4294901760
        %4019 = vmatpush1.msra.mxu0 %v4018
        %4020 = vmatprep.subr.mxu0 0.0
        %4021 = vmatpush1.msra.mxu0 0.0
        %4022 = vmatprep.subr.mxu0 0.0
        %4023 = vmatpush1.msra.mxu0 0.0
        %4024 = vmatprep.subr.mxu0 0.0
        %4025 = vmatpush1.msra.mxu0 0.0
        %4026 = vmatprep.subr.mxu0 0.0
        %4027 = vmatpush1.msra.mxu0 0.0
        %4028 = vmatprep.subr.mxu0 0.0
        %4029 = vmatpush1.msra.mxu0 0.0
        %4030 = vmatprep.subr.mxu0 0.0
        %4031 = vmatpush1.msra.mxu0 0.0
        %4032 = vmatprep.subr.mxu0 0.0
        %4033 = vmatpush1.msra.mxu0 0.0
        %4034 = vmatprep.subr.mxu0 0.0
        %4035 = vmatpush1.msra.mxu0 0.0
        %4036 = vmatprep.subr.mxu0 0.0
        %4037 = vmatpush1.msra.mxu0 0.0
        %4038 = vmatprep.subr.mxu0 0.0
        %4039 = vmatpush1.msra.mxu0 0.0
        %4040 = vmatprep.subr.mxu0 0.0
        %4041 = vmatpush1.msra.mxu0 0.0
        %4042 = vmatprep.subr.mxu0 0.0
        %4043 = vmatpush1.msra.mxu0 0.0
        %4044 = vmatprep.subr.mxu0 0.0
        %4045 = vmatpush1.msra.mxu0 0.0
        %4046 = vmatprep.subr.mxu0 0.0
        %4047 = vmatpush1.msra.mxu0 0.0
        %4048 = vmatprep.subr.mxu0 0.0
        %4049 = vmatpush1.msra.mxu0 0.0
        %4050 = vmatprep.subr.mxu0 0.0
        %4051 = vmatpush1.msra.mxu0 0.0
        %4052 = vmatprep.subr.mxu0 0.0
        %4053 = vmatpush1.msra.mxu0 0.0
        %4054 = vmatprep.subr.mxu0 0.0
        %4055 = vmatpush1.msra.mxu0 0.0
        %4056 = vmatprep.subr.mxu0 0.0
        %4057 = vmatpush1.msra.mxu0 0.0
        %4058 = vmatprep.subr.mxu0 0.0
        %4059 = vmatpush1.msra.mxu0 0.0
        %4060 = vmatprep.subr.mxu0 0.0
        %4061 = vmatpush1.msra.mxu0 0.0
        %4062 = vmatprep.subr.mxu0 0.0
        %4063 = vmatpush1.msra.mxu0 0.0
        %4064 = vmatprep.subr.mxu0 0.0
        %4065 = vmatpush1.msra.mxu0 0.0
        %4066 = vmatprep.subr.mxu0 0.0
        %4067 = vmatpush1.msra.mxu0 0.0
        %4068 = vmatprep.subr.mxu0 0.0
        %4069 = vmatpush1.msra.mxu0 0.0
        %4070 = vmatprep.subr.mxu0 0.0
        %4071 = vmatpush1.msra.mxu0 0.0
        %4072 = vmatprep.subr.mxu0 0.0
        %4073 = vmatpush1.msra.mxu0 0.0
        %4074 = vmatprep.subr.mxu0 0.0
        %4075 = vmatpush1.msra.mxu0 0.0
        %4076 = vmatprep.subr.mxu0 0.0
        %4077 = vmatpush1.msra.mxu0 0.0
        %4078 = vmatprep.subr.mxu0 0.0
        %4079 = vmatpush1.msra.mxu0 0.0
        %4080 = vmatprep.mubr.f32.mxu0 0.0
        %v4081 = vand.u32 %v3778, 4294901760
        %v4082 = vsub.f32 %v3778, %v4081
        %v4083 = vand.u32 %v4082, 4294901760
        %4084 = vmatmul.mubr.f32.gmra.mrb[0].mxu0 %v4083
        %v4085 = vpop.f32.mrb[0].mxu0
        %v4086 = vadd.f32 %v4011, %v4085
        %v4087 = vpop.f32.mrb[0].mxu0
        %4088 = vdwg.mxu0
        %4089 = vmatprep.subr.mxu0 0.0
        %v4090 = vand.u32 %v288, 4294901760
        %v4091 = vsub.f32 %v288, %v4090
        %v4092 = vand.u32 %v4091, 4294901760
        %4093 = vmatpush1.msra.mxu0 %v4092
        %4094 = vmatprep.subr.mxu0 0.0
        %v4095 = vand.u32 %v289, 4294901760
        %v4096 = vsub.f32 %v289, %v4095
        %v4097 = vand.u32 %v4096, 4294901760
        %4098 = vmatpush1.msra.mxu0 %v4097
        %4099 = vmatprep.subr.mxu0 0.0
        %4100 = vmatpush1.msra.mxu0 0.0
        %4101 = vmatprep.subr.mxu0 0.0
        %4102 = vmatpush1.msra.mxu0 0.0
        %4103 = vmatprep.subr.mxu0 0.0
        %4104 = vmatpush1.msra.mxu0 0.0
        %4105 = vmatprep.subr.mxu0 0.0
        %4106 = vmatpush1.msra.mxu0 0.0
        %4107 = vmatprep.subr.mxu0 0.0
        %4108 = vmatpush1.msra.mxu0 0.0
        %4109 = vmatprep.subr.mxu0 0.0
        %4110 = vmatpush1.msra.mxu0 0.0
        %4111 = vmatprep.subr.mxu0 0.0
        %4112 = vmatpush1.msra.mxu0 0.0
        %4113 = vmatprep.subr.mxu0 0.0
        %4114 = vmatpush1.msra.mxu0 0.0
        %4115 = vmatprep.subr.mxu0 0.0
        %4116 = vmatpush1.msra.mxu0 0.0
        %4117 = vmatprep.subr.mxu0 0.0
        %4118 = vmatpush1.msra.mxu0 0.0
        %4119 = vmatprep.subr.mxu0 0.0
        %4120 = vmatpush1.msra.mxu0 0.0
        %4121 = vmatprep.subr.mxu0 0.0
        %4122 = vmatpush1.msra.mxu0 0.0
        %4123 = vmatprep.subr.mxu0 0.0
        %4124 = vmatpush1.msra.mxu0 0.0
        %4125 = vmatprep.subr.mxu0 0.0
        %4126 = vmatpush1.msra.mxu0 0.0
        %4127 = vmatprep.subr.mxu0 0.0
        %4128 = vmatpush1.msra.mxu0 0.0
        %4129 = vmatprep.subr.mxu0 0.0
        %4130 = vmatpush1.msra.mxu0 0.0
        %4131 = vmatprep.subr.mxu0 0.0
        %4132 = vmatpush1.msra.mxu0 0.0
        %4133 = vmatprep.subr.mxu0 0.0
        %4134 = vmatpush1.msra.mxu0 0.0
        %4135 = vmatprep.subr.mxu0 0.0
        %4136 = vmatpush1.msra.mxu0 0.0
        %4137 = vmatprep.subr.mxu0 0.0
        %4138 = vmatpush1.msra.mxu0 0.0
        %4139 = vmatprep.subr.mxu0 0.0
        %4140 = vmatpush1.msra.mxu0 0.0
        %4141 = vmatprep.subr.mxu0 0.0
        %4142 = vmatpush1.msra.mxu0 0.0
        %4143 = vmatprep.subr.mxu0 0.0
        %4144 = vmatpush1.msra.mxu0 0.0
        %4145 = vmatprep.subr.mxu0 0.0
        %4146 = vmatpush1.msra.mxu0 0.0
        %4147 = vmatprep.subr.mxu0 0.0
        %4148 = vmatpush1.msra.mxu0 0.0
        %4149 = vmatprep.subr.mxu0 0.0
        %4150 = vmatpush1.msra.mxu0 0.0
        %4151 = vmatprep.subr.mxu0 0.0
        %4152 = vmatpush1.msra.mxu0 0.0
        %4153 = vmatprep.subr.mxu0 0.0
        %4154 = vmatpush1.msra.mxu0 0.0
        %4155 = vmatprep.subr.mxu0 0.0
        %4156 = vmatpush1.msra.mxu0 0.0
        %4157 = vmatprep.subr.mxu0 0.0
        %4158 = vmatpush1.msra.mxu0 0.0
        %4159 = vmatprep.mubr.f32.mxu0 0.0
        %v4160 = vand.u32 %v3778, 4294901760
        %4161 = vmatmul.mubr.f32.gmra.mrb[0].mxu0 %v4160
        %v4162 = vpop.f32.mrb[0].mxu0
        %v4163 = vadd.f32 %v4086, %v4162
        %v4164 = vpop.f32.mrb[0].mxu0
        %4165 = vdwg.mxu0
        %4166 = vmatprep.subr.mxu0 0.0
        %v4167 = vand.u32 %v288, 4294901760
        %4168 = vmatpush1.msra.mxu0 %v4167
        %4169 = vmatprep.subr.mxu0 0.0
        %v4170 = vand.u32 %v289, 4294901760
        %4171 = vmatpush1.msra.mxu0 %v4170
        %4172 = vmatprep.subr.mxu0 0.0
        %4173 = vmatpush1.msra.mxu0 0.0
        %4174 = vmatprep.subr.mxu0 0.0
        %4175 = vmatpush1.msra.mxu0 0.0
        %4176 = vmatprep.subr.mxu0 0.0
        %4177 = vmatpush1.msra.mxu0 0.0
        %4178 = vmatprep.subr.mxu0 0.0
        %4179 = vmatpush1.msra.mxu0 0.0
        %4180 = vmatprep.subr.mxu0 0.0
        %4181 = vmatpush1.msra.mxu0 0.0
        %4182 = vmatprep.subr.mxu0 0.0
        %4183 = vmatpush1.msra.mxu0 0.0
        %4184 = vmatprep.subr.mxu0 0.0
        %4185 = vmatpush1.msra.mxu0 0.0
        %4186 = vmatprep.subr.mxu0 0.0
        %4187 = vmatpush1.msra.mxu0 0.0
        %4188 = vmatprep.subr.mxu0 0.0
        %4189 = vmatpush1.msra.mxu0 0.0
        %4190 = vmatprep.subr.mxu0 0.0
        %4191 = vmatpush1.msra.mxu0 0.0
        %4192 = vmatprep.subr.mxu0 0.0
        %4193 = vmatpush1.msra.mxu0 0.0
        %4194 = vmatprep.subr.mxu0 0.0
        %4195 = vmatpush1.msra.mxu0 0.0
        %4196 = vmatprep.subr.mxu0 0.0
        %4197 = vmatpush1.msra.mxu0 0.0
        %4198 = vmatprep.subr.mxu0 0.0
        %4199 = vmatpush1.msra.mxu0 0.0
        %4200 = vmatprep.subr.mxu0 0.0
        %4201 = vmatpush1.msra.mxu0 0.0
        %4202 = vmatprep.subr.mxu0 0.0
        %4203 = vmatpush1.msra.mxu0 0.0
        %4204 = vmatprep.subr.mxu0 0.0
        %4205 = vmatpush1.msra.mxu0 0.0
        %4206 = vmatprep.subr.mxu0 0.0
        %4207 = vmatpush1.msra.mxu0 0.0
        %4208 = vmatprep.subr.mxu0 0.0
        %4209 = vmatpush1.msra.mxu0 0.0
        %4210 = vmatprep.subr.mxu0 0.0
        %4211 = vmatpush1.msra.mxu0 0.0
        %4212 = vmatprep.subr.mxu0 0.0
        %4213 = vmatpush1.msra.mxu0 0.0
        %4214 = vmatprep.subr.mxu0 0.0
        %4215 = vmatpush1.msra.mxu0 0.0
        %4216 = vmatprep.subr.mxu0 0.0
        %4217 = vmatpush1.msra.mxu0 0.0
        %4218 = vmatprep.subr.mxu0 0.0
        %4219 = vmatpush1.msra.mxu0 0.0
        %4220 = vmatprep.subr.mxu0 0.0
        %4221 = vmatpush1.msra.mxu0 0.0
        %4222 = vmatprep.subr.mxu0 0.0
        %4223 = vmatpush1.msra.mxu0 0.0
        %4224 = vmatprep.subr.mxu0 0.0
        %4225 = vmatpush1.msra.mxu0 0.0
        %4226 = vmatprep.subr.mxu0 0.0
        %4227 = vmatpush1.msra.mxu0 0.0
        %4228 = vmatprep.subr.mxu0 0.0
        %4229 = vmatpush1.msra.mxu0 0.0
        %4230 = vmatprep.subr.mxu0 0.0
        %4231 = vmatpush1.msra.mxu0 0.0
        %4232 = vmatprep.mubr.f32.mxu0 0.0
        %v4233 = vand.u32 %v3778, 4294901760
        %4234 = vmatmul.mubr.f32.gmra.mrb[0].mxu0 %v4233
        %v4235 = vpop.f32.mrb[0].mxu0
        %v4236 = vadd.f32 %v4163, %v4235
        %v4237 = vpop.f32.mrb[0].mxu0
        %4238 = vdwg.mxu0
        %v4240 = vsel %vm3776, %v3775, 0
        %4242 = vmatprep.subr.mxu0 0.0
        %v4243 = vand.u32 %v290, 4294901760
        %4244 = vmatpush1.msra.mxu0 %v4243
        %4245 = vmatprep.subr.mxu0 0.0
        %v4246 = vand.u32 %v291, 4294901760
        %4247 = vmatpush1.msra.mxu0 %v4246
        %4248 = vmatprep.subr.mxu0 0.0
        %4249 = vmatpush1.msra.mxu0 0.0
        %4250 = vmatprep.subr.mxu0 0.0
        %4251 = vmatpush1.msra.mxu0 0.0
        %4252 = vmatprep.subr.mxu0 0.0
        %4253 = vmatpush1.msra.mxu0 0.0
        %4254 = vmatprep.subr.mxu0 0.0
        %4255 = vmatpush1.msra.mxu0 0.0
        %4256 = vmatprep.subr.mxu0 0.0
        %4257 = vmatpush1.msra.mxu0 0.0
        %4258 = vmatprep.subr.mxu0 0.0
        %4259 = vmatpush1.msra.mxu0 0.0
        %4260 = vmatprep.subr.mxu0 0.0
        %4261 = vmatpush1.msra.mxu0 0.0
        %4262 = vmatprep.subr.mxu0 0.0
        %4263 = vmatpush1.msra.mxu0 0.0
        %4264 = vmatprep.subr.mxu0 0.0
        %4265 = vmatpush1.msra.mxu0 0.0
        %4266 = vmatprep.subr.mxu0 0.0
        %4267 = vmatpush1.msra.mxu0 0.0
        %4268 = vmatprep.subr.mxu0 0.0
        %4269 = vmatpush1.msra.mxu0 0.0
        %4270 = vmatprep.subr.mxu0 0.0
        %4271 = vmatpush1.msra.mxu0 0.0
        %4272 = vmatprep.subr.mxu0 0.0
        %4273 = vmatpush1.msra.mxu0 0.0
        %4274 = vmatprep.subr.mxu0 0.0
        %4275 = vmatpush1.msra.mxu0 0.0
        %4276 = vmatprep.subr.mxu0 0.0
        %4277 = vmatpush1.msra.mxu0 0.0
        %4278 = vmatprep.subr.mxu0 0.0
        %4279 = vmatpush1.msra.mxu0 0.0
        %4280 = vmatprep.subr.mxu0 0.0
        %4281 = vmatpush1.msra.mxu0 0.0
        %4282 = vmatprep.subr.mxu0 0.0
        %4283 = vmatpush1.msra.mxu0 0.0
        %4284 = vmatprep.subr.mxu0 0.0
        %4285 = vmatpush1.msra.mxu0 0.0
        %4286 = vmatprep.subr.mxu0 0.0
        %4287 = vmatpush1.msra.mxu0 0.0
        %4288 = vmatprep.subr.mxu0 0.0
        %4289 = vmatpush1.msra.mxu0 0.0
        %4290 = vmatprep.subr.mxu0 0.0
        %4291 = vmatpush1.msra.mxu0 0.0
        %4292 = vmatprep.subr.mxu0 0.0
        %4293 = vmatpush1.msra.mxu0 0.0
        %4294 = vmatprep.subr.mxu0 0.0
        %4295 = vmatpush1.msra.mxu0 0.0
        %4296 = vmatprep.subr.mxu0 0.0
        %4297 = vmatpush1.msra.mxu0 0.0
        %4298 = vmatprep.subr.mxu0 0.0
        %4299 = vmatpush1.msra.mxu0 0.0
        %4300 = vmatprep.subr.mxu0 0.0
        %4301 = vmatpush1.msra.mxu0 0.0
        %4302 = vmatprep.subr.mxu0 0.0
        %4303 = vmatpush1.msra.mxu0 0.0
        %4304 = vmatprep.subr.mxu0 0.0
        %4305 = vmatpush1.msra.mxu0 0.0
        %4306 = vmatprep.subr.mxu0 0.0
        %4307 = vmatpush1.msra.mxu0 0.0
        %4308 = vmatprep.mubr.f32.mxu0 0.0
        %v4309 = vand.u32 %v4240, 4294901760
        %v4310 = vsub.f32 %v4240, %v4309
        %v4311 = vand.u32 %v4310, 4294901760
        %v4312 = vsub.f32 %v4310, %v4311
        %v4313 = vand.u32 %v4312, 4294901760
        %4314 = vmatmul.mubr.f32.gmra.mrb[0].mxu0 %v4313
        %v4315 = vpop.f32.mrb[0].mxu0
        %v4316 = vadd.f32 0.0, %v4315
        %v4317 = vpop.f32.mrb[0].mxu0
        %4318 = vdwg.mxu0
        %4319 = vmatprep.subr.mxu0 0.0
        %v4320 = vand.u32 %v290, 4294901760
        %v4321 = vsub.f32 %v290, %v4320
        %v4322 = vand.u32 %v4321, 4294901760
        %v4323 = vsub.f32 %v4321, %v4322
        %v4324 = vand.u32 %v4323, 4294901760
        %4325 = vmatpush1.msra.mxu0 %v4324
        %4326 = vmatprep.subr.mxu0 0.0
        %v4327 = vand.u32 %v291, 4294901760
        %v4328 = vsub.f32 %v291, %v4327
        %v4329 = vand.u32 %v4328, 4294901760
        %v4330 = vsub.f32 %v4328, %v4329
        %v4331 = vand.u32 %v4330, 4294901760
        %4332 = vmatpush1.msra.mxu0 %v4331
        %4333 = vmatprep.subr.mxu0 0.0
        %4334 = vmatpush1.msra.mxu0 0.0
        %4335 = vmatprep.subr.mxu0 0.0
        %4336 = vmatpush1.msra.mxu0 0.0
        %4337 = vmatprep.subr.mxu0 0.0
        %4338 = vmatpush1.msra.mxu0 0.0
        %4339 = vmatprep.subr.mxu0 0.0
        %4340 = vmatpush1.msra.mxu0 0.0
        %4341 = vmatprep.subr.mxu0 0.0
        %4342 = vmatpush1.msra.mxu0 0.0
        %4343 = vmatprep.subr.mxu0 0.0
        %4344 = vmatpush1.msra.mxu0 0.0
        %4345 = vmatprep.subr.mxu0 0.0
        %4346 = vmatpush1.msra.mxu0 0.0
        %4347 = vmatprep.subr.mxu0 0.0
        %4348 = vmatpush1.msra.mxu0 0.0
        %4349 = vmatprep.subr.mxu0 0.0
        %4350 = vmatpush1.msra.mxu0 0.0
        %4351 = vmatprep.subr.mxu0 0.0
        %4352 = vmatpush1.msra.mxu0 0.0
        %4353 = vmatprep.subr.mxu0 0.0
        %4354 = vmatpush1.msra.mxu0 0.0
        %4355 = vmatprep.subr.mxu0 0.0
        %4356 = vmatpush1.msra.mxu0 0.0
        %4357 = vmatprep.subr.mxu0 0.0
        %4358 = vmatpush1.msra.mxu0 0.0
        %4359 = vmatprep.subr.mxu0 0.0
        %4360 = vmatpush1.msra.mxu0 0.0
        %4361 = vmatprep.subr.mxu0 0.0
        %4362 = vmatpush1.msra.mxu0 0.0
        %4363 = vmatprep.subr.mxu0 0.0
        %4364 = vmatpush1.msra.mxu0 0.0
        %4365 = vmatprep.subr.mxu0 0.0
        %4366 = vmatpush1.msra.mxu0 0.0
        %4367 = vmatprep.subr.mxu0 0.0
        %4368 = vmatpush1.msra.mxu0 0.0
        %4369 = vmatprep.subr.mxu0 0.0
        %4370 = vmatpush1.msra.mxu0 0.0
        %4371 = vmatprep.subr.mxu0 0.0
        %4372 = vmatpush1.msra.mxu0 0.0
        %4373 = vmatprep.subr.mxu0 0.0
        %4374 = vmatpush1.msra.mxu0 0.0
        %4375 = vmatprep.subr.mxu0 0.0
        %4376 = vmatpush1.msra.mxu0 0.0
        %4377 = vmatprep.subr.mxu0 0.0
        %4378 = vmatpush1.msra.mxu0 0.0
        %4379 = vmatprep.subr.mxu0 0.0
        %4380 = vmatpush1.msra.mxu0 0.0
        %4381 = vmatprep.subr.mxu0 0.0
        %4382 = vmatpush1.msra.mxu0 0.0
        %4383 = vmatprep.subr.mxu0 0.0
        %4384 = vmatpush1.msra.mxu0 0.0
        %4385 = vmatprep.subr.mxu0 0.0
        %4386 = vmatpush1.msra.mxu0 0.0
        %4387 = vmatprep.subr.mxu0 0.0
        %4388 = vmatpush1.msra.mxu0 0.0
        %4389 = vmatprep.subr.mxu0 0.0
        %4390 = vmatpush1.msra.mxu0 0.0
        %4391 = vmatprep.subr.mxu0 0.0
        %4392 = vmatpush1.msra.mxu0 0.0
        %4393 = vmatprep.mubr.f32.mxu0 0.0
        %v4394 = vand.u32 %v4240, 4294901760
        %4395 = vmatmul.mubr.f32.gmra.mrb[0].mxu0 %v4394
        %v4396 = vpop.f32.mrb[0].mxu0
        %v4397 = vadd.f32 %v4316, %v4396
        %v4398 = vpop.f32.mrb[0].mxu0
        %4399 = vdwg.mxu0
        %4400 = vmatprep.subr.mxu0 0.0
        %v4401 = vand.u32 %v290, 4294901760
        %v4402 = vsub.f32 %v290, %v4401
        %4403 = vmatpush1.msra.mxu0 %v4402
        %4404 = vmatprep.subr.mxu0 0.0
        %v4405 = vand.u32 %v291, 4294901760
        %v4406 = vsub.f32 %v291, %v4405
        %4407 = vmatpush1.msra.mxu0 %v4406
        %4408 = vmatprep.subr.mxu0 0.0
        %4409 = vmatpush1.msra.mxu0 0.0
        %4410 = vmatprep.subr.mxu0 0.0
        %4411 = vmatpush1.msra.mxu0 0.0
        %4412 = vmatprep.subr.mxu0 0.0
        %4413 = vmatpush1.msra.mxu0 0.0
        %4414 = vmatprep.subr.mxu0 0.0
        %4415 = vmatpush1.msra.mxu0 0.0
        %4416 = vmatprep.subr.mxu0 0.0
        %4417 = vmatpush1.msra.mxu0 0.0
        %4418 = vmatprep.subr.mxu0 0.0
        %4419 = vmatpush1.msra.mxu0 0.0
        %4420 = vmatprep.subr.mxu0 0.0
        %4421 = vmatpush1.msra.mxu0 0.0
        %4422 = vmatprep.subr.mxu0 0.0
        %4423 = vmatpush1.msra.mxu0 0.0
        %4424 = vmatprep.subr.mxu0 0.0
        %4425 = vmatpush1.msra.mxu0 0.0
        %4426 = vmatprep.subr.mxu0 0.0
        %4427 = vmatpush1.msra.mxu0 0.0
        %4428 = vmatprep.subr.mxu0 0.0
        %4429 = vmatpush1.msra.mxu0 0.0
        %4430 = vmatprep.subr.mxu0 0.0
        %4431 = vmatpush1.msra.mxu0 0.0
        %4432 = vmatprep.subr.mxu0 0.0
        %4433 = vmatpush1.msra.mxu0 0.0
        %4434 = vmatprep.subr.mxu0 0.0
        %4435 = vmatpush1.msra.mxu0 0.0
        %4436 = vmatprep.subr.mxu0 0.0
        %4437 = vmatpush1.msra.mxu0 0.0
        %4438 = vmatprep.subr.mxu0 0.0
        %4439 = vmatpush1.msra.mxu0 0.0
        %4440 = vmatprep.subr.mxu0 0.0
        %4441 = vmatpush1.msra.mxu0 0.0
        %4442 = vmatprep.subr.mxu0 0.0
        %4443 = vmatpush1.msra.mxu0 0.0
        %4444 = vmatprep.subr.mxu0 0.0
        %4445 = vmatpush1.msra.mxu0 0.0
        %4446 = vmatprep.subr.mxu0 0.0
        %4447 = vmatpush1.msra.mxu0 0.0
        %4448 = vmatprep.subr.mxu0 0.0
        %4449 = vmatpush1.msra.mxu0 0.0
        %4450 = vmatprep.subr.mxu0 0.0
        %4451 = vmatpush1.msra.mxu0 0.0
        %4452 = vmatprep.subr.mxu0 0.0
        %4453 = vmatpush1.msra.mxu0 0.0
        %4454 = vmatprep.subr.mxu0 0.0
        %4455 = vmatpush1.msra.mxu0 0.0
        %4456 = vmatprep.subr.mxu0 0.0
        %4457 = vmatpush1.msra.mxu0 0.0
        %4458 = vmatprep.subr.mxu0 0.0
        %4459 = vmatpush1.msra.mxu0 0.0
        %4460 = vmatprep.subr.mxu0 0.0
        %4461 = vmatpush1.msra.mxu0 0.0
        %4462 = vmatprep.subr.mxu0 0.0
        %4463 = vmatpush1.msra.mxu0 0.0
        %4464 = vmatprep.subr.mxu0 0.0
        %4465 = vmatpush1.msra.mxu0 0.0
        %4466 = vmatprep.subr.mxu0 0.0
        %4467 = vmatpush1.msra.mxu0 0.0
        %4468 = vmatprep.mubr.f32.mxu0 0.0
        %v4469 = vand.u32 %v4240, 4294901760
        %v4470 = vsub.f32 %v4240, %v4469
        %4471 = vmatmul.mubr.f32.gmra.mrb[0].mxu0 %v4470
        %v4472 = vpop.f32.mrb[0].mxu0
        %v4473 = vadd.f32 %v4397, %v4472
        %v4474 = vpop.f32.mrb[0].mxu0
        %4475 = vdwg.mxu0
        %4476 = vmatprep.subr.mxu0 0.0
        %v4477 = vand.u32 %v290, 4294901760
        %4478 = vmatpush1.msra.mxu0 %v4477
        %4479 = vmatprep.subr.mxu0 0.0
        %v4480 = vand.u32 %v291, 4294901760
        %4481 = vmatpush1.msra.mxu0 %v4480
        %4482 = vmatprep.subr.mxu0 0.0
        %4483 = vmatpush1.msra.mxu0 0.0
        %4484 = vmatprep.subr.mxu0 0.0
        %4485 = vmatpush1.msra.mxu0 0.0
        %4486 = vmatprep.subr.mxu0 0.0
        %4487 = vmatpush1.msra.mxu0 0.0
        %4488 = vmatprep.subr.mxu0 0.0
        %4489 = vmatpush1.msra.mxu0 0.0
        %4490 = vmatprep.subr.mxu0 0.0
        %4491 = vmatpush1.msra.mxu0 0.0
        %4492 = vmatprep.subr.mxu0 0.0
        %4493 = vmatpush1.msra.mxu0 0.0
        %4494 = vmatprep.subr.mxu0 0.0
        %4495 = vmatpush1.msra.mxu0 0.0
        %4496 = vmatprep.subr.mxu0 0.0
        %4497 = vmatpush1.msra.mxu0 0.0
        %4498 = vmatprep.subr.mxu0 0.0
        %4499 = vmatpush1.msra.mxu0 0.0
        %4500 = vmatprep.subr.mxu0 0.0
        %4501 = vmatpush1.msra.mxu0 0.0
        %4502 = vmatprep.subr.mxu0 0.0
        %4503 = vmatpush1.msra.mxu0 0.0
        %4504 = vmatprep.subr.mxu0 0.0
        %4505 = vmatpush1.msra.mxu0 0.0
        %4506 = vmatprep.subr.mxu0 0.0
        %4507 = vmatpush1.msra.mxu0 0.0
        %4508 = vmatprep.subr.mxu0 0.0
        %4509 = vmatpush1.msra.mxu0 0.0
        %4510 = vmatprep.subr.mxu0 0.0
        %4511 = vmatpush1.msra.mxu0 0.0
        %4512 = vmatprep.subr.mxu0 0.0
        %4513 = vmatpush1.msra.mxu0 0.0
        %4514 = vmatprep.subr.mxu0 0.0
        %4515 = vmatpush1.msra.mxu0 0.0
        %4516 = vmatprep.subr.mxu0 0.0
        %4517 = vmatpush1.msra.mxu0 0.0
        %4518 = vmatprep.subr.mxu0 0.0
        %4519 = vmatpush1.msra.mxu0 0.0
        %4520 = vmatprep.subr.mxu0 0.0
        %4521 = vmatpush1.msra.mxu0 0.0
        %4522 = vmatprep.subr.mxu0 0.0
        %4523 = vmatpush1.msra.mxu0 0.0
        %4524 = vmatprep.subr.mxu0 0.0
        %4525 = vmatpush1.msra.mxu0 0.0
        %4526 = vmatprep.subr.mxu0 0.0
        %4527 = vmatpush1.msra.mxu0 0.0
        %4528 = vmatprep.subr.mxu0 0.0
        %4529 = vmatpush1.msra.mxu0 0.0
        %4530 = vmatprep.subr.mxu0 0.0
        %4531 = vmatpush1.msra.mxu0 0.0
        %4532 = vmatprep.subr.mxu0 0.0
        %4533 = vmatpush1.msra.mxu0 0.0
        %4534 = vmatprep.subr.mxu0 0.0
        %4535 = vmatpush1.msra.mxu0 0.0
        %4536 = vmatprep.subr.mxu0 0.0
        %4537 = vmatpush1.msra.mxu0 0.0
        %4538 = vmatprep.subr.mxu0 0.0
        %4539 = vmatpush1.msra.mxu0 0.0
        %4540 = vmatprep.subr.mxu0 0.0
        %4541 = vmatpush1.msra.mxu0 0.0
        %4542 = vmatprep.mubr.f32.mxu0 0.0
        %v4543 = vand.u32 %v4240, 4294901760
        %v4544 = vsub.f32 %v4240, %v4543
        %v4545 = vand.u32 %v4544, 4294901760
        %4546 = vmatmul.mubr.f32.gmra.mrb[0].mxu0 %v4545
        %v4547 = vpop.f32.mrb[0].mxu0
        %v4548 = vadd.f32 %v4473, %v4547
        %v4549 = vpop.f32.mrb[0].mxu0
        %4550 = vdwg.mxu0
        %4551 = vmatprep.subr.mxu0 0.0
        %v4552 = vand.u32 %v290, 4294901760
        %v4553 = vsub.f32 %v290, %v4552
        %v4554 = vand.u32 %v4553, 4294901760
        %4555 = vmatpush1.msra.mxu0 %v4554
        %4556 = vmatprep.subr.mxu0 0.0
        %v4557 = vand.u32 %v291, 4294901760
        %v4558 = vsub.f32 %v291, %v4557
        %v4559 = vand.u32 %v4558, 4294901760
        %4560 = vmatpush1.msra.mxu0 %v4559
        %4561 = vmatprep.subr.mxu0 0.0
        %4562 = vmatpush1.msra.mxu0 0.0
        %4563 = vmatprep.subr.mxu0 0.0
        %4564 = vmatpush1.msra.mxu0 0.0
        %4565 = vmatprep.subr.mxu0 0.0
        %4566 = vmatpush1.msra.mxu0 0.0
        %4567 = vmatprep.subr.mxu0 0.0
        %4568 = vmatpush1.msra.mxu0 0.0
        %4569 = vmatprep.subr.mxu0 0.0
        %4570 = vmatpush1.msra.mxu0 0.0
        %4571 = vmatprep.subr.mxu0 0.0
        %4572 = vmatpush1.msra.mxu0 0.0
        %4573 = vmatprep.subr.mxu0 0.0
        %4574 = vmatpush1.msra.mxu0 0.0
        %4575 = vmatprep.subr.mxu0 0.0
        %4576 = vmatpush1.msra.mxu0 0.0
        %4577 = vmatprep.subr.mxu0 0.0
        %4578 = vmatpush1.msra.mxu0 0.0
        %4579 = vmatprep.subr.mxu0 0.0
        %4580 = vmatpush1.msra.mxu0 0.0
        %4581 = vmatprep.subr.mxu0 0.0
        %4582 = vmatpush1.msra.mxu0 0.0
        %4583 = vmatprep.subr.mxu0 0.0
        %4584 = vmatpush1.msra.mxu0 0.0
        %4585 = vmatprep.subr.mxu0 0.0
        %4586 = vmatpush1.msra.mxu0 0.0
        %4587 = vmatprep.subr.mxu0 0.0
        %4588 = vmatpush1.msra.mxu0 0.0
        %4589 = vmatprep.subr.mxu0 0.0
        %4590 = vmatpush1.msra.mxu0 0.0
        %4591 = vmatprep.subr.mxu0 0.0
        %4592 = vmatpush1.msra.mxu0 0.0
        %4593 = vmatprep.subr.mxu0 0.0
        %4594 = vmatpush1.msra.mxu0 0.0
        %4595 = vmatprep.subr.mxu0 0.0
        %4596 = vmatpush1.msra.mxu0 0.0
        %4597 = vmatprep.subr.mxu0 0.0
        %4598 = vmatpush1.msra.mxu0 0.0
        %4599 = vmatprep.subr.mxu0 0.0
        %4600 = vmatpush1.msra.mxu0 0.0
        %4601 = vmatprep.subr.mxu0 0.0
        %4602 = vmatpush1.msra.mxu0 0.0
        %4603 = vmatprep.subr.mxu0 0.0
        %4604 = vmatpush1.msra.mxu0 0.0
        %4605 = vmatprep.subr.mxu0 0.0
        %4606 = vmatpush1.msra.mxu0 0.0
        %4607 = vmatprep.subr.mxu0 0.0
        %4608 = vmatpush1.msra.mxu0 0.0
        %4609 = vmatprep.subr.mxu0 0.0
        %4610 = vmatpush1.msra.mxu0 0.0
        %4611 = vmatprep.subr.mxu0 0.0
        %4612 = vmatpush1.msra.mxu0 0.0
        %4613 = vmatprep.subr.mxu0 0.0
        %4614 = vmatpush1.msra.mxu0 0.0
        %4615 = vmatprep.subr.mxu0 0.0
        %4616 = vmatpush1.msra.mxu0 0.0
        %4617 = vmatprep.subr.mxu0 0.0
        %4618 = vmatpush1.msra.mxu0 0.0
        %4619 = vmatprep.subr.mxu0 0.0
        %4620 = vmatpush1.msra.mxu0 0.0
        %4621 = vmatprep.mubr.f32.mxu0 0.0
        %v4622 = vand.u32 %v4240, 4294901760
        %4623 = vmatmul.mubr.f32.gmra.mrb[0].mxu0 %v4622
        %v4624 = vpop.f32.mrb[0].mxu0
        %v4625 = vadd.f32 %v4548, %v4624
        %v4626 = vpop.f32.mrb[0].mxu0
        %4627 = vdwg.mxu0
        %4628 = vmatprep.subr.mxu0 0.0
        %v4629 = vand.u32 %v290, 4294901760
        %4630 = vmatpush1.msra.mxu0 %v4629
        %4631 = vmatprep.subr.mxu0 0.0
        %v4632 = vand.u32 %v291, 4294901760
        %4633 = vmatpush1.msra.mxu0 %v4632
        %4634 = vmatprep.subr.mxu0 0.0
        %4635 = vmatpush1.msra.mxu0 0.0
        %4636 = vmatprep.subr.mxu0 0.0
        %4637 = vmatpush1.msra.mxu0 0.0
        %4638 = vmatprep.subr.mxu0 0.0
        %4639 = vmatpush1.msra.mxu0 0.0
        %4640 = vmatprep.subr.mxu0 0.0
        %4641 = vmatpush1.msra.mxu0 0.0
        %4642 = vmatprep.subr.mxu0 0.0
        %4643 = vmatpush1.msra.mxu0 0.0
        %4644 = vmatprep.subr.mxu0 0.0
        %4645 = vmatpush1.msra.mxu0 0.0
        %4646 = vmatprep.subr.mxu0 0.0
        %4647 = vmatpush1.msra.mxu0 0.0
        %4648 = vmatprep.subr.mxu0 0.0
        %4649 = vmatpush1.msra.mxu0 0.0
        %4650 = vmatprep.subr.mxu0 0.0
        %4651 = vmatpush1.msra.mxu0 0.0
        %4652 = vmatprep.subr.mxu0 0.0
        %4653 = vmatpush1.msra.mxu0 0.0
        %4654 = vmatprep.subr.mxu0 0.0
        %4655 = vmatpush1.msra.mxu0 0.0
        %4656 = vmatprep.subr.mxu0 0.0
        %4657 = vmatpush1.msra.mxu0 0.0
        %4658 = vmatprep.subr.mxu0 0.0
        %4659 = vmatpush1.msra.mxu0 0.0
        %4660 = vmatprep.subr.mxu0 0.0
        %4661 = vmatpush1.msra.mxu0 0.0
        %4662 = vmatprep.subr.mxu0 0.0
        %4663 = vmatpush1.msra.mxu0 0.0
        %4664 = vmatprep.subr.mxu0 0.0
        %4665 = vmatpush1.msra.mxu0 0.0
        %4666 = vmatprep.subr.mxu0 0.0
        %4667 = vmatpush1.msra.mxu0 0.0
        %4668 = vmatprep.subr.mxu0 0.0
        %4669 = vmatpush1.msra.mxu0 0.0
        %4670 = vmatprep.subr.mxu0 0.0
        %4671 = vmatpush1.msra.mxu0 0.0
        %4672 = vmatprep.subr.mxu0 0.0
        %4673 = vmatpush1.msra.mxu0 0.0
        %4674 = vmatprep.subr.mxu0 0.0
        %4675 = vmatpush1.msra.mxu0 0.0
        %4676 = vmatprep.subr.mxu0 0.0
        %4677 = vmatpush1.msra.mxu0 0.0
        %4678 = vmatprep.subr.mxu0 0.0
        %4679 = vmatpush1.msra.mxu0 0.0
        %4680 = vmatprep.subr.mxu0 0.0
        %4681 = vmatpush1.msra.mxu0 0.0
        %4682 = vmatprep.subr.mxu0 0.0
        %4683 = vmatpush1.msra.mxu0 0.0
        %4684 = vmatprep.subr.mxu0 0.0
        %4685 = vmatpush1.msra.mxu0 0.0
        %4686 = vmatprep.subr.mxu0 0.0
        %4687 = vmatpush1.msra.mxu0 0.0
        %4688 = vmatprep.subr.mxu0 0.0
        %4689 = vmatpush1.msra.mxu0 0.0
        %4690 = vmatprep.subr.mxu0 0.0
        %4691 = vmatpush1.msra.mxu0 0.0
        %4692 = vmatprep.subr.mxu0 0.0
        %4693 = vmatpush1.msra.mxu0 0.0
        %4694 = vmatprep.mubr.f32.mxu0 0.0
        %v4695 = vand.u32 %v4240, 4294901760
        %4696 = vmatmul.mubr.f32.gmra.mrb[0].mxu0 %v4695
        %v4697 = vpop.f32.mrb[0].mxu0
        %v4698 = vadd.f32 %v4625, %v4697
        %v4699 = vpop.f32.mrb[0].mxu0
        %4700 = vdwg.mxu0
        %v4701 = vld [vmem:[%s4] sm:$0x1]
        %v4703 = vlaneseq
        %v4704 = vshrl.u32 %v4703, 7
        %v4705 = vsub.s32 0, %v4704
        %v4706 = vrot.slane %v4701, %v4705
        %v4708 = vmul.f32 %v4236, %v4706
        %v4709 = vmul.f32 %v4698, %v4706
        %v4712 = vrot.slane %v4709, 7
        %vm4713 = vcmask 1041409
        %v4714 = vsel %vm4713, %v4712, %v4708
        %vm4716 = vcmask 254976
        %v4717 = vsel %vm4716, %v4714, 0.0
        %4718 = vadd.xlane.f32.xlu0 %v4717
        %v4719 = vpop.xlane.xlu0 %4718
        %s4720 = sld [smem:[#allocation2]]
        %v4721 = vstv %s4720
        %v4722 = vadd.f32 %v4719, %v4721
        %vm4723 = vcmask 1041408
        %v4724 = vsel %vm4723, %v4722, 0.0
        %4726 = vset.pattern.permute.xlu0 0
        %4727 = vperm.xlu0 %4726, %v4724
        %v4728 = vpop.permute.xlu0 %4727
        %4730 = vst [vmem:[%s286] sm:$0xff] %v4728
        %s4731 = sand.u32 %s164, 1
        %s4732 = scalar_lea.sflag [#allocation5], %s4731
        %s4733 = sand.u32 %s164, 1
        %s4734 = smul.addr %s4733, 8
        %s4735 = scalar_lea.vmem [#allocation8], %s4734
        // Predicated region
        $region53: #{tpu_custom_call.1} parent=43 // pred_check
          %p4736 = pneg %p174
        $region54: #{tpu_custom_call.1} parent=43 // pred_check_branch
          %4738 = sbr.rel (%p4736) target = $region56
        $region55: #{tpu_custom_call.1} parent=43 // pred_region
          %s4740 = ssub.s32 128, 128
          %4741 = vsyncadd %s4732, %s4740
          %s4742 = smul.addr %s25, 128
          %s4743 = scalar_lea.hbm %s6, %s4742
          %s4745 = sshll.u32 %s4735, 4
          %s4746 = int_to_ptr.vmem [resolvable:$true] %s4745
          %4748 = dma.vmem_to_hbm [thread:$0]  %s4746, 128, %s4743, %s4732
        $region56: #{tpu_custom_call.1} parent=43 // pred_fallthru
          _
      $region44: #{tpu_custom_call.1} parent=5 // pred_fallthru
        _
      %p4749 = scmp.le.s32.totalorder 2, %s20
      // Predicated region
      $region57: #{tpu_custom_call.1} parent=5 // pred_check
        %p4750 = pneg %p4749
      $region58: #{tpu_custom_call.1} parent=5 // pred_check_branch
        %4752 = sbr.rel (%p4750) target = $region60
      $region59: #{tpu_custom_call.1} parent=5 // pred_region
        %s4753 = ssub.s32 %s20, 2
        // Predicated region
        $region61: #{tpu_custom_call.1} parent=59 // pred_check
          %p4754 = pneg %p180
        $region62: #{tpu_custom_call.1} parent=59 // pred_check_branch
          %4756 = sbr.rel (%p4754) target = $region64
        $region63: #{tpu_custom_call.1} parent=59 // pred_region
          %s4757 = sand.u32 %s165, 1
          %s4758 = scalar_lea.sflag [#allocation5], %s4757
          %s4759 = sand.u32 %s165, 1
          %s4760 = smul.addr %s4759, 8
          %s4761 = scalar_lea.vmem [#allocation8], %s4760
          %4762 = dma.done %s4758, 128
        $region64: #{tpu_custom_call.1} parent=59 // pred_fallthru
          _
      $region60: #{tpu_custom_call.1} parent=5 // pred_fallthru
        _
    $region6: #{tpu_custom_call.1} parent=1 // loop_footer
      %s24 = sadd.s32 1, %s20
    $region7: #{tpu_custom_call.1} parent=1 // loop_footer_branch
      %19 = sbr.rel target = $region3
    $region8: #{tpu_custom_call.1} parent=1 // loop_exit
      _
    %4763 = vsyncpa [#allocation4], 1
    %s4764 = scalar_lea.sflag [#allocation4], 1
    %4765 = vsyncpa %s4764, 1
    %4766 = vsyncpa [#allocation7], 1
    %4767 = vsyncpa [#allocation5], 1
    %s4768 = scalar_lea.sflag [#allocation5], 1
    %4769 = vsyncpa %s4768, 1

// kernel: tpu_custom_call.1
$region0: #{tpu_custom_call.1}
  #allocation0 [shape = 'u32[]', space=smem, size = 0x4, offset = 0x4, fixed_abs, tag = 'smem constant byte address 0x4 - core index']
  #allocation1 [shape = 'u32[144,128]{1,0:T(1,128)}', space=vmem, size = 0x12000, scoped, tag = 'internal scratch']
  #allocation2 [shape = 'f32[1]{0:T(128)S(6)}', space=smem, size = 0x200, scoped, tag = 'scoped memory for tpu_custom_call.1']
  %s0 = inlined_call_operand.hbm [shape: f32[4,16,32], index: 0, kind: input, shape index: {}]
  %s1 = inlined_call_operand.hbm [shape: f32[32,512], index: 1, kind: input, shape index: {}]
  %s2 = inlined_call_operand.vmem [shape: f32[1,512], index: 2, kind: input, shape index: {}]
  %s3 = inlined_call_operand.vmem [shape: f32[1,512], index: 3, kind: input, shape index: {}]
  %s4 = inlined_call_operand.vmem [shape: f32[1,32], index: 4, kind: input, shape index: {}]
  %s5 = inlined_call_operand.<no memory space> [shape: f32[1], index: 5, kind: input, shape index: {}]
  %s6 = inlined_call_operand.hbm [shape: f32[16,128], index: 6, kind: output, shape index: {}]
  %s7 = sld [smem:[#allocation0]]
  $region65: #{tpu_custom_call.1} parent=0
    _
  %s9 = ssub.s32 1, %s7
  %s10 = scalar_select 0, %s9, %s7
  %11 = sst [smem:[#allocation2]] %s5
  $region1: #{tpu_custom_call.1} parent=0
    #allocation3 [shape = 'u8[32768]{0}', space=vmem, size = 0x8000, scoped, tag = 'input window, operand 0']
    #allocation4 [shape = 's32[2]{0}', space=sflag, size = 0x8, scoped, tag = 'scoped memory for tpu_custom_call.1']
    #allocation5 [shape = 's32[2]{0}', space=sflag, size = 0x8, scoped, tag = 'scoped memory for tpu_custom_call.1']
    #allocation6 [shape = 'u8[65536]{0}', space=vmem, size = 0x10000, scoped, tag = 'input window, operand 1, single buffered']
    #allocation7 [shape = 's32[1]{0}', space=sflag, size = 0x4, scoped, tag = 'scoped memory for tpu_custom_call.1']
    #allocation8 [shape = 'u8[8192]{0}', space=vmem, size = 0x2000, scoped, tag = 'output window, operand 0']
    %12 = vsyncpa [#allocation4], 0
    %s13 = scalar_lea.sflag [#allocation4], 1
    %14 = vsyncpa %s13, 0
    %15 = vsyncpa [#allocation7], 0
    %16 = vsyncpa [#allocation5], 0
    %s17 = scalar_lea.sflag [#allocation5], 1
    %18 = vsyncpa %s17, 0
    loop: start=0, step=1, limit=4
    $region2: #{tpu_custom_call.1} parent=1 // loop_pre_header
      _
    $region3: #{tpu_custom_call.1} parent=1 // loop_header
      %s20 = sphi 0, %s24
      %p21 = scmp.ge.s32.totalorder %s20, 4
      %s30 = sphi 0, %s32
      %s33 = sphi 0, %s30
      %s34 = sphi 0, %s33
      %s50 = sphi 0, %s34
      %s54 = sphi 0, %s54
      %s56 = sphi 0, %s54
      %s57 = sphi 0, %s56
      %s71 = sphi 0, %s57
      %s75 = sphi 0, %s75
      %s77 = sphi 0, %s75
      %s78 = sphi 0, %s77
      %s92 = sphi 0, %s78
      %s96 = sphi 0, %s96
      %s98 = sphi 0, %s96
      %s99 = sphi 0, %s98
      %s113 = sphi 0, %s99
      %s117 = sphi 0, %s117
      %s119 = sphi 0, %s117
      %s120 = sphi 0, %s119
      %s134 = sphi 0, %s120
      %s138 = sphi 0, %s138
      %s140 = sphi 0, %s138
      %s141 = sphi 0, %s140
      %s155 = sphi 0, %s141
      %s161 = sphi 0, %s163
      %s164 = sphi 0, %s161
      %s165 = sphi 0, %s164
      %s181 = sphi 0, %s165
    $region4: #{tpu_custom_call.1} parent=1 // loop_header_branch
      %23 = sbr.rel (%p21) target = $region8
    $region5: #{tpu_custom_call.1} parent=1 // loop_body
      %s25 = ssub.s32 %s20, 1
      %s26 = ssub.s32 %s20, 2
      %s27 = sadd.s32 %s20, 1
      %s28 = ssub.s32 %s20, %s27
      %p29 = scmp.eq.s32.totalorder %s28, 0
      %s31 = sadd.s32 %s30, 1
      %s32 = scalar_select %p29, %s30, %s31
      %p35 = pneg %p29
      %p36 = scmp.eq.s32.totalorder %s20, 1
      %p37 = por %p35, %p36
      %p38 = scmp.ne.s32.totalorder %s30, %s33
      %p39 = scmp.eq.s32.totalorder %s20, 0
      %p40 = por %p38, %p39
      %p41 = scmp.ne.s32.totalorder %s30, %s33
      %p42 = scmp.eq.s32.totalorder %s25, 1
      %p43 = por %p41, %p42
      %p44 = scmp.ne.s32.totalorder %s33, %s34
      %p45 = scmp.eq.s32.totalorder %s25, 0
      %p46 = por %p44, %p45
      %p47 = scmp.ne.s32.totalorder %s33, %s34
      %p48 = scmp.eq.s32.totalorder %s26, 1
      %p49 = por %p47, %p48
      %p51 = scmp.ne.s32.totalorder %s34, %s50
      %p52 = scmp.eq.s32.totalorder %s26, 0
      %p53 = por %p51, %p52
      %s55 = sadd.s32 %s54, 1
      %p58 = scmp.eq.s32.totalorder %s20, 1
      %p59 = scmp.ne.s32.totalorder %s54, %s56
      %p60 = scmp.eq.s32.totalorder %s20, 0
      %p61 = por %p59, %p60
      %p62 = scmp.ne.s32.totalorder %s54, %s56
      %p63 = scmp.eq.s32.totalorder %s25, 1
      %p64 = por %p62, %p63
      %p65 = scmp.ne.s32.totalorder %s56, %s57
      %p66 = scmp.eq.s32.totalorder %s25, 0
      %p67 = por %p65, %p66
      %p68 = scmp.ne.s32.totalorder %s56, %s57
      %p69 = scmp.eq.s32.totalorder %s26, 1
      %p70 = por %p68, %p69
      %p72 = scmp.ne.s32.totalorder %s57, %s71
      %p73 = scmp.eq.s32.totalorder %s26, 0
      %p74 = por %p72, %p73
      %s76 = sadd.s32 %s75, 1
      %p79 = scmp.eq.s32.totalorder %s20, 1
      %p80 = scmp.ne.s32.totalorder %s75, %s77
      %p81 = scmp.eq.s32.totalorder %s20, 0
      %p82 = por %p80, %p81
      %p83 = scmp.ne.s32.totalorder %s75, %s77
      %p84 = scmp.eq.s32.totalorder %s25, 1
      %p85 = por %p83, %p84
      %p86 = scmp.ne.s32.totalorder %s77, %s78
      %p87 = scmp.eq.s32.totalorder %s25, 0
      %p88 = por %p86, %p87
      %p89 = scmp.ne.s32.totalorder %s77, %s78
      %p90 = scmp.eq.s32.totalorder %s26, 1
      %p91 = por %p89, %p90
      %p93 = scmp.ne.s32.totalorder %s78, %s92
      %p94 = scmp.eq.s32.totalorder %s26, 0
      %p95 = por %p93, %p94
      %s97 = sadd.s32 %s96, 1
      %p100 = scmp.eq.s32.totalorder %s20, 1
      %p101 = scmp.ne.s32.totalorder %s96, %s98
      %p102 = scmp.eq.s32.totalorder %s20, 0
      %p103 = por %p101, %p102
      %p104 = scmp.ne.s32.totalorder %s96, %s98
      %p105 = scmp.eq.s32.totalorder %s25, 1
      %p106 = por %p104, %p105
      %p107 = scmp.ne.s32.totalorder %s98, %s99
      %p108 = scmp.eq.s32.totalorder %s25, 0
      %p109 = por %p107, %p108
      %p110 = scmp.ne.s32.totalorder %s98, %s99
      %p111 = scmp.eq.s32.totalorder %s26, 1
      %p112 = por %p110, %p111
      %p114 = scmp.ne.s32.totalorder %s99, %s113
      %p115 = scmp.eq.s32.totalorder %s26, 0
      %p116 = por %p114, %p115
      %s118 = sadd.s32 %s117, 1
      %p121 = scmp.eq.s32.totalorder %s20, 1
      %p122 = scmp.ne.s32.totalorder %s117, %s119
      %p123 = scmp.eq.s32.totalorder %s20, 0
      %p124 = por %p122, %p123
      %p125 = scmp.ne.s32.totalorder %s117, %s119
      %p126 = scmp.eq.s32.totalorder %s25, 1
      %p127 = por %p125, %p126
      %p128 = scmp.ne.s32.totalorder %s119, %s120
      %p129 = scmp.eq.s32.totalorder %s25, 0
      %p130 = por %p128, %p129
      %p131 = scmp.ne.s32.totalorder %s119, %s120
      %p132 = scmp.eq.s32.totalorder %s26, 1
      %p133 = por %p131, %p132
      %p135 = scmp.ne.s32.totalorder %s120, %s134
      %p136 = scmp.eq.s32.totalorder %s26, 0
      %p137 = por %p135, %p136
      %s139 = sadd.s32 %s138, 1
      %p142 = scmp.eq.s32.totalorder %s20, 1
      %p143 = scmp.ne.s32.totalorder %s138, %s140
      %p144 = scmp.eq.s32.totalorder %s20, 0
      %p145 = por %p143, %p144
      %p146 = scmp.ne.s32.totalorder %s138, %s140
      %p147 = scmp.eq.s32.totalorder %s25, 1
      %p148 = por %p146, %p147
      %p149 = scmp.ne.s32.totalorder %s140, %s141
      %p150 = scmp.eq.s32.totalorder %s25, 0
      %p151 = por %p149, %p150
      %p152 = scmp.ne.s32.totalorder %s140, %s141
      %p153 = scmp.eq.s32.totalorder %s26, 1
      %p154 = por %p152, %p153
      %p156 = scmp.ne.s32.totalorder %s141, %s155
      %p157 = scmp.eq.s32.totalorder %s26, 0
      %p158 = por %p156, %p157
      %s159 = ssub.s32 %s20, %s27
      %p160 = scmp.eq.s32.totalorder %s159, 0
      %s162 = sadd.s32 %s161, 1
      %s163 = scalar_select %p160, %s161, %s162
      %p166 = pneg %p160
      %p167 = scmp.eq.s32.totalorder %s20, 1
      %p168 = por %p166, %p167
      %p169 = scmp.ne.s32.totalorder %s161, %s164
      %p170 = scmp.eq.s32.totalorder %s20, 0
      %p171 = por %p169, %p170
      %p172 = scmp.ne.s32.totalorder %s161, %s164
      %p173 = scmp.eq.s32.totalorder %s25, 1
      %p174 = por %p172, %p173
      %p175 = scmp.ne.s32.totalorder %s164, %s165
      %p176 = scmp.eq.s32.totalorder %s25, 0
      %p177 = por %p175, %p176
      %p178 = scmp.ne.s32.totalorder %s164, %s165
      %p179 = scmp.eq.s32.totalorder %s26, 1
      %p180 = por %p178, %p179
      %p182 = scmp.ne.s32.totalorder %s165, %s181
      %p183 = scmp.eq.s32.totalorder %s26, 0
      %p184 = por %p182, %p183
      %p185 = scmp.le.s32.totalorder 1, %s20
      %p186 = scmp.lt.s32.totalorder %s20, 3
      %p187 = pnand %p185, %p186
      %p188 = pneg %p187
      // Predicated region
      $region9: #{tpu_custom_call.1} parent=5 // pred_check
        _
      $region10: #{tpu_custom_call.1} parent=5 // pred_check_branch
        %190 = sbr.rel (%p187) target = $region12
      $region11: #{tpu_custom_call.1} parent=5 // pred_region
        %s191 = ssub.s32 %s20, 1
        // Predicated region
        $region13: #{tpu_custom_call.1} parent=11 // pred_check
          %p192 = pneg %p67
        $region14: #{tpu_custom_call.1} parent=11 // pred_check_branch
          %194 = sbr.rel (%p192) target = $region16
        $region15: #{tpu_custom_call.1} parent=11 // pred_region
          %s196 = ssub.s32 2048, 2048
          %197 = vsyncadd [#allocation7], %s196
          %s198 = sshll.u32 [#allocation6], 4
          %s199 = int_to_ptr.vmem [resolvable:$true] %s198
          %204 = dma.hbm_to_vmem [thread:$0]  %s1, 2048, %s199, [#allocation7], 512, 512, 32
        $region16: #{tpu_custom_call.1} parent=11 // pred_fallthru
          _
        // Predicated region
        $region17: #{tpu_custom_call.1} parent=11 // pred_check
          %p205 = pneg %p88
        $region18: #{tpu_custom_call.1} parent=11 // pred_check_branch
          %207 = sbr.rel (%p205) target = $region20
        $region19: #{tpu_custom_call.1} parent=11 // pred_region
          _
        $region20: #{tpu_custom_call.1} parent=11 // pred_fallthru
          _
        // Predicated region
        $region21: #{tpu_custom_call.1} parent=11 // pred_check
          %p208 = pneg %p109
        $region22: #{tpu_custom_call.1} parent=11 // pred_check_branch
          %210 = sbr.rel (%p208) target = $region24
        $region23: #{tpu_custom_call.1} parent=11 // pred_region
          _
        $region24: #{tpu_custom_call.1} parent=11 // pred_fallthru
          _
        // Predicated region
        $region25: #{tpu_custom_call.1} parent=11 // pred_check
          %p211 = pneg %p130
        $region26: #{tpu_custom_call.1} parent=11 // pred_check_branch
          %213 = sbr.rel (%p211) target = $region28
        $region27: #{tpu_custom_call.1} parent=11 // pred_region
          _
        $region28: #{tpu_custom_call.1} parent=11 // pred_fallthru
          _
        // Predicated region
        $region29: #{tpu_custom_call.1} parent=11 // pred_check
          %p214 = pneg %p151
        $region30: #{tpu_custom_call.1} parent=11 // pred_check_branch
          %216 = sbr.rel (%p214) target = $region32
        $region31: #{tpu_custom_call.1} parent=11 // pred_region
          _
        $region32: #{tpu_custom_call.1} parent=11 // pred_fallthru
          _
      $region12: #{tpu_custom_call.1} parent=5 // pred_fallthru
        _
      %p217 = scmp.lt.s32.totalorder %s20, 2
      // Predicated region
      $region33: #{tpu_custom_call.1} parent=5 // pred_check
        %p218 = pneg %p217
      $region34: #{tpu_custom_call.1} parent=5 // pred_check_branch
        %220 = sbr.rel (%p218) target = $region36
      $region35: #{tpu_custom_call.1} parent=5 // pred_region
        // Predicated region
        $region37: #{tpu_custom_call.1} parent=35 // pred_check
          %p221 = pneg %p40
        $region38: #{tpu_custom_call.1} parent=35 // pred_check_branch
          %223 = sbr.rel (%p221) target = $region40
        $region39: #{tpu_custom_call.1} parent=35 // pred_region
          %s224 = sand.u32 %s30, 1
          %s225 = scalar_lea.sflag [#allocation4], %s224
          %s226 = sand.u32 %s30, 1
          %s227 = smul.addr %s226, 32
          %s228 = scalar_lea.vmem [#allocation3], %s227
          %s229 = smul.u32 2, %s20
          %s231 = ssub.s32 512, 512
          %232 = vsyncadd %s225, %s231
          %s233 = smul.addr %s229, 2
          %s234 = smul.addr %s233, 128
          %s235 = scalar_lea.hbm %s0, %s234
          %s236 = sshll.u32 %s228, 4
          %s237 = int_to_ptr.vmem [resolvable:$true] %s236
          %242 = dma.hbm_to_vmem [thread:$0]  %s235, 512, %s237, %s225, 128, 128, 8
        $region40: #{tpu_custom_call.1} parent=35 // pred_fallthru
          _
      $region36: #{tpu_custom_call.1} parent=5 // pred_fallthru
        _
      %p243 = scmp.le.s32.totalorder 1, %s20
      %p244 = scmp.lt.s32.totalorder %s20, 3
      %p245 = pnand %p243, %p244
      %p246 = pneg %p245
      // Predicated region
      $region41: #{tpu_custom_call.1} parent=5 // pred_check
        _
      $region42: #{tpu_custom_call.1} parent=5 // pred_check_branch
        %248 = sbr.rel (%p245) target = $region44
      $region43: #{tpu_custom_call.1} parent=5 // pred_region
        %s249 = ssub.s32 %s20, 1
        %s250 = sand.u32 %s33, 1
        %s251 = scalar_lea.sflag [#allocation4], %s250
        %s252 = sand.u32 %s33, 1
        %s253 = smul.addr %s252, 32
        %s254 = scalar_lea.vmem [#allocation3], %s253
        // Predicated region
        $region45: #{tpu_custom_call.1} parent=43 // pred_check
          %p255 = pneg %p46
        $region46: #{tpu_custom_call.1} parent=43 // pred_check_branch
          %257 = sbr.rel (%p255) target = $region48
        $region47: #{tpu_custom_call.1} parent=43 // pred_region
          %258 = dma.done %s251, 512
        $region48: #{tpu_custom_call.1} parent=43 // pred_fallthru
          _
        // Predicated region
        $region49: #{tpu_custom_call.1} parent=43 // pred_check
          %p259 = pneg %p67
        $region50: #{tpu_custom_call.1} parent=43 // pred_check_branch
          %261 = sbr.rel (%p259) target = $region52
        $region51: #{tpu_custom_call.1} parent=43 // pred_region
          %262 = dma.done [#allocation7], 2048
        $region52: #{tpu_custom_call.1} parent=43 // pred_fallthru
          _
        %s263 = sand.u32 %s33, 1
        %s264 = scalar_lea.sflag [#allocation4], %s263
        %s265 = sand.u32 %s33, 1
        %s266 = smul.addr %s265, 32
        %s267 = scalar_lea.vmem [#allocation3], %s266
        %p268 = pneg %p46
        %p269 = pneg %p43
        %p270 = pneg %p67
        %p271 = pneg %p64
        %p272 = pneg %p88
        %p273 = pneg %p85
        %p274 = pneg %p109
        %p275 = pneg %p106
        %p276 = pneg %p130
        %p277 = pneg %p127
        %p278 = pneg %p151
        %p279 = pneg %p148
        %p280 = pneg %p177
        %p281 = pneg %p174
        %s282 = sand.u32 %s164, 1
        %s283 = scalar_lea.sflag [#allocation5], %s282
        %s284 = sand.u32 %s164, 1
        %s285 = smul.addr %s284, 8
        %s286 = scalar_lea.vmem [#allocation8], %s285
        %s287 = smul.u32 2, %s25
        %v288 = vld [vmem:[%s254] sm:$0xff]
        %v289 = vld [vmem:[%s254 + $0x8] sm:$0xff]
        %v290 = vld [vmem:[%s254 + $0x10] sm:$0xff]
        %v291 = vld [vmem:[%s254 + $0x18] sm:$0xff]
        %v292 = vld [vmem:[#allocation6] sm:$0xff]
        %v293 = vld [vmem:[#allocation6 + $0x8] sm:$0xff]
        %v294 = vld [vmem:[#allocation6 + $0x10] sm:$0xff]
        %v295 = vld [vmem:[#allocation6 + $0x18] sm:$0xff]
        %v296 = vld [vmem:[#allocation6 + $0x20] sm:$0xff]
        %v297 = vld [vmem:[#allocation6 + $0x28] sm:$0xff]
        %v298 = vld [vmem:[#allocation6 + $0x30] sm:$0xff]
        %v299 = vld [vmem:[#allocation6 + $0x38] sm:$0xff]
        %v300 = vld [vmem:[#allocation6 + $0x40] sm:$0xff]
        %v301 = vld [vmem:[#allocation6 + $0x48] sm:$0xff]
        %v302 = vld [vmem:[#allocation6 + $0x50] sm:$0xff]
        %v303 = vld [vmem:[#allocation6 + $0x58] sm:$0xff]
        %v304 = vld [vmem:[#allocation6 + $0x60] sm:$0xff]
        %v305 = vld [vmem:[#allocation6 + $0x68] sm:$0xff]
        %v306 = vld [vmem:[#allocation6 + $0x70] sm:$0xff]
        %v307 = vld [vmem:[#allocation6 + $0x78] sm:$0xff]
        %v308 = vld [vmem:[%s2] sm:$0xf]
        %v310 = vlaneseq
        %v311 = vshrl.u32 %v310, 7
        %v312 = vsub.s32 0, %v311
        %v313 = vrot.slane %v308, %v312
        %v314 = vlaneseq
        %v315 = vshrl.u32 %v314, 7
        %v316 = vsub.s32 1, %v315
        %v317 = vrot.slane %v308, %v316
        %v318 = vlaneseq
        %v319 = vshrl.u32 %v318, 7
        %v320 = vsub.s32 2, %v319
        %v321 = vrot.slane %v308, %v320
        %v322 = vlaneseq
        %v323 = vshrl.u32 %v322, 7
        %v324 = vsub.s32 3, %v323
        %v325 = vrot.slane %v308, %v324
        %vm330 = vcmask 261120
        %v332 = vsel %vm330, %v288, 0
        %v335 = vsel %vm330, %v289, 0
        %v338 = vsel %vm330, %v290, 0
        %v341 = vsel %vm330, %v291, 0
        %v343 = vand.u32 %v293, 4294901760
        %344 = vmatprep.subr.mxu0 %v343
        %v345 = vand.u32 %v292, 4294901760
        %346 = vmatpush1.msra.mxu0 %v345
        %v347 = vand.u32 %v297, 4294901760
        %348 = vmatprep.subr.mxu0 %v347
        %v349 = vand.u32 %v296, 4294901760
        %350 = vmatpush1.msra.mxu0 %v349
        %v351 = vand.u32 %v301, 4294901760
        %352 = vmatprep.subr.mxu0 %v351
        %v353 = vand.u32 %v300, 4294901760
        %354 = vmatpush1.msra.mxu0 %v353
        %v355 = vand.u32 %v305, 4294901760
        %356 = vmatprep.subr.mxu0 %v355
        %v357 = vand.u32 %v304, 4294901760
        %358 = vmatpush1.msra.mxu0 %v357
        %359 = vmatprep.subr.mxu0 0.0
        %360 = vmatpush1.msra.mxu0 0.0
        %361 = vmatprep.subr.mxu0 0.0
        %362 = vmatpush1.msra.mxu0 0.0
        %363 = vmatprep.subr.mxu0 0.0
        %364 = vmatpush1.msra.mxu0 0.0
        %365 = vmatprep.subr.mxu0 0.0
        %366 = vmatpush1.msra.mxu0 0.0
        %367 = vmatprep.subr.mxu0 0.0
        %368 = vmatpush1.msra.mxu0 0.0
        %369 = vmatprep.subr.mxu0 0.0
        %370 = vmatpush1.msra.mxu0 0.0
        %371 = vmatprep.subr.mxu0 0.0
        %372 = vmatpush1.msra.mxu0 0.0
        %373 = vmatprep.subr.mxu0 0.0
        %374 = vmatpush1.msra.mxu0 0.0
        %375 = vmatprep.subr.mxu0 0.0
        %376 = vmatpush1.msra.mxu0 0.0
        %377 = vmatprep.subr.mxu0 0.0
        %378 = vmatpush1.msra.mxu0 0.0
        %379 = vmatprep.subr.mxu0 0.0
        %380 = vmatpush1.msra.mxu0 0.0
        %381 = vmatprep.subr.mxu0 0.0
        %382 = vmatpush1.msra.mxu0 0.0
        %383 = vmatprep.subr.mxu0 0.0
        %384 = vmatpush1.msra.mxu0 0.0
        %385 = vmatprep.subr.mxu0 0.0
        %386 = vmatpush1.msra.mxu0 0.0
        %387 = vmatprep.subr.mxu0 0.0
        %388 = vmatpush1.msra.mxu0 0.0
        %389 = vmatprep.subr.mxu0 0.0
        %390 = vmatpush1.msra.mxu0 0.0
        %391 = vmatprep.subr.mxu0 0.0
        %392 = vmatpush1.msra.mxu0 0.0
        %393 = vmatprep.subr.mxu0 0.0
        %394 = vmatpush1.msra.mxu0 0.0
        %395 = vmatprep.subr.mxu0 0.0
        %396 = vmatpush1.msra.mxu0 0.0
        %397 = vmatprep.subr.mxu0 0.0
        %398 = vmatpush1.msra.mxu0 0.0
        %399 = vmatprep.subr.mxu0 0.0
        %400 = vmatpush1.msra.mxu0 0.0
        %401 = vmatprep.subr.mxu0 0.0
        %402 = vmatpush1.msra.mxu0 0.0
        %403 = vmatprep.subr.mxu0 0.0
        %404 = vmatpush1.msra.mxu0 0.0
        %405 = vmatprep.subr.mxu0 0.0
        %406 = vmatpush1.msra.mxu0 0.0
        %407 = vmatprep.subr.mxu0 0.0
        %408 = vmatpush1.msra.mxu0 0.0
        %409 = vmatprep.subr.mxu0 0.0
        %410 = vmatpush1.msra.mxu0 0.0
        %411 = vmatprep.subr.mxu0 0.0
        %412 = vmatpush1.msra.mxu0 0.0
        %413 = vmatprep.subr.mxu0 0.0
        %414 = vmatpush1.msra.mxu0 0.0
        %415 = vmatprep.mubr.f32.mxu0 0.0
        %v416 = vand.u32 %v332, 4294901760
        %v417 = vsub.f32 %v332, %v416
        %v418 = vand.u32 %v417, 4294901760
        %v419 = vsub.f32 %v417, %v418
        %v420 = vand.u32 %v419, 4294901760
        %421 = vmatmul.mubr.f32.gmra.mrb[0].mxu0 %v420
        %v422 = vpop.f32.mrb[0].mxu0
        %v423 = vadd.f32 %v313, %v422
        %v424 = vpop.f32.mrb[0].mxu0
        %v425 = vadd.f32 %v317, %v424
        %426 = vmatprep.mubr.f32.mxu0 0.0
        %v427 = vand.u32 %v335, 4294901760
        %v428 = vsub.f32 %v335, %v427
        %v429 = vand.u32 %v428, 4294901760
        %v430 = vsub.f32 %v428, %v429
        %v431 = vand.u32 %v430, 4294901760
        %432 = vmatmul.mubr.f32.gmra.mrb[0].mxu0 %v431
        %v433 = vpop.f32.mrb[0].mxu0
        %v434 = vadd.f32 %v313, %v433
        %v435 = vpop.f32.mrb[0].mxu0
        %v436 = vadd.f32 %v317, %v435
        %437 = vmatprep.mubr.f32.mxu0 0.0
        %v438 = vand.u32 %v338, 4294901760
        %v439 = vsub.f32 %v338, %v438
        %v440 = vand.u32 %v439, 4294901760
        %v441 = vsub.f32 %v439, %v440
        %v442 = vand.u32 %v441, 4294901760
        %443 = vmatmul.mubr.f32.gmra.mrb[0].mxu0 %v442
        %v444 = vpop.f32.mrb[0].mxu0
        %v445 = vadd.f32 %v313, %v444
        %v446 = vpop.f32.mrb[0].mxu0
        %v447 = vadd.f32 %v317, %v446
        %448 = vmatprep.mubr.f32.mxu0 0.0
        %v449 = vand.u32 %v341, 4294901760
        %v450 = vsub.f32 %v341, %v449
        %v451 = vand.u32 %v450, 4294901760
        %v452 = vsub.f32 %v450, %v451
        %v453 = vand.u32 %v452, 4294901760
        %454 = vmatmul.mubr.f32.gmra.mrb[0].mxu0 %v453
        %v455 = vpop.f32.mrb[0].mxu0
        %v456 = vadd.f32 %v313, %v455
        %v457 = vpop.f32.mrb[0].mxu0
        %v458 = vadd.f32 %v317, %v457
        %459 = vdwg.mxu0
        %v460 = vand.u32 %v293, 4294901760
        %v461 = vsub.f32 %v293, %v460
        %v462 = vand.u32 %v461, 4294901760
        %v463 = vsub.f32 %v461, %v462
        %v464 = vand.u32 %v463, 4294901760
        %465 = vmatprep.subr.mxu0 %v464
        %v466 = vand.u32 %v292, 4294901760
        %v467 = vsub.f32 %v292, %v466
        %v468 = vand.u32 %v467, 4294901760
        %v469 = vsub.f32 %v467, %v468
        %v470 = vand.u32 %v469, 4294901760
        %471 = vmatpush1.msra.mxu0 %v470
        %v472 = vand.u32 %v297, 4294901760
        %v473 = vsub.f32 %v297, %v472
        %v474 = vand.u32 %v473, 4294901760
        %v475 = vsub.f32 %v473, %v474
        %v476 = vand.u32 %v475, 4294901760
        %477 = vmatprep.subr.mxu0 %v476
        %v478 = vand.u32 %v296, 4294901760
        %v479 = vsub.f32 %v296, %v478
        %v480 = vand.u32 %v479, 4294901760
        %v481 = vsub.f32 %v479, %v480
        %v482 = vand.u32 %v481, 4294901760
        %483 = vmatpush1.msra.mxu0 %v482
        %v484 = vand.u32 %v301, 4294901760
        %v485 = vsub.f32 %v301, %v484
        %v486 = vand.u32 %v485, 4294901760
        %v487 = vsub.f32 %v485, %v486
        %v488 = vand.u32 %v487, 4294901760
        %489 = vmatprep.subr.mxu0 %v488
        %v490 = vand.u32 %v300, 4294901760
        %v491 = vsub.f32 %v300, %v490
        %v492 = vand.u32 %v491, 4294901760
        %v493 = vsub.f32 %v491, %v492
        %v494 = vand.u32 %v493, 4294901760
        %495 = vmatpush1.msra.mxu0 %v494
        %v496 = vand.u32 %v305, 4294901760
        %v497 = vsub.f32 %v305, %v496
        %v498 = vand.u32 %v497, 4294901760
        %v499 = vsub.f32 %v497, %v498
        %v500 = vand.u32 %v499, 4294901760
        %501 = vmatprep.subr.mxu0 %v500
        %v502 = vand.u32 %v304, 4294901760
        %v503 = vsub.f32 %v304, %v502
        %v504 = vand.u32 %v503, 4294901760
        %v505 = vsub.f32 %v503, %v504
        %v506 = vand.u32 %v505, 4294901760
        %507 = vmatpush1.msra.mxu0 %v506
        %508 = vmatprep.subr.mxu0 0.0
        %509 = vmatpush1.msra.mxu0 0.0
        %510 = vmatprep.subr.mxu0 0.0
        %511 = vmatpush1.msra.mxu0 0.0
        %512 = vmatprep.subr.mxu0 0.0
        %513 = vmatpush1.msra.mxu0 0.0
        %514 = vmatprep.subr.mxu0 0.0
        %515 = vmatpush1.msra.mxu0 0.0
        %516 = vmatprep.subr.mxu0 0.0
        %517 = vmatpush1.msra.mxu0 0.0
        %518 = vmatprep.subr.mxu0 0.0
        %519 = vmatpush1.msra.mxu0 0.0
        %520 = vmatprep.subr.mxu0 0.0
        %521 = vmatpush1.msra.mxu0 0.0
        %522 = vmatprep.subr.mxu0 0.0
        %523 = vmatpush1.msra.mxu0 0.0
        %524 = vmatprep.subr.mxu0 0.0
        %525 = vmatpush1.msra.mxu0 0.0
        %526 = vmatprep.subr.mxu0 0.0
        %527 = vmatpush1.msra.mxu0 0.0
        %528 = vmatprep.subr.mxu0 0.0
        %529 = vmatpush1.msra.mxu0 0.0
        %530 = vmatprep.subr.mxu0 0.0
        %531 = vmatpush1.msra.mxu0 0.0
        %532 = vmatprep.subr.mxu0 0.0
        %533 = vmatpush1.msra.mxu0 0.0
        %534 = vmatprep.subr.mxu0 0.0
        %535 = vmatpush1.msra.mxu0 0.0
        %536 = vmatprep.subr.mxu0 0.0
        %537 = vmatpush1.msra.mxu0 0.0
        %538 = vmatprep.subr.mxu0 0.0
        %539 = vmatpush1.msra.mxu0 0.0
        %540 = vmatprep.subr.mxu0 0.0
        %541 = vmatpush1.msra.mxu0 0.0
        %542 = vmatprep.subr.mxu0 0.0
        %543 = vmatpush1.msra.mxu0 0.0
        %544 = vmatprep.subr.mxu0 0.0
        %545 = vmatpush1.msra.mxu0 0.0
        %546 = vmatprep.subr.mxu0 0.0
        %547 = vmatpush1.msra.mxu0 0.0
        %548 = vmatprep.subr.mxu0 0.0
        %549 = vmatpush1.msra.mxu0 0.0
        %550 = vmatprep.subr.mxu0 0.0
        %551 = vmatpush1.msra.mxu0 0.0
        %552 = vmatprep.subr.mxu0 0.0
        %553 = vmatpush1.msra.mxu0 0.0
        %554 = vmatprep.subr.mxu0 0.0
        %555 = vmatpush1.msra.mxu0 0.0
        %556 = vmatprep.subr.mxu0 0.0
        %557 = vmatpush1.msra.mxu0 0.0
        %558 = vmatprep.subr.mxu0 0.0
        %559 = vmatpush1.msra.mxu0 0.0
        %560 = vmatprep.subr.mxu0 0.0
        %561 = vmatpush1.msra.mxu0 0.0
        %562 = vmatprep.subr.mxu0 0.0
        %563 = vmatpush1.msra.mxu0 0.0
        %564 = vmatprep.mubr.f32.mxu0 0.0
        %v565 = vand.u32 %v332, 4294901760
        %566 = vmatmul.mubr.f32.gmra.mrb[0].mxu0 %v565
        %v567 = vpop.f32.mrb[0].mxu0
        %v568 = vadd.f32 %v423, %v567
        %v569 = vpop.f32.mrb[0].mxu0
        %v570 = vadd.f32 %v425, %v569
        %571 = vmatprep.mubr.f32.mxu0 0.0
        %v572 = vand.u32 %v335, 4294901760
        %573 = vmatmul.mubr.f32.gmra.mrb[0].mxu0 %v572
        %v574 = vpop.f32.mrb[0].mxu0
        %v575 = vadd.f32 %v434, %v574
        %v576 = vpop.f32.mrb[0].mxu0
        %v577 = vadd.f32 %v436, %v576
        %578 = vmatprep.mubr.f32.mxu0 0.0
        %v579 = vand.u32 %v338, 4294901760
        %580 = vmatmul.mubr.f32.gmra.mrb[0].mxu0 %v579
        %v581 = vpop.f32.mrb[0].mxu0
        %v582 = vadd.f32 %v445, %v581
        %v583 = vpop.f32.mrb[0].mxu0
        %v584 = vadd.f32 %v447, %v583
        %585 = vmatprep.mubr.f32.mxu0 0.0
        %v586 = vand.u32 %v341, 4294901760
        %587 = vmatmul.mubr.f32.gmra.mrb[0].mxu0 %v586
        %v588 = vpop.f32.mrb[0].mxu0
        %v589 = vadd.f32 %v456, %v588
        %v590 = vpop.f32.mrb[0].mxu0
        %v591 = vadd.f32 %v458, %v590
        %592 = vdwg.mxu0
        %v593 = vand.u32 %v293, 4294901760
        %v594 = vsub.f32 %v293, %v593
        %595 = vmatprep.subr.mxu0 %v594
        %v596 = vand.u32 %v292, 4294901760
        %v597 = vsub.f32 %v292, %v596
        %598 = vmatpush1.msra.mxu0 %v597
        %v599 = vand.u32 %v297, 4294901760
        %v600 = vsub.f32 %v297, %v599
        %601 = vmatprep.subr.mxu0 %v600
        %v602 = vand.u32 %v296, 4294901760
        %v603 = vsub.f32 %v296, %v602
        %604 = vmatpush1.msra.mxu0 %v603
        %v605 = vand.u32 %v301, 4294901760
        %v606 = vsub.f32 %v301, %v605
        %607 = vmatprep.subr.mxu0 %v606
        %v608 = vand.u32 %v300, 4294901760
        %v609 = vsub.f32 %v300, %v608
        %610 = vmatpush1.msra.mxu0 %v609
        %v611 = vand.u32 %v305, 4294901760
        %v612 = vsub.f32 %v305, %v611
        %613 = vmatprep.subr.mxu0 %v612
        %v614 = vand.u32 %v304, 4294901760
        %v615 = vsub.f32 %v304, %v614
        %616 = vmatpush1.msra.mxu0 %v615
        %617 = vmatprep.subr.mxu0 0.0
        %618 = vmatpush1.msra.mxu0 0.0
        %619 = vmatprep.subr.mxu0 0.0
        %620 = vmatpush1.msra.mxu0 0.0
        %621 = vmatprep.subr.mxu0 0.0
        %622 = vmatpush1.msra.mxu0 0.0
        %623 = vmatprep.subr.mxu0 0.0
        %624 = vmatpush1.msra.mxu0 0.0
        %625 = vmatprep.subr.mxu0 0.0
        %626 = vmatpush1.msra.mxu0 0.0
        %627 = vmatprep.subr.mxu0 0.0
        %628 = vmatpush1.msra.mxu0 0.0
        %629 = vmatprep.subr.mxu0 0.0
        %630 = vmatpush1.msra.mxu0 0.0
        %631 = vmatprep.subr.mxu0 0.0
        %632 = vmatpush1.msra.mxu0 0.0
        %633 = vmatprep.subr.mxu0 0.0
        %634 = vmatpush1.msra.mxu0 0.0
        %635 = vmatprep.subr.mxu0 0.0
        %636 = vmatpush1.msra.mxu0 0.0
        %637 = vmatprep.subr.mxu0 0.0
        %638 = vmatpush1.msra.mxu0 0.0
        %639 = vmatprep.subr.mxu0 0.0
        %640 = vmatpush1.msra.mxu0 0.0
        %641 = vmatprep.subr.mxu0 0.0
        %642 = vmatpush1.msra.mxu0 0.0
        %643 = vmatprep.subr.mxu0 0.0
        %644 = vmatpush1.msra.mxu0 0.0
        %645 = vmatprep.subr.mxu0 0.0
        %646 = vmatpush1.msra.mxu0 0.0
        %647 = vmatprep.subr.mxu0 0.0
        %648 = vmatpush1.msra.mxu0 0.0
        %649 = vmatprep.subr.mxu0 0.0
        %650 = vmatpush1.msra.mxu0 0.0
        %651 = vmatprep.subr.mxu0 0.0
        %652 = vmatpush1.msra.mxu0 0.0
        %653 = vmatprep.subr.mxu0 0.0
        %654 = vmatpush1.msra.mxu0 0.0
        %655 = vmatprep.subr.mxu0 0.0
        %656 = vmatpush1.msra.mxu0 0.0
        %657 = vmatprep.subr.mxu0 0.0
        %658 = vmatpush1.msra.mxu0 0.0
        %659 = vmatprep.subr.mxu0 0.0
        %660 = vmatpush1.msra.mxu0 0.0
        %661 = vmatprep.subr.mxu0 0.0
        %662 = vmatpush1.msra.mxu0 0.0
        %663 = vmatprep.subr.mxu0 0.0
        %664 = vmatpush1.msra.mxu0 0.0
        %665 = vmatprep.subr.mxu0 0.0
        %666 = vmatpush1.msra.mxu0 0.0
        %667 = vmatprep.subr.mxu0 0.0
        %668 = vmatpush1.msra.mxu0 0.0
        %669 = vmatprep.subr.mxu0 0.0
        %670 = vmatpush1.msra.mxu0 0.0
        %671 = vmatprep.subr.mxu0 0.0
        %672 = vmatpush1.msra.mxu0 0.0
        %673 = vmatprep.mubr.f32.mxu0 0.0
        %v674 = vand.u32 %v332, 4294901760
        %v675 = vsub.f32 %v332, %v674
        %676 = vmatmul.mubr.f32.gmra.mrb[0].mxu0 %v675
        %v677 = vpop.f32.mrb[0].mxu0
        %v678 = vadd.f32 %v568, %v677
        %v679 = vpop.f32.mrb[0].mxu0
        %v680 = vadd.f32 %v570, %v679
        %681 = vmatprep.mubr.f32.mxu0 0.0
        %v682 = vand.u32 %v335, 4294901760
        %v683 = vsub.f32 %v335, %v682
        %684 = vmatmul.mubr.f32.gmra.mrb[0].mxu0 %v683
        %v685 = vpop.f32.mrb[0].mxu0
        %v686 = vadd.f32 %v575, %v685
        %v687 = vpop.f32.mrb[0].mxu0
        %v688 = vadd.f32 %v577, %v687
        %689 = vmatprep.mubr.f32.mxu0 0.0
        %v690 = vand.u32 %v338, 4294901760
        %v691 = vsub.f32 %v338, %v690
        %692 = vmatmul.mubr.f32.gmra.mrb[0].mxu0 %v691
        %v693 = vpop.f32.mrb[0].mxu0
        %v694 = vadd.f32 %v582, %v693
        %v695 = vpop.f32.mrb[0].mxu0
        %v696 = vadd.f32 %v584, %v695
        %697 = vmatprep.mubr.f32.mxu0 0.0
        %v698 = vand.u32 %v341, 4294901760
        %v699 = vsub.f32 %v341, %v698
        %700 = vmatmul.mubr.f32.gmra.mrb[0].mxu0 %v699
        %v701 = vpop.f32.mrb[0].mxu0
        %v702 = vadd.f32 %v589, %v701
        %v703 = vpop.f32.mrb[0].mxu0
        %v704 = vadd.f32 %v591, %v703
        %705 = vdwg.mxu0
        %v706 = vand.u32 %v293, 4294901760
        %707 = vmatprep.subr.mxu0 %v706
        %v708 = vand.u32 %v292, 4294901760
        %709 = vmatpush1.msra.mxu0 %v708
        %v710 = vand.u32 %v297, 4294901760
        %711 = vmatprep.subr.mxu0 %v710
        %v712 = vand.u32 %v296, 4294901760
        %713 = vmatpush1.msra.mxu0 %v712
        %v714 = vand.u32 %v301, 4294901760
        %715 = vmatprep.subr.mxu0 %v714
        %v716 = vand.u32 %v300, 4294901760
        %717 = vmatpush1.msra.mxu0 %v716
        %v718 = vand.u32 %v305, 4294901760
        %719 = vmatprep.subr.mxu0 %v718
        %v720 = vand.u32 %v304, 4294901760
        %721 = vmatpush1.msra.mxu0 %v720
        %722 = vmatprep.subr.mxu0 0.0
        %723 = vmatpush1.msra.mxu0 0.0
        %724 = vmatprep.subr.mxu0 0.0
        %725 = vmatpush1.msra.mxu0 0.0
        %726 = vmatprep.subr.mxu0 0.0
        %727 = vmatpush1.msra.mxu0 0.0
        %728 = vmatprep.subr.mxu0 0.0
        %729 = vmatpush1.msra.mxu0 0.0
        %730 = vmatprep.subr.mxu0 0.0
        %731 = vmatpush1.msra.mxu0 0.0
        %732 = vmatprep.subr.mxu0 0.0
        %733 = vmatpush1.msra.mxu0 0.0
        %734 = vmatprep.subr.mxu0 0.0
        %735 = vmatpush1.msra.mxu0 0.0
        %736 = vmatprep.subr.mxu0 0.0
        %737 = vmatpush1.msra.mxu0 0.0
        %738 = vmatprep.subr.mxu0 0.0
        %739 = vmatpush1.msra.mxu0 0.0
        %740 = vmatprep.subr.mxu0 0.0
        %741 = vmatpush1.msra.mxu0 0.0
        %742 = vmatprep.subr.mxu0 0.0
        %743 = vmatpush1.msra.mxu0 0.0
        %744 = vmatprep.subr.mxu0 0.0
        %745 = vmatpush1.msra.mxu0 0.0
        %746 = vmatprep.subr.mxu0 0.0
        %747 = vmatpush1.msra.mxu0 0.0
        %748 = vmatprep.subr.mxu0 0.0
        %749 = vmatpush1.msra.mxu0 0.0
        %750 = vmatprep.subr.mxu0 0.0
        %751 = vmatpush1.msra.mxu0 0.0
        %752 = vmatprep.subr.mxu0 0.0
        %753 = vmatpush1.msra.mxu0 0.0
        %754 = vmatprep.subr.mxu0 0.0
        %755 = vmatpush1.msra.mxu0 0.0
        %756 = vmatprep.subr.mxu0 0.0
        %757 = vmatpush1.msra.mxu0 0.0
        %758 = vmatprep.subr.mxu0 0.0
        %759 = vmatpush1.msra.mxu0 0.0
        %760 = vmatprep.subr.mxu0 0.0
        %761 = vmatpush1.msra.mxu0 0.0
        %762 = vmatprep.subr.mxu0 0.0
        %763 = vmatpush1.msra.mxu0 0.0
        %764 = vmatprep.subr.mxu0 0.0
        %765 = vmatpush1.msra.mxu0 0.0
        %766 = vmatprep.subr.mxu0 0.0
        %767 = vmatpush1.msra.mxu0 0.0
        %768 = vmatprep.subr.mxu0 0.0
        %769 = vmatpush1.msra.mxu0 0.0
        %770 = vmatprep.subr.mxu0 0.0
        %771 = vmatpush1.msra.mxu0 0.0
        %772 = vmatprep.subr.mxu0 0.0
        %773 = vmatpush1.msra.mxu0 0.0
        %774 = vmatprep.subr.mxu0 0.0
        %775 = vmatpush1.msra.mxu0 0.0
        %776 = vmatprep.subr.mxu0 0.0
        %777 = vmatpush1.msra.mxu0 0.0
        %778 = vmatprep.mubr.f32.mxu0 0.0
        %v779 = vand.u32 %v332, 4294901760
        %v780 = vsub.f32 %v332, %v779
        %v781 = vand.u32 %v780, 4294901760
        %782 = vmatmul.mubr.f32.gmra.mrb[0].mxu0 %v781
        %v783 = vpop.f32.mrb[0].mxu0
        %v784 = vadd.f32 %v678, %v783
        %v785 = vpop.f32.mrb[0].mxu0
        %v786 = vadd.f32 %v680, %v785
        %787 = vmatprep.mubr.f32.mxu0 0.0
        %v788 = vand.u32 %v335, 4294901760
        %v789 = vsub.f32 %v335, %v788
        %v790 = vand.u32 %v789, 4294901760
        %791 = vmatmul.mubr.f32.gmra.mrb[0].mxu0 %v790
        %v792 = vpop.f32.mrb[0].mxu0
        %v793 = vadd.f32 %v686, %v792
        %v794 = vpop.f32.mrb[0].mxu0
        %v795 = vadd.f32 %v688, %v794
        %796 = vmatprep.mubr.f32.mxu0 0.0
        %v797 = vand.u32 %v338, 4294901760
        %v798 = vsub.f32 %v338, %v797
        %v799 = vand.u32 %v798, 4294901760
        %800 = vmatmul.mubr.f32.gmra.mrb[0].mxu0 %v799
        %v801 = vpop.f32.mrb[0].mxu0
        %v802 = vadd.f32 %v694, %v801
        %v803 = vpop.f32.mrb[0].mxu0
        %v804 = vadd.f32 %v696, %v803
        %805 = vmatprep.mubr.f32.mxu0 0.0
        %v806 = vand.u32 %v341, 4294901760
        %v807 = vsub.f32 %v341, %v806
        %v808 = vand.u32 %v807, 4294901760
        %809 = vmatmul.mubr.f32.gmra.mrb[0].mxu0 %v808
        %v810 = vpop.f32.mrb[0].mxu0
        %v811 = vadd.f32 %v702, %v810
        %v812 = vpop.f32.mrb[0].mxu0
        %v813 = vadd.f32 %v704, %v812
        %814 = vdwg.mxu0
        %v815 = vand.u32 %v293, 4294901760
        %v816 = vsub.f32 %v293, %v815
        %v817 = vand.u32 %v816, 4294901760
        %818 = vmatprep.subr.mxu0 %v817
        %v819 = vand.u32 %v292, 4294901760
        %v820 = vsub.f32 %v292, %v819
        %v821 = vand.u32 %v820, 4294901760
        %822 = vmatpush1.msra.mxu0 %v821
        %v823 = vand.u32 %v297, 4294901760
        %v824 = vsub.f32 %v297, %v823
        %v825 = vand.u32 %v824, 4294901760
        %826 = vmatprep.subr.mxu0 %v825
        %v827 = vand.u32 %v296, 4294901760
        %v828 = vsub.f32 %v296, %v827
        %v829 = vand.u32 %v828, 4294901760
        %830 = vmatpush1.msra.mxu0 %v829
        %v831 = vand.u32 %v301, 4294901760
        %v832 = vsub.f32 %v301, %v831
        %v833 = vand.u32 %v832, 4294901760
        %834 = vmatprep.subr.mxu0 %v833
        %v835 = vand.u32 %v300, 4294901760
        %v836 = vsub.f32 %v300, %v835
        %v837 = vand.u32 %v836, 4294901760
        %838 = vmatpush1.msra.mxu0 %v837
        %v839 = vand.u32 %v305, 4294901760
        %v840 = vsub.f32 %v305, %v839
        %v841 = vand.u32 %v840, 4294901760
        %842 = vmatprep.subr.mxu0 %v841
        %v843 = vand.u32 %v304, 4294901760
        %v844 = vsub.f32 %v304, %v843
        %v845 = vand.u32 %v844, 4294901760
        %846 = vmatpush1.msra.mxu0 %v845
        %847 = vmatprep.subr.mxu0 0.0
        %848 = vmatpush1.msra.mxu0 0.0
        %849 = vmatprep.subr.mxu0 0.0
        %850 = vmatpush1.msra.mxu0 0.0
        %851 = vmatprep.subr.mxu0 0.0
        %852 = vmatpush1.msra.mxu0 0.0
        %853 = vmatprep.subr.mxu0 0.0
        %854 = vmatpush1.msra.mxu0 0.0
        %855 = vmatprep.subr.mxu0 0.0
        %856 = vmatpush1.msra.mxu0 0.0
        %857 = vmatprep.subr.mxu0 0.0
        %858 = vmatpush1.msra.mxu0 0.0
        %859 = vmatprep.subr.mxu0 0.0
        %860 = vmatpush1.msra.mxu0 0.0
        %861 = vmatprep.subr.mxu0 0.0
        %862 = vmatpush1.msra.mxu0 0.0
        %863 = vmatprep.subr.mxu0 0.0
        %864 = vmatpush1.msra.mxu0 0.0
        %865 = vmatprep.subr.mxu0 0.0
        %866 = vmatpush1.msra.mxu0 0.0
        %867 = vmatprep.subr.mxu0 0.0
        %868 = vmatpush1.msra.mxu0 0.0
        %869 = vmatprep.subr.mxu0 0.0
        %870 = vmatpush1.msra.mxu0 0.0
        %871 = vmatprep.subr.mxu0 0.0
        %872 = vmatpush1.msra.mxu0 0.0
        %873 = vmatprep.subr.mxu0 0.0
        %874 = vmatpush1.msra.mxu0 0.0
        %875 = vmatprep.subr.mxu0 0.0
        %876 = vmatpush1.msra.mxu0 0.0
        %877 = vmatprep.subr.mxu0 0.0
        %878 = vmatpush1.msra.mxu0 0.0
        %879 = vmatprep.subr.mxu0 0.0
        %880 = vmatpush1.msra.mxu0 0.0
        %881 = vmatprep.subr.mxu0 0.0
        %882 = vmatpush1.msra.mxu0 0.0
        %883 = vmatprep.subr.mxu0 0.0
        %884 = vmatpush1.msra.mxu0 0.0
        %885 = vmatprep.subr.mxu0 0.0
        %886 = vmatpush1.msra.mxu0 0.0
        %887 = vmatprep.subr.mxu0 0.0
        %888 = vmatpush1.msra.mxu0 0.0
        %889 = vmatprep.subr.mxu0 0.0
        %890 = vmatpush1.msra.mxu0 0.0
        %891 = vmatprep.subr.mxu0 0.0
        %892 = vmatpush1.msra.mxu0 0.0
        %893 = vmatprep.subr.mxu0 0.0
        %894 = vmatpush1.msra.mxu0 0.0
        %895 = vmatprep.subr.mxu0 0.0
        %896 = vmatpush1.msra.mxu0 0.0
        %897 = vmatprep.subr.mxu0 0.0
        %898 = vmatpush1.msra.mxu0 0.0
        %899 = vmatprep.subr.mxu0 0.0
        %900 = vmatpush1.msra.mxu0 0.0
        %901 = vmatprep.subr.mxu0 0.0
        %902 = vmatpush1.msra.mxu0 0.0
        %903 = vmatprep.mubr.f32.mxu0 0.0
        %v904 = vand.u32 %v332, 4294901760
        %905 = vmatmul.mubr.f32.gmra.mrb[0].mxu0 %v904
        %v906 = vpop.f32.mrb[0].mxu0
        %v907 = vadd.f32 %v784, %v906
        %v908 = vpop.f32.mrb[0].mxu0
        %v909 = vadd.f32 %v786, %v908
        %910 = vmatprep.mubr.f32.mxu0 0.0
        %v911 = vand.u32 %v335, 4294901760
        %912 = vmatmul.mubr.f32.gmra.mrb[0].mxu0 %v911
        %v913 = vpop.f32.mrb[0].mxu0
        %v914 = vadd.f32 %v793, %v913
        %v915 = vpop.f32.mrb[0].mxu0
        %v916 = vadd.f32 %v795, %v915
        %917 = vmatprep.mubr.f32.mxu0 0.0
        %v918 = vand.u32 %v338, 4294901760
        %919 = vmatmul.mubr.f32.gmra.mrb[0].mxu0 %v918
        %v920 = vpop.f32.mrb[0].mxu0
        %v921 = vadd.f32 %v802, %v920
        %v922 = vpop.f32.mrb[0].mxu0
        %v923 = vadd.f32 %v804, %v922
        %924 = vmatprep.mubr.f32.mxu0 0.0
        %v925 = vand.u32 %v341, 4294901760
        %926 = vmatmul.mubr.f32.gmra.mrb[0].mxu0 %v925
        %v927 = vpop.f32.mrb[0].mxu0
        %v928 = vadd.f32 %v811, %v927
        %v929 = vpop.f32.mrb[0].mxu0
        %v930 = vadd.f32 %v813, %v929
        %931 = vdwg.mxu0
        %v932 = vand.u32 %v293, 4294901760
        %933 = vmatprep.subr.mxu0 %v932
        %v934 = vand.u32 %v292, 4294901760
        %935 = vmatpush1.msra.mxu0 %v934
        %v936 = vand.u32 %v297, 4294901760
        %937 = vmatprep.subr.mxu0 %v936
        %v938 = vand.u32 %v296, 4294901760
        %939 = vmatpush1.msra.mxu0 %v938
        %v940 = vand.u32 %v301, 4294901760
        %941 = vmatprep.subr.mxu0 %v940
        %v942 = vand.u32 %v300, 4294901760
        %943 = vmatpush1.msra.mxu0 %v942
        %v944 = vand.u32 %v305, 4294901760
        %945 = vmatprep.subr.mxu0 %v944
        %v946 = vand.u32 %v304, 4294901760
        %947 = vmatpush1.msra.mxu0 %v946
        %948 = vmatprep.subr.mxu0 0.0
        %949 = vmatpush1.msra.mxu0 0.0
        %950 = vmatprep.subr.mxu0 0.0
        %951 = vmatpush1.msra.mxu0 0.0
        %952 = vmatprep.subr.mxu0 0.0
        %953 = vmatpush1.msra.mxu0 0.0
        %954 = vmatprep.subr.mxu0 0.0
        %955 = vmatpush1.msra.mxu0 0.0
        %956 = vmatprep.subr.mxu0 0.0
        %957 = vmatpush1.msra.mxu0 0.0
        %958 = vmatprep.subr.mxu0 0.0
        %959 = vmatpush1.msra.mxu0 0.0
        %960 = vmatprep.subr.mxu0 0.0
        %961 = vmatpush1.msra.mxu0 0.0
        %962 = vmatprep.subr.mxu0 0.0
        %963 = vmatpush1.msra.mxu0 0.0
        %964 = vmatprep.subr.mxu0 0.0
        %965 = vmatpush1.msra.mxu0 0.0
        %966 = vmatprep.subr.mxu0 0.0
        %967 = vmatpush1.msra.mxu0 0.0
        %968 = vmatprep.subr.mxu0 0.0
        %969 = vmatpush1.msra.mxu0 0.0
        %970 = vmatprep.subr.mxu0 0.0
        %971 = vmatpush1.msra.mxu0 0.0
        %972 = vmatprep.subr.mxu0 0.0
        %973 = vmatpush1.msra.mxu0 0.0
        %974 = vmatprep.subr.mxu0 0.0
        %975 = vmatpush1.msra.mxu0 0.0
        %976 = vmatprep.subr.mxu0 0.0
        %977 = vmatpush1.msra.mxu0 0.0
        %978 = vmatprep.subr.mxu0 0.0
        %979 = vmatpush1.msra.mxu0 0.0
        %980 = vmatprep.subr.mxu0 0.0
        %981 = vmatpush1.msra.mxu0 0.0
        %982 = vmatprep.subr.mxu0 0.0
        %983 = vmatpush1.msra.mxu0 0.0
        %984 = vmatprep.subr.mxu0 0.0
        %985 = vmatpush1.msra.mxu0 0.0
        %986 = vmatprep.subr.mxu0 0.0
        %987 = vmatpush1.msra.mxu0 0.0
        %988 = vmatprep.subr.mxu0 0.0
        %989 = vmatpush1.msra.mxu0 0.0
        %990 = vmatprep.subr.mxu0 0.0
        %991 = vmatpush1.msra.mxu0 0.0
        %992 = vmatprep.subr.mxu0 0.0
        %993 = vmatpush1.msra.mxu0 0.0
        %994 = vmatprep.subr.mxu0 0.0
        %995 = vmatpush1.msra.mxu0 0.0
        %996 = vmatprep.subr.mxu0 0.0
        %997 = vmatpush1.msra.mxu0 0.0
        %998 = vmatprep.subr.mxu0 0.0
        %999 = vmatpush1.msra.mxu0 0.0
        %1000 = vmatprep.subr.mxu0 0.0
        %1001 = vmatpush1.msra.mxu0 0.0
        %1002 = vmatprep.subr.mxu0 0.0
        %1003 = vmatpush1.msra.mxu0 0.0
        %1004 = vmatprep.mubr.f32.mxu0 0.0
        %v1005 = vand.u32 %v332, 4294901760
        %1006 = vmatmul.mubr.f32.gmra.mrb[0].mxu0 %v1005
        %v1007 = vpop.f32.mrb[0].mxu0
        %v1008 = vadd.f32 %v907, %v1007
        %v1009 = vpop.f32.mrb[0].mxu0
        %v1010 = vadd.f32 %v909, %v1009
        %1011 = vmatprep.mubr.f32.mxu0 0.0
        %v1012 = vand.u32 %v335, 4294901760
        %1013 = vmatmul.mubr.f32.gmra.mrb[0].mxu0 %v1012
        %v1014 = vpop.f32.mrb[0].mxu0
        %v1015 = vadd.f32 %v914, %v1014
        %v1016 = vpop.f32.mrb[0].mxu0
        %v1017 = vadd.f32 %v916, %v1016
        %1018 = vmatprep.mubr.f32.mxu0 0.0
        %v1019 = vand.u32 %v338, 4294901760
        %1020 = vmatmul.mubr.f32.gmra.mrb[0].mxu0 %v1019
        %v1021 = vpop.f32.mrb[0].mxu0
        %v1022 = vadd.f32 %v921, %v1021
        %v1023 = vpop.f32.mrb[0].mxu0
        %v1024 = vadd.f32 %v923, %v1023
        %1025 = vmatprep.mubr.f32.mxu0 0.0
        %v1026 = vand.u32 %v341, 4294901760
        %1027 = vmatmul.mubr.f32.gmra.mrb[0].mxu0 %v1026
        %v1028 = vpop.f32.mrb[0].mxu0
        %v1029 = vadd.f32 %v928, %v1028
        %v1030 = vpop.f32.mrb[0].mxu0
        %v1031 = vadd.f32 %v930, %v1030
        %1032 = vdwg.mxu0
        %v1033 = vand.u32 %v295, 4294901760
        %1034 = vmatprep.subr.mxu0 %v1033
        %v1035 = vand.u32 %v294, 4294901760
        %1036 = vmatpush1.msra.mxu0 %v1035
        %v1037 = vand.u32 %v299, 4294901760
        %1038 = vmatprep.subr.mxu0 %v1037
        %v1039 = vand.u32 %v298, 4294901760
        %1040 = vmatpush1.msra.mxu0 %v1039
        %v1041 = vand.u32 %v303, 4294901760
        %1042 = vmatprep.subr.mxu0 %v1041
        %v1043 = vand.u32 %v302, 4294901760
        %1044 = vmatpush1.msra.mxu0 %v1043
        %v1045 = vand.u32 %v307, 4294901760
        %1046 = vmatprep.subr.mxu0 %v1045
        %v1047 = vand.u32 %v306, 4294901760
        %1048 = vmatpush1.msra.mxu0 %v1047
        %1049 = vmatprep.subr.mxu0 0.0
        %1050 = vmatpush1.msra.mxu0 0.0
        %1051 = vmatprep.subr.mxu0 0.0
        %1052 = vmatpush1.msra.mxu0 0.0
        %1053 = vmatprep.subr.mxu0 0.0
        %1054 = vmatpush1.msra.mxu0 0.0
        %1055 = vmatprep.subr.mxu0 0.0
        %1056 = vmatpush1.msra.mxu0 0.0
        %1057 = vmatprep.subr.mxu0 0.0
        %1058 = vmatpush1.msra.mxu0 0.0
        %1059 = vmatprep.subr.mxu0 0.0
        %1060 = vmatpush1.msra.mxu0 0.0
        %1061 = vmatprep.subr.mxu0 0.0
        %1062 = vmatpush1.msra.mxu0 0.0
        %1063 = vmatprep.subr.mxu0 0.0
        %1064 = vmatpush1.msra.mxu0 0.0
        %1065 = vmatprep.subr.mxu0 0.0
        %1066 = vmatpush1.msra.mxu0 0.0
        %1067 = vmatprep.subr.mxu0 0.0
        %1068 = vmatpush1.msra.mxu0 0.0
        %1069 = vmatprep.subr.mxu0 0.0
        %1070 = vmatpush1.msra.mxu0 0.0
        %1071 = vmatprep.subr.mxu0 0.0
        %1072 = vmatpush1.msra.mxu0 0.0
        %1073 = vmatprep.subr.mxu0 0.0
        %1074 = vmatpush1.msra.mxu0 0.0
        %1075 = vmatprep.subr.mxu0 0.0
        %1076 = vmatpush1.msra.mxu0 0.0
        %1077 = vmatprep.subr.mxu0 0.0
        %1078 = vmatpush1.msra.mxu0 0.0
        %1079 = vmatprep.subr.mxu0 0.0
        %1080 = vmatpush1.msra.mxu0 0.0
        %1081 = vmatprep.subr.mxu0 0.0
        %1082 = vmatpush1.msra.mxu0 0.0
        %1083 = vmatprep.subr.mxu0 0.0
        %1084 = vmatpush1.msra.mxu0 0.0
        %1085 = vmatprep.subr.mxu0 0.0
        %1086 = vmatpush1.msra.mxu0 0.0
        %1087 = vmatprep.subr.mxu0 0.0
        %1088 = vmatpush1.msra.mxu0 0.0
        %1089 = vmatprep.subr.mxu0 0.0
        %1090 = vmatpush1.msra.mxu0 0.0
        %1091 = vmatprep.subr.mxu0 0.0
        %1092 = vmatpush1.msra.mxu0 0.0
        %1093 = vmatprep.subr.mxu0 0.0
        %1094 = vmatpush1.msra.mxu0 0.0
        %1095 = vmatprep.subr.mxu0 0.0
        %1096 = vmatpush1.msra.mxu0 0.0
        %1097 = vmatprep.subr.mxu0 0.0
        %1098 = vmatpush1.msra.mxu0 0.0
        %1099 = vmatprep.subr.mxu0 0.0
        %1100 = vmatpush1.msra.mxu0 0.0
        %1101 = vmatprep.subr.mxu0 0.0
        %1102 = vmatpush1.msra.mxu0 0.0
        %1103 = vmatprep.subr.mxu0 0.0
        %1104 = vmatpush1.msra.mxu0 0.0
        %1105 = vmatprep.mubr.f32.mxu0 0.0
        %v1106 = vand.u32 %v332, 4294901760
        %v1107 = vsub.f32 %v332, %v1106
        %v1108 = vand.u32 %v1107, 4294901760
        %v1109 = vsub.f32 %v1107, %v1108
        %v1110 = vand.u32 %v1109, 4294901760
        %1111 = vmatmul.mubr.f32.gmra.mrb[0].mxu0 %v1110
        %v1112 = vpop.f32.mrb[0].mxu0
        %v1113 = vadd.f32 %v321, %v1112
        %v1114 = vpop.f32.mrb[0].mxu0
        %v1115 = vadd.f32 %v325, %v1114
        %1116 = vmatprep.mubr.f32.mxu0 0.0
        %v1117 = vand.u32 %v335, 4294901760
        %v1118 = vsub.f32 %v335, %v1117
        %v1119 = vand.u32 %v1118, 4294901760
        %v1120 = vsub.f32 %v1118, %v1119
        %v1121 = vand.u32 %v1120, 4294901760
        %1122 = vmatmul.mubr.f32.gmra.mrb[0].mxu0 %v1121
        %v1123 = vpop.f32.mrb[0].mxu0
        %v1124 = vadd.f32 %v321, %v1123
        %v1125 = vpop.f32.mrb[0].mxu0
        %v1126 = vadd.f32 %v325, %v1125
        %1127 = vmatprep.mubr.f32.mxu0 0.0
        %v1128 = vand.u32 %v338, 4294901760
        %v1129 = vsub.f32 %v338, %v1128
        %v1130 = vand.u32 %v1129, 4294901760
        %v1131 = vsub.f32 %v1129, %v1130
        %v1132 = vand.u32 %v1131, 4294901760
        %1133 = vmatmul.mubr.f32.gmra.mrb[0].mxu0 %v1132
        %v1134 = vpop.f32.mrb[0].mxu0
        %v1135 = vadd.f32 %v321, %v1134
        %v1136 = vpop.f32.mrb[0].mxu0
        %v1137 = vadd.f32 %v325, %v1136
        %1138 = vmatprep.mubr.f32.mxu0 0.0
        %v1139 = vand.u32 %v341, 4294901760
        %v1140 = vsub.f32 %v341, %v1139
        %v1141 = vand.u32 %v1140, 4294901760
        %v1142 = vsub.f32 %v1140, %v1141
        %v1143 = vand.u32 %v1142, 4294901760
        %1144 = vmatmul.mubr.f32.gmra.mrb[0].mxu0 %v1143
        %v1145 = vpop.f32.mrb[0].mxu0
        %v1146 = vadd.f32 %v321, %v1145
        %v1147 = vpop.f32.mrb[0].mxu0
        %v1148 = vadd.f32 %v325, %v1147
        %1149 = vdwg.mxu0
        %v1150 = vand.u32 %v295, 4294901760
        %v1151 = vsub.f32 %v295, %v1150
        %v1152 = vand.u32 %v1151, 4294901760
        %v1153 = vsub.f32 %v1151, %v1152
        %v1154 = vand.u32 %v1153, 4294901760
        %1155 = vmatprep.subr.mxu0 %v1154
        %v1156 = vand.u32 %v294, 4294901760
        %v1157 = vsub.f32 %v294, %v1156
        %v1158 = vand.u32 %v1157, 4294901760
        %v1159 = vsub.f32 %v1157, %v1158
        %v1160 = vand.u32 %v1159, 4294901760
        %1161 = vmatpush1.msra.mxu0 %v1160
        %v1162 = vand.u32 %v299, 4294901760
        %v1163 = vsub.f32 %v299, %v1162
        %v1164 = vand.u32 %v1163, 4294901760
        %v1165 = vsub.f32 %v1163, %v1164
        %v1166 = vand.u32 %v1165, 4294901760
        %1167 = vmatprep.subr.mxu0 %v1166
        %v1168 = vand.u32 %v298, 4294901760
        %v1169 = vsub.f32 %v298, %v1168
        %v1170 = vand.u32 %v1169, 4294901760
        %v1171 = vsub.f32 %v1169, %v1170
        %v1172 = vand.u32 %v1171, 4294901760
        %1173 = vmatpush1.msra.mxu0 %v1172
        %v1174 = vand.u32 %v303, 4294901760
        %v1175 = vsub.f32 %v303, %v1174
        %v1176 = vand.u32 %v1175, 4294901760
        %v1177 = vsub.f32 %v1175, %v1176
        %v1178 = vand.u32 %v1177, 4294901760
        %1179 = vmatprep.subr.mxu0 %v1178
        %v1180 = vand.u32 %v302, 4294901760
        %v1181 = vsub.f32 %v302, %v1180
        %v1182 = vand.u32 %v1181, 4294901760
        %v1183 = vsub.f32 %v1181, %v1182
        %v1184 = vand.u32 %v1183, 4294901760
        %1185 = vmatpush1.msra.mxu0 %v1184
        %v1186 = vand.u32 %v307, 4294901760
        %v1187 = vsub.f32 %v307, %v1186
        %v1188 = vand.u32 %v1187, 4294901760
        %v1189 = vsub.f32 %v1187, %v1188
        %v1190 = vand.u32 %v1189, 4294901760
        %1191 = vmatprep.subr.mxu0 %v1190
        %v1192 = vand.u32 %v306, 4294901760
        %v1193 = vsub.f32 %v306, %v1192
        %v1194 = vand.u32 %v1193, 4294901760
        %v1195 = vsub.f32 %v1193, %v1194
        %v1196 = vand.u32 %v1195, 4294901760
        %1197 = vmatpush1.msra.mxu0 %v1196
        %1198 = vmatprep.subr.mxu0 0.0
        %1199 = vmatpush1.msra.mxu0 0.0
        %1200 = vmatprep.subr.mxu0 0.0
        %1201 = vmatpush1.msra.mxu0 0.0
        %1202 = vmatprep.subr.mxu0 0.0
        %1203 = vmatpush1.msra.mxu0 0.0
        %1204 = vmatprep.subr.mxu0 0.0
        %1205 = vmatpush1.msra.mxu0 0.0
        %1206 = vmatprep.subr.mxu0 0.0
        %1207 = vmatpush1.msra.mxu0 0.0
        %1208 = vmatprep.subr.mxu0 0.0
        %1209 = vmatpush1.msra.mxu0 0.0
        %1210 = vmatprep.subr.mxu0 0.0
        %1211 = vmatpush1.msra.mxu0 0.0
        %1212 = vmatprep.subr.mxu0 0.0
        %1213 = vmatpush1.msra.mxu0 0.0
        %1214 = vmatprep.subr.mxu0 0.0
        %1215 = vmatpush1.msra.mxu0 0.0
        %1216 = vmatprep.subr.mxu0 0.0
        %1217 = vmatpush1.msra.mxu0 0.0
        %1218 = vmatprep.subr.mxu0 0.0
        %1219 = vmatpush1.msra.mxu0 0.0
        %1220 = vmatprep.subr.mxu0 0.0
        %1221 = vmatpush1.msra.mxu0 0.0
        %1222 = vmatprep.subr.mxu0 0.0
        %1223 = vmatpush1.msra.mxu0 0.0
        %1224 = vmatprep.subr.mxu0 0.0
        %1225 = vmatpush1.msra.mxu0 0.0
        %1226 = vmatprep.subr.mxu0 0.0
        %1227 = vmatpush1.msra.mxu0 0.0
        %1228 = vmatprep.subr.mxu0 0.0
        %1229 = vmatpush1.msra.mxu0 0.0
        %1230 = vmatprep.subr.mxu0 0.0
        %1231 = vmatpush1.msra.mxu0 0.0
        %1232 = vmatprep.subr.mxu0 0.0
        %1233 = vmatpush1.msra.mxu0 0.0
        %1234 = vmatprep.subr.mxu0 0.0
        %1235 = vmatpush1.msra.mxu0 0.0
        %1236 = vmatprep.subr.mxu0 0.0
        %1237 = vmatpush1.msra.mxu0 0.0
        %1238 = vmatprep.subr.mxu0 0.0
        %1239 = vmatpush1.msra.mxu0 0.0
        %1240 = vmatprep.subr.mxu0 0.0
        %1241 = vmatpush1.msra.mxu0 0.0
        %1242 = vmatprep.subr.mxu0 0.0
        %1243 = vmatpush1.msra.mxu0 0.0
        %1244 = vmatprep.subr.mxu0 0.0
        %1245 = vmatpush1.msra.mxu0 0.0
        %1246 = vmatprep.subr.mxu0 0.0
        %1247 = vmatpush1.msra.mxu0 0.0
        %1248 = vmatprep.subr.mxu0 0.0
        %1249 = vmatpush1.msra.mxu0 0.0
        %1250 = vmatprep.subr.mxu0 0.0
        %1251 = vmatpush1.msra.mxu0 0.0
        %1252 = vmatprep.subr.mxu0 0.0
        %1253 = vmatpush1.msra.mxu0 0.0
        %1254 = vmatprep.mubr.f32.mxu0 0.0
        %v1255 = vand.u32 %v332, 4294901760
        %1256 = vmatmul.mubr.f32.gmra.mrb[0].mxu0 %v1255
        %v1257 = vpop.f32.mrb[0].mxu0
        %v1258 = vadd.f32 %v1113, %v1257
        %v1259 = vpop.f32.mrb[0].mxu0
        %v1260 = vadd.f32 %v1115, %v1259
        %1261 = vmatprep.mubr.f32.mxu0 0.0
        %v1262 = vand.u32 %v335, 4294901760
        %1263 = vmatmul.mubr.f32.gmra.mrb[0].mxu0 %v1262
        %v1264 = vpop.f32.mrb[0].mxu0
        %v1265 = vadd.f32 %v1124, %v1264
        %v1266 = vpop.f32.mrb[0].mxu0
        %v1267 = vadd.f32 %v1126, %v1266
        %1268 = vmatprep.mubr.f32.mxu0 0.0
        %v1269 = vand.u32 %v338, 4294901760
        %1270 = vmatmul.mubr.f32.gmra.mrb[0].mxu0 %v1269
        %v1271 = vpop.f32.mrb[0].mxu0
        %v1272 = vadd.f32 %v1135, %v1271
        %v1273 = vpop.f32.mrb[0].mxu0
        %v1274 = vadd.f32 %v1137, %v1273
        %1275 = vmatprep.mubr.f32.mxu0 0.0
        %v1276 = vand.u32 %v341, 4294901760
        %1277 = vmatmul.mubr.f32.gmra.mrb[0].mxu0 %v1276
        %v1278 = vpop.f32.mrb[0].mxu0
        %v1279 = vadd.f32 %v1146, %v1278
        %v1280 = vpop.f32.mrb[0].mxu0
        %v1281 = vadd.f32 %v1148, %v1280
        %1282 = vdwg.mxu0
        %v1283 = vand.u32 %v295, 4294901760
        %v1284 = vsub.f32 %v295, %v1283
        %1285 = vmatprep.subr.mxu0 %v1284
        %v1286 = vand.u32 %v294, 4294901760
        %v1287 = vsub.f32 %v294, %v1286
        %1288 = vmatpush1.msra.mxu0 %v1287
        %v1289 = vand.u32 %v299, 4294901760
        %v1290 = vsub.f32 %v299, %v1289
        %1291 = vmatprep.subr.mxu0 %v1290
        %v1292 = vand.u32 %v298, 4294901760
        %v1293 = vsub.f32 %v298, %v1292
        %1294 = vmatpush1.msra.mxu0 %v1293
        %v1295 = vand.u32 %v303, 4294901760
        %v1296 = vsub.f32 %v303, %v1295
        %1297 = vmatprep.subr.mxu0 %v1296
        %v1298 = vand.u32 %v302, 4294901760
        %v1299 = vsub.f32 %v302, %v1298
        %1300 = vmatpush1.msra.mxu0 %v1299
        %v1301 = vand.u32 %v307, 4294901760
        %v1302 = vsub.f32 %v307, %v1301
        %1303 = vmatprep.subr.mxu0 %v1302
        %v1304 = vand.u32 %v306, 4294901760
        %v1305 = vsub.f32 %v306, %v1304
        %1306 = vmatpush1.msra.mxu0 %v1305
        %1307 = vmatprep.subr.mxu0 0.0
        %1308 = vmatpush1.msra.mxu0 0.0
        %1309 = vmatprep.subr.mxu0 0.0
        %1310 = vmatpush1.msra.mxu0 0.0
        %1311 = vmatprep.subr.mxu0 0.0
        %1312 = vmatpush1.msra.mxu0 0.0
        %1313 = vmatprep.subr.mxu0 0.0
        %1314 = vmatpush1.msra.mxu0 0.0
        %1315 = vmatprep.subr.mxu0 0.0
        %1316 = vmatpush1.msra.mxu0 0.0
        %1317 = vmatprep.subr.mxu0 0.0
        %1318 = vmatpush1.msra.mxu0 0.0
        %1319 = vmatprep.subr.mxu0 0.0
        %1320 = vmatpush1.msra.mxu0 0.0
        %1321 = vmatprep.subr.mxu0 0.0
        %1322 = vmatpush1.msra.mxu0 0.0
        %1323 = vmatprep.subr.mxu0 0.0
        %1324 = vmatpush1.msra.mxu0 0.0
        %1325 = vmatprep.subr.mxu0 0.0
        %1326 = vmatpush1.msra.mxu0 0.0
        %1327 = vmatprep.subr.mxu0 0.0
        %1328 = vmatpush1.msra.mxu0 0.0
        %1329 = vmatprep.subr.mxu0 0.0
        %1330 = vmatpush1.msra.mxu0 0.0
        %1331 = vmatprep.subr.mxu0 0.0
        %1332 = vmatpush1.msra.mxu0 0.0
        %1333 = vmatprep.subr.mxu0 0.0
        %1334 = vmatpush1.msra.mxu0 0.0
        %1335 = vmatprep.subr.mxu0 0.0
        %1336 = vmatpush1.msra.mxu0 0.0
        %1337 = vmatprep.subr.mxu0 0.0
        %1338 = vmatpush1.msra.mxu0 0.0
        %1339 = vmatprep.subr.mxu0 0.0
        %1340 = vmatpush1.msra.mxu0 0.0
        %1341 = vmatprep.subr.mxu0 0.0
        %1342 = vmatpush1.msra.mxu0 0.0
        %1343 = vmatprep.subr.mxu0 0.0
        %1344 = vmatpush1.msra.mxu0 0.0
        %1345 = vmatprep.subr.mxu0 0.0
        %1346 = vmatpush1.msra.mxu0 0.0
        %1347 = vmatprep.subr.mxu0 0.0
        %1348 = vmatpush1.msra.mxu0 0.0
        %1349 = vmatprep.subr.mxu0 0.0
        %1350 = vmatpush1.msra.mxu0 0.0
        %1351 = vmatprep.subr.mxu0 0.0
        %1352 = vmatpush1.msra.mxu0 0.0
        %1353 = vmatprep.subr.mxu0 0.0
        %1354 = vmatpush1.msra.mxu0 0.0
        %1355 = vmatprep.subr.mxu0 0.0
        %1356 = vmatpush1.msra.mxu0 0.0
        %1357 = vmatprep.subr.mxu0 0.0
        %1358 = vmatpush1.msra.mxu0 0.0
        %1359 = vmatprep.subr.mxu0 0.0
        %1360 = vmatpush1.msra.mxu0 0.0
        %1361 = vmatprep.subr.mxu0 0.0
        %1362 = vmatpush1.msra.mxu0 0.0
        %1363 = vmatprep.mubr.f32.mxu0 0.0
        %v1364 = vand.u32 %v332, 4294901760
        %v1365 = vsub.f32 %v332, %v1364
        %1366 = vmatmul.mubr.f32.gmra.mrb[0].mxu0 %v1365
        %v1367 = vpop.f32.mrb[0].mxu0
        %v1368 = vadd.f32 %v1258, %v1367
        %v1369 = vpop.f32.mrb[0].mxu0
        %v1370 = vadd.f32 %v1260, %v1369
        %1371 = vmatprep.mubr.f32.mxu0 0.0
        %v1372 = vand.u32 %v335, 4294901760
        %v1373 = vsub.f32 %v335, %v1372
        %1374 = vmatmul.mubr.f32.gmra.mrb[0].mxu0 %v1373
        %v1375 = vpop.f32.mrb[0].mxu0
        %v1376 = vadd.f32 %v1265, %v1375
        %v1377 = vpop.f32.mrb[0].mxu0
        %v1378 = vadd.f32 %v1267, %v1377
        %1379 = vmatprep.mubr.f32.mxu0 0.0
        %v1380 = vand.u32 %v338, 4294901760
        %v1381 = vsub.f32 %v338, %v1380
        %1382 = vmatmul.mubr.f32.gmra.mrb[0].mxu0 %v1381
        %v1383 = vpop.f32.mrb[0].mxu0
        %v1384 = vadd.f32 %v1272, %v1383
        %v1385 = vpop.f32.mrb[0].mxu0
        %v1386 = vadd.f32 %v1274, %v1385
        %1387 = vmatprep.mubr.f32.mxu0 0.0
        %v1388 = vand.u32 %v341, 4294901760
        %v1389 = vsub.f32 %v341, %v1388
        %1390 = vmatmul.mubr.f32.gmra.mrb[0].mxu0 %v1389
        %v1391 = vpop.f32.mrb[0].mxu0
        %v1392 = vadd.f32 %v1279, %v1391
        %v1393 = vpop.f32.mrb[0].mxu0
        %v1394 = vadd.f32 %v1281, %v1393
        %1395 = vdwg.mxu0
        %v1396 = vand.u32 %v295, 4294901760
        %1397 = vmatprep.subr.mxu0 %v1396
        %v1398 = vand.u32 %v294, 4294901760
        %1399 = vmatpush1.msra.mxu0 %v1398
        %v1400 = vand.u32 %v299, 4294901760
        %1401 = vmatprep.subr.mxu0 %v1400
        %v1402 = vand.u32 %v298, 4294901760
        %1403 = vmatpush1.msra.mxu0 %v1402
        %v1404 = vand.u32 %v303, 4294901760
        %1405 = vmatprep.subr.mxu0 %v1404
        %v1406 = vand.u32 %v302, 4294901760
        %1407 = vmatpush1.msra.mxu0 %v1406
        %v1408 = vand.u32 %v307, 4294901760
        %1409 = vmatprep.subr.mxu0 %v1408
        %v1410 = vand.u32 %v306, 4294901760
        %1411 = vmatpush1.msra.mxu0 %v1410
        %1412 = vmatprep.subr.mxu0 0.0
        %1413 = vmatpush1.msra.mxu0 0.0
        %1414 = vmatprep.subr.mxu0 0.0
        %1415 = vmatpush1.msra.mxu0 0.0
        %1416 = vmatprep.subr.mxu0 0.0
        %1417 = vmatpush1.msra.mxu0 0.0
        %1418 = vmatprep.subr.mxu0 0.0
        %1419 = vmatpush1.msra.mxu0 0.0
        %1420 = vmatprep.subr.mxu0 0.0
        %1421 = vmatpush1.msra.mxu0 0.0
        %1422 = vmatprep.subr.mxu0 0.0
        %1423 = vmatpush1.msra.mxu0 0.0
        %1424 = vmatprep.subr.mxu0 0.0
        %1425 = vmatpush1.msra.mxu0 0.0
        %1426 = vmatprep.subr.mxu0 0.0
        %1427 = vmatpush1.msra.mxu0 0.0
        %1428 = vmatprep.subr.mxu0 0.0
        %1429 = vmatpush1.msra.mxu0 0.0
        %1430 = vmatprep.subr.mxu0 0.0
        %1431 = vmatpush1.msra.mxu0 0.0
        %1432 = vmatprep.subr.mxu0 0.0
        %1433 = vmatpush1.msra.mxu0 0.0
        %1434 = vmatprep.subr.mxu0 0.0
        %1435 = vmatpush1.msra.mxu0 0.0
        %1436 = vmatprep.subr.mxu0 0.0
        %1437 = vmatpush1.msra.mxu0 0.0
        %1438 = vmatprep.subr.mxu0 0.0
        %1439 = vmatpush1.msra.mxu0 0.0
        %1440 = vmatprep.subr.mxu0 0.0
        %1441 = vmatpush1.msra.mxu0 0.0
        %1442 = vmatprep.subr.mxu0 0.0
        %1443 = vmatpush1.msra.mxu0 0.0
        %1444 = vmatprep.subr.mxu0 0.0
        %1445 = vmatpush1.msra.mxu0 0.0
        %1446 = vmatprep.subr.mxu0 0.0
        %1447 = vmatpush1.msra.mxu0 0.0
        %1448 = vmatprep.subr.mxu0 0.0
        %1449 = vmatpush1.msra.mxu0 0.0
        %1450 = vmatprep.subr.mxu0 0.0
        %1451 = vmatpush1.msra.mxu0 0.0
        %1452 = vmatprep.subr.mxu0 0.0
        %1453 = vmatpush1.msra.mxu0 0.0
        %1454 = vmatprep.subr.mxu0 0.0
        %1455 = vmatpush1.msra.mxu0 0.0
        %1456 = vmatprep.subr.mxu0 0.0
        %1457 = vmatpush1.msra.mxu0 0.0
        %1458 = vmatprep.subr.mxu0 0.0
        %1459 = vmatpush1.msra.mxu0 0.0
        %1460 = vmatprep.subr.mxu0 0.0
        %1461 = vmatpush1.msra.mxu0 0.0
        %1462 = vmatprep.subr.mxu0 0.0
        %1463 = vmatpush1.msra.mxu0 0.0
        %1464 = vmatprep.subr.mxu0 0.0
        %1465 = vmatpush1.msra.mxu0 0.0
        %1466 = vmatprep.subr.mxu0 0.0
        %1467 = vmatpush1.msra.mxu0 0.0
        %1468 = vmatprep.mubr.f32.mxu0 0.0
        %v1469 = vand.u32 %v332, 4294901760
        %v1470 = vsub.f32 %v332, %v1469
        %v1471 = vand.u32 %v1470, 4294901760
        %1472 = vmatmul.mubr.f32.gmra.mrb[0].mxu0 %v1471
        %v1473 = vpop.f32.mrb[0].mxu0
        %v1474 = vadd.f32 %v1368, %v1473
        %v1475 = vpop.f32.mrb[0].mxu0
        %v1476 = vadd.f32 %v1370, %v1475
        %1477 = vmatprep.mubr.f32.mxu0 0.0
        %v1478 = vand.u32 %v335, 4294901760
        %v1479 = vsub.f32 %v335, %v1478
        %v1480 = vand.u32 %v1479, 4294901760
        %1481 = vmatmul.mubr.f32.gmra.mrb[0].mxu0 %v1480
        %v1482 = vpop.f32.mrb[0].mxu0
        %v1483 = vadd.f32 %v1376, %v1482
        %v1484 = vpop.f32.mrb[0].mxu0
        %v1485 = vadd.f32 %v1378, %v1484
        %1486 = vmatprep.mubr.f32.mxu0 0.0
        %v1487 = vand.u32 %v338, 4294901760
        %v1488 = vsub.f32 %v338, %v1487
        %v1489 = vand.u32 %v1488, 4294901760
        %1490 = vmatmul.mubr.f32.gmra.mrb[0].mxu0 %v1489
        %v1491 = vpop.f32.mrb[0].mxu0
        %v1492 = vadd.f32 %v1384, %v1491
        %v1493 = vpop.f32.mrb[0].mxu0
        %v1494 = vadd.f32 %v1386, %v1493
        %1495 = vmatprep.mubr.f32.mxu0 0.0
        %v1496 = vand.u32 %v341, 4294901760
        %v1497 = vsub.f32 %v341, %v1496
        %v1498 = vand.u32 %v1497, 4294901760
        %1499 = vmatmul.mubr.f32.gmra.mrb[0].mxu0 %v1498
        %v1500 = vpop.f32.mrb[0].mxu0
        %v1501 = vadd.f32 %v1392, %v1500
        %v1502 = vpop.f32.mrb[0].mxu0
        %v1503 = vadd.f32 %v1394, %v1502
        %1504 = vdwg.mxu0
        %v1505 = vand.u32 %v295, 4294901760
        %v1506 = vsub.f32 %v295, %v1505
        %v1507 = vand.u32 %v1506, 4294901760
        %1508 = vmatprep.subr.mxu0 %v1507
        %v1509 = vand.u32 %v294, 4294901760
        %v1510 = vsub.f32 %v294, %v1509
        %v1511 = vand.u32 %v1510, 4294901760
        %1512 = vmatpush1.msra.mxu0 %v1511
        %v1513 = vand.u32 %v299, 4294901760
        %v1514 = vsub.f32 %v299, %v1513
        %v1515 = vand.u32 %v1514, 4294901760
        %1516 = vmatprep.subr.mxu0 %v1515
        %v1517 = vand.u32 %v298, 4294901760
        %v1518 = vsub.f32 %v298, %v1517
        %v1519 = vand.u32 %v1518, 4294901760
        %1520 = vmatpush1.msra.mxu0 %v1519
        %v1521 = vand.u32 %v303, 4294901760
        %v1522 = vsub.f32 %v303, %v1521
        %v1523 = vand.u32 %v1522, 4294901760
        %1524 = vmatprep.subr.mxu0 %v1523
        %v1525 = vand.u32 %v302, 4294901760
        %v1526 = vsub.f32 %v302, %v1525
        %v1527 = vand.u32 %v1526, 4294901760
        %1528 = vmatpush1.msra.mxu0 %v1527
        %v1529 = vand.u32 %v307, 4294901760
        %v1530 = vsub.f32 %v307, %v1529
        %v1531 = vand.u32 %v1530, 4294901760
        %1532 = vmatprep.subr.mxu0 %v1531
        %v1533 = vand.u32 %v306, 4294901760
        %v1534 = vsub.f32 %v306, %v1533
        %v1535 = vand.u32 %v1534, 4294901760
        %1536 = vmatpush1.msra.mxu0 %v1535
        %1537 = vmatprep.subr.mxu0 0.0
        %1538 = vmatpush1.msra.mxu0 0.0
        %1539 = vmatprep.subr.mxu0 0.0
        %1540 = vmatpush1.msra.mxu0 0.0
        %1541 = vmatprep.subr.mxu0 0.0
        %1542 = vmatpush1.msra.mxu0 0.0
        %1543 = vmatprep.subr.mxu0 0.0
        %1544 = vmatpush1.msra.mxu0 0.0
        %1545 = vmatprep.subr.mxu0 0.0
        %1546 = vmatpush1.msra.mxu0 0.0
        %1547 = vmatprep.subr.mxu0 0.0
        %1548 = vmatpush1.msra.mxu0 0.0
        %1549 = vmatprep.subr.mxu0 0.0
        %1550 = vmatpush1.msra.mxu0 0.0
        %1551 = vmatprep.subr.mxu0 0.0
        %1552 = vmatpush1.msra.mxu0 0.0
        %1553 = vmatprep.subr.mxu0 0.0
        %1554 = vmatpush1.msra.mxu0 0.0
        %1555 = vmatprep.subr.mxu0 0.0
        %1556 = vmatpush1.msra.mxu0 0.0
        %1557 = vmatprep.subr.mxu0 0.0
        %1558 = vmatpush1.msra.mxu0 0.0
        %1559 = vmatprep.subr.mxu0 0.0
        %1560 = vmatpush1.msra.mxu0 0.0
        %1561 = vmatprep.subr.mxu0 0.0
        %1562 = vmatpush1.msra.mxu0 0.0
        %1563 = vmatprep.subr.mxu0 0.0
        %1564 = vmatpush1.msra.mxu0 0.0
        %1565 = vmatprep.subr.mxu0 0.0
        %1566 = vmatpush1.msra.mxu0 0.0
        %1567 = vmatprep.subr.mxu0 0.0
        %1568 = vmatpush1.msra.mxu0 0.0
        %1569 = vmatprep.subr.mxu0 0.0
        %1570 = vmatpush1.msra.mxu0 0.0
        %1571 = vmatprep.subr.mxu0 0.0
        %1572 = vmatpush1.msra.mxu0 0.0
        %1573 = vmatprep.subr.mxu0 0.0
        %1574 = vmatpush1.msra.mxu0 0.0
        %1575 = vmatprep.subr.mxu0 0.0
        %1576 = vmatpush1.msra.mxu0 0.0
        %1577 = vmatprep.subr.mxu0 0.0
        %1578 = vmatpush1.msra.mxu0 0.0
        %1579 = vmatprep.subr.mxu0 0.0
        %1580 = vmatpush1.msra.mxu0 0.0
        %1581 = vmatprep.subr.mxu0 0.0
        %1582 = vmatpush1.msra.mxu0 0.0
        %1583 = vmatprep.subr.mxu0 0.0
        %1584 = vmatpush1.msra.mxu0 0.0
        %1585 = vmatprep.subr.mxu0 0.0
        %1586 = vmatpush1.msra.mxu0 0.0
        %1587 = vmatprep.subr.mxu0 0.0
        %1588 = vmatpush1.msra.mxu0 0.0
        %1589 = vmatprep.subr.mxu0 0.0
        %1590 = vmatpush1.msra.mxu0 0.0
        %1591 = vmatprep.subr.mxu0 0.0
        %1592 = vmatpush1.msra.mxu0 0.0
        %1593 = vmatprep.mubr.f32.mxu0 0.0
        %v1594 = vand.u32 %v332, 4294901760
        %1595 = vmatmul.mubr.f32.gmra.mrb[0].mxu0 %v1594
        %v1596 = vpop.f32.mrb[0].mxu0
        %v1597 = vadd.f32 %v1474, %v1596
        %v1598 = vpop.f32.mrb[0].mxu0
        %v1599 = vadd.f32 %v1476, %v1598
        %1600 = vmatprep.mubr.f32.mxu0 0.0
        %v1601 = vand.u32 %v335, 4294901760
        %1602 = vmatmul.mubr.f32.gmra.mrb[0].mxu0 %v1601
        %v1603 = vpop.f32.mrb[0].mxu0
        %v1604 = vadd.f32 %v1483, %v1603
        %v1605 = vpop.f32.mrb[0].mxu0
        %v1606 = vadd.f32 %v1485, %v1605
        %1607 = vmatprep.mubr.f32.mxu0 0.0
        %v1608 = vand.u32 %v338, 4294901760
        %1609 = vmatmul.mubr.f32.gmra.mrb[0].mxu0 %v1608
        %v1610 = vpop.f32.mrb[0].mxu0
        %v1611 = vadd.f32 %v1492, %v1610
        %v1612 = vpop.f32.mrb[0].mxu0
        %v1613 = vadd.f32 %v1494, %v1612
        %1614 = vmatprep.mubr.f32.mxu0 0.0
        %v1615 = vand.u32 %v341, 4294901760
        %1616 = vmatmul.mubr.f32.gmra.mrb[0].mxu0 %v1615
        %v1617 = vpop.f32.mrb[0].mxu0
        %v1618 = vadd.f32 %v1501, %v1617
        %v1619 = vpop.f32.mrb[0].mxu0
        %v1620 = vadd.f32 %v1503, %v1619
        %1621 = vdwg.mxu0
        %v1622 = vand.u32 %v295, 4294901760
        %1623 = vmatprep.subr.mxu0 %v1622
        %v1624 = vand.u32 %v294, 4294901760
        %1625 = vmatpush1.msra.mxu0 %v1624
        %v1626 = vand.u32 %v299, 4294901760
        %1627 = vmatprep.subr.mxu0 %v1626
        %v1628 = vand.u32 %v298, 4294901760
        %1629 = vmatpush1.msra.mxu0 %v1628
        %v1630 = vand.u32 %v303, 4294901760
        %1631 = vmatprep.subr.mxu0 %v1630
        %v1632 = vand.u32 %v302, 4294901760
        %1633 = vmatpush1.msra.mxu0 %v1632
        %v1634 = vand.u32 %v307, 4294901760
        %1635 = vmatprep.subr.mxu0 %v1634
        %v1636 = vand.u32 %v306, 4294901760
        %1637 = vmatpush1.msra.mxu0 %v1636
        %1638 = vmatprep.subr.mxu0 0.0
        %1639 = vmatpush1.msra.mxu0 0.0
        %1640 = vmatprep.subr.mxu0 0.0
        %1641 = vmatpush1.msra.mxu0 0.0
        %1642 = vmatprep.subr.mxu0 0.0
        %1643 = vmatpush1.msra.mxu0 0.0
        %1644 = vmatprep.subr.mxu0 0.0
        %1645 = vmatpush1.msra.mxu0 0.0
        %1646 = vmatprep.subr.mxu0 0.0
        %1647 = vmatpush1.msra.mxu0 0.0
        %1648 = vmatprep.subr.mxu0 0.0
        %1649 = vmatpush1.msra.mxu0 0.0
        %1650 = vmatprep.subr.mxu0 0.0
        %1651 = vmatpush1.msra.mxu0 0.0
        %1652 = vmatprep.subr.mxu0 0.0
        %1653 = vmatpush1.msra.mxu0 0.0
        %1654 = vmatprep.subr.mxu0 0.0
        %1655 = vmatpush1.msra.mxu0 0.0
        %1656 = vmatprep.subr.mxu0 0.0
        %1657 = vmatpush1.msra.mxu0 0.0
        %1658 = vmatprep.subr.mxu0 0.0
        %1659 = vmatpush1.msra.mxu0 0.0
        %1660 = vmatprep.subr.mxu0 0.0
        %1661 = vmatpush1.msra.mxu0 0.0
        %1662 = vmatprep.subr.mxu0 0.0
        %1663 = vmatpush1.msra.mxu0 0.0
        %1664 = vmatprep.subr.mxu0 0.0
        %1665 = vmatpush1.msra.mxu0 0.0
        %1666 = vmatprep.subr.mxu0 0.0
        %1667 = vmatpush1.msra.mxu0 0.0
        %1668 = vmatprep.subr.mxu0 0.0
        %1669 = vmatpush1.msra.mxu0 0.0
        %1670 = vmatprep.subr.mxu0 0.0
        %1671 = vmatpush1.msra.mxu0 0.0
        %1672 = vmatprep.subr.mxu0 0.0
        %1673 = vmatpush1.msra.mxu0 0.0
        %1674 = vmatprep.subr.mxu0 0.0
        %1675 = vmatpush1.msra.mxu0 0.0
        %1676 = vmatprep.subr.mxu0 0.0
        %1677 = vmatpush1.msra.mxu0 0.0
        %1678 = vmatprep.subr.mxu0 0.0
        %1679 = vmatpush1.msra.mxu0 0.0
        %1680 = vmatprep.subr.mxu0 0.0
        %1681 = vmatpush1.msra.mxu0 0.0
        %1682 = vmatprep.subr.mxu0 0.0
        %1683 = vmatpush1.msra.mxu0 0.0
        %1684 = vmatprep.subr.mxu0 0.0
        %1685 = vmatpush1.msra.mxu0 0.0
        %1686 = vmatprep.subr.mxu0 0.0
        %1687 = vmatpush1.msra.mxu0 0.0
        %1688 = vmatprep.subr.mxu0 0.0
        %1689 = vmatpush1.msra.mxu0 0.0
        %1690 = vmatprep.subr.mxu0 0.0
        %1691 = vmatpush1.msra.mxu0 0.0
        %1692 = vmatprep.subr.mxu0 0.0
        %1693 = vmatpush1.msra.mxu0 0.0
        %1694 = vmatprep.mubr.f32.mxu0 0.0
        %v1695 = vand.u32 %v332, 4294901760
        %1696 = vmatmul.mubr.f32.gmra.mrb[0].mxu0 %v1695
        %v1697 = vpop.f32.mrb[0].mxu0
        %v1698 = vadd.f32 %v1597, %v1697
        %v1699 = vpop.f32.mrb[0].mxu0
        %v1700 = vadd.f32 %v1599, %v1699
        %1701 = vmatprep.mubr.f32.mxu0 0.0
        %v1702 = vand.u32 %v335, 4294901760
        %1703 = vmatmul.mubr.f32.gmra.mrb[0].mxu0 %v1702
        %v1704 = vpop.f32.mrb[0].mxu0
        %v1705 = vadd.f32 %v1604, %v1704
        %v1706 = vpop.f32.mrb[0].mxu0
        %v1707 = vadd.f32 %v1606, %v1706
        %1708 = vmatprep.mubr.f32.mxu0 0.0
        %v1709 = vand.u32 %v338, 4294901760
        %1710 = vmatmul.mubr.f32.gmra.mrb[0].mxu0 %v1709
        %v1711 = vpop.f32.mrb[0].mxu0
        %v1712 = vadd.f32 %v1611, %v1711
        %v1713 = vpop.f32.mrb[0].mxu0
        %v1714 = vadd.f32 %v1613, %v1713
        %1715 = vmatprep.mubr.f32.mxu0 0.0
        %v1716 = vand.u32 %v341, 4294901760
        %1717 = vmatmul.mubr.f32.gmra.mrb[0].mxu0 %v1716
        %v1718 = vpop.f32.mrb[0].mxu0
        %v1719 = vadd.f32 %v1618, %v1718
        %v1720 = vpop.f32.mrb[0].mxu0
        %v1721 = vadd.f32 %v1620, %v1720
        %1722 = vdwg.mxu0
        %v1723 = vtanh.pop %v1008
        %v1724 = vtanh.pop %v1010
        %v1725 = vtanh.pop %v1698
        %v1726 = vtanh.pop %v1700
        %v1727 = vtanh.pop %v1015
        %v1728 = vtanh.pop %v1017
        %v1729 = vtanh.pop %v1705
        %v1730 = vtanh.pop %v1707
        %v1731 = vtanh.pop %v1022
        %v1732 = vtanh.pop %v1024
        %v1733 = vtanh.pop %v1712
        %v1734 = vtanh.pop %v1714
        %v1735 = vtanh.pop %v1029
        %v1736 = vtanh.pop %v1031
        %v1737 = vtanh.pop %v1719
        %v1738 = vtanh.pop %v1721
        %v1739 = vld [vmem:[%s3] sm:$0xf]
        %v1741 = vlaneseq
        %v1742 = vshrl.u32 %v1741, 7
        %v1743 = vsub.s32 0, %v1742
        %v1744 = vrot.slane %v1739, %v1743
        %v1745 = vlaneseq
        %v1746 = vshrl.u32 %v1745, 7
        %v1747 = vsub.s32 1, %v1746
        %v1748 = vrot.slane %v1739, %v1747
        %v1749 = vlaneseq
        %v1750 = vshrl.u32 %v1749, 7
        %v1751 = vsub.s32 2, %v1750
        %v1752 = vrot.slane %v1739, %v1751
        %v1753 = vlaneseq
        %v1754 = vshrl.u32 %v1753, 7
        %v1755 = vsub.s32 3, %v1754
        %v1756 = vrot.slane %v1739, %v1755
        %v1761 = vand.u32 %v1724, 4294901760
        %1762 = vmatprep.subr.mxu0 %v1761
        %v1763 = vand.u32 %v1723, 4294901760
        %1764 = vmatpush1.xpose.msra.mxu0 %v1763
        %v1765 = vand.u32 %v1728, 4294901760
        %1766 = vmatprep.subr.mxu0 %v1765
        %v1767 = vand.u32 %v1727, 4294901760
        %1768 = vmatpush1.xpose.msra.mxu0 %v1767
        %1769 = vmatprep.subr.mxu0 0.0
        %1770 = vmatpush1.xpose.msra.mxu0 0.0
        %1771 = vmatprep.subr.mxu0 0.0
        %1772 = vmatpush1.xpose.msra.mxu0 0.0
        %1773 = vmatprep.subr.mxu0 0.0
        %1774 = vmatpush1.xpose.msra.mxu0 0.0
        %1775 = vmatprep.subr.mxu0 0.0
        %1776 = vmatpush1.xpose.msra.mxu0 0.0
        %1777 = vmatprep.subr.mxu0 0.0
        %1778 = vmatpush1.xpose.msra.mxu0 0.0
        %1779 = vmatprep.subr.mxu0 0.0
        %1780 = vmatpush1.xpose.msra.mxu0 0.0
        %1781 = vmatprep.subr.mxu0 0.0
        %1782 = vmatpush1.xpose.msra.mxu0 0.0
        %1783 = vmatprep.subr.mxu0 0.0
        %1784 = vmatpush1.xpose.msra.mxu0 0.0
        %1785 = vmatprep.subr.mxu0 0.0
        %1786 = vmatpush1.xpose.msra.mxu0 0.0
        %1787 = vmatprep.subr.mxu0 0.0
        %1788 = vmatpush1.xpose.msra.mxu0 0.0
        %1789 = vmatprep.subr.mxu0 0.0
        %1790 = vmatpush1.xpose.msra.mxu0 0.0
        %1791 = vmatprep.subr.mxu0 0.0
        %1792 = vmatpush1.xpose.msra.mxu0 0.0
        %1793 = vmatprep.subr.mxu0 0.0
        %1794 = vmatpush1.xpose.msra.mxu0 0.0
        %1795 = vmatprep.subr.mxu0 0.0
        %1796 = vmatpush1.xpose.msra.mxu0 0.0
        %1797 = vmatprep.subr.mxu0 0.0
        %1798 = vmatpush1.xpose.msra.mxu0 0.0
        %1799 = vmatprep.subr.mxu0 0.0
        %1800 = vmatpush1.xpose.msra.mxu0 0.0
        %1801 = vmatprep.subr.mxu0 0.0
        %1802 = vmatpush1.xpose.msra.mxu0 0.0
        %1803 = vmatprep.subr.mxu0 0.0
        %1804 = vmatpush1.xpose.msra.mxu0 0.0
        %1805 = vmatprep.subr.mxu0 0.0
        %1806 = vmatpush1.xpose.msra.mxu0 0.0
        %1807 = vmatprep.subr.mxu0 0.0
        %1808 = vmatpush1.xpose.msra.mxu0 0.0
        %1809 = vmatprep.subr.mxu0 0.0
        %1810 = vmatpush1.xpose.msra.mxu0 0.0
        %1811 = vmatprep.subr.mxu0 0.0
        %1812 = vmatpush1.xpose.msra.mxu0 0.0
        %1813 = vmatprep.subr.mxu0 0.0
        %1814 = vmatpush1.xpose.msra.mxu0 0.0
        %1815 = vmatprep.subr.mxu0 0.0
        %1816 = vmatpush1.xpose.msra.mxu0 0.0
        %1817 = vmatprep.subr.mxu0 0.0
        %1818 = vmatpush1.xpose.msra.mxu0 0.0
        %1819 = vmatprep.subr.mxu0 0.0
        %1820 = vmatpush1.xpose.msra.mxu0 0.0
        %1821 = vmatprep.subr.mxu0 0.0
        %1822 = vmatpush1.xpose.msra.mxu0 0.0
        %1823 = vmatprep.subr.mxu0 0.0
        %1824 = vmatpush1.xpose.msra.mxu0 0.0
        %1825 = vmatprep.subr.mxu0 0.0
        %1826 = vmatpush1.xpose.msra.mxu0 0.0
        %1827 = vmatprep.subr.mxu0 0.0
        %1828 = vmatpush1.xpose.msra.mxu0 0.0
        %v1829 = vand.u32 %v1748, 4294901760
        %v1830 = vsub.f32 %v1748, %v1829
        %v1831 = vand.u32 %v1830, 4294901760
        %v1832 = vsub.f32 %v1830, %v1831
        %v1833 = vand.u32 %v1832, 4294901760
        %1834 = vmatprep.mubr.f32.mxu0 %v1833
        %v1835 = vand.u32 %v1744, 4294901760
        %v1836 = vsub.f32 %v1744, %v1835
        %v1837 = vand.u32 %v1836, 4294901760
        %v1838 = vsub.f32 %v1836, %v1837
        %v1839 = vand.u32 %v1838, 4294901760
        %1840 = vmatmul.mubr.f32.gmra.mrb[0].mxu0 %v1839
        %v1841 = vpop.f32.mrb[0].mxu0
        %v1842 = vadd.f32 0.0, %v1841
        %v1843 = vpop.f32.mrb[0].mxu0
        %1844 = vdwg.mxu0
        %v1845 = vand.u32 %v1724, 4294901760
        %v1846 = vsub.f32 %v1724, %v1845
        %v1847 = vand.u32 %v1846, 4294901760
        %v1848 = vsub.f32 %v1846, %v1847
        %v1849 = vand.u32 %v1848, 4294901760
        %1850 = vmatprep.subr.mxu0 %v1849
        %v1851 = vand.u32 %v1723, 4294901760
        %v1852 = vsub.f32 %v1723, %v1851
        %v1853 = vand.u32 %v1852, 4294901760
        %v1854 = vsub.f32 %v1852, %v1853
        %v1855 = vand.u32 %v1854, 4294901760
        %1856 = vmatpush1.xpose.msra.mxu0 %v1855
        %v1857 = vand.u32 %v1728, 4294901760
        %v1858 = vsub.f32 %v1728, %v1857
        %v1859 = vand.u32 %v1858, 4294901760
        %v1860 = vsub.f32 %v1858, %v1859
        %v1861 = vand.u32 %v1860, 4294901760
        %1862 = vmatprep.subr.mxu0 %v1861
        %v1863 = vand.u32 %v1727, 4294901760
        %v1864 = vsub.f32 %v1727, %v1863
        %v1865 = vand.u32 %v1864, 4294901760
        %v1866 = vsub.f32 %v1864, %v1865
        %v1867 = vand.u32 %v1866, 4294901760
        %1868 = vmatpush1.xpose.msra.mxu0 %v1867
        %1869 = vmatprep.subr.mxu0 0.0
        %1870 = vmatpush1.xpose.msra.mxu0 0.0
        %1871 = vmatprep.subr.mxu0 0.0
        %1872 = vmatpush1.xpose.msra.mxu0 0.0
        %1873 = vmatprep.subr.mxu0 0.0
        %1874 = vmatpush1.xpose.msra.mxu0 0.0
        %1875 = vmatprep.subr.mxu0 0.0
        %1876 = vmatpush1.xpose.msra.mxu0 0.0
        %1877 = vmatprep.subr.mxu0 0.0
        %1878 = vmatpush1.xpose.msra.mxu0 0.0
        %1879 = vmatprep.subr.mxu0 0.0
        %1880 = vmatpush1.xpose.msra.mxu0 0.0
        %1881 = vmatprep.subr.mxu0 0.0
        %1882 = vmatpush1.xpose.msra.mxu0 0.0
        %1883 = vmatprep.subr.mxu0 0.0
        %1884 = vmatpush1.xpose.msra.mxu0 0.0
        %1885 = vmatprep.subr.mxu0 0.0
        %1886 = vmatpush1.xpose.msra.mxu0 0.0
        %1887 = vmatprep.subr.mxu0 0.0
        %1888 = vmatpush1.xpose.msra.mxu0 0.0
        %1889 = vmatprep.subr.mxu0 0.0
        %1890 = vmatpush1.xpose.msra.mxu0 0.0
        %1891 = vmatprep.subr.mxu0 0.0
        %1892 = vmatpush1.xpose.msra.mxu0 0.0
        %1893 = vmatprep.subr.mxu0 0.0
        %1894 = vmatpush1.xpose.msra.mxu0 0.0
        %1895 = vmatprep.subr.mxu0 0.0
        %1896 = vmatpush1.xpose.msra.mxu0 0.0
        %1897 = vmatprep.subr.mxu0 0.0
        %1898 = vmatpush1.xpose.msra.mxu0 0.0
        %1899 = vmatprep.subr.mxu0 0.0
        %1900 = vmatpush1.xpose.msra.mxu0 0.0
        %1901 = vmatprep.subr.mxu0 0.0
        %1902 = vmatpush1.xpose.msra.mxu0 0.0
        %1903 = vmatprep.subr.mxu0 0.0
        %1904 = vmatpush1.xpose.msra.mxu0 0.0
        %1905 = vmatprep.subr.mxu0 0.0
        %1906 = vmatpush1.xpose.msra.mxu0 0.0
        %1907 = vmatprep.subr.mxu0 0.0
        %1908 = vmatpush1.xpose.msra.mxu0 0.0
        %1909 = vmatprep.subr.mxu0 0.0
        %1910 = vmatpush1.xpose.msra.mxu0 0.0
        %1911 = vmatprep.subr.mxu0 0.0
        %1912 = vmatpush1.xpose.msra.mxu0 0.0
        %1913 = vmatprep.subr.mxu0 0.0
        %1914 = vmatpush1.xpose.msra.mxu0 0.0
        %1915 = vmatprep.subr.mxu0 0.0
        %1916 = vmatpush1.xpose.msra.mxu0 0.0
        %1917 = vmatprep.subr.mxu0 0.0
        %1918 = vmatpush1.xpose.msra.mxu0 0.0
        %1919 = vmatprep.subr.mxu0 0.0
        %1920 = vmatpush1.xpose.msra.mxu0 0.0
        %1921 = vmatprep.subr.mxu0 0.0
        %1922 = vmatpush1.xpose.msra.mxu0 0.0
        %1923 = vmatprep.subr.mxu0 0.0
        %1924 = vmatpush1.xpose.msra.mxu0 0.0
        %1925 = vmatprep.subr.mxu0 0.0
        %1926 = vmatpush1.xpose.msra.mxu0 0.0
        %1927 = vmatprep.subr.mxu0 0.0
        %1928 = vmatpush1.xpose.msra.mxu0 0.0
        %v1929 = vand.u32 %v1748, 4294901760
        %1930 = vmatprep.mubr.f32.mxu0 %v1929
        %v1931 = vand.u32 %v1744, 4294901760
        %1932 = vmatmul.mubr.f32.gmra.mrb[0].mxu0 %v1931
        %v1933 = vpop.f32.mrb[0].mxu0
        %v1934 = vadd.f32 %v1842, %v1933
        %v1935 = vpop.f32.mrb[0].mxu0
        %1936 = vdwg.mxu0
        %v1937 = vand.u32 %v1724, 4294901760
        %v1938 = vsub.f32 %v1724, %v1937
        %1939 = vmatprep.subr.mxu0 %v1938
        %v1940 = vand.u32 %v1723, 4294901760
        %v1941 = vsub.f32 %v1723, %v1940
        %1942 = vmatpush1.xpose.msra.mxu0 %v1941
        %v1943 = vand.u32 %v1728, 4294901760
        %v1944 = vsub.f32 %v1728, %v1943
        %1945 = vmatprep.subr.mxu0 %v1944
        %v1946 = vand.u32 %v1727, 4294901760
        %v1947 = vsub.f32 %v1727, %v1946
        %1948 = vmatpush1.xpose.msra.mxu0 %v1947
        %1949 = vmatprep.subr.mxu0 0.0
        %1950 = vmatpush1.xpose.msra.mxu0 0.0
        %1951 = vmatprep.subr.mxu0 0.0
        %1952 = vmatpush1.xpose.msra.mxu0 0.0
        %1953 = vmatprep.subr.mxu0 0.0
        %1954 = vmatpush1.xpose.msra.mxu0 0.0
        %1955 = vmatprep.subr.mxu0 0.0
        %1956 = vmatpush1.xpose.msra.mxu0 0.0
        %1957 = vmatprep.subr.mxu0 0.0
        %1958 = vmatpush1.xpose.msra.mxu0 0.0
        %1959 = vmatprep.subr.mxu0 0.0
        %1960 = vmatpush1.xpose.msra.mxu0 0.0
        %1961 = vmatprep.subr.mxu0 0.0
        %1962 = vmatpush1.xpose.msra.mxu0 0.0
        %1963 = vmatprep.subr.mxu0 0.0
        %1964 = vmatpush1.xpose.msra.mxu0 0.0
        %1965 = vmatprep.subr.mxu0 0.0
        %1966 = vmatpush1.xpose.msra.mxu0 0.0
        %1967 = vmatprep.subr.mxu0 0.0
        %1968 = vmatpush1.xpose.msra.mxu0 0.0
        %1969 = vmatprep.subr.mxu0 0.0
        %1970 = vmatpush1.xpose.msra.mxu0 0.0
        %1971 = vmatprep.subr.mxu0 0.0
        %1972 = vmatpush1.xpose.msra.mxu0 0.0
        %1973 = vmatprep.subr.mxu0 0.0
        %1974 = vmatpush1.xpose.msra.mxu0 0.0
        %1975 = vmatprep.subr.mxu0 0.0
        %1976 = vmatpush1.xpose.msra.mxu0 0.0
        %1977 = vmatprep.subr.mxu0 0.0
        %1978 = vmatpush1.xpose.msra.mxu0 0.0
        %1979 = vmatprep.subr.mxu0 0.0
        %1980 = vmatpush1.xpose.msra.mxu0 0.0
        %1981 = vmatprep.subr.mxu0 0.0
        %1982 = vmatpush1.xpose.msra.mxu0 0.0
        %1983 = vmatprep.subr.mxu0 0.0
        %1984 = vmatpush1.xpose.msra.mxu0 0.0
        %1985 = vmatprep.subr.mxu0 0.0
        %1986 = vmatpush1.xpose.msra.mxu0 0.0
        %1987 = vmatprep.subr.mxu0 0.0
        %1988 = vmatpush1.xpose.msra.mxu0 0.0
        %1989 = vmatprep.subr.mxu0 0.0
        %1990 = vmatpush1.xpose.msra.mxu0 0.0
        %1991 = vmatprep.subr.mxu0 0.0
        %1992 = vmatpush1.xpose.msra.mxu0 0.0
        %1993 = vmatprep.subr.mxu0 0.0
        %1994 = vmatpush1.xpose.msra.mxu0 0.0
        %1995 = vmatprep.subr.mxu0 0.0
        %1996 = vmatpush1.xpose.msra.mxu0 0.0
        %1997 = vmatprep.subr.mxu0 0.0
        %1998 = vmatpush1.xpose.msra.mxu0 0.0
        %1999 = vmatprep.subr.mxu0 0.0
        %2000 = vmatpush1.xpose.msra.mxu0 0.0
        %2001 = vmatprep.subr.mxu0 0.0
        %2002 = vmatpush1.xpose.msra.mxu0 0.0
        %2003 = vmatprep.subr.mxu0 0.0
        %2004 = vmatpush1.xpose.msra.mxu0 0.0
        %2005 = vmatprep.subr.mxu0 0.0
        %2006 = vmatpush1.xpose.msra.mxu0 0.0
        %2007 = vmatprep.subr.mxu0 0.0
        %2008 = vmatpush1.xpose.msra.mxu0 0.0
        %v2009 = vand.u32 %v1748, 4294901760
        %v2010 = vsub.f32 %v1748, %v2009
        %2011 = vmatprep.mubr.f32.mxu0 %v2010
        %v2012 = vand.u32 %v1744, 4294901760
        %v2013 = vsub.f32 %v1744, %v2012
        %2014 = vmatmul.mubr.f32.gmra.mrb[0].mxu0 %v2013
        %v2015 = vpop.f32.mrb[0].mxu0
        %v2016 = vadd.f32 %v1934, %v2015
        %v2017 = vpop.f32.mrb[0].mxu0
        %2018 = vdwg.mxu0
        %v2019 = vand.u32 %v1724, 4294901760
        %2020 = vmatprep.subr.mxu0 %v2019
        %v2021 = vand.u32 %v1723, 4294901760
        %2022 = vmatpush1.xpose.msra.mxu0 %v2021
        %v2023 = vand.u32 %v1728, 4294901760
        %2024 = vmatprep.subr.mxu0 %v2023
        %v2025 = vand.u32 %v1727, 4294901760
        %2026 = vmatpush1.xpose.msra.mxu0 %v2025
        %2027 = vmatprep.subr.mxu0 0.0
        %2028 = vmatpush1.xpose.msra.mxu0 0.0
        %2029 = vmatprep.subr.mxu0 0.0
        %2030 = vmatpush1.xpose.msra.mxu0 0.0
        %2031 = vmatprep.subr.mxu0 0.0
        %2032 = vmatpush1.xpose.msra.mxu0 0.0
        %2033 = vmatprep.subr.mxu0 0.0
        %2034 = vmatpush1.xpose.msra.mxu0 0.0
        %2035 = vmatprep.subr.mxu0 0.0
        %2036 = vmatpush1.xpose.msra.mxu0 0.0
        %2037 = vmatprep.subr.mxu0 0.0
        %2038 = vmatpush1.xpose.msra.mxu0 0.0
        %2039 = vmatprep.subr.mxu0 0.0
        %2040 = vmatpush1.xpose.msra.mxu0 0.0
        %2041 = vmatprep.subr.mxu0 0.0
        %2042 = vmatpush1.xpose.msra.mxu0 0.0
        %2043 = vmatprep.subr.mxu0 0.0
        %2044 = vmatpush1.xpose.msra.mxu0 0.0
        %2045 = vmatprep.subr.mxu0 0.0
        %2046 = vmatpush1.xpose.msra.mxu0 0.0
        %2047 = vmatprep.subr.mxu0 0.0
        %2048 = vmatpush1.xpose.msra.mxu0 0.0
        %2049 = vmatprep.subr.mxu0 0.0
        %2050 = vmatpush1.xpose.msra.mxu0 0.0
        %2051 = vmatprep.subr.mxu0 0.0
        %2052 = vmatpush1.xpose.msra.mxu0 0.0
        %2053 = vmatprep.subr.mxu0 0.0
        %2054 = vmatpush1.xpose.msra.mxu0 0.0
        %2055 = vmatprep.subr.mxu0 0.0
        %2056 = vmatpush1.xpose.msra.mxu0 0.0
        %2057 = vmatprep.subr.mxu0 0.0
        %2058 = vmatpush1.xpose.msra.mxu0 0.0
        %2059 = vmatprep.subr.mxu0 0.0
        %2060 = vmatpush1.xpose.msra.mxu0 0.0
        %2061 = vmatprep.subr.mxu0 0.0
        %2062 = vmatpush1.xpose.msra.mxu0 0.0
        %2063 = vmatprep.subr.mxu0 0.0
        %2064 = vmatpush1.xpose.msra.mxu0 0.0
        %2065 = vmatprep.subr.mxu0 0.0
        %2066 = vmatpush1.xpose.msra.mxu0 0.0
        %2067 = vmatprep.subr.mxu0 0.0
        %2068 = vmatpush1.xpose.msra.mxu0 0.0
        %2069 = vmatprep.subr.mxu0 0.0
        %2070 = vmatpush1.xpose.msra.mxu0 0.0
        %2071 = vmatprep.subr.mxu0 0.0
        %2072 = vmatpush1.xpose.msra.mxu0 0.0
        %2073 = vmatprep.subr.mxu0 0.0
        %2074 = vmatpush1.xpose.msra.mxu0 0.0
        %2075 = vmatprep.subr.mxu0 0.0
        %2076 = vmatpush1.xpose.msra.mxu0 0.0
        %2077 = vmatprep.subr.mxu0 0.0
        %2078 = vmatpush1.xpose.msra.mxu0 0.0
        %2079 = vmatprep.subr.mxu0 0.0
        %2080 = vmatpush1.xpose.msra.mxu0 0.0
        %2081 = vmatprep.subr.mxu0 0.0
        %2082 = vmatpush1.xpose.msra.mxu0 0.0
        %2083 = vmatprep.subr.mxu0 0.0
        %2084 = vmatpush1.xpose.msra.mxu0 0.0
        %2085 = vmatprep.subr.mxu0 0.0
        %2086 = vmatpush1.xpose.msra.mxu0 0.0
        %v2087 = vand.u32 %v1748, 4294901760
        %v2088 = vsub.f32 %v1748, %v2087
        %v2089 = vand.u32 %v2088, 4294901760
        %2090 = vmatprep.mubr.f32.mxu0 %v2089
        %v2091 = vand.u32 %v1744, 4294901760
        %v2092 = vsub.f32 %v1744, %v2091
        %v2093 = vand.u32 %v2092, 4294901760
        %2094 = vmatmul.mubr.f32.gmra.mrb[0].mxu0 %v2093
        %v2095 = vpop.f32.mrb[0].mxu0
        %v2096 = vadd.f32 %v2016, %v2095
        %v2097 = vpop.f32.mrb[0].mxu0
        %2098 = vdwg.mxu0
        %v2099 = vand.u32 %v1724, 4294901760
        %v2100 = vsub.f32 %v1724, %v2099
        %v2101 = vand.u32 %v2100, 4294901760
        %2102 = vmatprep.subr.mxu0 %v2101
        %v2103 = vand.u32 %v1723, 4294901760
        %v2104 = vsub.f32 %v1723, %v2103
        %v2105 = vand.u32 %v2104, 4294901760
        %2106 = vmatpush1.xpose.msra.mxu0 %v2105
        %v2107 = vand.u32 %v1728, 4294901760
        %v2108 = vsub.f32 %v1728, %v2107
        %v2109 = vand.u32 %v2108, 4294901760
        %2110 = vmatprep.subr.mxu0 %v2109
        %v2111 = vand.u32 %v1727, 4294901760
        %v2112 = vsub.f32 %v1727, %v2111
        %v2113 = vand.u32 %v2112, 4294901760
        %2114 = vmatpush1.xpose.msra.mxu0 %v2113
        %2115 = vmatprep.subr.mxu0 0.0
        %2116 = vmatpush1.xpose.msra.mxu0 0.0
        %2117 = vmatprep.subr.mxu0 0.0
        %2118 = vmatpush1.xpose.msra.mxu0 0.0
        %2119 = vmatprep.subr.mxu0 0.0
        %2120 = vmatpush1.xpose.msra.mxu0 0.0
        %2121 = vmatprep.subr.mxu0 0.0
        %2122 = vmatpush1.xpose.msra.mxu0 0.0
        %2123 = vmatprep.subr.mxu0 0.0
        %2124 = vmatpush1.xpose.msra.mxu0 0.0
        %2125 = vmatprep.subr.mxu0 0.0
        %2126 = vmatpush1.xpose.msra.mxu0 0.0
        %2127 = vmatprep.subr.mxu0 0.0
        %2128 = vmatpush1.xpose.msra.mxu0 0.0
        %2129 = vmatprep.subr.mxu0 0.0
        %2130 = vmatpush1.xpose.msra.mxu0 0.0
        %2131 = vmatprep.subr.mxu0 0.0
        %2132 = vmatpush1.xpose.msra.mxu0 0.0
        %2133 = vmatprep.subr.mxu0 0.0
        %2134 = vmatpush1.xpose.msra.mxu0 0.0
        %2135 = vmatprep.subr.mxu0 0.0
        %2136 = vmatpush1.xpose.msra.mxu0 0.0
        %2137 = vmatprep.subr.mxu0 0.0
        %2138 = vmatpush1.xpose.msra.mxu0 0.0
        %2139 = vmatprep.subr.mxu0 0.0
        %2140 = vmatpush1.xpose.msra.mxu0 0.0
        %2141 = vmatprep.subr.mxu0 0.0
        %2142 = vmatpush1.xpose.msra.mxu0 0.0
        %2143 = vmatprep.subr.mxu0 0.0
        %2144 = vmatpush1.xpose.msra.mxu0 0.0
        %2145 = vmatprep.subr.mxu0 0.0
        %2146 = vmatpush1.xpose.msra.mxu0 0.0
        %2147 = vmatprep.subr.mxu0 0.0
        %2148 = vmatpush1.xpose.msra.mxu0 0.0
        %2149 = vmatprep.subr.mxu0 0.0
        %2150 = vmatpush1.xpose.msra.mxu0 0.0
        %2151 = vmatprep.subr.mxu0 0.0
        %2152 = vmatpush1.xpose.msra.mxu0 0.0
        %2153 = vmatprep.subr.mxu0 0.0
        %2154 = vmatpush1.xpose.msra.mxu0 0.0
        %2155 = vmatprep.subr.mxu0 0.0
        %2156 = vmatpush1.xpose.msra.mxu0 0.0
        %2157 = vmatprep.subr.mxu0 0.0
        %2158 = vmatpush1.xpose.msra.mxu0 0.0
        %2159 = vmatprep.subr.mxu0 0.0
        %2160 = vmatpush1.xpose.msra.mxu0 0.0
        %2161 = vmatprep.subr.mxu0 0.0
        %2162 = vmatpush1.xpose.msra.mxu0 0.0
        %2163 = vmatprep.subr.mxu0 0.0
        %2164 = vmatpush1.xpose.msra.mxu0 0.0
        %2165 = vmatprep.subr.mxu0 0.0
        %2166 = vmatpush1.xpose.msra.mxu0 0.0
        %2167 = vmatprep.subr.mxu0 0.0
        %2168 = vmatpush1.xpose.msra.mxu0 0.0
        %2169 = vmatprep.subr.mxu0 0.0
        %2170 = vmatpush1.xpose.msra.mxu0 0.0
        %2171 = vmatprep.subr.mxu0 0.0
        %2172 = vmatpush1.xpose.msra.mxu0 0.0
        %2173 = vmatprep.subr.mxu0 0.0
        %2174 = vmatpush1.xpose.msra.mxu0 0.0
        %v2175 = vand.u32 %v1748, 4294901760
        %2176 = vmatprep.mubr.f32.mxu0 %v2175
        %v2177 = vand.u32 %v1744, 4294901760
        %2178 = vmatmul.mubr.f32.gmra.mrb[0].mxu0 %v2177
        %v2179 = vpop.f32.mrb[0].mxu0
        %v2180 = vadd.f32 %v2096, %v2179
        %v2181 = vpop.f32.mrb[0].mxu0
        %2182 = vdwg.mxu0
        %v2183 = vand.u32 %v1724, 4294901760
        %2184 = vmatprep.subr.mxu0 %v2183
        %v2185 = vand.u32 %v1723, 4294901760
        %2186 = vmatpush1.xpose.msra.mxu0 %v2185
        %v2187 = vand.u32 %v1728, 4294901760
        %2188 = vmatprep.subr.mxu0 %v2187
        %v2189 = vand.u32 %v1727, 4294901760
        %2190 = vmatpush1.xpose.msra.mxu0 %v2189
        %2191 = vmatprep.subr.mxu0 0.0
        %2192 = vmatpush1.xpose.msra.mxu0 0.0
        %2193 = vmatprep.subr.mxu0 0.0
        %2194 = vmatpush1.xpose.msra.mxu0 0.0
        %2195 = vmatprep.subr.mxu0 0.0
        %2196 = vmatpush1.xpose.msra.mxu0 0.0
        %2197 = vmatprep.subr.mxu0 0.0
        %2198 = vmatpush1.xpose.msra.mxu0 0.0
        %2199 = vmatprep.subr.mxu0 0.0
        %2200 = vmatpush1.xpose.msra.mxu0 0.0
        %2201 = vmatprep.subr.mxu0 0.0
        %2202 = vmatpush1.xpose.msra.mxu0 0.0
        %2203 = vmatprep.subr.mxu0 0.0
        %2204 = vmatpush1.xpose.msra.mxu0 0.0
        %2205 = vmatprep.subr.mxu0 0.0
        %2206 = vmatpush1.xpose.msra.mxu0 0.0
        %2207 = vmatprep.subr.mxu0 0.0
        %2208 = vmatpush1.xpose.msra.mxu0 0.0
        %2209 = vmatprep.subr.mxu0 0.0
        %2210 = vmatpush1.xpose.msra.mxu0 0.0
        %2211 = vmatprep.subr.mxu0 0.0
        %2212 = vmatpush1.xpose.msra.mxu0 0.0
        %2213 = vmatprep.subr.mxu0 0.0
        %2214 = vmatpush1.xpose.msra.mxu0 0.0
        %2215 = vmatprep.subr.mxu0 0.0
        %2216 = vmatpush1.xpose.msra.mxu0 0.0
        %2217 = vmatprep.subr.mxu0 0.0
        %2218 = vmatpush1.xpose.msra.mxu0 0.0
        %2219 = vmatprep.subr.mxu0 0.0
        %2220 = vmatpush1.xpose.msra.mxu0 0.0
        %2221 = vmatprep.subr.mxu0 0.0
        %2222 = vmatpush1.xpose.msra.mxu0 0.0
        %2223 = vmatprep.subr.mxu0 0.0
        %2224 = vmatpush1.xpose.msra.mxu0 0.0
        %2225 = vmatprep.subr.mxu0 0.0
        %2226 = vmatpush1.xpose.msra.mxu0 0.0
        %2227 = vmatprep.subr.mxu0 0.0
        %2228 = vmatpush1.xpose.msra.mxu0 0.0
        %2229 = vmatprep.subr.mxu0 0.0
        %2230 = vmatpush1.xpose.msra.mxu0 0.0
        %2231 = vmatprep.subr.mxu0 0.0
        %2232 = vmatpush1.xpose.msra.mxu0 0.0
        %2233 = vmatprep.subr.mxu0 0.0
        %2234 = vmatpush1.xpose.msra.mxu0 0.0
        %2235 = vmatprep.subr.mxu0 0.0
        %2236 = vmatpush1.xpose.msra.mxu0 0.0
        %2237 = vmatprep.subr.mxu0 0.0
        %2238 = vmatpush1.xpose.msra.mxu0 0.0
        %2239 = vmatprep.subr.mxu0 0.0
        %2240 = vmatpush1.xpose.msra.mxu0 0.0
        %2241 = vmatprep.subr.mxu0 0.0
        %2242 = vmatpush1.xpose.msra.mxu0 0.0
        %2243 = vmatprep.subr.mxu0 0.0
        %2244 = vmatpush1.xpose.msra.mxu0 0.0
        %2245 = vmatprep.subr.mxu0 0.0
        %2246 = vmatpush1.xpose.msra.mxu0 0.0
        %2247 = vmatprep.subr.mxu0 0.0
        %2248 = vmatpush1.xpose.msra.mxu0 0.0
        %2249 = vmatprep.subr.mxu0 0.0
        %2250 = vmatpush1.xpose.msra.mxu0 0.0
        %v2251 = vand.u32 %v1748, 4294901760
        %2252 = vmatprep.mubr.f32.mxu0 %v2251
        %v2253 = vand.u32 %v1744, 4294901760
        %2254 = vmatmul.mubr.f32.gmra.mrb[0].mxu0 %v2253
        %v2255 = vpop.f32.mrb[0].mxu0
        %v2256 = vadd.f32 %v2180, %v2255
        %v2257 = vpop.f32.mrb[0].mxu0
        %2258 = vdwg.mxu0
        %v2259 = vand.u32 %v1726, 4294901760
        %2260 = vmatprep.subr.mxu0 %v2259
        %v2261 = vand.u32 %v1725, 4294901760
        %2262 = vmatpush1.xpose.msra.mxu0 %v2261
        %v2263 = vand.u32 %v1730, 4294901760
        %2264 = vmatprep.subr.mxu0 %v2263
        %v2265 = vand.u32 %v1729, 4294901760
        %2266 = vmatpush1.xpose.msra.mxu0 %v2265
        %2267 = vmatprep.subr.mxu0 0.0
        %2268 = vmatpush1.xpose.msra.mxu0 0.0
        %2269 = vmatprep.subr.mxu0 0.0
        %2270 = vmatpush1.xpose.msra.mxu0 0.0
        %2271 = vmatprep.subr.mxu0 0.0
        %2272 = vmatpush1.xpose.msra.mxu0 0.0
        %2273 = vmatprep.subr.mxu0 0.0
        %2274 = vmatpush1.xpose.msra.mxu0 0.0
        %2275 = vmatprep.subr.mxu0 0.0
        %2276 = vmatpush1.xpose.msra.mxu0 0.0
        %2277 = vmatprep.subr.mxu0 0.0
        %2278 = vmatpush1.xpose.msra.mxu0 0.0
        %2279 = vmatprep.subr.mxu0 0.0
        %2280 = vmatpush1.xpose.msra.mxu0 0.0
        %2281 = vmatprep.subr.mxu0 0.0
        %2282 = vmatpush1.xpose.msra.mxu0 0.0
        %2283 = vmatprep.subr.mxu0 0.0
        %2284 = vmatpush1.xpose.msra.mxu0 0.0
        %2285 = vmatprep.subr.mxu0 0.0
        %2286 = vmatpush1.xpose.msra.mxu0 0.0
        %2287 = vmatprep.subr.mxu0 0.0
        %2288 = vmatpush1.xpose.msra.mxu0 0.0
        %2289 = vmatprep.subr.mxu0 0.0
        %2290 = vmatpush1.xpose.msra.mxu0 0.0
        %2291 = vmatprep.subr.mxu0 0.0
        %2292 = vmatpush1.xpose.msra.mxu0 0.0
        %2293 = vmatprep.subr.mxu0 0.0
        %2294 = vmatpush1.xpose.msra.mxu0 0.0
        %2295 = vmatprep.subr.mxu0 0.0
        %2296 = vmatpush1.xpose.msra.mxu0 0.0
        %2297 = vmatprep.subr.mxu0 0.0
        %2298 = vmatpush1.xpose.msra.mxu0 0.0
        %2299 = vmatprep.subr.mxu0 0.0
        %2300 = vmatpush1.xpose.msra.mxu0 0.0
        %2301 = vmatprep.subr.mxu0 0.0
        %2302 = vmatpush1.xpose.msra.mxu0 0.0
        %2303 = vmatprep.subr.mxu0 0.0
        %2304 = vmatpush1.xpose.msra.mxu0 0.0
        %2305 = vmatprep.subr.mxu0 0.0
        %2306 = vmatpush1.xpose.msra.mxu0 0.0
        %2307 = vmatprep.subr.mxu0 0.0
        %2308 = vmatpush1.xpose.msra.mxu0 0.0
        %2309 = vmatprep.subr.mxu0 0.0
        %2310 = vmatpush1.xpose.msra.mxu0 0.0
        %2311 = vmatprep.subr.mxu0 0.0
        %2312 = vmatpush1.xpose.msra.mxu0 0.0
        %2313 = vmatprep.subr.mxu0 0.0
        %2314 = vmatpush1.xpose.msra.mxu0 0.0
        %2315 = vmatprep.subr.mxu0 0.0
        %2316 = vmatpush1.xpose.msra.mxu0 0.0
        %2317 = vmatprep.subr.mxu0 0.0
        %2318 = vmatpush1.xpose.msra.mxu0 0.0
        %2319 = vmatprep.subr.mxu0 0.0
        %2320 = vmatpush1.xpose.msra.mxu0 0.0
        %2321 = vmatprep.subr.mxu0 0.0
        %2322 = vmatpush1.xpose.msra.mxu0 0.0
        %2323 = vmatprep.subr.mxu0 0.0
        %2324 = vmatpush1.xpose.msra.mxu0 0.0
        %2325 = vmatprep.subr.mxu0 0.0
        %2326 = vmatpush1.xpose.msra.mxu0 0.0
        %v2327 = vand.u32 %v1756, 4294901760
        %v2328 = vsub.f32 %v1756, %v2327
        %v2329 = vand.u32 %v2328, 4294901760
        %v2330 = vsub.f32 %v2328, %v2329
        %v2331 = vand.u32 %v2330, 4294901760
        %2332 = vmatprep.mubr.f32.mxu0 %v2331
        %v2333 = vand.u32 %v1752, 4294901760
        %v2334 = vsub.f32 %v1752, %v2333
        %v2335 = vand.u32 %v2334, 4294901760
        %v2336 = vsub.f32 %v2334, %v2335
        %v2337 = vand.u32 %v2336, 4294901760
        %2338 = vmatmul.mubr.f32.gmra.mrb[0].mxu0 %v2337
        %v2339 = vpop.f32.mrb[0].mxu0
        %v2340 = vadd.f32 %v2256, %v2339
        %v2341 = vpop.f32.mrb[0].mxu0
        %2342 = vdwg.mxu0
        %v2343 = vand.u32 %v1726, 4294901760
        %v2344 = vsub.f32 %v1726, %v2343
        %v2345 = vand.u32 %v2344, 4294901760
        %v2346 = vsub.f32 %v2344, %v2345
        %v2347 = vand.u32 %v2346, 4294901760
        %2348 = vmatprep.subr.mxu0 %v2347
        %v2349 = vand.u32 %v1725, 4294901760
        %v2350 = vsub.f32 %v1725, %v2349
        %v2351 = vand.u32 %v2350, 4294901760
        %v2352 = vsub.f32 %v2350, %v2351
        %v2353 = vand.u32 %v2352, 4294901760
        %2354 = vmatpush1.xpose.msra.mxu0 %v2353
        %v2355 = vand.u32 %v1730, 4294901760
        %v2356 = vsub.f32 %v1730, %v2355
        %v2357 = vand.u32 %v2356, 4294901760
        %v2358 = vsub.f32 %v2356, %v2357
        %v2359 = vand.u32 %v2358, 4294901760
        %2360 = vmatprep.subr.mxu0 %v2359
        %v2361 = vand.u32 %v1729, 4294901760
        %v2362 = vsub.f32 %v1729, %v2361
        %v2363 = vand.u32 %v2362, 4294901760
        %v2364 = vsub.f32 %v2362, %v2363
        %v2365 = vand.u32 %v2364, 4294901760
        %2366 = vmatpush1.xpose.msra.mxu0 %v2365
        %2367 = vmatprep.subr.mxu0 0.0
        %2368 = vmatpush1.xpose.msra.mxu0 0.0
        %2369 = vmatprep.subr.mxu0 0.0
        %2370 = vmatpush1.xpose.msra.mxu0 0.0
        %2371 = vmatprep.subr.mxu0 0.0
        %2372 = vmatpush1.xpose.msra.mxu0 0.0
        %2373 = vmatprep.subr.mxu0 0.0
        %2374 = vmatpush1.xpose.msra.mxu0 0.0
        %2375 = vmatprep.subr.mxu0 0.0
        %2376 = vmatpush1.xpose.msra.mxu0 0.0
        %2377 = vmatprep.subr.mxu0 0.0
        %2378 = vmatpush1.xpose.msra.mxu0 0.0
        %2379 = vmatprep.subr.mxu0 0.0
        %2380 = vmatpush1.xpose.msra.mxu0 0.0
        %2381 = vmatprep.subr.mxu0 0.0
        %2382 = vmatpush1.xpose.msra.mxu0 0.0
        %2383 = vmatprep.subr.mxu0 0.0
        %2384 = vmatpush1.xpose.msra.mxu0 0.0
        %2385 = vmatprep.subr.mxu0 0.0
        %2386 = vmatpush1.xpose.msra.mxu0 0.0
        %2387 = vmatprep.subr.mxu0 0.0
        %2388 = vmatpush1.xpose.msra.mxu0 0.0
        %2389 = vmatprep.subr.mxu0 0.0
        %2390 = vmatpush1.xpose.msra.mxu0 0.0
        %2391 = vmatprep.subr.mxu0 0.0
        %2392 = vmatpush1.xpose.msra.mxu0 0.0
        %2393 = vmatprep.subr.mxu0 0.0
        %2394 = vmatpush1.xpose.msra.mxu0 0.0
        %2395 = vmatprep.subr.mxu0 0.0
        %2396 = vmatpush1.xpose.msra.mxu0 0.0
        %2397 = vmatprep.subr.mxu0 0.0
        %2398 = vmatpush1.xpose.msra.mxu0 0.0
        %2399 = vmatprep.subr.mxu0 0.0
        %2400 = vmatpush1.xpose.msra.mxu0 0.0
        %2401 = vmatprep.subr.mxu0 0.0
        %2402 = vmatpush1.xpose.msra.mxu0 0.0
        %2403 = vmatprep.subr.mxu0 0.0
        %2404 = vmatpush1.xpose.msra.mxu0 0.0
        %2405 = vmatprep.subr.mxu0 0.0
        %2406 = vmatpush1.xpose.msra.mxu0 0.0
        %2407 = vmatprep.subr.mxu0 0.0
        %2408 = vmatpush1.xpose.msra.mxu0 0.0
        %2409 = vmatprep.subr.mxu0 0.0
        %2410 = vmatpush1.xpose.msra.mxu0 0.0
        %2411 = vmatprep.subr.mxu0 0.0
        %2412 = vmatpush1.xpose.msra.mxu0 0.0
        %2413 = vmatprep.subr.mxu0 0.0
        %2414 = vmatpush1.xpose.msra.mxu0 0.0
        %2415 = vmatprep.subr.mxu0 0.0
        %2416 = vmatpush1.xpose.msra.mxu0 0.0
        %2417 = vmatprep.subr.mxu0 0.0
        %2418 = vmatpush1.xpose.msra.mxu0 0.0
        %2419 = vmatprep.subr.mxu0 0.0
        %2420 = vmatpush1.xpose.msra.mxu0 0.0
        %2421 = vmatprep.subr.mxu0 0.0
        %2422 = vmatpush1.xpose.msra.mxu0 0.0
        %2423 = vmatprep.subr.mxu0 0.0
        %2424 = vmatpush1.xpose.msra.mxu0 0.0
        %2425 = vmatprep.subr.mxu0 0.0
        %2426 = vmatpush1.xpose.msra.mxu0 0.0
        %v2427 = vand.u32 %v1756, 4294901760
        %2428 = vmatprep.mubr.f32.mxu0 %v2427
        %v2429 = vand.u32 %v1752, 4294901760
        %2430 = vmatmul.mubr.f32.gmra.mrb[0].mxu0 %v2429
        %v2431 = vpop.f32.mrb[0].mxu0
        %v2432 = vadd.f32 %v2340, %v2431
        %v2433 = vpop.f32.mrb[0].mxu0
        %2434 = vdwg.mxu0
        %v2435 = vand.u32 %v1726, 4294901760
        %v2436 = vsub.f32 %v1726, %v2435
        %2437 = vmatprep.subr.mxu0 %v2436
        %v2438 = vand.u32 %v1725, 4294901760
        %v2439 = vsub.f32 %v1725, %v2438
        %2440 = vmatpush1.xpose.msra.mxu0 %v2439
        %v2441 = vand.u32 %v1730, 4294901760
        %v2442 = vsub.f32 %v1730, %v2441
        %2443 = vmatprep.subr.mxu0 %v2442
        %v2444 = vand.u32 %v1729, 4294901760
        %v2445 = vsub.f32 %v1729, %v2444
        %2446 = vmatpush1.xpose.msra.mxu0 %v2445
        %2447 = vmatprep.subr.mxu0 0.0
        %2448 = vmatpush1.xpose.msra.mxu0 0.0
        %2449 = vmatprep.subr.mxu0 0.0
        %2450 = vmatpush1.xpose.msra.mxu0 0.0
        %2451 = vmatprep.subr.mxu0 0.0
        %2452 = vmatpush1.xpose.msra.mxu0 0.0
        %2453 = vmatprep.subr.mxu0 0.0
        %2454 = vmatpush1.xpose.msra.mxu0 0.0
        %2455 = vmatprep.subr.mxu0 0.0
        %2456 = vmatpush1.xpose.msra.mxu0 0.0
        %2457 = vmatprep.subr.mxu0 0.0
        %2458 = vmatpush1.xpose.msra.mxu0 0.0
        %2459 = vmatprep.subr.mxu0 0.0
        %2460 = vmatpush1.xpose.msra.mxu0 0.0
        %2461 = vmatprep.subr.mxu0 0.0
        %2462 = vmatpush1.xpose.msra.mxu0 0.0
        %2463 = vmatprep.subr.mxu0 0.0
        %2464 = vmatpush1.xpose.msra.mxu0 0.0
        %2465 = vmatprep.subr.mxu0 0.0
        %2466 = vmatpush1.xpose.msra.mxu0 0.0
        %2467 = vmatprep.subr.mxu0 0.0
        %2468 = vmatpush1.xpose.msra.mxu0 0.0
        %2469 = vmatprep.subr.mxu0 0.0
        %2470 = vmatpush1.xpose.msra.mxu0 0.0
        %2471 = vmatprep.subr.mxu0 0.0
        %2472 = vmatpush1.xpose.msra.mxu0 0.0
        %2473 = vmatprep.subr.mxu0 0.0
        %2474 = vmatpush1.xpose.msra.mxu0 0.0
        %2475 = vmatprep.subr.mxu0 0.0
        %2476 = vmatpush1.xpose.msra.mxu0 0.0
        %2477 = vmatprep.subr.mxu0 0.0
        %2478 = vmatpush1.xpose.msra.mxu0 0.0
        %2479 = vmatprep.subr.mxu0 0.0
        %2480 = vmatpush1.xpose.msra.mxu0 0.0
        %2481 = vmatprep.subr.mxu0 0.0
        %2482 = vmatpush1.xpose.msra.mxu0 0.0
        %2483 = vmatprep.subr.mxu0 0.0
        %2484 = vmatpush1.xpose.msra.mxu0 0.0
        %2485 = vmatprep.subr.mxu0 0.0
        %2486 = vmatpush1.xpose.msra.mxu0 0.0
        %2487 = vmatprep.subr.mxu0 0.0
        %2488 = vmatpush1.xpose.msra.mxu0 0.0
        %2489 = vmatprep.subr.mxu0 0.0
        %2490 = vmatpush1.xpose.msra.mxu0 0.0
        %2491 = vmatprep.subr.mxu0 0.0
        %2492 = vmatpush1.xpose.msra.mxu0 0.0
        %2493 = vmatprep.subr.mxu0 0.0
        %2494 = vmatpush1.xpose.msra.mxu0 0.0
        %2495 = vmatprep.subr.mxu0 0.0
        %2496 = vmatpush1.xpose.msra.mxu0 0.0
        %2497 = vmatprep.subr.mxu0 0.0
        %2498 = vmatpush1.xpose.msra.mxu0 0.0
        %2499 = vmatprep.subr.mxu0 0.0
        %2500 = vmatpush1.xpose.msra.mxu0 0.0
        %2501 = vmatprep.subr.mxu0 0.0
        %2502 = vmatpush1.xpose.msra.mxu0 0.0
        %2503 = vmatprep.subr.mxu0 0.0
        %2504 = vmatpush1.xpose.msra.mxu0 0.0
        %2505 = vmatprep.subr.mxu0 0.0
        %2506 = vmatpush1.xpose.msra.mxu0 0.0
        %v2507 = vand.u32 %v1756, 4294901760
        %v2508 = vsub.f32 %v1756, %v2507
        %2509 = vmatprep.mubr.f32.mxu0 %v2508
        %v2510 = vand.u32 %v1752, 4294901760
        %v2511 = vsub.f32 %v1752, %v2510
        %2512 = vmatmul.mubr.f32.gmra.mrb[0].mxu0 %v2511
        %v2513 = vpop.f32.mrb[0].mxu0
        %v2514 = vadd.f32 %v2432, %v2513
        %v2515 = vpop.f32.mrb[0].mxu0
        %2516 = vdwg.mxu0
        %v2517 = vand.u32 %v1726, 4294901760
        %2518 = vmatprep.subr.mxu0 %v2517
        %v2519 = vand.u32 %v1725, 4294901760
        %2520 = vmatpush1.xpose.msra.mxu0 %v2519
        %v2521 = vand.u32 %v1730, 4294901760
        %2522 = vmatprep.subr.mxu0 %v2521
        %v2523 = vand.u32 %v1729, 4294901760
        %2524 = vmatpush1.xpose.msra.mxu0 %v2523
        %2525 = vmatprep.subr.mxu0 0.0
        %2526 = vmatpush1.xpose.msra.mxu0 0.0
        %2527 = vmatprep.subr.mxu0 0.0
        %2528 = vmatpush1.xpose.msra.mxu0 0.0
        %2529 = vmatprep.subr.mxu0 0.0
        %2530 = vmatpush1.xpose.msra.mxu0 0.0
        %2531 = vmatprep.subr.mxu0 0.0
        %2532 = vmatpush1.xpose.msra.mxu0 0.0
        %2533 = vmatprep.subr.mxu0 0.0
        %2534 = vmatpush1.xpose.msra.mxu0 0.0
        %2535 = vmatprep.subr.mxu0 0.0
        %2536 = vmatpush1.xpose.msra.mxu0 0.0
        %2537 = vmatprep.subr.mxu0 0.0
        %2538 = vmatpush1.xpose.msra.mxu0 0.0
        %2539 = vmatprep.subr.mxu0 0.0
        %2540 = vmatpush1.xpose.msra.mxu0 0.0
        %2541 = vmatprep.subr.mxu0 0.0
        %2542 = vmatpush1.xpose.msra.mxu0 0.0
        %2543 = vmatprep.subr.mxu0 0.0
        %2544 = vmatpush1.xpose.msra.mxu0 0.0
        %2545 = vmatprep.subr.mxu0 0.0
        %2546 = vmatpush1.xpose.msra.mxu0 0.0
        %2547 = vmatprep.subr.mxu0 0.0
        %2548 = vmatpush1.xpose.msra.mxu0 0.0
        %2549 = vmatprep.subr.mxu0 0.0
        %2550 = vmatpush1.xpose.msra.mxu0 0.0
        %2551 = vmatprep.subr.mxu0 0.0
        %2552 = vmatpush1.xpose.msra.mxu0 0.0
        %2553 = vmatprep.subr.mxu0 0.0
        %2554 = vmatpush1.xpose.msra.mxu0 0.0
        %2555 = vmatprep.subr.mxu0 0.0
        %2556 = vmatpush1.xpose.msra.mxu0 0.0
        %2557 = vmatprep.subr.mxu0 0.0
        %2558 = vmatpush1.xpose.msra.mxu0 0.0
        %2559 = vmatprep.subr.mxu0 0.0
        %2560 = vmatpush1.xpose.msra.mxu0 0.0
        %2561 = vmatprep.subr.mxu0 0.0
        %2562 = vmatpush1.xpose.msra.mxu0 0.0
        %2563 = vmatprep.subr.mxu0 0.0
        %2564 = vmatpush1.xpose.msra.mxu0 0.0
        %2565 = vmatprep.subr.mxu0 0.0
        %2566 = vmatpush1.xpose.msra.mxu0 0.0
        %2567 = vmatprep.subr.mxu0 0.0
        %2568 = vmatpush1.xpose.msra.mxu0 0.0
        %2569 = vmatprep.subr.mxu0 0.0
        %2570 = vmatpush1.xpose.msra.mxu0 0.0
        %2571 = vmatprep.subr.mxu0 0.0
        %2572 = vmatpush1.xpose.msra.mxu0 0.0
        %2573 = vmatprep.subr.mxu0 0.0
        %2574 = vmatpush1.xpose.msra.mxu0 0.0
        %2575 = vmatprep.subr.mxu0 0.0
        %2576 = vmatpush1.xpose.msra.mxu0 0.0
        %2577 = vmatprep.subr.mxu0 0.0
        %2578 = vmatpush1.xpose.msra.mxu0 0.0
        %2579 = vmatprep.subr.mxu0 0.0
        %2580 = vmatpush1.xpose.msra.mxu0 0.0
        %2581 = vmatprep.subr.mxu0 0.0
        %2582 = vmatpush1.xpose.msra.mxu0 0.0
        %2583 = vmatprep.subr.mxu0 0.0
        %2584 = vmatpush1.xpose.msra.mxu0 0.0
        %v2585 = vand.u32 %v1756, 4294901760
        %v2586 = vsub.f32 %v1756, %v2585
        %v2587 = vand.u32 %v2586, 4294901760
        %2588 = vmatprep.mubr.f32.mxu0 %v2587
        %v2589 = vand.u32 %v1752, 4294901760
        %v2590 = vsub.f32 %v1752, %v2589
        %v2591 = vand.u32 %v2590, 4294901760
        %2592 = vmatmul.mubr.f32.gmra.mrb[0].mxu0 %v2591
        %v2593 = vpop.f32.mrb[0].mxu0
        %v2594 = vadd.f32 %v2514, %v2593
        %v2595 = vpop.f32.mrb[0].mxu0
        %2596 = vdwg.mxu0
        %v2597 = vand.u32 %v1726, 4294901760
        %v2598 = vsub.f32 %v1726, %v2597
        %v2599 = vand.u32 %v2598, 4294901760
        %2600 = vmatprep.subr.mxu0 %v2599
        %v2601 = vand.u32 %v1725, 4294901760
        %v2602 = vsub.f32 %v1725, %v2601
        %v2603 = vand.u32 %v2602, 4294901760
        %2604 = vmatpush1.xpose.msra.mxu0 %v2603
        %v2605 = vand.u32 %v1730, 4294901760
        %v2606 = vsub.f32 %v1730, %v2605
        %v2607 = vand.u32 %v2606, 4294901760
        %2608 = vmatprep.subr.mxu0 %v2607
        %v2609 = vand.u32 %v1729, 4294901760
        %v2610 = vsub.f32 %v1729, %v2609
        %v2611 = vand.u32 %v2610, 4294901760
        %2612 = vmatpush1.xpose.msra.mxu0 %v2611
        %2613 = vmatprep.subr.mxu0 0.0
        %2614 = vmatpush1.xpose.msra.mxu0 0.0
        %2615 = vmatprep.subr.mxu0 0.0
        %2616 = vmatpush1.xpose.msra.mxu0 0.0
        %2617 = vmatprep.subr.mxu0 0.0
        %2618 = vmatpush1.xpose.msra.mxu0 0.0
        %2619 = vmatprep.subr.mxu0 0.0
        %2620 = vmatpush1.xpose.msra.mxu0 0.0
        %2621 = vmatprep.subr.mxu0 0.0
        %2622 = vmatpush1.xpose.msra.mxu0 0.0
        %2623 = vmatprep.subr.mxu0 0.0
        %2624 = vmatpush1.xpose.msra.mxu0 0.0
        %2625 = vmatprep.subr.mxu0 0.0
        %2626 = vmatpush1.xpose.msra.mxu0 0.0
        %2627 = vmatprep.subr.mxu0 0.0
        %2628 = vmatpush1.xpose.msra.mxu0 0.0
        %2629 = vmatprep.subr.mxu0 0.0
        %2630 = vmatpush1.xpose.msra.mxu0 0.0
        %2631 = vmatprep.subr.mxu0 0.0
        %2632 = vmatpush1.xpose.msra.mxu0 0.0
        %2633 = vmatprep.subr.mxu0 0.0
        %2634 = vmatpush1.xpose.msra.mxu0 0.0
        %2635 = vmatprep.subr.mxu0 0.0
        %2636 = vmatpush1.xpose.msra.mxu0 0.0
        %2637 = vmatprep.subr.mxu0 0.0
        %2638 = vmatpush1.xpose.msra.mxu0 0.0
        %2639 = vmatprep.subr.mxu0 0.0
        %2640 = vmatpush1.xpose.msra.mxu0 0.0
        %2641 = vmatprep.subr.mxu0 0.0
        %2642 = vmatpush1.xpose.msra.mxu0 0.0
        %2643 = vmatprep.subr.mxu0 0.0
        %2644 = vmatpush1.xpose.msra.mxu0 0.0
        %2645 = vmatprep.subr.mxu0 0.0
        %2646 = vmatpush1.xpose.msra.mxu0 0.0
        %2647 = vmatprep.subr.mxu0 0.0
        %2648 = vmatpush1.xpose.msra.mxu0 0.0
        %2649 = vmatprep.subr.mxu0 0.0
        %2650 = vmatpush1.xpose.msra.mxu0 0.0
        %2651 = vmatprep.subr.mxu0 0.0
        %2652 = vmatpush1.xpose.msra.mxu0 0.0
        %2653 = vmatprep.subr.mxu0 0.0
        %2654 = vmatpush1.xpose.msra.mxu0 0.0
        %2655 = vmatprep.subr.mxu0 0.0
        %2656 = vmatpush1.xpose.msra.mxu0 0.0
        %2657 = vmatprep.subr.mxu0 0.0
        %2658 = vmatpush1.xpose.msra.mxu0 0.0
        %2659 = vmatprep.subr.mxu0 0.0
        %2660 = vmatpush1.xpose.msra.mxu0 0.0
        %2661 = vmatprep.subr.mxu0 0.0
        %2662 = vmatpush1.xpose.msra.mxu0 0.0
        %2663 = vmatprep.subr.mxu0 0.0
        %2664 = vmatpush1.xpose.msra.mxu0 0.0
        %2665 = vmatprep.subr.mxu0 0.0
        %2666 = vmatpush1.xpose.msra.mxu0 0.0
        %2667 = vmatprep.subr.mxu0 0.0
        %2668 = vmatpush1.xpose.msra.mxu0 0.0
        %2669 = vmatprep.subr.mxu0 0.0
        %2670 = vmatpush1.xpose.msra.mxu0 0.0
        %2671 = vmatprep.subr.mxu0 0.0
        %2672 = vmatpush1.xpose.msra.mxu0 0.0
        %v2673 = vand.u32 %v1756, 4294901760
        %2674 = vmatprep.mubr.f32.mxu0 %v2673
        %v2675 = vand.u32 %v1752, 4294901760
        %2676 = vmatmul.mubr.f32.gmra.mrb[0].mxu0 %v2675
        %v2677 = vpop.f32.mrb[0].mxu0
        %v2678 = vadd.f32 %v2594, %v2677
        %v2679 = vpop.f32.mrb[0].mxu0
        %2680 = vdwg.mxu0
        %v2681 = vand.u32 %v1726, 4294901760
        %2682 = vmatprep.subr.mxu0 %v2681
        %v2683 = vand.u32 %v1725, 4294901760
        %2684 = vmatpush1.xpose.msra.mxu0 %v2683
        %v2685 = vand.u32 %v1730, 4294901760
        %2686 = vmatprep.subr.mxu0 %v2685
        %v2687 = vand.u32 %v1729, 4294901760
        %2688 = vmatpush1.xpose.msra.mxu0 %v2687
        %2689 = vmatprep.subr.mxu0 0.0
        %2690 = vmatpush1.xpose.msra.mxu0 0.0
        %2691 = vmatprep.subr.mxu0 0.0
        %2692 = vmatpush1.xpose.msra.mxu0 0.0
        %2693 = vmatprep.subr.mxu0 0.0
        %2694 = vmatpush1.xpose.msra.mxu0 0.0
        %2695 = vmatprep.subr.mxu0 0.0
        %2696 = vmatpush1.xpose.msra.mxu0 0.0
        %2697 = vmatprep.subr.mxu0 0.0
        %2698 = vmatpush1.xpose.msra.mxu0 0.0
        %2699 = vmatprep.subr.mxu0 0.0
        %2700 = vmatpush1.xpose.msra.mxu0 0.0
        %2701 = vmatprep.subr.mxu0 0.0
        %2702 = vmatpush1.xpose.msra.mxu0 0.0
        %2703 = vmatprep.subr.mxu0 0.0
        %2704 = vmatpush1.xpose.msra.mxu0 0.0
        %2705 = vmatprep.subr.mxu0 0.0
        %2706 = vmatpush1.xpose.msra.mxu0 0.0
        %2707 = vmatprep.subr.mxu0 0.0
        %2708 = vmatpush1.xpose.msra.mxu0 0.0
        %2709 = vmatprep.subr.mxu0 0.0
        %2710 = vmatpush1.xpose.msra.mxu0 0.0
        %2711 = vmatprep.subr.mxu0 0.0
        %2712 = vmatpush1.xpose.msra.mxu0 0.0
        %2713 = vmatprep.subr.mxu0 0.0
        %2714 = vmatpush1.xpose.msra.mxu0 0.0
        %2715 = vmatprep.subr.mxu0 0.0
        %2716 = vmatpush1.xpose.msra.mxu0 0.0
        %2717 = vmatprep.subr.mxu0 0.0
        %2718 = vmatpush1.xpose.msra.mxu0 0.0
        %2719 = vmatprep.subr.mxu0 0.0
        %2720 = vmatpush1.xpose.msra.mxu0 0.0
        %2721 = vmatprep.subr.mxu0 0.0
        %2722 = vmatpush1.xpose.msra.mxu0 0.0
        %2723 = vmatprep.subr.mxu0 0.0
        %2724 = vmatpush1.xpose.msra.mxu0 0.0
        %2725 = vmatprep.subr.mxu0 0.0
        %2726 = vmatpush1.xpose.msra.mxu0 0.0
        %2727 = vmatprep.subr.mxu0 0.0
        %2728 = vmatpush1.xpose.msra.mxu0 0.0
        %2729 = vmatprep.subr.mxu0 0.0
        %2730 = vmatpush1.xpose.msra.mxu0 0.0
        %2731 = vmatprep.subr.mxu0 0.0
        %2732 = vmatpush1.xpose.msra.mxu0 0.0
        %2733 = vmatprep.subr.mxu0 0.0
        %2734 = vmatpush1.xpose.msra.mxu0 0.0
        %2735 = vmatprep.subr.mxu0 0.0
        %2736 = vmatpush1.xpose.msra.mxu0 0.0
        %2737 = vmatprep.subr.mxu0 0.0
        %2738 = vmatpush1.xpose.msra.mxu0 0.0
        %2739 = vmatprep.subr.mxu0 0.0
        %2740 = vmatpush1.xpose.msra.mxu0 0.0
        %2741 = vmatprep.subr.mxu0 0.0
        %2742 = vmatpush1.xpose.msra.mxu0 0.0
        %2743 = vmatprep.subr.mxu0 0.0
        %2744 = vmatpush1.xpose.msra.mxu0 0.0
        %2745 = vmatprep.subr.mxu0 0.0
        %2746 = vmatpush1.xpose.msra.mxu0 0.0
        %2747 = vmatprep.subr.mxu0 0.0
        %2748 = vmatpush1.xpose.msra.mxu0 0.0
        %v2749 = vand.u32 %v1756, 4294901760
        %2750 = vmatprep.mubr.f32.mxu0 %v2749
        %v2751 = vand.u32 %v1752, 4294901760
        %2752 = vmatmul.mubr.f32.gmra.mrb[0].mxu0 %v2751
        %v2753 = vpop.f32.mrb[0].mxu0
        %v2754 = vadd.f32 %v2678, %v2753
        %v2755 = vpop.f32.mrb[0].mxu0
        %2756 = vdwg.mxu0
        %v2757 = vand.u32 %v1732, 4294901760
        %2758 = vmatprep.subr.mxu0 %v2757
        %v2759 = vand.u32 %v1731, 4294901760
        %2760 = vmatpush1.xpose.msra.mxu0 %v2759
        %v2761 = vand.u32 %v1736, 4294901760
        %2762 = vmatprep.subr.mxu0 %v2761
        %v2763 = vand.u32 %v1735, 4294901760
        %2764 = vmatpush1.xpose.msra.mxu0 %v2763
        %2765 = vmatprep.subr.mxu0 0.0
        %2766 = vmatpush1.xpose.msra.mxu0 0.0
        %2767 = vmatprep.subr.mxu0 0.0
        %2768 = vmatpush1.xpose.msra.mxu0 0.0
        %2769 = vmatprep.subr.mxu0 0.0
        %2770 = vmatpush1.xpose.msra.mxu0 0.0
        %2771 = vmatprep.subr.mxu0 0.0
        %2772 = vmatpush1.xpose.msra.mxu0 0.0
        %2773 = vmatprep.subr.mxu0 0.0
        %2774 = vmatpush1.xpose.msra.mxu0 0.0
        %2775 = vmatprep.subr.mxu0 0.0
        %2776 = vmatpush1.xpose.msra.mxu0 0.0
        %2777 = vmatprep.subr.mxu0 0.0
        %2778 = vmatpush1.xpose.msra.mxu0 0.0
        %2779 = vmatprep.subr.mxu0 0.0
        %2780 = vmatpush1.xpose.msra.mxu0 0.0
        %2781 = vmatprep.subr.mxu0 0.0
        %2782 = vmatpush1.xpose.msra.mxu0 0.0
        %2783 = vmatprep.subr.mxu0 0.0
        %2784 = vmatpush1.xpose.msra.mxu0 0.0
        %2785 = vmatprep.subr.mxu0 0.0
        %2786 = vmatpush1.xpose.msra.mxu0 0.0
        %2787 = vmatprep.subr.mxu0 0.0
        %2788 = vmatpush1.xpose.msra.mxu0 0.0
        %2789 = vmatprep.subr.mxu0 0.0
        %2790 = vmatpush1.xpose.msra.mxu0 0.0
        %2791 = vmatprep.subr.mxu0 0.0
        %2792 = vmatpush1.xpose.msra.mxu0 0.0
        %2793 = vmatprep.subr.mxu0 0.0
        %2794 = vmatpush1.xpose.msra.mxu0 0.0
        %2795 = vmatprep.subr.mxu0 0.0
        %2796 = vmatpush1.xpose.msra.mxu0 0.0
        %2797 = vmatprep.subr.mxu0 0.0
        %2798 = vmatpush1.xpose.msra.mxu0 0.0
        %2799 = vmatprep.subr.mxu0 0.0
        %2800 = vmatpush1.xpose.msra.mxu0 0.0
        %2801 = vmatprep.subr.mxu0 0.0
        %2802 = vmatpush1.xpose.msra.mxu0 0.0
        %2803 = vmatprep.subr.mxu0 0.0
        %2804 = vmatpush1.xpose.msra.mxu0 0.0
        %2805 = vmatprep.subr.mxu0 0.0
        %2806 = vmatpush1.xpose.msra.mxu0 0.0
        %2807 = vmatprep.subr.mxu0 0.0
        %2808 = vmatpush1.xpose.msra.mxu0 0.0
        %2809 = vmatprep.subr.mxu0 0.0
        %2810 = vmatpush1.xpose.msra.mxu0 0.0
        %2811 = vmatprep.subr.mxu0 0.0
        %2812 = vmatpush1.xpose.msra.mxu0 0.0
        %2813 = vmatprep.subr.mxu0 0.0
        %2814 = vmatpush1.xpose.msra.mxu0 0.0
        %2815 = vmatprep.subr.mxu0 0.0
        %2816 = vmatpush1.xpose.msra.mxu0 0.0
        %2817 = vmatprep.subr.mxu0 0.0
        %2818 = vmatpush1.xpose.msra.mxu0 0.0
        %2819 = vmatprep.subr.mxu0 0.0
        %2820 = vmatpush1.xpose.msra.mxu0 0.0
        %2821 = vmatprep.subr.mxu0 0.0
        %2822 = vmatpush1.xpose.msra.mxu0 0.0
        %2823 = vmatprep.subr.mxu0 0.0
        %2824 = vmatpush1.xpose.msra.mxu0 0.0
        %v2825 = vand.u32 %v1748, 4294901760
        %v2826 = vsub.f32 %v1748, %v2825
        %v2827 = vand.u32 %v2826, 4294901760
        %v2828 = vsub.f32 %v2826, %v2827
        %v2829 = vand.u32 %v2828, 4294901760
        %2830 = vmatprep.mubr.f32.mxu0 %v2829
        %v2831 = vand.u32 %v1744, 4294901760
        %v2832 = vsub.f32 %v1744, %v2831
        %v2833 = vand.u32 %v2832, 4294901760
        %v2834 = vsub.f32 %v2832, %v2833
        %v2835 = vand.u32 %v2834, 4294901760
        %2836 = vmatmul.mubr.f32.gmra.mrb[0].mxu0 %v2835
        %v2837 = vpop.f32.mrb[0].mxu0
        %v2838 = vadd.f32 0.0, %v2837
        %v2839 = vpop.f32.mrb[0].mxu0
        %2840 = vdwg.mxu0
        %v2841 = vand.u32 %v1732, 4294901760
        %v2842 = vsub.f32 %v1732, %v2841
        %v2843 = vand.u32 %v2842, 4294901760
        %v2844 = vsub.f32 %v2842, %v2843
        %v2845 = vand.u32 %v2844, 4294901760
        %2846 = vmatprep.subr.mxu0 %v2845
        %v2847 = vand.u32 %v1731, 4294901760
        %v2848 = vsub.f32 %v1731, %v2847
        %v2849 = vand.u32 %v2848, 4294901760
        %v2850 = vsub.f32 %v2848, %v2849
        %v2851 = vand.u32 %v2850, 4294901760
        %2852 = vmatpush1.xpose.msra.mxu0 %v2851
        %v2853 = vand.u32 %v1736, 4294901760
        %v2854 = vsub.f32 %v1736, %v2853
        %v2855 = vand.u32 %v2854, 4294901760
        %v2856 = vsub.f32 %v2854, %v2855
        %v2857 = vand.u32 %v2856, 4294901760
        %2858 = vmatprep.subr.mxu0 %v2857
        %v2859 = vand.u32 %v1735, 4294901760
        %v2860 = vsub.f32 %v1735, %v2859
        %v2861 = vand.u32 %v2860, 4294901760
        %v2862 = vsub.f32 %v2860, %v2861
        %v2863 = vand.u32 %v2862, 4294901760
        %2864 = vmatpush1.xpose.msra.mxu0 %v2863
        %2865 = vmatprep.subr.mxu0 0.0
        %2866 = vmatpush1.xpose.msra.mxu0 0.0
        %2867 = vmatprep.subr.mxu0 0.0
        %2868 = vmatpush1.xpose.msra.mxu0 0.0
        %2869 = vmatprep.subr.mxu0 0.0
        %2870 = vmatpush1.xpose.msra.mxu0 0.0
        %2871 = vmatprep.subr.mxu0 0.0
        %2872 = vmatpush1.xpose.msra.mxu0 0.0
        %2873 = vmatprep.subr.mxu0 0.0
        %2874 = vmatpush1.xpose.msra.mxu0 0.0
        %2875 = vmatprep.subr.mxu0 0.0
        %2876 = vmatpush1.xpose.msra.mxu0 0.0
        %2877 = vmatprep.subr.mxu0 0.0
        %2878 = vmatpush1.xpose.msra.mxu0 0.0
        %2879 = vmatprep.subr.mxu0 0.0
        %2880 = vmatpush1.xpose.msra.mxu0 0.0
        %2881 = vmatprep.subr.mxu0 0.0
        %2882 = vmatpush1.xpose.msra.mxu0 0.0
        %2883 = vmatprep.subr.mxu0 0.0
        %2884 = vmatpush1.xpose.msra.mxu0 0.0
        %2885 = vmatprep.subr.mxu0 0.0
        %2886 = vmatpush1.xpose.msra.mxu0 0.0
        %2887 = vmatprep.subr.mxu0 0.0
        %2888 = vmatpush1.xpose.msra.mxu0 0.0
        %2889 = vmatprep.subr.mxu0 0.0
        %2890 = vmatpush1.xpose.msra.mxu0 0.0
        %2891 = vmatprep.subr.mxu0 0.0
        %2892 = vmatpush1.xpose.msra.mxu0 0.0
        %2893 = vmatprep.subr.mxu0 0.0
        %2894 = vmatpush1.xpose.msra.mxu0 0.0
        %2895 = vmatprep.subr.mxu0 0.0
        %2896 = vmatpush1.xpose.msra.mxu0 0.0
        %2897 = vmatprep.subr.mxu0 0.0
        %2898 = vmatpush1.xpose.msra.mxu0 0.0
        %2899 = vmatprep.subr.mxu0 0.0
        %2900 = vmatpush1.xpose.msra.mxu0 0.0
        %2901 = vmatprep.subr.mxu0 0.0
        %2902 = vmatpush1.xpose.msra.mxu0 0.0
        %2903 = vmatprep.subr.mxu0 0.0
        %2904 = vmatpush1.xpose.msra.mxu0 0.0
        %2905 = vmatprep.subr.mxu0 0.0
        %2906 = vmatpush1.xpose.msra.mxu0 0.0
        %2907 = vmatprep.subr.mxu0 0.0
        %2908 = vmatpush1.xpose.msra.mxu0 0.0
        %2909 = vmatprep.subr.mxu0 0.0
        %2910 = vmatpush1.xpose.msra.mxu0 0.0
        %2911 = vmatprep.subr.mxu0 0.0
        %2912 = vmatpush1.xpose.msra.mxu0 0.0
        %2913 = vmatprep.subr.mxu0 0.0
        %2914 = vmatpush1.xpose.msra.mxu0 0.0
        %2915 = vmatprep.subr.mxu0 0.0
        %2916 = vmatpush1.xpose.msra.mxu0 0.0
        %2917 = vmatprep.subr.mxu0 0.0
        %2918 = vmatpush1.xpose.msra.mxu0 0.0
        %2919 = vmatprep.subr.mxu0 0.0
        %2920 = vmatpush1.xpose.msra.mxu0 0.0
        %2921 = vmatprep.subr.mxu0 0.0
        %2922 = vmatpush1.xpose.msra.mxu0 0.0
        %2923 = vmatprep.subr.mxu0 0.0
        %2924 = vmatpush1.xpose.msra.mxu0 0.0
        %v2925 = vand.u32 %v1748, 4294901760
        %2926 = vmatprep.mubr.f32.mxu0 %v2925
        %v2927 = vand.u32 %v1744, 4294901760
        %2928 = vmatmul.mubr.f32.gmra.mrb[0].mxu0 %v2927
        %v2929 = vpop.f32.mrb[0].mxu0
        %v2930 = vadd.f32 %v2838, %v2929
        %v2931 = vpop.f32.mrb[0].mxu0
        %2932 = vdwg.mxu0
        %v2933 = vand.u32 %v1732, 4294901760
        %v2934 = vsub.f32 %v1732, %v2933
        %2935 = vmatprep.subr.mxu0 %v2934
        %v2936 = vand.u32 %v1731, 4294901760
        %v2937 = vsub.f32 %v1731, %v2936
        %2938 = vmatpush1.xpose.msra.mxu0 %v2937
        %v2939 = vand.u32 %v1736, 4294901760
        %v2940 = vsub.f32 %v1736, %v2939
        %2941 = vmatprep.subr.mxu0 %v2940
        %v2942 = vand.u32 %v1735, 4294901760
        %v2943 = vsub.f32 %v1735, %v2942
        %2944 = vmatpush1.xpose.msra.mxu0 %v2943
        %2945 = vmatprep.subr.mxu0 0.0
        %2946 = vmatpush1.xpose.msra.mxu0 0.0
        %2947 = vmatprep.subr.mxu0 0.0
        %2948 = vmatpush1.xpose.msra.mxu0 0.0
        %2949 = vmatprep.subr.mxu0 0.0
        %2950 = vmatpush1.xpose.msra.mxu0 0.0
        %2951 = vmatprep.subr.mxu0 0.0
        %2952 = vmatpush1.xpose.msra.mxu0 0.0
        %2953 = vmatprep.subr.mxu0 0.0
        %2954 = vmatpush1.xpose.msra.mxu0 0.0
        %2955 = vmatprep.subr.mxu0 0.0
        %2956 = vmatpush1.xpose.msra.mxu0 0.0
        %2957 = vmatprep.subr.mxu0 0.0
        %2958 = vmatpush1.xpose.msra.mxu0 0.0
        %2959 = vmatprep.subr.mxu0 0.0
        %2960 = vmatpush1.xpose.msra.mxu0 0.0
        %2961 = vmatprep.subr.mxu0 0.0
        %2962 = vmatpush1.xpose.msra.mxu0 0.0
        %2963 = vmatprep.subr.mxu0 0.0
        %2964 = vmatpush1.xpose.msra.mxu0 0.0
        %2965 = vmatprep.subr.mxu0 0.0
        %2966 = vmatpush1.xpose.msra.mxu0 0.0
        %2967 = vmatprep.subr.mxu0 0.0
        %2968 = vmatpush1.xpose.msra.mxu0 0.0
        %2969 = vmatprep.subr.mxu0 0.0
        %2970 = vmatpush1.xpose.msra.mxu0 0.0
        %2971 = vmatprep.subr.mxu0 0.0
        %2972 = vmatpush1.xpose.msra.mxu0 0.0
        %2973 = vmatprep.subr.mxu0 0.0
        %2974 = vmatpush1.xpose.msra.mxu0 0.0
        %2975 = vmatprep.subr.mxu0 0.0
        %2976 = vmatpush1.xpose.msra.mxu0 0.0
        %2977 = vmatprep.subr.mxu0 0.0
        %2978 = vmatpush1.xpose.msra.mxu0 0.0
        %2979 = vmatprep.subr.mxu0 0.0
        %2980 = vmatpush1.xpose.msra.mxu0 0.0
        %2981 = vmatprep.subr.mxu0 0.0
        %2982 = vmatpush1.xpose.msra.mxu0 0.0
        %2983 = vmatprep.subr.mxu0 0.0
        %2984 = vmatpush1.xpose.msra.mxu0 0.0
        %2985 = vmatprep.subr.mxu0 0.0
        %2986 = vmatpush1.xpose.msra.mxu0 0.0
        %2987 = vmatprep.subr.mxu0 0.0
        %2988 = vmatpush1.xpose.msra.mxu0 0.0
        %2989 = vmatprep.subr.mxu0 0.0
        %2990 = vmatpush1.xpose.msra.mxu0 0.0
        %2991 = vmatprep.subr.mxu0 0.0
        %2992 = vmatpush1.xpose.msra.mxu0 0.0
        %2993 = vmatprep.subr.mxu0 0.0
        %2994 = vmatpush1.xpose.msra.mxu0 0.0
        %2995 = vmatprep.subr.mxu0 0.0
        %2996 = vmatpush1.xpose.msra.mxu0 0.0
        %2997 = vmatprep.subr.mxu0 0.0
        %2998 = vmatpush1.xpose.msra.mxu0 0.0
        %2999 = vmatprep.subr.mxu0 0.0
        %3000 = vmatpush1.xpose.msra.mxu0 0.0
        %3001 = vmatprep.subr.mxu0 0.0
        %3002 = vmatpush1.xpose.msra.mxu0 0.0
        %3003 = vmatprep.subr.mxu0 0.0
        %3004 = vmatpush1.xpose.msra.mxu0 0.0
        %v3005 = vand.u32 %v1748, 4294901760
        %v3006 = vsub.f32 %v1748, %v3005
        %3007 = vmatprep.mubr.f32.mxu0 %v3006
        %v3008 = vand.u32 %v1744, 4294901760
        %v3009 = vsub.f32 %v1744, %v3008
        %3010 = vmatmul.mubr.f32.gmra.mrb[0].mxu0 %v3009
        %v3011 = vpop.f32.mrb[0].mxu0
        %v3012 = vadd.f32 %v2930, %v3011
        %v3013 = vpop.f32.mrb[0].mxu0
        %3014 = vdwg.mxu0
        %v3015 = vand.u32 %v1732, 4294901760
        %3016 = vmatprep.subr.mxu0 %v3015
        %v3017 = vand.u32 %v1731, 4294901760
        %3018 = vmatpush1.xpose.msra.mxu0 %v3017
        %v3019 = vand.u32 %v1736, 4294901760
        %3020 = vmatprep.subr.mxu0 %v3019
        %v3021 = vand.u32 %v1735, 4294901760
        %3022 = vmatpush1.xpose.msra.mxu0 %v3021
        %3023 = vmatprep.subr.mxu0 0.0
        %3024 = vmatpush1.xpose.msra.mxu0 0.0
        %3025 = vmatprep.subr.mxu0 0.0
        %3026 = vmatpush1.xpose.msra.mxu0 0.0
        %3027 = vmatprep.subr.mxu0 0.0
        %3028 = vmatpush1.xpose.msra.mxu0 0.0
        %3029 = vmatprep.subr.mxu0 0.0
        %3030 = vmatpush1.xpose.msra.mxu0 0.0
        %3031 = vmatprep.subr.mxu0 0.0
        %3032 = vmatpush1.xpose.msra.mxu0 0.0
        %3033 = vmatprep.subr.mxu0 0.0
        %3034 = vmatpush1.xpose.msra.mxu0 0.0
        %3035 = vmatprep.subr.mxu0 0.0
        %3036 = vmatpush1.xpose.msra.mxu0 0.0
        %3037 = vmatprep.subr.mxu0 0.0
        %3038 = vmatpush1.xpose.msra.mxu0 0.0
        %3039 = vmatprep.subr.mxu0 0.0
        %3040 = vmatpush1.xpose.msra.mxu0 0.0
        %3041 = vmatprep.subr.mxu0 0.0
        %3042 = vmatpush1.xpose.msra.mxu0 0.0
        %3043 = vmatprep.subr.mxu0 0.0
        %3044 = vmatpush1.xpose.msra.mxu0 0.0
        %3045 = vmatprep.subr.mxu0 0.0
        %3046 = vmatpush1.xpose.msra.mxu0 0.0
        %3047 = vmatprep.subr.mxu0 0.0
        %3048 = vmatpush1.xpose.msra.mxu0 0.0
        %3049 = vmatprep.subr.mxu0 0.0
        %3050 = vmatpush1.xpose.msra.mxu0 0.0
        %3051 = vmatprep.subr.mxu0 0.0
        %3052 = vmatpush1.xpose.msra.mxu0 0.0
        %3053 = vmatprep.subr.mxu0 0.0
        %3054 = vmatpush1.xpose.msra.mxu0 0.0
        %3055 = vmatprep.subr.mxu0 0.0
        %3056 = vmatpush1.xpose.msra.mxu0 0.0
        %3057 = vmatprep.subr.mxu0 0.0
        %3058 = vmatpush1.xpose.msra.mxu0 0.0
        %3059 = vmatprep.subr.mxu0 0.0
        %3060 = vmatpush1.xpose.msra.mxu0 0.0
        %3061 = vmatprep.subr.mxu0 0.0
        %3062 = vmatpush1.xpose.msra.mxu0 0.0
        %3063 = vmatprep.subr.mxu0 0.0
        %3064 = vmatpush1.xpose.msra.mxu0 0.0
        %3065 = vmatprep.subr.mxu0 0.0
        %3066 = vmatpush1.xpose.msra.mxu0 0.0
        %3067 = vmatprep.subr.mxu0 0.0
        %3068 = vmatpush1.xpose.msra.mxu0 0.0
        %3069 = vmatprep.subr.mxu0 0.0
        %3070 = vmatpush1.xpose.msra.mxu0 0.0
        %3071 = vmatprep.subr.mxu0 0.0
        %3072 = vmatpush1.xpose.msra.mxu0 0.0
        %3073 = vmatprep.subr.mxu0 0.0
        %3074 = vmatpush1.xpose.msra.mxu0 0.0
        %3075 = vmatprep.subr.mxu0 0.0
        %3076 = vmatpush1.xpose.msra.mxu0 0.0
        %3077 = vmatprep.subr.mxu0 0.0
        %3078 = vmatpush1.xpose.msra.mxu0 0.0
        %3079 = vmatprep.subr.mxu0 0.0
        %3080 = vmatpush1.xpose.msra.mxu0 0.0
        %3081 = vmatprep.subr.mxu0 0.0
        %3082 = vmatpush1.xpose.msra.mxu0 0.0
        %v3083 = vand.u32 %v1748, 4294901760
        %v3084 = vsub.f32 %v1748, %v3083
        %v3085 = vand.u32 %v3084, 4294901760
        %3086 = vmatprep.mubr.f32.mxu0 %v3085
        %v3087 = vand.u32 %v1744, 4294901760
        %v3088 = vsub.f32 %v1744, %v3087
        %v3089 = vand.u32 %v3088, 4294901760
        %3090 = vmatmul.mubr.f32.gmra.mrb[0].mxu0 %v3089
        %v3091 = vpop.f32.mrb[0].mxu0
        %v3092 = vadd.f32 %v3012, %v3091
        %v3093 = vpop.f32.mrb[0].mxu0
        %3094 = vdwg.mxu0
        %v3095 = vand.u32 %v1732, 4294901760
        %v3096 = vsub.f32 %v1732, %v3095
        %v3097 = vand.u32 %v3096, 4294901760
        %3098 = vmatprep.subr.mxu0 %v3097
        %v3099 = vand.u32 %v1731, 4294901760
        %v3100 = vsub.f32 %v1731, %v3099
        %v3101 = vand.u32 %v3100, 4294901760
        %3102 = vmatpush1.xpose.msra.mxu0 %v3101
        %v3103 = vand.u32 %v1736, 4294901760
        %v3104 = vsub.f32 %v1736, %v3103
        %v3105 = vand.u32 %v3104, 4294901760
        %3106 = vmatprep.subr.mxu0 %v3105
        %v3107 = vand.u32 %v1735, 4294901760
        %v3108 = vsub.f32 %v1735, %v3107
        %v3109 = vand.u32 %v3108, 4294901760
        %3110 = vmatpush1.xpose.msra.mxu0 %v3109
        %3111 = vmatprep.subr.mxu0 0.0
        %3112 = vmatpush1.xpose.msra.mxu0 0.0
        %3113 = vmatprep.subr.mxu0 0.0
        %3114 = vmatpush1.xpose.msra.mxu0 0.0
        %3115 = vmatprep.subr.mxu0 0.0
        %3116 = vmatpush1.xpose.msra.mxu0 0.0
        %3117 = vmatprep.subr.mxu0 0.0
        %3118 = vmatpush1.xpose.msra.mxu0 0.0
        %3119 = vmatprep.subr.mxu0 0.0
        %3120 = vmatpush1.xpose.msra.mxu0 0.0
        %3121 = vmatprep.subr.mxu0 0.0
        %3122 = vmatpush1.xpose.msra.mxu0 0.0
        %3123 = vmatprep.subr.mxu0 0.0
        %3124 = vmatpush1.xpose.msra.mxu0 0.0
        %3125 = vmatprep.subr.mxu0 0.0
        %3126 = vmatpush1.xpose.msra.mxu0 0.0
        %3127 = vmatprep.subr.mxu0 0.0
        %3128 = vmatpush1.xpose.msra.mxu0 0.0
        %3129 = vmatprep.subr.mxu0 0.0
        %3130 = vmatpush1.xpose.msra.mxu0 0.0
        %3131 = vmatprep.subr.mxu0 0.0
        %3132 = vmatpush1.xpose.msra.mxu0 0.0
        %3133 = vmatprep.subr.mxu0 0.0
        %3134 = vmatpush1.xpose.msra.mxu0 0.0
        %3135 = vmatprep.subr.mxu0 0.0
        %3136 = vmatpush1.xpose.msra.mxu0 0.0
        %3137 = vmatprep.subr.mxu0 0.0
        %3138 = vmatpush1.xpose.msra.mxu0 0.0
        %3139 = vmatprep.subr.mxu0 0.0
        %3140 = vmatpush1.xpose.msra.mxu0 0.0
        %3141 = vmatprep.subr.mxu0 0.0
        %3142 = vmatpush1.xpose.msra.mxu0 0.0
        %3143 = vmatprep.subr.mxu0 0.0
        %3144 = vmatpush1.xpose.msra.mxu0 0.0
        %3145 = vmatprep.subr.mxu0 0.0
        %3146 = vmatpush1.xpose.msra.mxu0 0.0
        %3147 = vmatprep.subr.mxu0 0.0
        %3148 = vmatpush1.xpose.msra.mxu0 0.0
        %3149 = vmatprep.subr.mxu0 0.0
        %3150 = vmatpush1.xpose.msra.mxu0 0.0
        %3151 = vmatprep.subr.mxu0 0.0
        %3152 = vmatpush1.xpose.msra.mxu0 0.0
        %3153 = vmatprep.subr.mxu0 0.0
        %3154 = vmatpush1.xpose.msra.mxu0 0.0
        %3155 = vmatprep.subr.mxu0 0.0
        %3156 = vmatpush1.xpose.msra.mxu0 0.0
        %3157 = vmatprep.subr.mxu0 0.0
        %3158 = vmatpush1.xpose.msra.mxu0 0.0
        %3159 = vmatprep.subr.mxu0 0.0
        %3160 = vmatpush1.xpose.msra.mxu0 0.0
        %3161 = vmatprep.subr.mxu0 0.0
        %3162 = vmatpush1.xpose.msra.mxu0 0.0
        %3163 = vmatprep.subr.mxu0 0.0
        %3164 = vmatpush1.xpose.msra.mxu0 0.0
        %3165 = vmatprep.subr.mxu0 0.0
        %3166 = vmatpush1.xpose.msra.mxu0 0.0
        %3167 = vmatprep.subr.mxu0 0.0
        %3168 = vmatpush1.xpose.msra.mxu0 0.0
        %3169 = vmatprep.subr.mxu0 0.0
        %3170 = vmatpush1.xpose.msra.mxu0 0.0
        %v3171 = vand.u32 %v1748, 4294901760
        %3172 = vmatprep.mubr.f32.mxu0 %v3171
        %v3173 = vand.u32 %v1744, 4294901760
        %3174 = vmatmul.mubr.f32.gmra.mrb[0].mxu0 %v3173
        %v3175 = vpop.f32.mrb[0].mxu0
        %v3176 = vadd.f32 %v3092, %v3175
        %v3177 = vpop.f32.mrb[0].mxu0
        %3178 = vdwg.mxu0
        %v3179 = vand.u32 %v1732, 4294901760
        %3180 = vmatprep.subr.mxu0 %v3179
        %v3181 = vand.u32 %v1731, 4294901760
        %3182 = vmatpush1.xpose.msra.mxu0 %v3181
        %v3183 = vand.u32 %v1736, 4294901760
        %3184 = vmatprep.subr.mxu0 %v3183
        %v3185 = vand.u32 %v1735, 4294901760
        %3186 = vmatpush1.xpose.msra.mxu0 %v3185
        %3187 = vmatprep.subr.mxu0 0.0
        %3188 = vmatpush1.xpose.msra.mxu0 0.0
        %3189 = vmatprep.subr.mxu0 0.0
        %3190 = vmatpush1.xpose.msra.mxu0 0.0
        %3191 = vmatprep.subr.mxu0 0.0
        %3192 = vmatpush1.xpose.msra.mxu0 0.0
        %3193 = vmatprep.subr.mxu0 0.0
        %3194 = vmatpush1.xpose.msra.mxu0 0.0
        %3195 = vmatprep.subr.mxu0 0.0
        %3196 = vmatpush1.xpose.msra.mxu0 0.0
        %3197 = vmatprep.subr.mxu0 0.0
        %3198 = vmatpush1.xpose.msra.mxu0 0.0
        %3199 = vmatprep.subr.mxu0 0.0
        %3200 = vmatpush1.xpose.msra.mxu0 0.0
        %3201 = vmatprep.subr.mxu0 0.0
        %3202 = vmatpush1.xpose.msra.mxu0 0.0
        %3203 = vmatprep.subr.mxu0 0.0
        %3204 = vmatpush1.xpose.msra.mxu0 0.0
        %3205 = vmatprep.subr.mxu0 0.0
        %3206 = vmatpush1.xpose.msra.mxu0 0.0
        %3207 = vmatprep.subr.mxu0 0.0
        %3208 = vmatpush1.xpose.msra.mxu0 0.0
        %3209 = vmatprep.subr.mxu0 0.0
        %3210 = vmatpush1.xpose.msra.mxu0 0.0
        %3211 = vmatprep.subr.mxu0 0.0
        %3212 = vmatpush1.xpose.msra.mxu0 0.0
        %3213 = vmatprep.subr.mxu0 0.0
        %3214 = vmatpush1.xpose.msra.mxu0 0.0
        %3215 = vmatprep.subr.mxu0 0.0
        %3216 = vmatpush1.xpose.msra.mxu0 0.0
        %3217 = vmatprep.subr.mxu0 0.0
        %3218 = vmatpush1.xpose.msra.mxu0 0.0
        %3219 = vmatprep.subr.mxu0 0.0
        %3220 = vmatpush1.xpose.msra.mxu0 0.0
        %3221 = vmatprep.subr.mxu0 0.0
        %3222 = vmatpush1.xpose.msra.mxu0 0.0
        %3223 = vmatprep.subr.mxu0 0.0
        %3224 = vmatpush1.xpose.msra.mxu0 0.0
        %3225 = vmatprep.subr.mxu0 0.0
        %3226 = vmatpush1.xpose.msra.mxu0 0.0
        %3227 = vmatprep.subr.mxu0 0.0
        %3228 = vmatpush1.xpose.msra.mxu0 0.0
        %3229 = vmatprep.subr.mxu0 0.0
        %3230 = vmatpush1.xpose.msra.mxu0 0.0
        %3231 = vmatprep.subr.mxu0 0.0
        %3232 = vmatpush1.xpose.msra.mxu0 0.0
        %3233 = vmatprep.subr.mxu0 0.0
        %3234 = vmatpush1.xpose.msra.mxu0 0.0
        %3235 = vmatprep.subr.mxu0 0.0
        %3236 = vmatpush1.xpose.msra.mxu0 0.0
        %3237 = vmatprep.subr.mxu0 0.0
        %3238 = vmatpush1.xpose.msra.mxu0 0.0
        %3239 = vmatprep.subr.mxu0 0.0
        %3240 = vmatpush1.xpose.msra.mxu0 0.0
        %3241 = vmatprep.subr.mxu0 0.0
        %3242 = vmatpush1.xpose.msra.mxu0 0.0
        %3243 = vmatprep.subr.mxu0 0.0
        %3244 = vmatpush1.xpose.msra.mxu0 0.0
        %3245 = vmatprep.subr.mxu0 0.0
        %3246 = vmatpush1.xpose.msra.mxu0 0.0
        %v3247 = vand.u32 %v1748, 4294901760
        %3248 = vmatprep.mubr.f32.mxu0 %v3247
        %v3249 = vand.u32 %v1744, 4294901760
        %3250 = vmatmul.mubr.f32.gmra.mrb[0].mxu0 %v3249
        %v3251 = vpop.f32.mrb[0].mxu0
        %v3252 = vadd.f32 %v3176, %v3251
        %v3253 = vpop.f32.mrb[0].mxu0
        %3254 = vdwg.mxu0
        %v3255 = vand.u32 %v1734, 4294901760
        %3256 = vmatprep.subr.mxu0 %v3255
        %v3257 = vand.u32 %v1733, 4294901760
        %3258 = vmatpush1.xpose.msra.mxu0 %v3257
        %v3259 = vand.u32 %v1738, 4294901760
        %3260 = vmatprep.subr.mxu0 %v3259
        %v3261 = vand.u32 %v1737, 4294901760
        %3262 = vmatpush1.xpose.msra.mxu0 %v3261
        %3263 = vmatprep.subr.mxu0 0.0
        %3264 = vmatpush1.xpose.msra.mxu0 0.0
        %3265 = vmatprep.subr.mxu0 0.0
        %3266 = vmatpush1.xpose.msra.mxu0 0.0
        %3267 = vmatprep.subr.mxu0 0.0
        %3268 = vmatpush1.xpose.msra.mxu0 0.0
        %3269 = vmatprep.subr.mxu0 0.0
        %3270 = vmatpush1.xpose.msra.mxu0 0.0
        %3271 = vmatprep.subr.mxu0 0.0
        %3272 = vmatpush1.xpose.msra.mxu0 0.0
        %3273 = vmatprep.subr.mxu0 0.0
        %3274 = vmatpush1.xpose.msra.mxu0 0.0
        %3275 = vmatprep.subr.mxu0 0.0
        %3276 = vmatpush1.xpose.msra.mxu0 0.0
        %3277 = vmatprep.subr.mxu0 0.0
        %3278 = vmatpush1.xpose.msra.mxu0 0.0
        %3279 = vmatprep.subr.mxu0 0.0
        %3280 = vmatpush1.xpose.msra.mxu0 0.0
        %3281 = vmatprep.subr.mxu0 0.0
        %3282 = vmatpush1.xpose.msra.mxu0 0.0
        %3283 = vmatprep.subr.mxu0 0.0
        %3284 = vmatpush1.xpose.msra.mxu0 0.0
        %3285 = vmatprep.subr.mxu0 0.0
        %3286 = vmatpush1.xpose.msra.mxu0 0.0
        %3287 = vmatprep.subr.mxu0 0.0
        %3288 = vmatpush1.xpose.msra.mxu0 0.0
        %3289 = vmatprep.subr.mxu0 0.0
        %3290 = vmatpush1.xpose.msra.mxu0 0.0
        %3291 = vmatprep.subr.mxu0 0.0
        %3292 = vmatpush1.xpose.msra.mxu0 0.0
        %3293 = vmatprep.subr.mxu0 0.0
        %3294 = vmatpush1.xpose.msra.mxu0 0.0
        %3295 = vmatprep.subr.mxu0 0.0
        %3296 = vmatpush1.xpose.msra.mxu0 0.0
        %3297 = vmatprep.subr.mxu0 0.0
        %3298 = vmatpush1.xpose.msra.mxu0 0.0
        %3299 = vmatprep.subr.mxu0 0.0
        %3300 = vmatpush1.xpose.msra.mxu0 0.0
        %3301 = vmatprep.subr.mxu0 0.0
        %3302 = vmatpush1.xpose.msra.mxu0 0.0
        %3303 = vmatprep.subr.mxu0 0.0
        %3304 = vmatpush1.xpose.msra.mxu0 0.0
        %3305 = vmatprep.subr.mxu0 0.0
        %3306 = vmatpush1.xpose.msra.mxu0 0.0
        %3307 = vmatprep.subr.mxu0 0.0
        %3308 = vmatpush1.xpose.msra.mxu0 0.0
        %3309 = vmatprep.subr.mxu0 0.0
        %3310 = vmatpush1.xpose.msra.mxu0 0.0
        %3311 = vmatprep.subr.mxu0 0.0
        %3312 = vmatpush1.xpose.msra.mxu0 0.0
        %3313 = vmatprep.subr.mxu0 0.0
        %3314 = vmatpush1.xpose.msra.mxu0 0.0
        %3315 = vmatprep.subr.mxu0 0.0
        %3316 = vmatpush1.xpose.msra.mxu0 0.0
        %3317 = vmatprep.subr.mxu0 0.0
        %3318 = vmatpush1.xpose.msra.mxu0 0.0
        %3319 = vmatprep.subr.mxu0 0.0
        %3320 = vmatpush1.xpose.msra.mxu0 0.0
        %3321 = vmatprep.subr.mxu0 0.0
        %3322 = vmatpush1.xpose.msra.mxu0 0.0
        %v3323 = vand.u32 %v1756, 4294901760
        %v3324 = vsub.f32 %v1756, %v3323
        %v3325 = vand.u32 %v3324, 4294901760
        %v3326 = vsub.f32 %v3324, %v3325
        %v3327 = vand.u32 %v3326, 4294901760
        %3328 = vmatprep.mubr.f32.mxu0 %v3327
        %v3329 = vand.u32 %v1752, 4294901760
        %v3330 = vsub.f32 %v1752, %v3329
        %v3331 = vand.u32 %v3330, 4294901760
        %v3332 = vsub.f32 %v3330, %v3331
        %v3333 = vand.u32 %v3332, 4294901760
        %3334 = vmatmul.mubr.f32.gmra.mrb[0].mxu0 %v3333
        %v3335 = vpop.f32.mrb[0].mxu0
        %v3336 = vadd.f32 %v3252, %v3335
        %v3337 = vpop.f32.mrb[0].mxu0
        %3338 = vdwg.mxu0
        %v3339 = vand.u32 %v1734, 4294901760
        %v3340 = vsub.f32 %v1734, %v3339
        %v3341 = vand.u32 %v3340, 4294901760
        %v3342 = vsub.f32 %v3340, %v3341
        %v3343 = vand.u32 %v3342, 4294901760
        %3344 = vmatprep.subr.mxu0 %v3343
        %v3345 = vand.u32 %v1733, 4294901760
        %v3346 = vsub.f32 %v1733, %v3345
        %v3347 = vand.u32 %v3346, 4294901760
        %v3348 = vsub.f32 %v3346, %v3347
        %v3349 = vand.u32 %v3348, 4294901760
        %3350 = vmatpush1.xpose.msra.mxu0 %v3349
        %v3351 = vand.u32 %v1738, 4294901760
        %v3352 = vsub.f32 %v1738, %v3351
        %v3353 = vand.u32 %v3352, 4294901760
        %v3354 = vsub.f32 %v3352, %v3353
        %v3355 = vand.u32 %v3354, 4294901760
        %3356 = vmatprep.subr.mxu0 %v3355
        %v3357 = vand.u32 %v1737, 4294901760
        %v3358 = vsub.f32 %v1737, %v3357
        %v3359 = vand.u32 %v3358, 4294901760
        %v3360 = vsub.f32 %v3358, %v3359
        %v3361 = vand.u32 %v3360, 4294901760
        %3362 = vmatpush1.xpose.msra.mxu0 %v3361
        %3363 = vmatprep.subr.mxu0 0.0
        %3364 = vmatpush1.xpose.msra.mxu0 0.0
        %3365 = vmatprep.subr.mxu0 0.0
        %3366 = vmatpush1.xpose.msra.mxu0 0.0
        %3367 = vmatprep.subr.mxu0 0.0
        %3368 = vmatpush1.xpose.msra.mxu0 0.0
        %3369 = vmatprep.subr.mxu0 0.0
        %3370 = vmatpush1.xpose.msra.mxu0 0.0
        %3371 = vmatprep.subr.mxu0 0.0
        %3372 = vmatpush1.xpose.msra.mxu0 0.0
        %3373 = vmatprep.subr.mxu0 0.0
        %3374 = vmatpush1.xpose.msra.mxu0 0.0
        %3375 = vmatprep.subr.mxu0 0.0
        %3376 = vmatpush1.xpose.msra.mxu0 0.0
        %3377 = vmatprep.subr.mxu0 0.0
        %3378 = vmatpush1.xpose.msra.mxu0 0.0
        %3379 = vmatprep.subr.mxu0 0.0
        %3380 = vmatpush1.xpose.msra.mxu0 0.0
        %3381 = vmatprep.subr.mxu0 0.0
        %3382 = vmatpush1.xpose.msra.mxu0 0.0
        %3383 = vmatprep.subr.mxu0 0.0
        %3384 = vmatpush1.xpose.msra.mxu0 0.0
        %3385 = vmatprep.subr.mxu0 0.0
        %3386 = vmatpush1.xpose.msra.mxu0 0.0
        %3387 = vmatprep.subr.mxu0 0.0
        %3388 = vmatpush1.xpose.msra.mxu0 0.0
        %3389 = vmatprep.subr.mxu0 0.0
        %3390 = vmatpush1.xpose.msra.mxu0 0.0
        %3391 = vmatprep.subr.mxu0 0.0
        %3392 = vmatpush1.xpose.msra.mxu0 0.0
        %3393 = vmatprep.subr.mxu0 0.0
        %3394 = vmatpush1.xpose.msra.mxu0 0.0
        %3395 = vmatprep.subr.mxu0 0.0
        %3396 = vmatpush1.xpose.msra.mxu0 0.0
        %3397 = vmatprep.subr.mxu0 0.0
        %3398 = vmatpush1.xpose.msra.mxu0 0.0
        %3399 = vmatprep.subr.mxu0 0.0
        %3400 = vmatpush1.xpose.msra.mxu0 0.0
        %3401 = vmatprep.subr.mxu0 0.0
        %3402 = vmatpush1.xpose.msra.mxu0 0.0
        %3403 = vmatprep.subr.mxu0 0.0
        %3404 = vmatpush1.xpose.msra.mxu0 0.0
        %3405 = vmatprep.subr.mxu0 0.0
        %3406 = vmatpush1.xpose.msra.mxu0 0.0
        %3407 = vmatprep.subr.mxu0 0.0
        %3408 = vmatpush1.xpose.msra.mxu0 0.0
        %3409 = vmatprep.subr.mxu0 0.0
        %3410 = vmatpush1.xpose.msra.mxu0 0.0
        %3411 = vmatprep.subr.mxu0 0.0
        %3412 = vmatpush1.xpose.msra.mxu0 0.0
        %3413 = vmatprep.subr.mxu0 0.0
        %3414 = vmatpush1.xpose.msra.mxu0 0.0
        %3415 = vmatprep.subr.mxu0 0.0
        %3416 = vmatpush1.xpose.msra.mxu0 0.0
        %3417 = vmatprep.subr.mxu0 0.0
        %3418 = vmatpush1.xpose.msra.mxu0 0.0
        %3419 = vmatprep.subr.mxu0 0.0
        %3420 = vmatpush1.xpose.msra.mxu0 0.0
        %3421 = vmatprep.subr.mxu0 0.0
        %3422 = vmatpush1.xpose.msra.mxu0 0.0
        %v3423 = vand.u32 %v1756, 4294901760
        %3424 = vmatprep.mubr.f32.mxu0 %v3423
        %v3425 = vand.u32 %v1752, 4294901760
        %3426 = vmatmul.mubr.f32.gmra.mrb[0].mxu0 %v3425
        %v3427 = vpop.f32.mrb[0].mxu0
        %v3428 = vadd.f32 %v3336, %v3427
        %v3429 = vpop.f32.mrb[0].mxu0
        %3430 = vdwg.mxu0
        %v3431 = vand.u32 %v1734, 4294901760
        %v3432 = vsub.f32 %v1734, %v3431
        %3433 = vmatprep.subr.mxu0 %v3432
        %v3434 = vand.u32 %v1733, 4294901760
        %v3435 = vsub.f32 %v1733, %v3434
        %3436 = vmatpush1.xpose.msra.mxu0 %v3435
        %v3437 = vand.u32 %v1738, 4294901760
        %v3438 = vsub.f32 %v1738, %v3437
        %3439 = vmatprep.subr.mxu0 %v3438
        %v3440 = vand.u32 %v1737, 4294901760
        %v3441 = vsub.f32 %v1737, %v3440
        %3442 = vmatpush1.xpose.msra.mxu0 %v3441
        %3443 = vmatprep.subr.mxu0 0.0
        %3444 = vmatpush1.xpose.msra.mxu0 0.0
        %3445 = vmatprep.subr.mxu0 0.0
        %3446 = vmatpush1.xpose.msra.mxu0 0.0
        %3447 = vmatprep.subr.mxu0 0.0
        %3448 = vmatpush1.xpose.msra.mxu0 0.0
        %3449 = vmatprep.subr.mxu0 0.0
        %3450 = vmatpush1.xpose.msra.mxu0 0.0
        %3451 = vmatprep.subr.mxu0 0.0
        %3452 = vmatpush1.xpose.msra.mxu0 0.0
        %3453 = vmatprep.subr.mxu0 0.0
        %3454 = vmatpush1.xpose.msra.mxu0 0.0
        %3455 = vmatprep.subr.mxu0 0.0
        %3456 = vmatpush1.xpose.msra.mxu0 0.0
        %3457 = vmatprep.subr.mxu0 0.0
        %3458 = vmatpush1.xpose.msra.mxu0 0.0
        %3459 = vmatprep.subr.mxu0 0.0
        %3460 = vmatpush1.xpose.msra.mxu0 0.0
        %3461 = vmatprep.subr.mxu0 0.0
        %3462 = vmatpush1.xpose.msra.mxu0 0.0
        %3463 = vmatprep.subr.mxu0 0.0
        %3464 = vmatpush1.xpose.msra.mxu0 0.0
        %3465 = vmatprep.subr.mxu0 0.0
        %3466 = vmatpush1.xpose.msra.mxu0 0.0
        %3467 = vmatprep.subr.mxu0 0.0
        %3468 = vmatpush1.xpose.msra.mxu0 0.0
        %3469 = vmatprep.subr.mxu0 0.0
        %3470 = vmatpush1.xpose.msra.mxu0 0.0
        %3471 = vmatprep.subr.mxu0 0.0
        %3472 = vmatpush1.xpose.msra.mxu0 0.0
        %3473 = vmatprep.subr.mxu0 0.0
        %3474 = vmatpush1.xpose.msra.mxu0 0.0
        %3475 = vmatprep.subr.mxu0 0.0
        %3476 = vmatpush1.xpose.msra.mxu0 0.0
        %3477 = vmatprep.subr.mxu0 0.0
        %3478 = vmatpush1.xpose.msra.mxu0 0.0
        %3479 = vmatprep.subr.mxu0 0.0
        %3480 = vmatpush1.xpose.msra.mxu0 0.0
        %3481 = vmatprep.subr.mxu0 0.0
        %3482 = vmatpush1.xpose.msra.mxu0 0.0
        %3483 = vmatprep.subr.mxu0 0.0
        %3484 = vmatpush1.xpose.msra.mxu0 0.0
        %3485 = vmatprep.subr.mxu0 0.0
        %3486 = vmatpush1.xpose.msra.mxu0 0.0
        %3487 = vmatprep.subr.mxu0 0.0
        %3488 = vmatpush1.xpose.msra.mxu0 0.0
        %3489 = vmatprep.subr.mxu0 0.0
        %3490 = vmatpush1.xpose.msra.mxu0 0.0
        %3491 = vmatprep.subr.mxu0 0.0
        %3492 = vmatpush1.xpose.msra.mxu0 0.0
        %3493 = vmatprep.subr.mxu0 0.0
        %3494 = vmatpush1.xpose.msra.mxu0 0.0
        %3495 = vmatprep.subr.mxu0 0.0
        %3496 = vmatpush1.xpose.msra.mxu0 0.0
        %3497 = vmatprep.subr.mxu0 0.0
        %3498 = vmatpush1.xpose.msra.mxu0 0.0
        %3499 = vmatprep.subr.mxu0 0.0
        %3500 = vmatpush1.xpose.msra.mxu0 0.0
        %3501 = vmatprep.subr.mxu0 0.0
        %3502 = vmatpush1.xpose.msra.mxu0 0.0
        %v3503 = vand.u32 %v1756, 4294901760
        %v3504 = vsub.f32 %v1756, %v3503
        %3505 = vmatprep.mubr.f32.mxu0 %v3504
        %v3506 = vand.u32 %v1752, 4294901760
        %v3507 = vsub.f32 %v1752, %v3506
        %3508 = vmatmul.mubr.f32.gmra.mrb[0].mxu0 %v3507
        %v3509 = vpop.f32.mrb[0].mxu0
        %v3510 = vadd.f32 %v3428, %v3509
        %v3511 = vpop.f32.mrb[0].mxu0
        %3512 = vdwg.mxu0
        %v3513 = vand.u32 %v1734, 4294901760
        %3514 = vmatprep.subr.mxu0 %v3513
        %v3515 = vand.u32 %v1733, 4294901760
        %3516 = vmatpush1.xpose.msra.mxu0 %v3515
        %v3517 = vand.u32 %v1738, 4294901760
        %3518 = vmatprep.subr.mxu0 %v3517
        %v3519 = vand.u32 %v1737, 4294901760
        %3520 = vmatpush1.xpose.msra.mxu0 %v3519
        %3521 = vmatprep.subr.mxu0 0.0
        %3522 = vmatpush1.xpose.msra.mxu0 0.0
        %3523 = vmatprep.subr.mxu0 0.0
        %3524 = vmatpush1.xpose.msra.mxu0 0.0
        %3525 = vmatprep.subr.mxu0 0.0
        %3526 = vmatpush1.xpose.msra.mxu0 0.0
        %3527 = vmatprep.subr.mxu0 0.0
        %3528 = vmatpush1.xpose.msra.mxu0 0.0
        %3529 = vmatprep.subr.mxu0 0.0
        %3530 = vmatpush1.xpose.msra.mxu0 0.0
        %3531 = vmatprep.subr.mxu0 0.0
        %3532 = vmatpush1.xpose.msra.mxu0 0.0
        %3533 = vmatprep.subr.mxu0 0.0
        %3534 = vmatpush1.xpose.msra.mxu0 0.0
        %3535 = vmatprep.subr.mxu0 0.0
        %3536 = vmatpush1.xpose.msra.mxu0 0.0
        %3537 = vmatprep.subr.mxu0 0.0
        %3538 = vmatpush1.xpose.msra.mxu0 0.0
        %3539 = vmatprep.subr.mxu0 0.0
        %3540 = vmatpush1.xpose.msra.mxu0 0.0
        %3541 = vmatprep.subr.mxu0 0.0
        %3542 = vmatpush1.xpose.msra.mxu0 0.0
        %3543 = vmatprep.subr.mxu0 0.0
        %3544 = vmatpush1.xpose.msra.mxu0 0.0
        %3545 = vmatprep.subr.mxu0 0.0
        %3546 = vmatpush1.xpose.msra.mxu0 0.0
        %3547 = vmatprep.subr.mxu0 0.0
        %3548 = vmatpush1.xpose.msra.mxu0 0.0
        %3549 = vmatprep.subr.mxu0 0.0
        %3550 = vmatpush1.xpose.msra.mxu0 0.0
        %3551 = vmatprep.subr.mxu0 0.0
        %3552 = vmatpush1.xpose.msra.mxu0 0.0
        %3553 = vmatprep.subr.mxu0 0.0
        %3554 = vmatpush1.xpose.msra.mxu0 0.0
        %3555 = vmatprep.subr.mxu0 0.0
        %3556 = vmatpush1.xpose.msra.mxu0 0.0
        %3557 = vmatprep.subr.mxu0 0.0
        %3558 = vmatpush1.xpose.msra.mxu0 0.0
        %3559 = vmatprep.subr.mxu0 0.0
        %3560 = vmatpush1.xpose.msra.mxu0 0.0
        %3561 = vmatprep.subr.mxu0 0.0
        %3562 = vmatpush1.xpose.msra.mxu0 0.0
        %3563 = vmatprep.subr.mxu0 0.0
        %3564 = vmatpush1.xpose.msra.mxu0 0.0
        %3565 = vmatprep.subr.mxu0 0.0
        %3566 = vmatpush1.xpose.msra.mxu0 0.0
        %3567 = vmatprep.subr.mxu0 0.0
        %3568 = vmatpush1.xpose.msra.mxu0 0.0
        %3569 = vmatprep.subr.mxu0 0.0
        %3570 = vmatpush1.xpose.msra.mxu0 0.0
        %3571 = vmatprep.subr.mxu0 0.0
        %3572 = vmatpush1.xpose.msra.mxu0 0.0
        %3573 = vmatprep.subr.mxu0 0.0
        %3574 = vmatpush1.xpose.msra.mxu0 0.0
        %3575 = vmatprep.subr.mxu0 0.0
        %3576 = vmatpush1.xpose.msra.mxu0 0.0
        %3577 = vmatprep.subr.mxu0 0.0
        %3578 = vmatpush1.xpose.msra.mxu0 0.0
        %3579 = vmatprep.subr.mxu0 0.0
        %3580 = vmatpush1.xpose.msra.mxu0 0.0
        %v3581 = vand.u32 %v1756, 4294901760
        %v3582 = vsub.f32 %v1756, %v3581
        %v3583 = vand.u32 %v3582, 4294901760
        %3584 = vmatprep.mubr.f32.mxu0 %v3583
        %v3585 = vand.u32 %v1752, 4294901760
        %v3586 = vsub.f32 %v1752, %v3585
        %v3587 = vand.u32 %v3586, 4294901760
        %3588 = vmatmul.mubr.f32.gmra.mrb[0].mxu0 %v3587
        %v3589 = vpop.f32.mrb[0].mxu0
        %v3590 = vadd.f32 %v3510, %v3589
        %v3591 = vpop.f32.mrb[0].mxu0
        %3592 = vdwg.mxu0
        %v3593 = vand.u32 %v1734, 4294901760
        %v3594 = vsub.f32 %v1734, %v3593
        %v3595 = vand.u32 %v3594, 4294901760
        %3596 = vmatprep.subr.mxu0 %v3595
        %v3597 = vand.u32 %v1733, 4294901760
        %v3598 = vsub.f32 %v1733, %v3597
        %v3599 = vand.u32 %v3598, 4294901760
        %3600 = vmatpush1.xpose.msra.mxu0 %v3599
        %v3601 = vand.u32 %v1738, 4294901760
        %v3602 = vsub.f32 %v1738, %v3601
        %v3603 = vand.u32 %v3602, 4294901760
        %3604 = vmatprep.subr.mxu0 %v3603
        %v3605 = vand.u32 %v1737, 4294901760
        %v3606 = vsub.f32 %v1737, %v3605
        %v3607 = vand.u32 %v3606, 4294901760
        %3608 = vmatpush1.xpose.msra.mxu0 %v3607
        %3609 = vmatprep.subr.mxu0 0.0
        %3610 = vmatpush1.xpose.msra.mxu0 0.0
        %3611 = vmatprep.subr.mxu0 0.0
        %3612 = vmatpush1.xpose.msra.mxu0 0.0
        %3613 = vmatprep.subr.mxu0 0.0
        %3614 = vmatpush1.xpose.msra.mxu0 0.0
        %3615 = vmatprep.subr.mxu0 0.0
        %3616 = vmatpush1.xpose.msra.mxu0 0.0
        %3617 = vmatprep.subr.mxu0 0.0
        %3618 = vmatpush1.xpose.msra.mxu0 0.0
        %3619 = vmatprep.subr.mxu0 0.0
        %3620 = vmatpush1.xpose.msra.mxu0 0.0
        %3621 = vmatprep.subr.mxu0 0.0
        %3622 = vmatpush1.xpose.msra.mxu0 0.0
        %3623 = vmatprep.subr.mxu0 0.0
        %3624 = vmatpush1.xpose.msra.mxu0 0.0
        %3625 = vmatprep.subr.mxu0 0.0
        %3626 = vmatpush1.xpose.msra.mxu0 0.0
        %3627 = vmatprep.subr.mxu0 0.0
        %3628 = vmatpush1.xpose.msra.mxu0 0.0
        %3629 = vmatprep.subr.mxu0 0.0
        %3630 = vmatpush1.xpose.msra.mxu0 0.0
        %3631 = vmatprep.subr.mxu0 0.0
        %3632 = vmatpush1.xpose.msra.mxu0 0.0
        %3633 = vmatprep.subr.mxu0 0.0
        %3634 = vmatpush1.xpose.msra.mxu0 0.0
        %3635 = vmatprep.subr.mxu0 0.0
        %3636 = vmatpush1.xpose.msra.mxu0 0.0
        %3637 = vmatprep.subr.mxu0 0.0
        %3638 = vmatpush1.xpose.msra.mxu0 0.0
        %3639 = vmatprep.subr.mxu0 0.0
        %3640 = vmatpush1.xpose.msra.mxu0 0.0
        %3641 = vmatprep.subr.mxu0 0.0
        %3642 = vmatpush1.xpose.msra.mxu0 0.0
        %3643 = vmatprep.subr.mxu0 0.0
        %3644 = vmatpush1.xpose.msra.mxu0 0.0
        %3645 = vmatprep.subr.mxu0 0.0
        %3646 = vmatpush1.xpose.msra.mxu0 0.0
        %3647 = vmatprep.subr.mxu0 0.0
        %3648 = vmatpush1.xpose.msra.mxu0 0.0
        %3649 = vmatprep.subr.mxu0 0.0
        %3650 = vmatpush1.xpose.msra.mxu0 0.0
        %3651 = vmatprep.subr.mxu0 0.0
        %3652 = vmatpush1.xpose.msra.mxu0 0.0
        %3653 = vmatprep.subr.mxu0 0.0
        %3654 = vmatpush1.xpose.msra.mxu0 0.0
        %3655 = vmatprep.subr.mxu0 0.0
        %3656 = vmatpush1.xpose.msra.mxu0 0.0
        %3657 = vmatprep.subr.mxu0 0.0
        %3658 = vmatpush1.xpose.msra.mxu0 0.0
        %3659 = vmatprep.subr.mxu0 0.0
        %3660 = vmatpush1.xpose.msra.mxu0 0.0
        %3661 = vmatprep.subr.mxu0 0.0
        %3662 = vmatpush1.xpose.msra.mxu0 0.0
        %3663 = vmatprep.subr.mxu0 0.0
        %3664 = vmatpush1.xpose.msra.mxu0 0.0
        %3665 = vmatprep.subr.mxu0 0.0
        %3666 = vmatpush1.xpose.msra.mxu0 0.0
        %3667 = vmatprep.subr.mxu0 0.0
        %3668 = vmatpush1.xpose.msra.mxu0 0.0
        %v3669 = vand.u32 %v1756, 4294901760
        %3670 = vmatprep.mubr.f32.mxu0 %v3669
        %v3671 = vand.u32 %v1752, 4294901760
        %3672 = vmatmul.mubr.f32.gmra.mrb[0].mxu0 %v3671
        %v3673 = vpop.f32.mrb[0].mxu0
        %v3674 = vadd.f32 %v3590, %v3673
        %v3675 = vpop.f32.mrb[0].mxu0
        %3676 = vdwg.mxu0
        %v3677 = vand.u32 %v1734, 4294901760
        %3678 = vmatprep.subr.mxu0 %v3677
        %v3679 = vand.u32 %v1733, 4294901760
        %3680 = vmatpush1.xpose.msra.mxu0 %v3679
        %v3681 = vand.u32 %v1738, 4294901760
        %3682 = vmatprep.subr.mxu0 %v3681
        %v3683 = vand.u32 %v1737, 4294901760
        %3684 = vmatpush1.xpose.msra.mxu0 %v3683
        %3685 = vmatprep.subr.mxu0 0.0
        %3686 = vmatpush1.xpose.msra.mxu0 0.0
        %3687 = vmatprep.subr.mxu0 0.0
        %3688 = vmatpush1.xpose.msra.mxu0 0.0
        %3689 = vmatprep.subr.mxu0 0.0
        %3690 = vmatpush1.xpose.msra.mxu0 0.0
        %3691 = vmatprep.subr.mxu0 0.0
        %3692 = vmatpush1.xpose.msra.mxu0 0.0
        %3693 = vmatprep.subr.mxu0 0.0
        %3694 = vmatpush1.xpose.msra.mxu0 0.0
        %3695 = vmatprep.subr.mxu0 0.0
        %3696 = vmatpush1.xpose.msra.mxu0 0.0
        %3697 = vmatprep.subr.mxu0 0.0
        %3698 = vmatpush1.xpose.msra.mxu0 0.0
        %3699 = vmatprep.subr.mxu0 0.0
        %3700 = vmatpush1.xpose.msra.mxu0 0.0
        %3701 = vmatprep.subr.mxu0 0.0
        %3702 = vmatpush1.xpose.msra.mxu0 0.0
        %3703 = vmatprep.subr.mxu0 0.0
        %3704 = vmatpush1.xpose.msra.mxu0 0.0
        %3705 = vmatprep.subr.mxu0 0.0
        %3706 = vmatpush1.xpose.msra.mxu0 0.0
        %3707 = vmatprep.subr.mxu0 0.0
        %3708 = vmatpush1.xpose.msra.mxu0 0.0
        %3709 = vmatprep.subr.mxu0 0.0
        %3710 = vmatpush1.xpose.msra.mxu0 0.0
        %3711 = vmatprep.subr.mxu0 0.0
        %3712 = vmatpush1.xpose.msra.mxu0 0.0
        %3713 = vmatprep.subr.mxu0 0.0
        %3714 = vmatpush1.xpose.msra.mxu0 0.0
        %3715 = vmatprep.subr.mxu0 0.0
        %3716 = vmatpush1.xpose.msra.mxu0 0.0
        %3717 = vmatprep.subr.mxu0 0.0
        %3718 = vmatpush1.xpose.msra.mxu0 0.0
        %3719 = vmatprep.subr.mxu0 0.0
        %3720 = vmatpush1.xpose.msra.mxu0 0.0
        %3721 = vmatprep.subr.mxu0 0.0
        %3722 = vmatpush1.xpose.msra.mxu0 0.0
        %3723 = vmatprep.subr.mxu0 0.0
        %3724 = vmatpush1.xpose.msra.mxu0 0.0
        %3725 = vmatprep.subr.mxu0 0.0
        %3726 = vmatpush1.xpose.msra.mxu0 0.0
        %3727 = vmatprep.subr.mxu0 0.0
        %3728 = vmatpush1.xpose.msra.mxu0 0.0
        %3729 = vmatprep.subr.mxu0 0.0
        %3730 = vmatpush1.xpose.msra.mxu0 0.0
        %3731 = vmatprep.subr.mxu0 0.0
        %3732 = vmatpush1.xpose.msra.mxu0 0.0
        %3733 = vmatprep.subr.mxu0 0.0
        %3734 = vmatpush1.xpose.msra.mxu0 0.0
        %3735 = vmatprep.subr.mxu0 0.0
        %3736 = vmatpush1.xpose.msra.mxu0 0.0
        %3737 = vmatprep.subr.mxu0 0.0
        %3738 = vmatpush1.xpose.msra.mxu0 0.0
        %3739 = vmatprep.subr.mxu0 0.0
        %3740 = vmatpush1.xpose.msra.mxu0 0.0
        %3741 = vmatprep.subr.mxu0 0.0
        %3742 = vmatpush1.xpose.msra.mxu0 0.0
        %3743 = vmatprep.subr.mxu0 0.0
        %3744 = vmatpush1.xpose.msra.mxu0 0.0
        %v3745 = vand.u32 %v1756, 4294901760
        %3746 = vmatprep.mubr.f32.mxu0 %v3745
        %v3747 = vand.u32 %v1752, 4294901760
        %3748 = vmatmul.mubr.f32.gmra.mrb[0].mxu0 %v3747
        %v3749 = vpop.f32.mrb[0].mxu0
        %v3750 = vadd.f32 %v3674, %v3749
        %v3751 = vpop.f32.mrb[0].mxu0
        %3752 = vdwg.mxu0
        %vm3753 = vcmask 122880
        %v3754 = vsel %vm3753, %v2754, -inf
        %3755 = vmax.xlane.f32.xlu0 %v3754
        %v3756 = vpop.xlane.xlu0 %3755
        %v3757 = vsel %vm3753, %v3750, -inf
        %3758 = vmax.xlane.f32.xlu0 %v3757
        %v3759 = vpop.xlane.xlu0 %3758
        %v3760 = vsub.f32 %v2754, %v3756
        %v3761 = vsub.f32 %v3750, %v3759
        %v3762 = vmul.f32 %v3760, 1.442695
        %v3763 = vpow.pop %v3762
        %v3764 = vmul.f32 %v3761, 1.442695
        %v3765 = vpow.pop %v3764
        %v3766 = vsel %vm3753, %v3763, 0.0
        %3767 = vadd.xlane.f32.xlu0 %v3766
        %v3768 = vpop.xlane.xlu0 %3767
        %v3769 = vsel %vm3753, %v3765, 0.0
        %3770 = vadd.xlane.f32.xlu0 %v3769
        %v3771 = vpop.xlane.xlu0 %3770
        %v3772 = vrcp.pop %v3768
        %v3773 = vrcp.pop %v3771
        %v3774 = vmul.f32 %v3763, %v3772
        %v3775 = vmul.f32 %v3765, %v3773
        %vm3776 = vcmask 130048
        %v3778 = vsel %vm3776, %v3774, 0
        %3780 = vmatprep.subr.mxu0 0.0
        %v3781 = vand.u32 %v288, 4294901760
        %3782 = vmatpush1.msra.mxu0 %v3781
        %3783 = vmatprep.subr.mxu0 0.0
        %v3784 = vand.u32 %v289, 4294901760
        %3785 = vmatpush1.msra.mxu0 %v3784
        %3786 = vmatprep.subr.mxu0 0.0
        %3787 = vmatpush1.msra.mxu0 0.0
        %3788 = vmatprep.subr.mxu0 0.0
        %3789 = vmatpush1.msra.mxu0 0.0
        %3790 = vmatprep.subr.mxu0 0.0
        %3791 = vmatpush1.msra.mxu0 0.0
        %3792 = vmatprep.subr.mxu0 0.0
        %3793 = vmatpush1.msra.mxu0 0.0
        %3794 = vmatprep.subr.mxu0 0.0
        %3795 = vmatpush1.msra.mxu0 0.0
        %3796 = vmatprep.subr.mxu0 0.0
        %3797 = vmatpush1.msra.mxu0 0.0
        %3798 = vmatprep.subr.mxu0 0.0
        %3799 = vmatpush1.msra.mxu0 0.0
        %3800 = vmatprep.subr.mxu0 0.0
        %3801 = vmatpush1.msra.mxu0 0.0
        %3802 = vmatprep.subr.mxu0 0.0
        %3803 = vmatpush1.msra.mxu0 0.0
        %3804 = vmatprep.subr.mxu0 0.0
        %3805 = vmatpush1.msra.mxu0 0.0
        %3806 = vmatprep.subr.mxu0 0.0
        %3807 = vmatpush1.msra.mxu0 0.0
        %3808 = vmatprep.subr.mxu0 0.0
        %3809 = vmatpush1.msra.mxu0 0.0
        %3810 = vmatprep.subr.mxu0 0.0
        %3811 = vmatpush1.msra.mxu0 0.0
        %3812 = vmatprep.subr.mxu0 0.0
        %3813 = vmatpush1.msra.mxu0 0.0
        %3814 = vmatprep.subr.mxu0 0.0
        %3815 = vmatpush1.msra.mxu0 0.0
        %3816 = vmatprep.subr.mxu0 0.0
        %3817 = vmatpush1.msra.mxu0 0.0
        %3818 = vmatprep.subr.mxu0 0.0
        %3819 = vmatpush1.msra.mxu0 0.0
        %3820 = vmatprep.subr.mxu0 0.0
        %3821 = vmatpush1.msra.mxu0 0.0
        %3822 = vmatprep.subr.mxu0 0.0
        %3823 = vmatpush1.msra.mxu0 0.0
        %3824 = vmatprep.subr.mxu0 0.0
        %3825 = vmatpush1.msra.mxu0 0.0
        %3826 = vmatprep.subr.mxu0 0.0
        %3827 = vmatpush1.msra.mxu0 0.0
        %3828 = vmatprep.subr.mxu0 0.0
        %3829 = vmatpush1.msra.mxu0 0.0
        %3830 = vmatprep.subr.mxu0 0.0
        %3831 = vmatpush1.msra.mxu0 0.0
        %3832 = vmatprep.subr.mxu0 0.0
        %3833 = vmatpush1.msra.mxu0 0.0
        %3834 = vmatprep.subr.mxu0 0.0
        %3835 = vmatpush1.msra.mxu0 0.0
        %3836 = vmatprep.subr.mxu0 0.0
        %3837 = vmatpush1.msra.mxu0 0.0
        %3838 = vmatprep.subr.mxu0 0.0
        %3839 = vmatpush1.msra.mxu0 0.0
        %3840 = vmatprep.subr.mxu0 0.0
        %3841 = vmatpush1.msra.mxu0 0.0
        %3842 = vmatprep.subr.mxu0 0.0
        %3843 = vmatpush1.msra.mxu0 0.0
        %3844 = vmatprep.subr.mxu0 0.0
        %3845 = vmatpush1.msra.mxu0 0.0
        %3846 = vmatprep.mubr.f32.mxu0 0.0
        %v3847 = vand.u32 %v3778, 4294901760
        %v3848 = vsub.f32 %v3778, %v3847
        %v3849 = vand.u32 %v3848, 4294901760
        %v3850 = vsub.f32 %v3848, %v3849
        %v3851 = vand.u32 %v3850, 4294901760
        %3852 = vmatmul.mubr.f32.gmra.mrb[0].mxu0 %v3851
        %v3853 = vpop.f32.mrb[0].mxu0
        %v3854 = vadd.f32 0.0, %v3853
        %v3855 = vpop.f32.mrb[0].mxu0
        %3856 = vdwg.mxu0
        %3857 = vmatprep.subr.mxu0 0.0
        %v3858 = vand.u32 %v288, 4294901760
        %v3859 = vsub.f32 %v288, %v3858
        %v3860 = vand.u32 %v3859, 4294901760
        %v3861 = vsub.f32 %v3859, %v3860
        %v3862 = vand.u32 %v3861, 4294901760
        %3863 = vmatpush1.msra.mxu0 %v3862
        %3864 = vmatprep.subr.mxu0 0.0
        %v3865 = vand.u32 %v289, 4294901760
        %v3866 = vsub.f32 %v289, %v3865
        %v3867 = vand.u32 %v3866, 4294901760
        %v3868 = vsub.f32 %v3866, %v3867
        %v3869 = vand.u32 %v3868, 4294901760
        %3870 = vmatpush1.msra.mxu0 %v3869
        %3871 = vmatprep.subr.mxu0 0.0
        %3872 = vmatpush1.msra.mxu0 0.0
        %3873 = vmatprep.subr.mxu0 0.0
        %3874 = vmatpush1.msra.mxu0 0.0
        %3875 = vmatprep.subr.mxu0 0.0
        %3876 = vmatpush1.msra.mxu0 0.0
        %3877 = vmatprep.subr.mxu0 0.0
        %3878 = vmatpush1.msra.mxu0 0.0
        %3879 = vmatprep.subr.mxu0 0.0
        %3880 = vmatpush1.msra.mxu0 0.0
        %3881 = vmatprep.subr.mxu0 0.0
        %3882 = vmatpush1.msra.mxu0 0.0
        %3883 = vmatprep.subr.mxu0 0.0
        %3884 = vmatpush1.msra.mxu0 0.0
        %3885 = vmatprep.subr.mxu0 0.0
        %3886 = vmatpush1.msra.mxu0 0.0
        %3887 = vmatprep.subr.mxu0 0.0
        %3888 = vmatpush1.msra.mxu0 0.0
        %3889 = vmatprep.subr.mxu0 0.0
        %3890 = vmatpush1.msra.mxu0 0.0
        %3891 = vmatprep.subr.mxu0 0.0
        %3892 = vmatpush1.msra.mxu0 0.0
        %3893 = vmatprep.subr.mxu0 0.0
        %3894 = vmatpush1.msra.mxu0 0.0
        %3895 = vmatprep.subr.mxu0 0.0
        %3896 = vmatpush1.msra.mxu0 0.0
        %3897 = vmatprep.subr.mxu0 0.0
        %3898 = vmatpush1.msra.mxu0 0.0
        %3899 = vmatprep.subr.mxu0 0.0
        %3900 = vmatpush1.msra.mxu0 0.0
        %3901 = vmatprep.subr.mxu0 0.0
        %3902 = vmatpush1.msra.mxu0 0.0
        %3903 = vmatprep.subr.mxu0 0.0
        %3904 = vmatpush1.msra.mxu0 0.0
        %3905 = vmatprep.subr.mxu0 0.0
        %3906 = vmatpush1.msra.mxu0 0.0
        %3907 = vmatprep.subr.mxu0 0.0
        %3908 = vmatpush1.msra.mxu0 0.0
        %3909 = vmatprep.subr.mxu0 0.0
        %3910 = vmatpush1.msra.mxu0 0.0
        %3911 = vmatprep.subr.mxu0 0.0
        %3912 = vmatpush1.msra.mxu0 0.0
        %3913 = vmatprep.subr.mxu0 0.0
        %3914 = vmatpush1.msra.mxu0 0.0
        %3915 = vmatprep.subr.mxu0 0.0
        %3916 = vmatpush1.msra.mxu0 0.0
        %3917 = vmatprep.subr.mxu0 0.0
        %3918 = vmatpush1.msra.mxu0 0.0
        %3919 = vmatprep.subr.mxu0 0.0
        %3920 = vmatpush1.msra.mxu0 0.0
        %3921 = vmatprep.subr.mxu0 0.0
        %3922 = vmatpush1.msra.mxu0 0.0
        %3923 = vmatprep.subr.mxu0 0.0
        %3924 = vmatpush1.msra.mxu0 0.0
        %3925 = vmatprep.subr.mxu0 0.0
        %3926 = vmatpush1.msra.mxu0 0.0
        %3927 = vmatprep.subr.mxu0 0.0
        %3928 = vmatpush1.msra.mxu0 0.0
        %3929 = vmatprep.subr.mxu0 0.0
        %3930 = vmatpush1.msra.mxu0 0.0
        %3931 = vmatprep.mubr.f32.mxu0 0.0
        %v3932 = vand.u32 %v3778, 4294901760
        %3933 = vmatmul.mubr.f32.gmra.mrb[0].mxu0 %v3932
        %v3934 = vpop.f32.mrb[0].mxu0
        %v3935 = vadd.f32 %v3854, %v3934
        %v3936 = vpop.f32.mrb[0].mxu0
        %3937 = vdwg.mxu0
        %3938 = vmatprep.subr.mxu0 0.0
        %v3939 = vand.u32 %v288, 4294901760
        %v3940 = vsub.f32 %v288, %v3939
        %3941 = vmatpush1.msra.mxu0 %v3940
        %3942 = vmatprep.subr.mxu0 0.0
        %v3943 = vand.u32 %v289, 4294901760
        %v3944 = vsub.f32 %v289, %v3943
        %3945 = vmatpush1.msra.mxu0 %v3944
        %3946 = vmatprep.subr.mxu0 0.0
        %3947 = vmatpush1.msra.mxu0 0.0
        %3948 = vmatprep.subr.mxu0 0.0
        %3949 = vmatpush1.msra.mxu0 0.0
        %3950 = vmatprep.subr.mxu0 0.0
        %3951 = vmatpush1.msra.mxu0 0.0
        %3952 = vmatprep.subr.mxu0 0.0
        %3953 = vmatpush1.msra.mxu0 0.0
        %3954 = vmatprep.subr.mxu0 0.0
        %3955 = vmatpush1.msra.mxu0 0.0
        %3956 = vmatprep.subr.mxu0 0.0
        %3957 = vmatpush1.msra.mxu0 0.0
        %3958 = vmatprep.subr.mxu0 0.0
        %3959 = vmatpush1.msra.mxu0 0.0
        %3960 = vmatprep.subr.mxu0 0.0
        %3961 = vmatpush1.msra.mxu0 0.0
        %3962 = vmatprep.subr.mxu0 0.0
        %3963 = vmatpush1.msra.mxu0 0.0
        %3964 = vmatprep.subr.mxu0 0.0
        %3965 = vmatpush1.msra.mxu0 0.0
        %3966 = vmatprep.subr.mxu0 0.0
        %3967 = vmatpush1.msra.mxu0 0.0
        %3968 = vmatprep.subr.mxu0 0.0
        %3969 = vmatpush1.msra.mxu0 0.0
        %3970 = vmatprep.subr.mxu0 0.0
        %3971 = vmatpush1.msra.mxu0 0.0
        %3972 = vmatprep.subr.mxu0 0.0
        %3973 = vmatpush1.msra.mxu0 0.0
        %3974 = vmatprep.subr.mxu0 0.0
        %3975 = vmatpush1.msra.mxu0 0.0
        %3976 = vmatprep.subr.mxu0 0.0
        %3977 = vmatpush1.msra.mxu0 0.0
        %3978 = vmatprep.subr.mxu0 0.0
        %3979 = vmatpush1.msra.mxu0 0.0
        %3980 = vmatprep.subr.mxu0 0.0
        %3981 = vmatpush1.msra.mxu0 0.0
        %3982 = vmatprep.subr.mxu0 0.0
        %3983 = vmatpush1.msra.mxu0 0.0
        %3984 = vmatprep.subr.mxu0 0.0
        %3985 = vmatpush1.msra.mxu0 0.0
        %3986 = vmatprep.subr.mxu0 0.0
        %3987 = vmatpush1.msra.mxu0 0.0
        %3988 = vmatprep.subr.mxu0 0.0
        %3989 = vmatpush1.msra.mxu0 0.0
        %3990 = vmatprep.subr.mxu0 0.0
        %3991 = vmatpush1.msra.mxu0 0.0
        %3992 = vmatprep.subr.mxu0 0.0
        %3993 = vmatpush1.msra.mxu0 0.0
        %3994 = vmatprep.subr.mxu0 0.0
        %3995 = vmatpush1.msra.mxu0 0.0
        %3996 = vmatprep.subr.mxu0 0.0
        %3997 = vmatpush1.msra.mxu0 0.0
        %3998 = vmatprep.subr.mxu0 0.0
        %3999 = vmatpush1.msra.mxu0 0.0
        %4000 = vmatprep.subr.mxu0 0.0
        %4001 = vmatpush1.msra.mxu0 0.0
        %4002 = vmatprep.subr.mxu0 0.0
        %4003 = vmatpush1.msra.mxu0 0.0
        %4004 = vmatprep.subr.mxu0 0.0
        %4005 = vmatpush1.msra.mxu0 0.0
        %4006 = vmatprep.mubr.f32.mxu0 0.0
        %v4007 = vand.u32 %v3778, 4294901760
        %v4008 = vsub.f32 %v3778, %v4007
        %4009 = vmatmul.mubr.f32.gmra.mrb[0].mxu0 %v4008
        %v4010 = vpop.f32.mrb[0].mxu0
        %v4011 = vadd.f32 %v3935, %v4010
        %v4012 = vpop.f32.mrb[0].mxu0
        %4013 = vdwg.mxu0
        %4014 = vmatprep.subr.mxu0 0.0
        %v4015 = vand.u32 %v288, 4294901760
        %4016 = vmatpush1.msra.mxu0 %v4015
        %4017 = vmatprep.subr.mxu0 0.0
        %v4018 = vand.u32 %v289, 4294901760
        %4019 = vmatpush1.msra.mxu0 %v4018
        %4020 = vmatprep.subr.mxu0 0.0
        %4021 = vmatpush1.msra.mxu0 0.0
        %4022 = vmatprep.subr.mxu0 0.0
        %4023 = vmatpush1.msra.mxu0 0.0
        %4024 = vmatprep.subr.mxu0 0.0
        %4025 = vmatpush1.msra.mxu0 0.0
        %4026 = vmatprep.subr.mxu0 0.0
        %4027 = vmatpush1.msra.mxu0 0.0
        %4028 = vmatprep.subr.mxu0 0.0
        %4029 = vmatpush1.msra.mxu0 0.0
        %4030 = vmatprep.subr.mxu0 0.0
        %4031 = vmatpush1.msra.mxu0 0.0
        %4032 = vmatprep.subr.mxu0 0.0
        %4033 = vmatpush1.msra.mxu0 0.0
        %4034 = vmatprep.subr.mxu0 0.0
        %4035 = vmatpush1.msra.mxu0 0.0
        %4036 = vmatprep.subr.mxu0 0.0
        %4037 = vmatpush1.msra.mxu0 0.0
        %4038 = vmatprep.subr.mxu0 0.0
        %4039 = vmatpush1.msra.mxu0 0.0
        %4040 = vmatprep.subr.mxu0 0.0
        %4041 = vmatpush1.msra.mxu0 0.0
        %4042 = vmatprep.subr.mxu0 0.0
        %4043 = vmatpush1.msra.mxu0 0.0
        %4044 = vmatprep.subr.mxu0 0.0
        %4045 = vmatpush1.msra.mxu0 0.0
        %4046 = vmatprep.subr.mxu0 0.0
        %4047 = vmatpush1.msra.mxu0 0.0
        %4048 = vmatprep.subr.mxu0 0.0
        %4049 = vmatpush1.msra.mxu0 0.0
        %4050 = vmatprep.subr.mxu0 0.0
        %4051 = vmatpush1.msra.mxu0 0.0
        %4052 = vmatprep.subr.mxu0 0.0
        %4053 = vmatpush1.msra.mxu0 0.0
        %4054 = vmatprep.subr.mxu0 0.0
        %4055 = vmatpush1.msra.mxu0 0.0
        %4056 = vmatprep.subr.mxu0 0.0
        %4057 = vmatpush1.msra.mxu0 0.0
        %4058 = vmatprep.subr.mxu0 0.0
        %4059 = vmatpush1.msra.mxu0 0.0
        %4060 = vmatprep.subr.mxu0 0.0
        %4061 = vmatpush1.msra.mxu0 0.0
        %4062 = vmatprep.subr.mxu0 0.0
        %4063 = vmatpush1.msra.mxu0 0.0
        %4064 = vmatprep.subr.mxu0 0.0
        %4065 = vmatpush1.msra.mxu0 0.0
        %4066 = vmatprep.subr.mxu0 0.0
        %4067 = vmatpush1.msra.mxu0 0.0
        %4068 = vmatprep.subr.mxu0 0.0
        %4069 = vmatpush1.msra.mxu0 0.0
        %4070 = vmatprep.subr.mxu0 0.0
        %4071 = vmatpush1.msra.mxu0 0.0
        %4072 = vmatprep.subr.mxu0 0.0
        %4073 = vmatpush1.msra.mxu0 0.0
        %4074 = vmatprep.subr.mxu0 0.0
        %4075 = vmatpush1.msra.mxu0 0.0
        %4076 = vmatprep.subr.mxu0 0.0
        %4077 = vmatpush1.msra.mxu0 0.0
        %4078 = vmatprep.subr.mxu0 0.0
        %4079 = vmatpush1.msra.mxu0 0.0
        %4080 = vmatprep.mubr.f32.mxu0 0.0
        %v4081 = vand.u32 %v3778, 4294901760
        %v4082 = vsub.f32 %v3778, %v4081
        %v4083 = vand.u32 %v4082, 4294901760
        %4084 = vmatmul.mubr.f32.gmra.mrb[0].mxu0 %v4083
        %v4085 = vpop.f32.mrb[0].mxu0
        %v4086 = vadd.f32 %v4011, %v4085
        %v4087 = vpop.f32.mrb[0].mxu0
        %4088 = vdwg.mxu0
        %4089 = vmatprep.subr.mxu0 0.0
        %v4090 = vand.u32 %v288, 4294901760
        %v4091 = vsub.f32 %v288, %v4090
        %v4092 = vand.u32 %v4091, 4294901760
        %4093 = vmatpush1.msra.mxu0 %v4092
        %4094 = vmatprep.subr.mxu0 0.0
        %v4095 = vand.u32 %v289, 4294901760
        %v4096 = vsub.f32 %v289, %v4095
        %v4097 = vand.u32 %v4096, 4294901760
        %4098 = vmatpush1.msra.mxu0 %v4097
        %4099 = vmatprep.subr.mxu0 0.0
        %4100 = vmatpush1.msra.mxu0 0.0
        %4101 = vmatprep.subr.mxu0 0.0
        %4102 = vmatpush1.msra.mxu0 0.0
        %4103 = vmatprep.subr.mxu0 0.0
        %4104 = vmatpush1.msra.mxu0 0.0
        %4105 = vmatprep.subr.mxu0 0.0
        %4106 = vmatpush1.msra.mxu0 0.0
        %4107 = vmatprep.subr.mxu0 0.0
        %4108 = vmatpush1.msra.mxu0 0.0
        %4109 = vmatprep.subr.mxu0 0.0
        %4110 = vmatpush1.msra.mxu0 0.0
        %4111 = vmatprep.subr.mxu0 0.0
        %4112 = vmatpush1.msra.mxu0 0.0
        %4113 = vmatprep.subr.mxu0 0.0
        %4114 = vmatpush1.msra.mxu0 0.0
        %4115 = vmatprep.subr.mxu0 0.0
        %4116 = vmatpush1.msra.mxu0 0.0
        %4117 = vmatprep.subr.mxu0 0.0
        %4118 = vmatpush1.msra.mxu0 0.0
        %4119 = vmatprep.subr.mxu0 0.0
        %4120 = vmatpush1.msra.mxu0 0.0
        %4121 = vmatprep.subr.mxu0 0.0
        %4122 = vmatpush1.msra.mxu0 0.0
        %4123 = vmatprep.subr.mxu0 0.0
        %4124 = vmatpush1.msra.mxu0 0.0
        %4125 = vmatprep.subr.mxu0 0.0
        %4126 = vmatpush1.msra.mxu0 0.0
        %4127 = vmatprep.subr.mxu0 0.0
        %4128 = vmatpush1.msra.mxu0 0.0
        %4129 = vmatprep.subr.mxu0 0.0
        %4130 = vmatpush1.msra.mxu0 0.0
        %4131 = vmatprep.subr.mxu0 0.0
        %4132 = vmatpush1.msra.mxu0 0.0
        %4133 = vmatprep.subr.mxu0 0.0
        %4134 = vmatpush1.msra.mxu0 0.0
        %4135 = vmatprep.subr.mxu0 0.0
        %4136 = vmatpush1.msra.mxu0 0.0
        %4137 = vmatprep.subr.mxu0 0.0
        %4138 = vmatpush1.msra.mxu0 0.0
        %4139 = vmatprep.subr.mxu0 0.0
        %4140 = vmatpush1.msra.mxu0 0.0
        %4141 = vmatprep.subr.mxu0 0.0
        %4142 = vmatpush1.msra.mxu0 0.0
        %4143 = vmatprep.subr.mxu0 0.0
        %4144 = vmatpush1.msra.mxu0 0.0
        %4145 = vmatprep.subr.mxu0 0.0
        %4146 = vmatpush1.msra.mxu0 0.0
        %4147 = vmatprep.subr.mxu0 0.0
        %4148 = vmatpush1.msra.mxu0 0.0
        %4149 = vmatprep.subr.mxu0 0.0
        %4150 = vmatpush1.msra.mxu0 0.0
        %4151 = vmatprep.subr.mxu0 0.0
        %4152 = vmatpush1.msra.mxu0 0.0
        %4153 = vmatprep.subr.mxu0 0.0
        %4154 = vmatpush1.msra.mxu0 0.0
        %4155 = vmatprep.subr.mxu0 0.0
        %4156 = vmatpush1.msra.mxu0 0.0
        %4157 = vmatprep.subr.mxu0 0.0
        %4158 = vmatpush1.msra.mxu0 0.0
        %4159 = vmatprep.mubr.f32.mxu0 0.0
        %v4160 = vand.u32 %v3778, 4294901760
        %4161 = vmatmul.mubr.f32.gmra.mrb[0].mxu0 %v4160
        %v4162 = vpop.f32.mrb[0].mxu0
        %v4163 = vadd.f32 %v4086, %v4162
        %v4164 = vpop.f32.mrb[0].mxu0
        %4165 = vdwg.mxu0
        %4166 = vmatprep.subr.mxu0 0.0
        %v4167 = vand.u32 %v288, 4294901760
        %4168 = vmatpush1.msra.mxu0 %v4167
        %4169 = vmatprep.subr.mxu0 0.0
        %v4170 = vand.u32 %v289, 4294901760
        %4171 = vmatpush1.msra.mxu0 %v4170
        %4172 = vmatprep.subr.mxu0 0.0
        %4173 = vmatpush1.msra.mxu0 0.0
        %4174 = vmatprep.subr.mxu0 0.0
        %4175 = vmatpush1.msra.mxu0 0.0
        %4176 = vmatprep.subr.mxu0 0.0
        %4177 = vmatpush1.msra.mxu0 0.0
        %4178 = vmatprep.subr.mxu0 0.0
        %4179 = vmatpush1.msra.mxu0 0.0
        %4180 = vmatprep.subr.mxu0 0.0
        %4181 = vmatpush1.msra.mxu0 0.0
        %4182 = vmatprep.subr.mxu0 0.0
        %4183 = vmatpush1.msra.mxu0 0.0
        %4184 = vmatprep.subr.mxu0 0.0
        %4185 = vmatpush1.msra.mxu0 0.0
        %4186 = vmatprep.subr.mxu0 0.0
        %4187 = vmatpush1.msra.mxu0 0.0
        %4188 = vmatprep.subr.mxu0 0.0
        %4189 = vmatpush1.msra.mxu0 0.0
        %4190 = vmatprep.subr.mxu0 0.0
        %4191 = vmatpush1.msra.mxu0 0.0
        %4192 = vmatprep.subr.mxu0 0.0
        %4193 = vmatpush1.msra.mxu0 0.0
        %4194 = vmatprep.subr.mxu0 0.0
        %4195 = vmatpush1.msra.mxu0 0.0
        %4196 = vmatprep.subr.mxu0 0.0
        %4197 = vmatpush1.msra.mxu0 0.0
        %4198 = vmatprep.subr.mxu0 0.0
        %4199 = vmatpush1.msra.mxu0 0.0
        %4200 = vmatprep.subr.mxu0 0.0
        %4201 = vmatpush1.msra.mxu0 0.0
        %4202 = vmatprep.subr.mxu0 0.0
        %4203 = vmatpush1.msra.mxu0 0.0
        %4204 = vmatprep.subr.mxu0 0.0
        %4205 = vmatpush1.msra.mxu0 0.0
        %4206 = vmatprep.subr.mxu0 0.0
        %4207 = vmatpush1.msra.mxu0 0.0
        %4208 = vmatprep.subr.mxu0 0.0
        %4209 = vmatpush1.msra.mxu0 0.0
        %4210 = vmatprep.subr.mxu0 0.0
        %4211 = vmatpush1.msra.mxu0 0.0
        %4212 = vmatprep.subr.mxu0 0.0
        %4213 = vmatpush1.msra.mxu0 0.0
        %4214 = vmatprep.subr.mxu0 0.0
        %4215 = vmatpush1.msra.mxu0 0.0
        %4216 = vmatprep.subr.mxu0 0.0
        %4217 = vmatpush1.msra.mxu0 0.0
        %4218 = vmatprep.subr.mxu0 0.0
        %4219 = vmatpush1.msra.mxu0 0.0
        %4220 = vmatprep.subr.mxu0 0.0
        %4221 = vmatpush1.msra.mxu0 0.0
        %4222 = vmatprep.subr.mxu0 0.0
        %4223 = vmatpush1.msra.mxu0 0.0
        %4224 = vmatprep.subr.mxu0 0.0
        %4225 = vmatpush1.msra.mxu0 0.0
        %4226 = vmatprep.subr.mxu0 0.0
        %4227 = vmatpush1.msra.mxu0 0.0
        %4228 = vmatprep.subr.mxu0 0.0
        %4229 = vmatpush1.msra.mxu0 0.0
        %4230 = vmatprep.subr.mxu0 0.0
        %4231 = vmatpush1.msra.mxu0 0.0
        %4232 = vmatprep.mubr.f32.mxu0 0.0
        %v4233 = vand.u32 %v3778, 4294901760
        %4234 = vmatmul.mubr.f32.gmra.mrb[0].mxu0 %v4233
        %v4235 = vpop.f32.mrb[0].mxu0
        %v4236 = vadd.f32 %v4163, %v4235
        %v4237 = vpop.f32.mrb[0].mxu0
        %4238 = vdwg.mxu0
        %v4240 = vsel %vm3776, %v3775, 0
        %4242 = vmatprep.subr.mxu0 0.0
        %v4243 = vand.u32 %v290, 4294901760
        %4244 = vmatpush1.msra.mxu0 %v4243
        %4245 = vmatprep.subr.mxu0 0.0
        %v4246 = vand.u32 %v291, 4294901760
        %4247 = vmatpush1.msra.mxu0 %v4246
        %4248 = vmatprep.subr.mxu0 0.0
        %4249 = vmatpush1.msra.mxu0 0.0
        %4250 = vmatprep.subr.mxu0 0.0
        %4251 = vmatpush1.msra.mxu0 0.0
        %4252 = vmatprep.subr.mxu0 0.0
        %4253 = vmatpush1.msra.mxu0 0.0
        %4254 = vmatprep.subr.mxu0 0.0
        %4255 = vmatpush1.msra.mxu0 0.0
        %4256 = vmatprep.subr.mxu0 0.0
        %4257 = vmatpush1.msra.mxu0 0.0
        %4258 = vmatprep.subr.mxu0 0.0
        %4259 = vmatpush1.msra.mxu0 0.0
        %4260 = vmatprep.subr.mxu0 0.0
        %4261 = vmatpush1.msra.mxu0 0.0
        %4262 = vmatprep.subr.mxu0 0.0
        %4263 = vmatpush1.msra.mxu0 0.0
        %4264 = vmatprep.subr.mxu0 0.0
        %4265 = vmatpush1.msra.mxu0 0.0
        %4266 = vmatprep.subr.mxu0 0.0
        %4267 = vmatpush1.msra.mxu0 0.0
        %4268 = vmatprep.subr.mxu0 0.0
        %4269 = vmatpush1.msra.mxu0 0.0
        %4270 = vmatprep.subr.mxu0 0.0
        %4271 = vmatpush1.msra.mxu0 0.0
        %4272 = vmatprep.subr.mxu0 0.0
        %4273 = vmatpush1.msra.mxu0 0.0
        %4274 = vmatprep.subr.mxu0 0.0
        %4275 = vmatpush1.msra.mxu0 0.0
        %4276 = vmatprep.subr.mxu0 0.0
        %4277 = vmatpush1.msra.mxu0 0.0
        %4278 = vmatprep.subr.mxu0 0.0
        %4279 = vmatpush1.msra.mxu0 0.0
        %4280 = vmatprep.subr.mxu0 0.0
        %4281 = vmatpush1.msra.mxu0 0.0
        %4282 = vmatprep.subr.mxu0 0.0
        %4283 = vmatpush1.msra.mxu0 0.0
        %4284 = vmatprep.subr.mxu0 0.0
        %4285 = vmatpush1.msra.mxu0 0.0
        %4286 = vmatprep.subr.mxu0 0.0
        %4287 = vmatpush1.msra.mxu0 0.0
        %4288 = vmatprep.subr.mxu0 0.0
        %4289 = vmatpush1.msra.mxu0 0.0
        %4290 = vmatprep.subr.mxu0 0.0
        %4291 = vmatpush1.msra.mxu0 0.0
        %4292 = vmatprep.subr.mxu0 0.0
        %4293 = vmatpush1.msra.mxu0 0.0
        %4294 = vmatprep.subr.mxu0 0.0
        %4295 = vmatpush1.msra.mxu0 0.0
        %4296 = vmatprep.subr.mxu0 0.0
        %4297 = vmatpush1.msra.mxu0 0.0
        %4298 = vmatprep.subr.mxu0 0.0
        %4299 = vmatpush1.msra.mxu0 0.0
        %4300 = vmatprep.subr.mxu0 0.0
        %4301 = vmatpush1.msra.mxu0 0.0
        %4302 = vmatprep.subr.mxu0 0.0
        %4303 = vmatpush1.msra.mxu0 0.0
        %4304 = vmatprep.subr.mxu0 0.0
        %4305 = vmatpush1.msra.mxu0 0.0
        %4306 = vmatprep.subr.mxu0 0.0
        %4307 = vmatpush1.msra.mxu0 0.0
        %4308 = vmatprep.mubr.f32.mxu0 0.0
        %v4309 = vand.u32 %v4240, 4294901760
        %v4310 = vsub.f32 %v4240, %v4309
        %v4311 = vand.u32 %v4310, 4294901760
        %v4312 = vsub.f32 %v4310, %v4311
        %v4313 = vand.u32 %v4312, 4294901760
        %4314 = vmatmul.mubr.f32.gmra.mrb[0].mxu0 %v4313
        %v4315 = vpop.f32.mrb[0].mxu0
        %v4316 = vadd.f32 0.0, %v4315
        %v4317 = vpop.f32.mrb[0].mxu0
        %4318 = vdwg.mxu0
        %4319 = vmatprep.subr.mxu0 0.0
        %v4320 = vand.u32 %v290, 4294901760
        %v4321 = vsub.f32 %v290, %v4320
        %v4322 = vand.u32 %v4321, 4294901760
        %v4323 = vsub.f32 %v4321, %v4322
        %v4324 = vand.u32 %v4323, 4294901760
        %4325 = vmatpush1.msra.mxu0 %v4324
        %4326 = vmatprep.subr.mxu0 0.0
        %v4327 = vand.u32 %v291, 4294901760
        %v4328 = vsub.f32 %v291, %v4327
        %v4329 = vand.u32 %v4328, 4294901760
        %v4330 = vsub.f32 %v4328, %v4329
        %v4331 = vand.u32 %v4330, 4294901760
        %4332 = vmatpush1.msra.mxu0 %v4331
        %4333 = vmatprep.subr.mxu0 0.0
        %4334 = vmatpush1.msra.mxu0 0.0
        %4335 = vmatprep.subr.mxu0 0.0
        %4336 = vmatpush1.msra.mxu0 0.0
        %4337 = vmatprep.subr.mxu0 0.0
        %4338 = vmatpush1.msra.mxu0 0.0
        %4339 = vmatprep.subr.mxu0 0.0
        %4340 = vmatpush1.msra.mxu0 0.0
        %4341 = vmatprep.subr.mxu0 0.0
        %4342 = vmatpush1.msra.mxu0 0.0
        %4343 = vmatprep.subr.mxu0 0.0
        %4344 = vmatpush1.msra.mxu0 0.0
        %4345 = vmatprep.subr.mxu0 0.0
        %4346 = vmatpush1.msra.mxu0 0.0
        %4347 = vmatprep.subr.mxu0 0.0
        %4348 = vmatpush1.msra.mxu0 0.0
        %4349 = vmatprep.subr.mxu0 0.0
        %4350 = vmatpush1.msra.mxu0 0.0
        %4351 = vmatprep.subr.mxu0 0.0
        %4352 = vmatpush1.msra.mxu0 0.0
        %4353 = vmatprep.subr.mxu0 0.0
        %4354 = vmatpush1.msra.mxu0 0.0
        %4355 = vmatprep.subr.mxu0 0.0
        %4356 = vmatpush1.msra.mxu0 0.0
        %4357 = vmatprep.subr.mxu0 0.0
        %4358 = vmatpush1.msra.mxu0 0.0
        %4359 = vmatprep.subr.mxu0 0.0
        %4360 = vmatpush1.msra.mxu0 0.0
        %4361 = vmatprep.subr.mxu0 0.0
        %4362 = vmatpush1.msra.mxu0 0.0
        %4363 = vmatprep.subr.mxu0 0.0
        %4364 = vmatpush1.msra.mxu0 0.0
        %4365 = vmatprep.subr.mxu0 0.0
        %4366 = vmatpush1.msra.mxu0 0.0
        %4367 = vmatprep.subr.mxu0 0.0
        %4368 = vmatpush1.msra.mxu0 0.0
        %4369 = vmatprep.subr.mxu0 0.0
        %4370 = vmatpush1.msra.mxu0 0.0
        %4371 = vmatprep.subr.mxu0 0.0
        %4372 = vmatpush1.msra.mxu0 0.0
        %4373 = vmatprep.subr.mxu0 0.0
        %4374 = vmatpush1.msra.mxu0 0.0
        %4375 = vmatprep.subr.mxu0 0.0
        %4376 = vmatpush1.msra.mxu0 0.0
        %4377 = vmatprep.subr.mxu0 0.0
        %4378 = vmatpush1.msra.mxu0 0.0
        %4379 = vmatprep.subr.mxu0 0.0
        %4380 = vmatpush1.msra.mxu0 0.0
        %4381 = vmatprep.subr.mxu0 0.0
        %4382 = vmatpush1.msra.mxu0 0.0
        %4383 = vmatprep.subr.mxu0 0.0
        %4384 = vmatpush1.msra.mxu0 0.0
        %4385 = vmatprep.subr.mxu0 0.0
        %4386 = vmatpush1.msra.mxu0 0.0
        %4387 = vmatprep.subr.mxu0 0.0
        %4388 = vmatpush1.msra.mxu0 0.0
        %4389 = vmatprep.subr.mxu0 0.0
        %4390 = vmatpush1.msra.mxu0 0.0
        %4391 = vmatprep.subr.mxu0 0.0
        %4392 = vmatpush1.msra.mxu0 0.0
        %4393 = vmatprep.mubr.f32.mxu0 0.0
        %v4394 = vand.u32 %v4240, 4294901760
        %4395 = vmatmul.mubr.f32.gmra.mrb[0].mxu0 %v4394
        %v4396 = vpop.f32.mrb[0].mxu0
        %v4397 = vadd.f32 %v4316, %v4396
        %v4398 = vpop.f32.mrb[0].mxu0
        %4399 = vdwg.mxu0
        %4400 = vmatprep.subr.mxu0 0.0
        %v4401 = vand.u32 %v290, 4294901760
        %v4402 = vsub.f32 %v290, %v4401
        %4403 = vmatpush1.msra.mxu0 %v4402
        %4404 = vmatprep.subr.mxu0 0.0
        %v4405 = vand.u32 %v291, 4294901760
        %v4406 = vsub.f32 %v291, %v4405
        %4407 = vmatpush1.msra.mxu0 %v4406
        %4408 = vmatprep.subr.mxu0 0.0
        %4409 = vmatpush1.msra.mxu0 0.0
        %4410 = vmatprep.subr.mxu0 0.0
        %4411 = vmatpush1.msra.mxu0 0.0
        %4412 = vmatprep.subr.mxu0 0.0
        %4413 = vmatpush1.msra.mxu0 0.0
        %4414 = vmatprep.subr.mxu0 0.0
        %4415 = vmatpush1.msra.mxu0 0.0
        %4416 = vmatprep.subr.mxu0 0.0
        %4417 = vmatpush1.msra.mxu0 0.0
        %4418 = vmatprep.subr.mxu0 0.0
        %4419 = vmatpush1.msra.mxu0 0.0
        %4420 = vmatprep.subr.mxu0 0.0
        %4421 = vmatpush1.msra.mxu0 0.0
        %4422 = vmatprep.subr.mxu0 0.0
        %4423 = vmatpush1.msra.mxu0 0.0
        %4424 = vmatprep.subr.mxu0 0.0
        %4425 = vmatpush1.msra.mxu0 0.0
        %4426 = vmatprep.subr.mxu0 0.0
        %4427 = vmatpush1.msra.mxu0 0.0
        %4428 = vmatprep.subr.mxu0 0.0
        %4429 = vmatpush1.msra.mxu0 0.0
        %4430 = vmatprep.subr.mxu0 0.0
        %4431 = vmatpush1.msra.mxu0 0.0
        %4432 = vmatprep.subr.mxu0 0.0
        %4433 = vmatpush1.msra.mxu0 0.0
        %4434 = vmatprep.subr.mxu0 0.0
        %4435 = vmatpush1.msra.mxu0 0.0
        %4436 = vmatprep.subr.mxu0 0.0
        %4437 = vmatpush1.msra.mxu0 0.0
        %4438 = vmatprep.subr.mxu0 0.0
        %4439 = vmatpush1.msra.mxu0 0.0
        %4440 = vmatprep.subr.mxu0 0.0
        %4441 = vmatpush1.msra.mxu0 0.0
        %4442 = vmatprep.subr.mxu0 0.0
        %4443 = vmatpush1.msra.mxu0 0.0
        %4444 = vmatprep.subr.mxu0 0.0
        %4445 = vmatpush1.msra.mxu0 0.0
        %4446 = vmatprep.subr.mxu0 0.0
        %4447 = vmatpush1.msra.mxu0 0.0
        %4448 = vmatprep.subr.mxu0 0.0
        %4449 = vmatpush1.msra.mxu0 0.0
        %4450 = vmatprep.subr.mxu0 0.0
        %4451 = vmatpush1.msra.mxu0 0.0
        %4452 = vmatprep.subr.mxu0 0.0
        %4453 = vmatpush1.msra.mxu0 0.0
        %4454 = vmatprep.subr.mxu0 0.0
        %4455 = vmatpush1.msra.mxu0 0.0
        %4456 = vmatprep.subr.mxu0 0.0
        %4457 = vmatpush1.msra.mxu0 0.0
        %4458 = vmatprep.subr.mxu0 0.0
        %4459 = vmatpush1.msra.mxu0 0.0
        %4460 = vmatprep.subr.mxu0 0.0
        %4461 = vmatpush1.msra.mxu0 0.0
        %4462 = vmatprep.subr.mxu0 0.0
        %4463 = vmatpush1.msra.mxu0 0.0
        %4464 = vmatprep.subr.mxu0 0.0
        %4465 = vmatpush1.msra.mxu0 0.0
        %4466 = vmatprep.subr.mxu0 0.0
        %4467 = vmatpush1.msra.mxu0 0.0
        %4468 = vmatprep.mubr.f32.mxu0 0.0
        %v4469 = vand.u32 %v4240, 4294901760
        %v4470 = vsub.f32 %v4240, %v4469
        %4471 = vmatmul.mubr.f32.gmra.mrb[0].mxu0 %v4470
        %v4472 = vpop.f32.mrb[0].mxu0
        %v4473 = vadd.f32 %v4397, %v4472
        %v4474 = vpop.f32.mrb[0].mxu0
        %4475 = vdwg.mxu0
        %4476 = vmatprep.subr.mxu0 0.0
        %v4477 = vand.u32 %v290, 4294901760
        %4478 = vmatpush1.msra.mxu0 %v4477
        %4479 = vmatprep.subr.mxu0 0.0
        %v4480 = vand.u32 %v291, 4294901760
        %4481 = vmatpush1.msra.mxu0 %v4480
        %4482 = vmatprep.subr.mxu0 0.0
        %4483 = vmatpush1.msra.mxu0 0.0
        %4484 = vmatprep.subr.mxu0 0.0
        %4485 = vmatpush1.msra.mxu0 0.0
        %4486 = vmatprep.subr.mxu0 0.0
        %4487 = vmatpush1.msra.mxu0 0.0
        %4488 = vmatprep.subr.mxu0 0.0
        %4489 = vmatpush1.msra.mxu0 0.0
        %4490 = vmatprep.subr.mxu0 0.0
        %4491 = vmatpush1.msra.mxu0 0.0
        %4492 = vmatprep.subr.mxu0 0.0
        %4493 = vmatpush1.msra.mxu0 0.0
        %4494 = vmatprep.subr.mxu0 0.0
        %4495 = vmatpush1.msra.mxu0 0.0
        %4496 = vmatprep.subr.mxu0 0.0
        %4497 = vmatpush1.msra.mxu0 0.0
        %4498 = vmatprep.subr.mxu0 0.0
        %4499 = vmatpush1.msra.mxu0 0.0
        %4500 = vmatprep.subr.mxu0 0.0
        %4501 = vmatpush1.msra.mxu0 0.0
        %4502 = vmatprep.subr.mxu0 0.0
        %4503 = vmatpush1.msra.mxu0 0.0
        %4504 = vmatprep.subr.mxu0 0.0
        %4505 = vmatpush1.msra.mxu0 0.0
        %4506 = vmatprep.subr.mxu0 0.0
        %4507 = vmatpush1.msra.mxu0 0.0
        %4508 = vmatprep.subr.mxu0 0.0
        %4509 = vmatpush1.msra.mxu0 0.0
        %4510 = vmatprep.subr.mxu0 0.0
        %4511 = vmatpush1.msra.mxu0 0.0
        %4512 = vmatprep.subr.mxu0 0.0
        %4513 = vmatpush1.msra.mxu0 0.0
        %4514 = vmatprep.subr.mxu0 0.0
        %4515 = vmatpush1.msra.mxu0 0.0
        %4516 = vmatprep.subr.mxu0 0.0
        %4517 = vmatpush1.msra.mxu0 0.0
        %4518 = vmatprep.subr.mxu0 0.0
        %4519 = vmatpush1.msra.mxu0 0.0
        %4520 = vmatprep.subr.mxu0 0.0
        %4521 = vmatpush1.msra.mxu0 0.0
        %4522 = vmatprep.subr.mxu0 0.0
        %4523 = vmatpush1.msra.mxu0 0.0
        %4524 = vmatprep.subr.mxu0 0.0
        %4525 = vmatpush1.msra.mxu0 0.0
        %4526 = vmatprep.subr.mxu0 0.0
        %4527 = vmatpush1.msra.mxu0 0.0
        %4528 = vmatprep.subr.mxu0 0.0
        %4529 = vmatpush1.msra.mxu0 0.0
        %4530 = vmatprep.subr.mxu0 0.0
        %4531 = vmatpush1.msra.mxu0 0.0
        %4532 = vmatprep.subr.mxu0 0.0
        %4533 = vmatpush1.msra.mxu0 0.0
        %4534 = vmatprep.subr.mxu0 0.0
        %4535 = vmatpush1.msra.mxu0 0.0
        %4536 = vmatprep.subr.mxu0 0.0
        %4537 = vmatpush1.msra.mxu0 0.0
        %4538 = vmatprep.subr.mxu0 0.0
        %4539 = vmatpush1.msra.mxu0 0.0
        %4540 = vmatprep.subr.mxu0 0.0
        %4541 = vmatpush1.msra.mxu0 0.0
        %4542 = vmatprep.mubr.f32.mxu0 0.0
        %v4543 = vand.u32 %v4240, 4294901760
        %v4544 = vsub.f32 %v4240, %v4543
        %v4545 = vand.u32 %v4544, 4294901760
        %4546 = vmatmul.mubr.f32.gmra.mrb[0].mxu0 %v4545
        %v4547 = vpop.f32.mrb[0].mxu0
        %v4548 = vadd.f32 %v4473, %v4547
        %v4549 = vpop.f32.mrb[0].mxu0
        %4550 = vdwg.mxu0
        %4551 = vmatprep.subr.mxu0 0.0
        %v4552 = vand.u32 %v290, 4294901760
        %v4553 = vsub.f32 %v290, %v4552
        %v4554 = vand.u32 %v4553, 4294901760
        %4555 = vmatpush1.msra.mxu0 %v4554
        %4556 = vmatprep.subr.mxu0 0.0
        %v4557 = vand.u32 %v291, 4294901760
        %v4558 = vsub.f32 %v291, %v4557
        %v4559 = vand.u32 %v4558, 4294901760
        %4560 = vmatpush1.msra.mxu0 %v4559
        %4561 = vmatprep.subr.mxu0 0.0
        %4562 = vmatpush1.msra.mxu0 0.0
        %4563 = vmatprep.subr.mxu0 0.0
        %4564 = vmatpush1.msra.mxu0 0.0
        %4565 = vmatprep.subr.mxu0 0.0
        %4566 = vmatpush1.msra.mxu0 0.0
        %4567 = vmatprep.subr.mxu0 0.0
        %4568 = vmatpush1.msra.mxu0 0.0
        %4569 = vmatprep.subr.mxu0 0.0
        %4570 = vmatpush1.msra.mxu0 0.0
        %4571 = vmatprep.subr.mxu0 0.0
        %4572 = vmatpush1.msra.mxu0 0.0
        %4573 = vmatprep.subr.mxu0 0.0
        %4574 = vmatpush1.msra.mxu0 0.0
        %4575 = vmatprep.subr.mxu0 0.0
        %4576 = vmatpush1.msra.mxu0 0.0
        %4577 = vmatprep.subr.mxu0 0.0
        %4578 = vmatpush1.msra.mxu0 0.0
        %4579 = vmatprep.subr.mxu0 0.0
        %4580 = vmatpush1.msra.mxu0 0.0
        %4581 = vmatprep.subr.mxu0 0.0
        %4582 = vmatpush1.msra.mxu0 0.0
        %4583 = vmatprep.subr.mxu0 0.0
        %4584 = vmatpush1.msra.mxu0 0.0
        %4585 = vmatprep.subr.mxu0 0.0
        %4586 = vmatpush1.msra.mxu0 0.0
        %4587 = vmatprep.subr.mxu0 0.0
        %4588 = vmatpush1.msra.mxu0 0.0
        %4589 = vmatprep.subr.mxu0 0.0
        %4590 = vmatpush1.msra.mxu0 0.0
        %4591 = vmatprep.subr.mxu0 0.0
        %4592 = vmatpush1.msra.mxu0 0.0
        %4593 = vmatprep.subr.mxu0 0.0
        %4594 = vmatpush1.msra.mxu0 0.0
        %4595 = vmatprep.subr.mxu0 0.0
        %4596 = vmatpush1.msra.mxu0 0.0
        %4597 = vmatprep.subr.mxu0 0.0
        %4598 = vmatpush1.msra.mxu0 0.0
        %4599 = vmatprep.subr.mxu0 0.0
        %4600 = vmatpush1.msra.mxu0 0.0
        %4601 = vmatprep.subr.mxu0 0.0
        %4602 = vmatpush1.msra.mxu0 0.0
        %4603 = vmatprep.subr.mxu0 0.0
        %4604 = vmatpush1.msra.mxu0 0.0
        %4605 = vmatprep.subr.mxu0 0.0
        %4606 = vmatpush1.msra.mxu0 0.0
        %4607 = vmatprep.subr.mxu0 0.0
        %4608 = vmatpush1.msra.mxu0 0.0
        %4609 = vmatprep.subr.mxu0 0.0
        %4610 = vmatpush1.msra.mxu0 0.0
        %4611 = vmatprep.subr.mxu0 0.0
        %4612 = vmatpush1.msra.mxu0 0.0
        %4613 = vmatprep.subr.mxu0 0.0
        %4614 = vmatpush1.msra.mxu0 0.0
        %4615 = vmatprep.subr.mxu0 0.0
        %4616 = vmatpush1.msra.mxu0 0.0
        %4617 = vmatprep.subr.mxu0 0.0
        %4618 = vmatpush1.msra.mxu0 0.0
        %4619 = vmatprep.subr.mxu0 0.0
        %4620 = vmatpush1.msra.mxu0 0.0
        %4621 = vmatprep.mubr.f32.mxu0 0.0
        %v4622 = vand.u32 %v4240, 4294901760
        %4623 = vmatmul.mubr.f32.gmra.mrb[0].mxu0 %v4622
        %v4624 = vpop.f32.mrb[0].mxu0
        %v4625 = vadd.f32 %v4548, %v4624
        %v4626 = vpop.f32.mrb[0].mxu0
        %4627 = vdwg.mxu0
        %4628 = vmatprep.subr.mxu0 0.0
        %v4629 = vand.u32 %v290, 4294901760
        %4630 = vmatpush1.msra.mxu0 %v4629
        %4631 = vmatprep.subr.mxu0 0.0
        %v4632 = vand.u32 %v291, 4294901760
        %4633 = vmatpush1.msra.mxu0 %v4632
        %4634 = vmatprep.subr.mxu0 0.0
        %4635 = vmatpush1.msra.mxu0 0.0
        %4636 = vmatprep.subr.mxu0 0.0
        %4637 = vmatpush1.msra.mxu0 0.0
        %4638 = vmatprep.subr.mxu0 0.0
        %4639 = vmatpush1.msra.mxu0 0.0
        %4640 = vmatprep.subr.mxu0 0.0
        %4641 = vmatpush1.msra.mxu0 0.0
        %4642 = vmatprep.subr.mxu0 0.0
        %4643 = vmatpush1.msra.mxu0 0.0
        %4644 = vmatprep.subr.mxu0 0.0
        %4645 = vmatpush1.msra.mxu0 0.0
        %4646 = vmatprep.subr.mxu0 0.0
        %4647 = vmatpush1.msra.mxu0 0.0
        %4648 = vmatprep.subr.mxu0 0.0
        %4649 = vmatpush1.msra.mxu0 0.0
        %4650 = vmatprep.subr.mxu0 0.0
        %4651 = vmatpush1.msra.mxu0 0.0
        %4652 = vmatprep.subr.mxu0 0.0
        %4653 = vmatpush1.msra.mxu0 0.0
        %4654 = vmatprep.subr.mxu0 0.0
        %4655 = vmatpush1.msra.mxu0 0.0
        %4656 = vmatprep.subr.mxu0 0.0
        %4657 = vmatpush1.msra.mxu0 0.0
        %4658 = vmatprep.subr.mxu0 0.0
        %4659 = vmatpush1.msra.mxu0 0.0
        %4660 = vmatprep.subr.mxu0 0.0
        %4661 = vmatpush1.msra.mxu0 0.0
        %4662 = vmatprep.subr.mxu0 0.0
        %4663 = vmatpush1.msra.mxu0 0.0
        %4664 = vmatprep.subr.mxu0 0.0
        %4665 = vmatpush1.msra.mxu0 0.0
        %4666 = vmatprep.subr.mxu0 0.0
        %4667 = vmatpush1.msra.mxu0 0.0
        %4668 = vmatprep.subr.mxu0 0.0
        %4669 = vmatpush1.msra.mxu0 0.0
        %4670 = vmatprep.subr.mxu0 0.0
        %4671 = vmatpush1.msra.mxu0 0.0
        %4672 = vmatprep.subr.mxu0 0.0
        %4673 = vmatpush1.msra.mxu0 0.0
        %4674 = vmatprep.subr.mxu0 0.0
        %4675 = vmatpush1.msra.mxu0 0.0
        %4676 = vmatprep.subr.mxu0 0.0
        %4677 = vmatpush1.msra.mxu0 0.0
        %4678 = vmatprep.subr.mxu0 0.0
        %4679 = vmatpush1.msra.mxu0 0.0
        %4680 = vmatprep.subr.mxu0 0.0
        %4681 = vmatpush1.msra.mxu0 0.0
        %4682 = vmatprep.subr.mxu0 0.0
        %4683 = vmatpush1.msra.mxu0 0.0
        %4684 = vmatprep.subr.mxu0 0.0
        %4685 = vmatpush1.msra.mxu0 0.0
        %4686 = vmatprep.subr.mxu0 0.0
        %4687 = vmatpush1.msra.mxu0 0.0
        %4688 = vmatprep.subr.mxu0 0.0
        %4689 = vmatpush1.msra.mxu0 0.0
        %4690 = vmatprep.subr.mxu0 0.0
        %4691 = vmatpush1.msra.mxu0 0.0
        %4692 = vmatprep.subr.mxu0 0.0
        %4693 = vmatpush1.msra.mxu0 0.0
        %4694 = vmatprep.mubr.f32.mxu0 0.0
        %v4695 = vand.u32 %v4240, 4294901760
        %4696 = vmatmul.mubr.f32.gmra.mrb[0].mxu0 %v4695
        %v4697 = vpop.f32.mrb[0].mxu0
        %v4698 = vadd.f32 %v4625, %v4697
        %v4699 = vpop.f32.mrb[0].mxu0
        %4700 = vdwg.mxu0
        %v4701 = vld [vmem:[%s4] sm:$0x1]
        %v4703 = vlaneseq
        %v4704 = vshrl.u32 %v4703, 7
        %v4705 = vsub.s32 0, %v4704
        %v4706 = vrot.slane %v4701, %v4705
        %v4708 = vmul.f32 %v4236, %v4706
        %v4709 = vmul.f32 %v4698, %v4706
        %v4712 = vrot.slane %v4709, 7
        %vm4713 = vcmask 1041409
        %v4714 = vsel %vm4713, %v4712, %v4708
        %vm4716 = vcmask 254976
        %v4717 = vsel %vm4716, %v4714, 0.0
        %4718 = vadd.xlane.f32.xlu0 %v4717
        %v4719 = vpop.xlane.xlu0 %4718
        %s4720 = sld [smem:[#allocation2]]
        %v4721 = vstv %s4720
        %v4722 = vadd.f32 %v4719, %v4721
        %vm4723 = vcmask 1041408
        %v4724 = vsel %vm4723, %v4722, 0.0
        %4726 = vset.pattern.permute.xlu0 0
        %4727 = vperm.xlu0 %4726, %v4724
        %v4728 = vpop.permute.xlu0 %4727
        %4730 = vst [vmem:[%s286] sm:$0xff] %v4728
        %s4731 = sand.u32 %s164, 1
        %s4732 = scalar_lea.sflag [#allocation5], %s4731
        %s4733 = sand.u32 %s164, 1
        %s4734 = smul.addr %s4733, 8
        %s4735 = scalar_lea.vmem [#allocation8], %s4734
        // Predicated region
        $region53: #{tpu_custom_call.1} parent=43 // pred_check
          %p4736 = pneg %p174
        $region54: #{tpu_custom_call.1} parent=43 // pred_check_branch
          %4738 = sbr.rel (%p4736) target = $region56
        $region55: #{tpu_custom_call.1} parent=43 // pred_region
          %s4740 = ssub.s32 128, 128
          %4741 = vsyncadd %s4732, %s4740
          %s4742 = smul.addr %s25, 128
          %s4743 = scalar_lea.hbm %s6, %s4742
          %s4745 = sshll.u32 %s4735, 4
          %s4746 = int_to_ptr.vmem [resolvable:$true] %s4745
          %4748 = dma.vmem_to_hbm [thread:$0]  %s4746, 128, %s4743, %s4732
        $region56: #{tpu_custom_call.1} parent=43 // pred_fallthru
          _
      $region44: #{tpu_custom_call.1} parent=5 // pred_fallthru
        _
      %p4749 = scmp.le.s32.totalorder 2, %s20
      // Predicated region
      $region57: #{tpu_custom_call.1} parent=5 // pred_check
        %p4750 = pneg %p4749
      $region58: #{tpu_custom_call.1} parent=5 // pred_check_branch
        %4752 = sbr.rel (%p4750) target = $region60
      $region59: #{tpu_custom_call.1} parent=5 // pred_region
        %s4753 = ssub.s32 %s20, 2
        // Predicated region
        $region61: #{tpu_custom_call.1} parent=59 // pred_check
          %p4754 = pneg %p180
        $region62: #{tpu_custom_call.1} parent=59 // pred_check_branch
          %4756 = sbr.rel (%p4754) target = $region64
        $region63: #{tpu_custom_call.1} parent=59 // pred_region
          %s4757 = sand.u32 %s165, 1
          %s4758 = scalar_lea.sflag [#allocation5], %s4757
          %s4759 = sand.u32 %s165, 1
          %s4760 = smul.addr %s4759, 8
          %s4761 = scalar_lea.vmem [#allocation8], %s4760
          %4762 = dma.done %s4758, 128
        $region64: #{tpu_custom_call.1} parent=59 // pred_fallthru
          _
      $region60: #{tpu_custom_call.1} parent=5 // pred_fallthru
        _
    $region6: #{tpu_custom_call.1} parent=1 // loop_footer
      %s24 = sadd.s32 1, %s20
    $region7: #{tpu_custom_call.1} parent=1 // loop_footer_branch
      %19 = sbr.rel target = $region3
    $region8: #{tpu_custom_call.1} parent=1 // loop_exit
      _
    %4763 = vsyncpa [#allocation4], 1
    %s4764 = scalar_lea.sflag [#allocation4], 1
    %4765 = vsyncpa %s4764, 1
    %4766 = vsyncpa [#allocation7], 1
    %4767 = vsyncpa [#allocation5], 1
    %s4768 = scalar_lea.sflag [#allocation5], 1
    %4769 = vsyncpa %s4768, 1

</llo_original>
